<compile_context>
chip_gen: v7x
topology: tpu7x:2x2x1
jax: 0.10.0
libtpu: 0.0.40
codegen_flags: <defaults>
</compile_context>

<pallas_src>
import functools

import jax
import jax.numpy as jnp
from jax import lax
from jax.experimental import pallas as pl
from jax.experimental.pallas import tpu as pltpu


# -----------------------------------------------------------------------------
# Fused per-step kernel (block_b images per grid step)
#   x14:  (Bb, 196, 136) bf16   channels-last 14x14 backbone feature
#   x7:   (Bb, 49,  384) bf16   channels-last 7x7  backbone feature
#   wtex: (136, M)  bf16   adap_conv14 ∘ attention_texture conv (BN folded)
#   btex: (1, M)    f32    folded bias + BN shift (texture)
#   w7:   (384, 2048) bf16 adap_conv7 weight (feat7 still needed for fm)
#   b7:   (1, 2048) f32
#   wsem: (384, M)  bf16   adap_conv7 ∘ attention_semantic conv (BN folded)
#   bsem: (1, M)    f32    folded bias + BN shift (semantic)
#   pool: (49, 196) bf16   2x2 avg-pool on the 14x14 grid as a matmul
#   wcls: (M, 1)    f32    conv1d head weight
#   bcls: (1, 1)    f32    conv1d head bias
# outputs per step:
#   attn_t: (Bb, M, 49)   f32   attention maps, channel-major (already transposed)
#   fm:     (Bb, M, 2048) f32   bilinear-pooled feature matrix
#   cls:    (Bb, 1, 2048) f32   classifier feature
# -----------------------------------------------------------------------------
def _msfe_kernel(x14_ref, x7_ref, wtex_ref, btex_ref, w7_ref, b7_ref,
                 wsem_ref, bsem_ref, pool_ref, wcls_ref, bcls_ref,
                 attn_ref, fm_ref, cls_ref, *, block_b, inv_hw):
    wtex = wtex_ref[...]
    btex = btex_ref[...]
    w7 = w7_ref[...]
    b7 = b7_ref[...]
    wsem = wsem_ref[...]
    bsem = bsem_ref[...]
    pool = pool_ref[...]
    wcls = wcls_ref[...]
    bcls = bcls_ref[...]

    for i in range(block_b):  # static, unrolled at trace time
        x14 = x14_ref[i]                                               # (196,136) bf16
        x7 = x7_ref[i]                                                 # (49,384)  bf16

        # --- texture path: (adap_conv14 ∘ attention_texture ∘ BN) + ReLU ----
        tex = jnp.maximum(
            jnp.dot(x14, wtex, preferred_element_type=jnp.float32) + btex,
            0.0)                                                       # (196,M) f32
        # 2x2 avg-pool expressed as a bf16 matmul (no in-kernel reshapes)
        tex_pool = jnp.dot(pool, tex.astype(jnp.bfloat16),
                           preferred_element_type=jnp.float32)         # (49,M)

        # --- semantic path ---------------------------------------------------
        feat7p = jnp.dot(x7, w7,
                         preferred_element_type=jnp.float32) + b7      # (49,2048) f32
        sem = jnp.maximum(
            jnp.dot(x7, wsem, preferred_element_type=jnp.float32) + bsem,
            0.0)                                                       # (49,M)

        attn_t = (sem + tex_pool).T                                    # (M,49) f32
        attn_ref[i] = attn_t

        # fm[m,c] = sum_hw attn_t[m,hw] * feat7p[hw,c] / HW   (plain matmul)
        fm = jnp.dot(attn_t.astype(jnp.bfloat16), feat7p.astype(jnp.bfloat16),
                     preferred_element_type=jnp.float32) * inv_hw      # (M,2048)
        fm_ref[i] = fm

        # conv1d head as a VPU/XLU reduction over the M maps
        cls_ref[i] = jnp.sum(wcls * fm, axis=0, keepdims=True) + bcls  # (1,2048)


def msfe_fused(x14, x7, kp, *, block_b=None):
    B, N14, C14 = x14.shape
    _, HW, C7 = x7.shape
    M = kp["Wtex"].shape[1]
    C = kp["W7"].shape[1]

    if block_b is None:
        block_b = 2 if (B % 2 == 0) else 1
    assert B % block_b == 0, (B, block_b)

    kernel = functools.partial(_msfe_kernel, block_b=block_b,
                               inv_hw=1.0 / float(HW))

    def const2d(arr):
        # Constant weights: index_map never changes, so Pallas DMAs them once.
        return pl.BlockSpec(arr.shape, lambda b: (0, 0))

    return pl.pallas_call(
        kernel,
        out_shape=(
            jax.ShapeDtypeStruct((B, M, HW), jnp.float32),
            jax.ShapeDtypeStruct((B, M, C), jnp.float32),
            jax.ShapeDtypeStruct((B, 1, C), jnp.float32),
        ),
        grid=(B // block_b,),
        in_specs=[
            pl.BlockSpec((block_b, N14, C14), lambda b: (b, 0, 0)),
            pl.BlockSpec((block_b, HW, C7), lambda b: (b, 0, 0)),
            const2d(kp["Wtex"]),
            const2d(kp["btex"]),
            const2d(kp["W7"]),
            const2d(kp["b7"]),
            const2d(kp["Wsem"]),
            const2d(kp["bsem"]),
            const2d(kp["P_pool"]),
            const2d(kp["w_cls"]),
            const2d(kp["b_cls"]),
        ],
        out_specs=(
            pl.BlockSpec((block_b, M, HW), lambda b: (b, 0, 0)),
            pl.BlockSpec((block_b, M, C), lambda b: (b, 0, 0)),
            pl.BlockSpec((block_b, 1, C), lambda b: (b, 0, 0)),
        ),
        compiler_params=pltpu.CompilerParams(
            dimension_semantics=("parallel",),
            vmem_limit_bytes=32 * 1024 * 1024),
    )(x14, x7, kp["Wtex"], kp["btex"], kp["W7"], kp["b7"],
      kp["Wsem"], kp["bsem"], kp["P_pool"], kp["w_cls"], kp["b_cls"])


# -----------------------------------------------------------------------------
# Full forward (backbone stub + layout glue + fused kernel)
# -----------------------------------------------------------------------------
def effi_encoder_msfe_forward(x, kp, *, block_b=None):
    B = x.shape[0]
    M = kp["Wtex"].shape[1]

    # ---- backbone stub (glue): avg-pool + deterministic 1x1 projection ----
    # TODO(synk): replaces the pretrained timm EfficientNet feature extractor.
    pooled14 = x.reshape(B, 3, 14, 16, 14, 16).mean(axis=(3, 5))      # (B,3,14,14)
    pooled7 = x.reshape(B, 3, 7, 32, 7, 32).mean(axis=(3, 5))         # (B,3,7,7)
    x14 = jnp.einsum("bchw,cd->bhwd", pooled14,
                     kp["P14"]).reshape(B, 196, -1).astype(jnp.bfloat16)
    x7 = jnp.einsum("bchw,cd->bhwd", pooled7,
                    kp["P7"]).reshape(B, 49, -1).astype(jnp.bfloat16)

    attn_t, fm, cls = msfe_fused(x14, x7, kp, block_b=block_b)

    # attn comes out channel-major already: (B, M, 49) -> (B, M, 7, 7), no transpose.
    attention_maps_cls = attn_t.reshape(B, M, 7, 7)
    cls = cls.reshape(B, -1)
    return attention_maps_cls, cls, fm


# -----------------------------------------------------------------------------
# Parameters: logical (f32, torch-layout) params + kernel-prepped params
# -----------------------------------------------------------------------------
def make_params(key, M=32):
    ks = jax.random.split(key, 16)
    std = 0.02
    p = {
        # backbone stub projections
        "P14": jax.random.normal(ks[0], (3, 136), jnp.float32) * std,
        "P7": jax.random.normal(ks[1], (3, 384), jnp.float32) * std,
        # adap_conv14 / adap_conv7 (1x1 convs with bias)
        "W14": jax.random.normal(ks[2], (136, 1024), jnp.float32) * std,
        "b14": jax.random.normal(ks[3], (1024,), jnp.float32) * std,
        "W7": jax.random.normal(ks[4], (384, 2048), jnp.float32) * std,
        "b7": jax.random.normal(ks[5], (2048,), jnp.float32) * std,
        # attention_texture / attention_semantic 1x1 convs (no bias)
        "Wt": jax.random.normal(ks[6], (1024, M), jnp.float32) * std,
        "Ws": jax.random.normal(ks[7], (2048, M), jnp.float32) * std,
        # separate eval-mode BatchNorm2d params per branch (eps = 1e-3)
        "gamma_t": 1.0 + 0.1 * jax.random.normal(ks[8], (M,), jnp.float32),
        "beta_t": 0.1 * jax.random.normal(ks[9], (M,), jnp.float32),
        "mean_t": 0.1 * jax.random.normal(ks[10], (M,), jnp.float32),
        "var_t": jax.random.uniform(ks[11], (M,), jnp.float32, 0.5, 1.5),
        "gamma_s": 1.0 + 0.1 * jax.random.normal(ks[12], (M,), jnp.float32),
        "beta_s": 0.1 * jax.random.normal(ks[13], (M,), jnp.float32),
        "mean_s": 0.1 * jax.random.normal(ks[14], (M,), jnp.float32),
        "var_s": jax.random.uniform(ks[15], (M,), jnp.float32, 0.5, 1.5),
        # WSLL conv1d head: linear combination over the M attention maps
        "w_cls": jax.random.normal(jax.random.fold_in(key, 99), (M,),
                                   jnp.float32) * std,
        "b_cls": jnp.zeros((), jnp.float32),
    }
    return p


def _make_pool_matrix():
    """(49, 196) matrix implementing AvgPool2d(2,2) on a 14x14 grid."""
    rows = jnp.arange(49)
    cols = jnp.arange(196)
    out_r, out_c = rows // 7, rows % 7
    in_r, in_c = cols // 14, cols % 14
    hit = ((in_r[None, :] // 2 == out_r[:, None]) &
           (in_c[None, :] // 2 == out_c[:, None]))
    return hit.astype(jnp.float32) * 0.25


def prepare_kernel_params(p, eps=1e-3):
    """Fold BN and compose the back-to-back 1x1 convs (exact: no nonlinearity
    between adap_conv* and attention_*); cast big weights to bf16 once."""
    sc_t = p["gamma_t"] / jnp.sqrt(p["var_t"] + eps)
    sh_t = p["beta_t"] - p["mean_t"] * sc_t
    sc_s = p["gamma_s"] / jnp.sqrt(p["var_s"] + eps)
    sh_s = p["beta_s"] - p["mean_s"] * sc_s

    wt_s = p["Wt"] * sc_t[None, :]            # (1024, M), BN scale folded
    ws_s = p["Ws"] * sc_s[None, :]            # (2048, M), BN scale folded

    # compose in f32, cast once
    wtex = p["W14"] @ wt_s                    # (136, M)
    btex = p["b14"] @ wt_s + sh_t             # (M,)
    wsem = p["W7"] @ ws_s                     # (384, M)
    bsem = p["b7"] @ ws_s + sh_s              # (M,)

    return {
        "P14": p["P14"],
        "P7": p["P7"],
        "Wtex": wtex.astype(jnp.bfloat16),
        "btex": btex.reshape(1, -1),
        "W7": p["W7"].astype(jnp.bfloat16),
        "b7": p["b7"].reshape(1, -1),
        "Wsem": wsem.astype(jnp.bfloat16),
        "bsem": bsem.reshape(1, -1),
        "P_pool": _make_pool_matrix().astype(jnp.bfloat16),
        "w_cls": p["w_cls"].reshape(-1, 1),
        "b_cls": p["b_cls"].reshape(1, 1),
    }


# -----------------------------------------------------------------------------
# Pure-JAX f32 reference for the correctness check
# -----------------------------------------------------------------------------
def reference_forward(x, p, eps=1e-3):
    B = x.shape[0]
    M = p["Wt"].shape[1]
    pooled14 = x.reshape(B, 3, 14, 16, 14, 16).mean(axis=(3, 5))
    pooled7 = x.reshape(B, 3, 7, 32, 7, 32).mean(axis=(3, 5))
    feat14 = jnp.einsum("bchw,cd->bdhw", pooled14, p["P14"])
    feat7 = jnp.einsum("bchw,cd->bdhw", pooled7, p["P7"])

    f14 = jnp.einsum("bchw,cd->bdhw", feat14, p["W14"]) + \
        p["b14"].reshape(1, -1, 1, 1)
    f7 = jnp.einsum("bchw,cd->bdhw", feat7, p["W7"]) + \
        p["b7"].reshape(1, -1, 1, 1)

    sc_t = (p["gamma_t"] / jnp.sqrt(p["var_t"] + eps)).reshape(1, -1, 1, 1)
    sh_t = p["beta_t"].reshape(1, -1, 1, 1) - \
        p["mean_t"].reshape(1, -1, 1, 1) * sc_t
    sc_s = (p["gamma_s"] / jnp.sqrt(p["var_s"] + eps)).reshape(1, -1, 1, 1)
    sh_s = p["beta_s"].reshape(1, -1, 1, 1) - \
        p["mean_s"].reshape(1, -1, 1, 1) * sc_s

    texture = jax.nn.relu(
        jnp.einsum("bchw,cm->bmhw", f14, p["Wt"]) * sc_t + sh_t)
    semantic = jax.nn.relu(
        jnp.einsum("bchw,cm->bmhw", f7, p["Ws"]) * sc_s + sh_s)
    tex_pool = texture.reshape(B, M, 7, 2, 7, 2).mean(axis=(3, 5))
    attention = semantic + tex_pool                                   # (B,M,7,7)

    fm = jnp.einsum("imjk,injk->imn", attention, f7) / 49.0           # (B,M,2048)
    cls = jnp.einsum("m,bmn->bn", p["w_cls"], fm) + p["b_cls"]        # (B,2048)
    return attention, cls, fm


if __name__ == "__main__":
    key = jax.random.PRNGKey(0)
    k_x, k_p = jax.random.split(key)
    B, M = 4, 32
    x = jax.random.normal(k_x, (B, 3, 224, 224), jnp.float32)
    params = make_params(k_p, M=M)
    kparams = prepare_kernel_params(params)

    # block_b=2: 2 images per grid step (amortizes per-step cost on v5e/v6e)
    # while keeping 2 grid steps so v7x's two TensorCores both get work.
    fwd = jax.jit(functools.partial(effi_encoder_msfe_forward, block_b=2))
    attn, cls, fm = fwd(x, kparams)
    jax.block_until_ready((attn, cls, fm))

    attn_ref, cls_ref, fm_ref = reference_forward(x, params)
    assert attn.shape == (B, M, 7, 7)
    assert cls.shape == (B, 2048)
    assert fm.shape == (B, M, 2048)
    assert jnp.allclose(attn, attn_ref, atol=1e-2, rtol=1e-2)
    assert jnp.allclose(fm, fm_ref, atol=1e-2, rtol=1e-2)
    assert jnp.allclose(cls, cls_ref, atol=1e-2, rtol=1e-2)

    print("KERNEL_OK")
</pallas_src>

<mosaic_0001>
module attributes {stable_mosaic.version = 11 : i64} {
  func.func @_msfe_kernel(%arg0: i32, %arg1: memref<2x196x136xbf16, #tpu.memory_space<vmem>>, %arg2: memref<2x49x384xbf16, #tpu.memory_space<vmem>>, %arg3: memref<136x32xbf16, #tpu.memory_space<vmem>>, %arg4: memref<1x32xf32, #tpu.memory_space<vmem>>, %arg5: memref<384x2048xbf16, #tpu.memory_space<vmem>>, %arg6: memref<1x2048xf32, #tpu.memory_space<vmem>>, %arg7: memref<384x32xbf16, #tpu.memory_space<vmem>>, %arg8: memref<1x32xf32, #tpu.memory_space<vmem>>, %arg9: memref<49x196xbf16, #tpu.memory_space<vmem>>, %arg10: memref<32x1xf32, #tpu.memory_space<vmem>>, %arg11: memref<1x1xf32, #tpu.memory_space<vmem>>, %arg12: memref<2x32x49xf32, #tpu.memory_space<vmem>>, %arg13: memref<2x32x2048xf32, #tpu.memory_space<vmem>>, %arg14: memref<2x1x2048xf32, #tpu.memory_space<vmem>>) attributes {dimension_semantics = [#tpu.dimension_semantics<parallel>], iteration_bounds = array<i64: 2>, scalar_prefetch = 0 : i64, scratch_operands = 0 : i64, tpu.core_type = #tpu.core_type<tc>, window_params = [{transform_indices = @transform_0, window_bounds = array<i64: 2, 196, 136>}, {transform_indices = @transform_1, window_bounds = array<i64: 2, 49, 384>}, {pipeline_mode = #tpu.pipeline_mode<synchronous>, transform_indices = @transform_2, window_bounds = array<i64: 136, 32>}, {pipeline_mode = #tpu.pipeline_mode<synchronous>, transform_indices = @transform_3, window_bounds = array<i64: 1, 32>}, {pipeline_mode = #tpu.pipeline_mode<synchronous>, transform_indices = @transform_4, window_bounds = array<i64: 384, 2048>}, {pipeline_mode = #tpu.pipeline_mode<synchronous>, transform_indices = @transform_5, window_bounds = array<i64: 1, 2048>}, {pipeline_mode = #tpu.pipeline_mode<synchronous>, transform_indices = @transform_6, window_bounds = array<i64: 384, 32>}, {pipeline_mode = #tpu.pipeline_mode<synchronous>, transform_indices = @transform_7, window_bounds = array<i64: 1, 32>}, {pipeline_mode = #tpu.pipeline_mode<synchronous>, transform_indices = @transform_8, window_bounds = array<i64: 49, 196>}, {pipeline_mode = #tpu.pipeline_mode<synchronous>, transform_indices = @transform_9, window_bounds = array<i64: 32, 1>}, {pipeline_mode = #tpu.pipeline_mode<synchronous>, transform_indices = @transform_10, window_bounds = array<i64: 1, 1>}, {transform_indices = @transform_11, window_bounds = array<i64: 2, 32, 49>}, {transform_indices = @transform_12, window_bounds = array<i64: 2, 32, 2048>}, {transform_indices = @transform_13, window_bounds = array<i64: 2, 1, 2048>}]} {
    %c0 = arith.constant 0 : index
    %c0_0 = arith.constant 0 : index
    %0 = vector.load %arg3[%c0, %c0_0] : memref<136x32xbf16, #tpu.memory_space<vmem>>, vector<136x32xbf16>
    %c0_1 = arith.constant 0 : index
    %c0_2 = arith.constant 0 : index
    %1 = vector.load %arg4[%c0_1, %c0_2] : memref<1x32xf32, #tpu.memory_space<vmem>>, vector<1x32xf32>
    %c0_3 = arith.constant 0 : index
    %c0_4 = arith.constant 0 : index
    %2 = vector.load %arg5[%c0_3, %c0_4] : memref<384x2048xbf16, #tpu.memory_space<vmem>>, vector<384x2048xbf16>
    %c0_5 = arith.constant 0 : index
    %c0_6 = arith.constant 0 : index
    %3 = vector.load %arg6[%c0_5, %c0_6] : memref<1x2048xf32, #tpu.memory_space<vmem>>, vector<1x2048xf32>
    %c0_7 = arith.constant 0 : index
    %c0_8 = arith.constant 0 : index
    %4 = vector.load %arg7[%c0_7, %c0_8] : memref<384x32xbf16, #tpu.memory_space<vmem>>, vector<384x32xbf16>
    %c0_9 = arith.constant 0 : index
    %c0_10 = arith.constant 0 : index
    %5 = vector.load %arg8[%c0_9, %c0_10] : memref<1x32xf32, #tpu.memory_space<vmem>>, vector<1x32xf32>
    %c0_11 = arith.constant 0 : index
    %c0_12 = arith.constant 0 : index
    %6 = vector.load %arg9[%c0_11, %c0_12] : memref<49x196xbf16, #tpu.memory_space<vmem>>, vector<49x196xbf16>
    %c0_13 = arith.constant 0 : index
    %c0_14 = arith.constant 0 : index
    %7 = vector.load %arg10[%c0_13, %c0_14] : memref<32x1xf32, #tpu.memory_space<vmem>>, vector<32x1xf32>
    %c0_15 = arith.constant 0 : index
    %c0_16 = arith.constant 0 : index
    %8 = vector.load %arg11[%c0_15, %c0_16] : memref<1x1xf32, #tpu.memory_space<vmem>>, vector<1x1xf32>
    %c0_17 = arith.constant 0 : index
    %c0_18 = arith.constant 0 : index
    %c0_19 = arith.constant 0 : index
    %9 = vector.load %arg1[%c0_17, %c0_18, %c0_19] : memref<2x196x136xbf16, #tpu.memory_space<vmem>>, vector<1x196x136xbf16>
    %10 = vector.shape_cast %9 : vector<1x196x136xbf16> to vector<196x136xbf16>
    %c0_20 = arith.constant 0 : index
    %c0_21 = arith.constant 0 : index
    %c0_22 = arith.constant 0 : index
    %11 = vector.load %arg2[%c0_20, %c0_21, %c0_22] : memref<2x49x384xbf16, #tpu.memory_space<vmem>>, vector<1x49x384xbf16>
    %12 = vector.shape_cast %11 : vector<1x49x384xbf16> to vector<49x384xbf16>
    %cst = arith.constant dense<0.000000e+00> : vector<196x32xf32>
    %13 = tpu.matmul %10, %0, %cst {dimension_numbers = #tpu.dot_dimension_numbers<[1], [0], [0], [1], [0, 0, 1, 1], [], []>} : vector<196x136xbf16>, vector<136x32xbf16>, vector<196x32xf32> -> vector<196x32xf32>
    %14 = vector.broadcast %1 : vector<1x32xf32> to vector<196x32xf32>
    %15 = arith.addf %13, %14 : vector<196x32xf32>
    %cst_23 = arith.constant 0.000000e+00 : f32
    %16 = vector.broadcast %cst_23 : f32 to vector<196x32xf32>
    %17 = arith.maximumf %15, %16 : vector<196x32xf32>
    %18 = arith.truncf %17 : vector<196x32xf32> to vector<196x32xbf16>
    %cst_24 = arith.constant dense<0.000000e+00> : vector<49x32xf32>
    %19 = tpu.matmul %6, %18, %cst_24 {dimension_numbers = #tpu.dot_dimension_numbers<[1], [0], [0], [1], [0, 0, 1, 1], [], []>} : vector<49x196xbf16>, vector<196x32xbf16>, vector<49x32xf32> -> vector<49x32xf32>
    %cst_25 = arith.constant dense<0.000000e+00> : vector<49x2048xf32>
    %20 = tpu.matmul %12, %2, %cst_25 {dimension_numbers = #tpu.dot_dimension_numbers<[1], [0], [0], [1], [0, 0, 1, 1], [], []>} : vector<49x384xbf16>, vector<384x2048xbf16>, vector<49x2048xf32> -> vector<49x2048xf32>
    %21 = vector.broadcast %3 : vector<1x2048xf32> to vector<49x2048xf32>
    %22 = arith.addf %20, %21 : vector<49x2048xf32>
    %cst_26 = arith.constant dense<0.000000e+00> : vector<49x32xf32>
    %23 = tpu.matmul %12, %4, %cst_26 {dimension_numbers = #tpu.dot_dimension_numbers<[1], [0], [0], [1], [0, 0, 1, 1], [], []>} : vector<49x384xbf16>, vector<384x32xbf16>, vector<49x32xf32> -> vector<49x32xf32>
    %24 = vector.broadcast %5 : vector<1x32xf32> to vector<49x32xf32>
    %25 = arith.addf %23, %24 : vector<49x32xf32>
    %cst_27 = arith.constant 0.000000e+00 : f32
    %26 = vector.broadcast %cst_27 : f32 to vector<49x32xf32>
    %27 = arith.maximumf %25, %26 : vector<49x32xf32>
    %28 = arith.addf %27, %19 : vector<49x32xf32>
    %29 = tpu.transpose %28, [1, 0] : vector<49x32xf32> -> vector<32x49xf32>
    %c0_28 = arith.constant 0 : index
    %c0_29 = arith.constant 0 : index
    %c0_30 = arith.constant 0 : index
    %30 = vector.load %arg12[%c0_28, %c0_29, %c0_30] : memref<2x32x49xf32, #tpu.memory_space<vmem>>, vector<1x32x49xf32>
    %31 = vector.shape_cast %30 : vector<1x32x49xf32> to vector<32x49xf32>
    %32 = vector.shape_cast %29 : vector<32x49xf32> to vector<1x32x49xf32>
    tpu.vector_store %arg12[%c0_28, %c0_29, %c0_30], %32 {strides = array<i32>} : memref<2x32x49xf32, #tpu.memory_space<vmem>>, vector<1x32x49xf32>,
    %33 = arith.truncf %29 : vector<32x49xf32> to vector<32x49xbf16>
    %34 = arith.truncf %22 : vector<49x2048xf32> to vector<49x2048xbf16>
    %cst_31 = arith.constant dense<0.000000e+00> : vector<32x2048xf32>
    %35 = tpu.matmul %33, %34, %cst_31 {dimension_numbers = #tpu.dot_dimension_numbers<[1], [0], [0], [1], [0, 0, 1, 1], [], []>} : vector<32x49xbf16>, vector<49x2048xbf16>, vector<32x2048xf32> -> vector<32x2048xf32>
    %cst_32 = arith.constant 0.0204081628 : f32
    %36 = vector.broadcast %cst_32 : f32 to vector<32x2048xf32>
    %37 = arith.mulf %35, %36 : vector<32x2048xf32>
    %c0_33 = arith.constant 0 : index
    %c0_34 = arith.constant 0 : index
    %c0_35 = arith.constant 0 : index
    %38 = vector.load %arg13[%c0_33, %c0_34, %c0_35] : memref<2x32x2048xf32, #tpu.memory_space<vmem>>, vector<1x32x2048xf32>
    %39 = vector.shape_cast %38 : vector<1x32x2048xf32> to vector<32x2048xf32>
    %40 = vector.shape_cast %37 : vector<32x2048xf32> to vector<1x32x2048xf32>
    tpu.vector_store %arg13[%c0_33, %c0_34, %c0_35], %40 {strides = array<i32>} : memref<2x32x2048xf32, #tpu.memory_space<vmem>>, vector<1x32x2048xf32>,
    %41 = vector.broadcast %7 : vector<32x1xf32> to vector<32x2048xf32>
    %42 = arith.mulf %41, %37 : vector<32x2048xf32>
    %cst_36 = arith.constant dense<0.000000e+00> : vector<2048xf32>
    %43 = vector.multi_reduction <add>, %42, %cst_36 [0] : vector<32x2048xf32> to vector<2048xf32>
    %44 = vector.shape_cast %43 : vector<2048xf32> to vector<1x2048xf32>
    %45 = vector.broadcast %8 : vector<1x1xf32> to vector<1x2048xf32>
    %46 = arith.addf %44, %45 : vector<1x2048xf32>
    %c0_37 = arith.constant 0 : index
    %c0_38 = arith.constant 0 : index
    %c0_39 = arith.constant 0 : index
    %47 = vector.load %arg14[%c0_37, %c0_38, %c0_39] : memref<2x1x2048xf32, #tpu.memory_space<vmem>>, vector<1x1x2048xf32>
    %48 = vector.shape_cast %47 : vector<1x1x2048xf32> to vector<1x2048xf32>
    %49 = vector.shape_cast %46 : vector<1x2048xf32> to vector<1x1x2048xf32>
    tpu.vector_store %arg14[%c0_37, %c0_38, %c0_39], %49 {strides = array<i32>} : memref<2x1x2048xf32, #tpu.memory_space<vmem>>, vector<1x1x2048xf32>,
    %c1 = arith.constant 1 : index
    %c0_40 = arith.constant 0 : index
    %c0_41 = arith.constant 0 : index
    %50 = vector.load %arg1[%c1, %c0_40, %c0_41] : memref<2x196x136xbf16, #tpu.memory_space<vmem>>, vector<1x196x136xbf16>
    %51 = vector.shape_cast %50 : vector<1x196x136xbf16> to vector<196x136xbf16>
    %c1_42 = arith.constant 1 : index
    %c0_43 = arith.constant 0 : index
    %c0_44 = arith.constant 0 : index
    %52 = vector.load %arg2[%c1_42, %c0_43, %c0_44] : memref<2x49x384xbf16, #tpu.memory_space<vmem>>, vector<1x49x384xbf16>
    %53 = vector.shape_cast %52 : vector<1x49x384xbf16> to vector<49x384xbf16>
    %cst_45 = arith.constant dense<0.000000e+00> : vector<196x32xf32>
    %54 = tpu.matmul %51, %0, %cst_45 {dimension_numbers = #tpu.dot_dimension_numbers<[1], [0], [0], [1], [0, 0, 1, 1], [], []>} : vector<196x136xbf16>, vector<136x32xbf16>, vector<196x32xf32> -> vector<196x32xf32>
    %55 = vector.broadcast %1 : vector<1x32xf32> to vector<196x32xf32>
    %56 = arith.addf %54, %55 : vector<196x32xf32>
    %cst_46 = arith.constant 0.000000e+00 : f32
    %57 = vector.broadcast %cst_46 : f32 to vector<196x32xf32>
    %58 = arith.maximumf %56, %57 : vector<196x32xf32>
    %59 = arith.truncf %58 : vector<196x32xf32> to vector<196x32xbf16>
    %cst_47 = arith.constant dense<0.000000e+00> : vector<49x32xf32>
    %60 = tpu.matmul %6, %59, %cst_47 {dimension_numbers = #tpu.dot_dimension_numbers<[1], [0], [0], [1], [0, 0, 1, 1], [], []>} : vector<49x196xbf16>, vector<196x32xbf16>, vector<49x32xf32> -> vector<49x32xf32>
    %cst_48 = arith.constant dense<0.000000e+00> : vector<49x2048xf32>
    %61 = tpu.matmul %53, %2, %cst_48 {dimension_numbers = #tpu.dot_dimension_numbers<[1], [0], [0], [1], [0, 0, 1, 1], [], []>} : vector<49x384xbf16>, vector<384x2048xbf16>, vector<49x2048xf32> -> vector<49x2048xf32>
    %62 = vector.broadcast %3 : vector<1x2048xf32> to vector<49x2048xf32>
    %63 = arith.addf %61, %62 : vector<49x2048xf32>
    %cst_49 = arith.constant dense<0.000000e+00> : vector<49x32xf32>
    %64 = tpu.matmul %53, %4, %cst_49 {dimension_numbers = #tpu.dot_dimension_numbers<[1], [0], [0], [1], [0, 0, 1, 1], [], []>} : vector<49x384xbf16>, vector<384x32xbf16>, vector<49x32xf32> -> vector<49x32xf32>
    %65 = vector.broadcast %5 : vector<1x32xf32> to vector<49x32xf32>
    %66 = arith.addf %64, %65 : vector<49x32xf32>
    %cst_50 = arith.constant 0.000000e+00 : f32
    %67 = vector.broadcast %cst_50 : f32 to vector<49x32xf32>
    %68 = arith.maximumf %66, %67 : vector<49x32xf32>
    %69 = arith.addf %68, %60 : vector<49x32xf32>
    %70 = tpu.transpose %69, [1, 0] : vector<49x32xf32> -> vector<32x49xf32>
    %c1_51 = arith.constant 1 : index
    %c0_52 = arith.constant 0 : index
    %c0_53 = arith.constant 0 : index
    %71 = vector.load %arg12[%c1_51, %c0_52, %c0_53] : memref<2x32x49xf32, #tpu.memory_space<vmem>>, vector<1x32x49xf32>
    %72 = vector.shape_cast %71 : vector<1x32x49xf32> to vector<32x49xf32>
    %73 = vector.shape_cast %70 : vector<32x49xf32> to vector<1x32x49xf32>
    tpu.vector_store %arg12[%c1_51, %c0_52, %c0_53], %73 {strides = array<i32>} : memref<2x32x49xf32, #tpu.memory_space<vmem>>, vector<1x32x49xf32>,
    %74 = arith.truncf %70 : vector<32x49xf32> to vector<32x49xbf16>
    %75 = arith.truncf %63 : vector<49x2048xf32> to vector<49x2048xbf16>
    %cst_54 = arith.constant dense<0.000000e+00> : vector<32x2048xf32>
    %76 = tpu.matmul %74, %75, %cst_54 {dimension_numbers = #tpu.dot_dimension_numbers<[1], [0], [0], [1], [0, 0, 1, 1], [], []>} : vector<32x49xbf16>, vector<49x2048xbf16>, vector<32x2048xf32> -> vector<32x2048xf32>
    %cst_55 = arith.constant 0.0204081628 : f32
    %77 = vector.broadcast %cst_55 : f32 to vector<32x2048xf32>
    %78 = arith.mulf %76, %77 : vector<32x2048xf32>
    %c1_56 = arith.constant 1 : index
    %c0_57 = arith.constant 0 : index
    %c0_58 = arith.constant 0 : index
    %79 = vector.load %arg13[%c1_56, %c0_57, %c0_58] : memref<2x32x2048xf32, #tpu.memory_space<vmem>>, vector<1x32x2048xf32>
    %80 = vector.shape_cast %79 : vector<1x32x2048xf32> to vector<32x2048xf32>
    %81 = vector.shape_cast %78 : vector<32x2048xf32> to vector<1x32x2048xf32>
    tpu.vector_store %arg13[%c1_56, %c0_57, %c0_58], %81 {strides = array<i32>} : memref<2x32x2048xf32, #tpu.memory_space<vmem>>, vector<1x32x2048xf32>,
    %82 = vector.broadcast %7 : vector<32x1xf32> to vector<32x2048xf32>
    %83 = arith.mulf %82, %78 : vector<32x2048xf32>
    %cst_59 = arith.constant dense<0.000000e+00> : vector<2048xf32>
    %84 = vector.multi_reduction <add>, %83, %cst_59 [0] : vector<32x2048xf32> to vector<2048xf32>
    %85 = vector.shape_cast %84 : vector<2048xf32> to vector<1x2048xf32>
    %86 = vector.broadcast %8 : vector<1x1xf32> to vector<1x2048xf32>
    %87 = arith.addf %85, %86 : vector<1x2048xf32>
    %c1_60 = arith.constant 1 : index
    %c0_61 = arith.constant 0 : index
    %c0_62 = arith.constant 0 : index
    %88 = vector.load %arg14[%c1_60, %c0_61, %c0_62] : memref<2x1x2048xf32, #tpu.memory_space<vmem>>, vector<1x1x2048xf32>
    %89 = vector.shape_cast %88 : vector<1x1x2048xf32> to vector<1x2048xf32>
    %90 = vector.shape_cast %87 : vector<1x2048xf32> to vector<1x1x2048xf32>
    tpu.vector_store %arg14[%c1_60, %c0_61, %c0_62], %90 {strides = array<i32>} : memref<2x1x2048xf32, #tpu.memory_space<vmem>>, vector<1x1x2048xf32>,
    return
  }
  func.func @transform_0(%arg0: i32) -> (i32, i32, i32) {
    %c0_i32 = arith.constant 0 : i32
    %c0_i32_0 = arith.constant 0 : i32
    %c0_i32_1 = arith.constant 0 : i32
    return %arg0, %c0_i32, %c0_i32_0 : i32, i32, i32
  }
  func.func @transform_1(%arg0: i32) -> (i32, i32, i32) {
    %c0_i32 = arith.constant 0 : i32
    %c0_i32_0 = arith.constant 0 : i32
    %c0_i32_1 = arith.constant 0 : i32
    return %arg0, %c0_i32, %c0_i32_0 : i32, i32, i32
  }
  func.func @transform_2(%arg0: i32) -> (i32, i32) {
    %c0_i32 = arith.constant 0 : i32
    %c0_i32_0 = arith.constant 0 : i32
    %c0_i32_1 = arith.constant 0 : i32
    return %c0_i32, %c0_i32_0 : i32, i32
  }
  func.func @transform_3(%arg0: i32) -> (i32, i32) {
    %c0_i32 = arith.constant 0 : i32
    %c0_i32_0 = arith.constant 0 : i32
    %c0_i32_1 = arith.constant 0 : i32
    return %c0_i32, %c0_i32_0 : i32, i32
  }
  func.func @transform_4(%arg0: i32) -> (i32, i32) {
    %c0_i32 = arith.constant 0 : i32
    %c0_i32_0 = arith.constant 0 : i32
    %c0_i32_1 = arith.constant 0 : i32
    return %c0_i32, %c0_i32_0 : i32, i32
  }
  func.func @transform_5(%arg0: i32) -> (i32, i32) {
    %c0_i32 = arith.constant 0 : i32
    %c0_i32_0 = arith.constant 0 : i32
    %c0_i32_1 = arith.constant 0 : i32
    return %c0_i32, %c0_i32_0 : i32, i32
  }
  func.func @transform_6(%arg0: i32) -> (i32, i32) {
    %c0_i32 = arith.constant 0 : i32
    %c0_i32_0 = arith.constant 0 : i32
    %c0_i32_1 = arith.constant 0 : i32
    return %c0_i32, %c0_i32_0 : i32, i32
  }
  func.func @transform_7(%arg0: i32) -> (i32, i32) {
    %c0_i32 = arith.constant 0 : i32
    %c0_i32_0 = arith.constant 0 : i32
    %c0_i32_1 = arith.constant 0 : i32
    return %c0_i32, %c0_i32_0 : i32, i32
  }
  func.func @transform_8(%arg0: i32) -> (i32, i32) {
    %c0_i32 = arith.constant 0 : i32
    %c0_i32_0 = arith.constant 0 : i32
    %c0_i32_1 = arith.constant 0 : i32
    return %c0_i32, %c0_i32_0 : i32, i32
  }
  func.func @transform_9(%arg0: i32) -> (i32, i32) {
    %c0_i32 = arith.constant 0 : i32
    %c0_i32_0 = arith.constant 0 : i32
    %c0_i32_1 = arith.constant 0 : i32
    return %c0_i32, %c0_i32_0 : i32, i32
  }
  func.func @transform_10(%arg0: i32) -> (i32, i32) {
    %c0_i32 = arith.constant 0 : i32
    %c0_i32_0 = arith.constant 0 : i32
    %c0_i32_1 = arith.constant 0 : i32
    return %c0_i32, %c0_i32_0 : i32, i32
  }
  func.func @transform_11(%arg0: i32) -> (i32, i32, i32) {
    %c0_i32 = arith.constant 0 : i32
    %c0_i32_0 = arith.constant 0 : i32
    %c0_i32_1 = arith.constant 0 : i32
    return %arg0, %c0_i32, %c0_i32_0 : i32, i32, i32
  }
  func.func @transform_12(%arg0: i32) -> (i32, i32, i32) {
    %c0_i32 = arith.constant 0 : i32
    %c0_i32_0 = arith.constant 0 : i32
    %c0_i32_1 = arith.constant 0 : i32
    return %arg0, %c0_i32, %c0_i32_0 : i32, i32, i32
  }
  func.func @transform_13(%arg0: i32) -> (i32, i32, i32) {
    %c0_i32 = arith.constant 0 : i32
    %c0_i32_0 = arith.constant 0 : i32
    %c0_i32_1 = arith.constant 0 : i32
    return %arg0, %c0_i32, %c0_i32_0 : i32, i32, i32
  }
}

</mosaic_0001>

<llo_original>
// kernel: effi_encoder_msfe_forward.1
$region0: #{effi_encoder_msfe_forward.1}
  #allocation0 [shape = 'u32[]', space=smem, size = 0x4, offset = 0x4, fixed_abs, tag = 'smem constant byte address 0x4 - core index']
  #allocation1 [shape = 'u32[144,128]{1,0:T(1,128)}', space=vmem, size = 0x12000, scoped, tag = 'internal scratch']
  #allocation2 [shape = 'f32[1,1]{1,0:T(1,128)S(1)}', space=vmem, size = 0x200, scoped, tag = 'scoped memory for effi_encoder_msfe_forward.1']
  %s0 = inlined_call_operand.vmem [shape: bf16[4,196,136], index: 0, kind: input, shape index: {}]
  %s1 = inlined_call_operand.vmem [shape: bf16[4,49,384], index: 1, kind: input, shape index: {}]
  %s2 = inlined_call_operand.vmem [shape: bf16[136,32], index: 2, kind: input, shape index: {}]
  %s3 = inlined_call_operand.vmem [shape: f32[1,32], index: 3, kind: input, shape index: {}]
  %s4 = inlined_call_operand.vmem [shape: bf16[384,2048], index: 4, kind: input, shape index: {}]
  %s5 = inlined_call_operand.vmem [shape: f32[1,2048], index: 5, kind: input, shape index: {}]
  %s6 = inlined_call_operand.vmem [shape: bf16[384,32], index: 6, kind: input, shape index: {}]
  %s7 = inlined_call_operand.vmem [shape: f32[1,32], index: 7, kind: input, shape index: {}]
  %s8 = inlined_call_operand.vmem [shape: bf16[49,196], index: 8, kind: input, shape index: {}]
  %s9 = inlined_call_operand.vmem [shape: f32[32,1], index: 9, kind: input, shape index: {}]
  %s10 = inlined_call_operand.<no memory space> [shape: f32[1,1], index: 10, kind: input, shape index: {}]
  %s11 = inlined_call_operand.vmem [shape: f32[4,32,49], index: 11, kind: output, shape index: {0}]
  %s12 = inlined_call_operand.hbm [shape: f32[4,32,2048], index: 12, kind: output, shape index: {1}]
  %s13 = inlined_call_operand.vmem [shape: f32[4,1,2048], index: 13, kind: output, shape index: {2}]
  %14 = xla_tuple %s11, %s12, %s13
  %s15 = sld [smem:[#allocation0]]
  $region93: #{effi_encoder_msfe_forward.1} parent=0
    _
  %s17 = ssub.s32 1, %s15
  %s18 = scalar_select 0, %s17, %s15
  %v19 = vstv %s10
  %20 = vst [vmem:[#allocation2] sm:$0x1] %v19
  $region1: #{effi_encoder_msfe_forward.1} parent=0
    #allocation3 [shape = 'u8[1048576]{0}', space=vmem, size = 0x100000, scoped, tag = 'output window, operand 1']
    #allocation4 [shape = 's32[2]{0}', space=sflag, size = 0x8, scoped, tag = 'scoped memory for effi_encoder_msfe_forward.1']
    %21 = vsyncpa [#allocation4], 0
    %s22 = scalar_lea.sflag [#allocation4], 1
    %23 = vsyncpa %s22, 0
    loop: start=0, step=1, limit=4
    $region2: #{effi_encoder_msfe_forward.1} parent=1 // loop_pre_header
      _
    $region3: #{effi_encoder_msfe_forward.1} parent=1 // loop_header
      %s25 = sphi 0, %s29
      %p26 = scmp.ge.s32.totalorder %s25, 4
      %s35 = sphi 0, %s37
      %s38 = sphi 0, %s35
      %s39 = sphi 0, %s38
      %s55 = sphi 0, %s39
      %s61 = sphi 0, %s63
      %s64 = sphi 0, %s61
      %s65 = sphi 0, %s64
      %s81 = sphi 0, %s65
      %s85 = sphi 0, %s85
      %s87 = sphi 0, %s85
      %s88 = sphi 0, %s87
      %s102 = sphi 0, %s88
      %s106 = sphi 0, %s106
      %s108 = sphi 0, %s106
      %s109 = sphi 0, %s108
      %s123 = sphi 0, %s109
      %s127 = sphi 0, %s127
      %s129 = sphi 0, %s127
      %s130 = sphi 0, %s129
      %s144 = sphi 0, %s130
      %s148 = sphi 0, %s148
      %s150 = sphi 0, %s148
      %s151 = sphi 0, %s150
      %s165 = sphi 0, %s151
      %s169 = sphi 0, %s169
      %s171 = sphi 0, %s169
      %s172 = sphi 0, %s171
      %s186 = sphi 0, %s172
      %s190 = sphi 0, %s190
      %s192 = sphi 0, %s190
      %s193 = sphi 0, %s192
      %s207 = sphi 0, %s193
      %s211 = sphi 0, %s211
      %s213 = sphi 0, %s211
      %s214 = sphi 0, %s213
      %s228 = sphi 0, %s214
      %s232 = sphi 0, %s232
      %s234 = sphi 0, %s232
      %s235 = sphi 0, %s234
      %s249 = sphi 0, %s235
      %s253 = sphi 0, %s253
      %s255 = sphi 0, %s253
      %s256 = sphi 0, %s255
      %s270 = sphi 0, %s256
      %s276 = sphi 0, %s278
      %s279 = sphi 0, %s276
      %s280 = sphi 0, %s279
      %s296 = sphi 0, %s280
      %s302 = sphi 0, %s304
      %s305 = sphi 0, %s302
      %s306 = sphi 0, %s305
      %s322 = sphi 0, %s306
      %s328 = sphi 0, %s330
      %s331 = sphi 0, %s328
      %s332 = sphi 0, %s331
      %s348 = sphi 0, %s332
    $region4: #{effi_encoder_msfe_forward.1} parent=1 // loop_header_branch
      %28 = sbr.rel (%p26) target = $region8
    $region5: #{effi_encoder_msfe_forward.1} parent=1 // loop_body
      %s30 = ssub.s32 %s25, 1
      %s31 = ssub.s32 %s25, 2
      %s32 = sadd.s32 %s25, 1
      %s33 = ssub.s32 %s25, %s32
      %p34 = scmp.eq.s32.totalorder %s33, 0
      %s36 = sadd.s32 %s35, 1
      %s37 = scalar_select %p34, %s35, %s36
      %p40 = pneg %p34
      %p41 = scmp.eq.s32.totalorder %s25, 1
      %p42 = por %p40, %p41
      %p43 = scmp.ne.s32.totalorder %s35, %s38
      %p44 = scmp.eq.s32.totalorder %s25, 0
      %p45 = por %p43, %p44
      %p46 = scmp.ne.s32.totalorder %s35, %s38
      %p47 = scmp.eq.s32.totalorder %s30, 1
      %p48 = por %p46, %p47
      %p49 = scmp.ne.s32.totalorder %s38, %s39
      %p50 = scmp.eq.s32.totalorder %s30, 0
      %p51 = por %p49, %p50
      %p52 = scmp.ne.s32.totalorder %s38, %s39
      %p53 = scmp.eq.s32.totalorder %s31, 1
      %p54 = por %p52, %p53
      %p56 = scmp.ne.s32.totalorder %s39, %s55
      %p57 = scmp.eq.s32.totalorder %s31, 0
      %p58 = por %p56, %p57
      %s59 = ssub.s32 %s25, %s32
      %p60 = scmp.eq.s32.totalorder %s59, 0
      %s62 = sadd.s32 %s61, 1
      %s63 = scalar_select %p60, %s61, %s62
      %p66 = pneg %p60
      %p67 = scmp.eq.s32.totalorder %s25, 1
      %p68 = por %p66, %p67
      %p69 = scmp.ne.s32.totalorder %s61, %s64
      %p70 = scmp.eq.s32.totalorder %s25, 0
      %p71 = por %p69, %p70
      %p72 = scmp.ne.s32.totalorder %s61, %s64
      %p73 = scmp.eq.s32.totalorder %s30, 1
      %p74 = por %p72, %p73
      %p75 = scmp.ne.s32.totalorder %s64, %s65
      %p76 = scmp.eq.s32.totalorder %s30, 0
      %p77 = por %p75, %p76
      %p78 = scmp.ne.s32.totalorder %s64, %s65
      %p79 = scmp.eq.s32.totalorder %s31, 1
      %p80 = por %p78, %p79
      %p82 = scmp.ne.s32.totalorder %s65, %s81
      %p83 = scmp.eq.s32.totalorder %s31, 0
      %p84 = por %p82, %p83
      %s86 = sadd.s32 %s85, 1
      %p89 = scmp.eq.s32.totalorder %s25, 1
      %p90 = scmp.ne.s32.totalorder %s85, %s87
      %p91 = scmp.eq.s32.totalorder %s25, 0
      %p92 = por %p90, %p91
      %p93 = scmp.ne.s32.totalorder %s85, %s87
      %p94 = scmp.eq.s32.totalorder %s30, 1
      %p95 = por %p93, %p94
      %p96 = scmp.ne.s32.totalorder %s87, %s88
      %p97 = scmp.eq.s32.totalorder %s30, 0
      %p98 = por %p96, %p97
      %p99 = scmp.ne.s32.totalorder %s87, %s88
      %p100 = scmp.eq.s32.totalorder %s31, 1
      %p101 = por %p99, %p100
      %p103 = scmp.ne.s32.totalorder %s88, %s102
      %p104 = scmp.eq.s32.totalorder %s31, 0
      %p105 = por %p103, %p104
      %s107 = sadd.s32 %s106, 1
      %p110 = scmp.eq.s32.totalorder %s25, 1
      %p111 = scmp.ne.s32.totalorder %s106, %s108
      %p112 = scmp.eq.s32.totalorder %s25, 0
      %p113 = por %p111, %p112
      %p114 = scmp.ne.s32.totalorder %s106, %s108
      %p115 = scmp.eq.s32.totalorder %s30, 1
      %p116 = por %p114, %p115
      %p117 = scmp.ne.s32.totalorder %s108, %s109
      %p118 = scmp.eq.s32.totalorder %s30, 0
      %p119 = por %p117, %p118
      %p120 = scmp.ne.s32.totalorder %s108, %s109
      %p121 = scmp.eq.s32.totalorder %s31, 1
      %p122 = por %p120, %p121
      %p124 = scmp.ne.s32.totalorder %s109, %s123
      %p125 = scmp.eq.s32.totalorder %s31, 0
      %p126 = por %p124, %p125
      %s128 = sadd.s32 %s127, 1
      %p131 = scmp.eq.s32.totalorder %s25, 1
      %p132 = scmp.ne.s32.totalorder %s127, %s129
      %p133 = scmp.eq.s32.totalorder %s25, 0
      %p134 = por %p132, %p133
      %p135 = scmp.ne.s32.totalorder %s127, %s129
      %p136 = scmp.eq.s32.totalorder %s30, 1
      %p137 = por %p135, %p136
      %p138 = scmp.ne.s32.totalorder %s129, %s130
      %p139 = scmp.eq.s32.totalorder %s30, 0
      %p140 = por %p138, %p139
      %p141 = scmp.ne.s32.totalorder %s129, %s130
      %p142 = scmp.eq.s32.totalorder %s31, 1
      %p143 = por %p141, %p142
      %p145 = scmp.ne.s32.totalorder %s130, %s144
      %p146 = scmp.eq.s32.totalorder %s31, 0
      %p147 = por %p145, %p146
      %s149 = sadd.s32 %s148, 1
      %p152 = scmp.eq.s32.totalorder %s25, 1
      %p153 = scmp.ne.s32.totalorder %s148, %s150
      %p154 = scmp.eq.s32.totalorder %s25, 0
      %p155 = por %p153, %p154
      %p156 = scmp.ne.s32.totalorder %s148, %s150
      %p157 = scmp.eq.s32.totalorder %s30, 1
      %p158 = por %p156, %p157
      %p159 = scmp.ne.s32.totalorder %s150, %s151
      %p160 = scmp.eq.s32.totalorder %s30, 0
      %p161 = por %p159, %p160
      %p162 = scmp.ne.s32.totalorder %s150, %s151
      %p163 = scmp.eq.s32.totalorder %s31, 1
      %p164 = por %p162, %p163
      %p166 = scmp.ne.s32.totalorder %s151, %s165
      %p167 = scmp.eq.s32.totalorder %s31, 0
      %p168 = por %p166, %p167
      %s170 = sadd.s32 %s169, 1
      %p173 = scmp.eq.s32.totalorder %s25, 1
      %p174 = scmp.ne.s32.totalorder %s169, %s171
      %p175 = scmp.eq.s32.totalorder %s25, 0
      %p176 = por %p174, %p175
      %p177 = scmp.ne.s32.totalorder %s169, %s171
      %p178 = scmp.eq.s32.totalorder %s30, 1
      %p179 = por %p177, %p178
      %p180 = scmp.ne.s32.totalorder %s171, %s172
      %p181 = scmp.eq.s32.totalorder %s30, 0
      %p182 = por %p180, %p181
      %p183 = scmp.ne.s32.totalorder %s171, %s172
      %p184 = scmp.eq.s32.totalorder %s31, 1
      %p185 = por %p183, %p184
      %p187 = scmp.ne.s32.totalorder %s172, %s186
      %p188 = scmp.eq.s32.totalorder %s31, 0
      %p189 = por %p187, %p188
      %s191 = sadd.s32 %s190, 1
      %p194 = scmp.eq.s32.totalorder %s25, 1
      %p195 = scmp.ne.s32.totalorder %s190, %s192
      %p196 = scmp.eq.s32.totalorder %s25, 0
      %p197 = por %p195, %p196
      %p198 = scmp.ne.s32.totalorder %s190, %s192
      %p199 = scmp.eq.s32.totalorder %s30, 1
      %p200 = por %p198, %p199
      %p201 = scmp.ne.s32.totalorder %s192, %s193
      %p202 = scmp.eq.s32.totalorder %s30, 0
      %p203 = por %p201, %p202
      %p204 = scmp.ne.s32.totalorder %s192, %s193
      %p205 = scmp.eq.s32.totalorder %s31, 1
      %p206 = por %p204, %p205
      %p208 = scmp.ne.s32.totalorder %s193, %s207
      %p209 = scmp.eq.s32.totalorder %s31, 0
      %p210 = por %p208, %p209
      %s212 = sadd.s32 %s211, 1
      %p215 = scmp.eq.s32.totalorder %s25, 1
      %p216 = scmp.ne.s32.totalorder %s211, %s213
      %p217 = scmp.eq.s32.totalorder %s25, 0
      %p218 = por %p216, %p217
      %p219 = scmp.ne.s32.totalorder %s211, %s213
      %p220 = scmp.eq.s32.totalorder %s30, 1
      %p221 = por %p219, %p220
      %p222 = scmp.ne.s32.totalorder %s213, %s214
      %p223 = scmp.eq.s32.totalorder %s30, 0
      %p224 = por %p222, %p223
      %p225 = scmp.ne.s32.totalorder %s213, %s214
      %p226 = scmp.eq.s32.totalorder %s31, 1
      %p227 = por %p225, %p226
      %p229 = scmp.ne.s32.totalorder %s214, %s228
      %p230 = scmp.eq.s32.totalorder %s31, 0
      %p231 = por %p229, %p230
      %s233 = sadd.s32 %s232, 1
      %p236 = scmp.eq.s32.totalorder %s25, 1
      %p237 = scmp.ne.s32.totalorder %s232, %s234
      %p238 = scmp.eq.s32.totalorder %s25, 0
      %p239 = por %p237, %p238
      %p240 = scmp.ne.s32.totalorder %s232, %s234
      %p241 = scmp.eq.s32.totalorder %s30, 1
      %p242 = por %p240, %p241
      %p243 = scmp.ne.s32.totalorder %s234, %s235
      %p244 = scmp.eq.s32.totalorder %s30, 0
      %p245 = por %p243, %p244
      %p246 = scmp.ne.s32.totalorder %s234, %s235
      %p247 = scmp.eq.s32.totalorder %s31, 1
      %p248 = por %p246, %p247
      %p250 = scmp.ne.s32.totalorder %s235, %s249
      %p251 = scmp.eq.s32.totalorder %s31, 0
      %p252 = por %p250, %p251
      %s254 = sadd.s32 %s253, 1
      %p257 = scmp.eq.s32.totalorder %s25, 1
      %p258 = scmp.ne.s32.totalorder %s253, %s255
      %p259 = scmp.eq.s32.totalorder %s25, 0
      %p260 = por %p258, %p259
      %p261 = scmp.ne.s32.totalorder %s253, %s255
      %p262 = scmp.eq.s32.totalorder %s30, 1
      %p263 = por %p261, %p262
      %p264 = scmp.ne.s32.totalorder %s255, %s256
      %p265 = scmp.eq.s32.totalorder %s30, 0
      %p266 = por %p264, %p265
      %p267 = scmp.ne.s32.totalorder %s255, %s256
      %p268 = scmp.eq.s32.totalorder %s31, 1
      %p269 = por %p267, %p268
      %p271 = scmp.ne.s32.totalorder %s256, %s270
      %p272 = scmp.eq.s32.totalorder %s31, 0
      %p273 = por %p271, %p272
      %s274 = ssub.s32 %s25, %s32
      %p275 = scmp.eq.s32.totalorder %s274, 0
      %s277 = sadd.s32 %s276, 1
      %s278 = scalar_select %p275, %s276, %s277
      %p281 = pneg %p275
      %p282 = scmp.eq.s32.totalorder %s25, 1
      %p283 = por %p281, %p282
      %p284 = scmp.ne.s32.totalorder %s276, %s279
      %p285 = scmp.eq.s32.totalorder %s25, 0
      %p286 = por %p284, %p285
      %p287 = scmp.ne.s32.totalorder %s276, %s279
      %p288 = scmp.eq.s32.totalorder %s30, 1
      %p289 = por %p287, %p288
      %p290 = scmp.ne.s32.totalorder %s279, %s280
      %p291 = scmp.eq.s32.totalorder %s30, 0
      %p292 = por %p290, %p291
      %p293 = scmp.ne.s32.totalorder %s279, %s280
      %p294 = scmp.eq.s32.totalorder %s31, 1
      %p295 = por %p293, %p294
      %p297 = scmp.ne.s32.totalorder %s280, %s296
      %p298 = scmp.eq.s32.totalorder %s31, 0
      %p299 = por %p297, %p298
      %s300 = ssub.s32 %s25, %s32
      %p301 = scmp.eq.s32.totalorder %s300, 0
      %s303 = sadd.s32 %s302, 1
      %s304 = scalar_select %p301, %s302, %s303
      %p307 = pneg %p301
      %p308 = scmp.eq.s32.totalorder %s25, 1
      %p309 = por %p307, %p308
      %p310 = scmp.ne.s32.totalorder %s302, %s305
      %p311 = scmp.eq.s32.totalorder %s25, 0
      %p312 = por %p310, %p311
      %p313 = scmp.ne.s32.totalorder %s302, %s305
      %p314 = scmp.eq.s32.totalorder %s30, 1
      %p315 = por %p313, %p314
      %p316 = scmp.ne.s32.totalorder %s305, %s306
      %p317 = scmp.eq.s32.totalorder %s30, 0
      %p318 = por %p316, %p317
      %p319 = scmp.ne.s32.totalorder %s305, %s306
      %p320 = scmp.eq.s32.totalorder %s31, 1
      %p321 = por %p319, %p320
      %p323 = scmp.ne.s32.totalorder %s306, %s322
      %p324 = scmp.eq.s32.totalorder %s31, 0
      %p325 = por %p323, %p324
      %s326 = ssub.s32 %s25, %s32
      %p327 = scmp.eq.s32.totalorder %s326, 0
      %s329 = sadd.s32 %s328, 1
      %s330 = scalar_select %p327, %s328, %s329
      %p333 = pneg %p327
      %p334 = scmp.eq.s32.totalorder %s25, 1
      %p335 = por %p333, %p334
      %p336 = scmp.ne.s32.totalorder %s328, %s331
      %p337 = scmp.eq.s32.totalorder %s25, 0
      %p338 = por %p336, %p337
      %p339 = scmp.ne.s32.totalorder %s328, %s331
      %p340 = scmp.eq.s32.totalorder %s30, 1
      %p341 = por %p339, %p340
      %p342 = scmp.ne.s32.totalorder %s331, %s332
      %p343 = scmp.eq.s32.totalorder %s30, 0
      %p344 = por %p342, %p343
      %p345 = scmp.ne.s32.totalorder %s331, %s332
      %p346 = scmp.eq.s32.totalorder %s31, 1
      %p347 = por %p345, %p346
      %p349 = scmp.ne.s32.totalorder %s332, %s348
      %p350 = scmp.eq.s32.totalorder %s31, 0
      %p351 = por %p349, %p350
      %p352 = scmp.le.s32.totalorder 1, %s25
      %p353 = scmp.lt.s32.totalorder %s25, 3
      %p354 = pnand %p352, %p353
      %p355 = pneg %p354
      // Predicated region
      $region9: #{effi_encoder_msfe_forward.1} parent=5 // pred_check
        _
      $region10: #{effi_encoder_msfe_forward.1} parent=5 // pred_check_branch
        %357 = sbr.rel (%p354) target = $region12
      $region11: #{effi_encoder_msfe_forward.1} parent=5 // pred_region
        %s358 = ssub.s32 %s25, 1
        // Predicated region
        $region13: #{effi_encoder_msfe_forward.1} parent=11 // pred_check
          %p359 = pneg %p98
        $region14: #{effi_encoder_msfe_forward.1} parent=11 // pred_check_branch
          %361 = sbr.rel (%p359) target = $region16
        $region15: #{effi_encoder_msfe_forward.1} parent=11 // pred_region
          _
        $region16: #{effi_encoder_msfe_forward.1} parent=11 // pred_fallthru
          _
        // Predicated region
        $region17: #{effi_encoder_msfe_forward.1} parent=11 // pred_check
          %p362 = pneg %p119
        $region18: #{effi_encoder_msfe_forward.1} parent=11 // pred_check_branch
          %364 = sbr.rel (%p362) target = $region20
        $region19: #{effi_encoder_msfe_forward.1} parent=11 // pred_region
          _
        $region20: #{effi_encoder_msfe_forward.1} parent=11 // pred_fallthru
          _
        // Predicated region
        $region21: #{effi_encoder_msfe_forward.1} parent=11 // pred_check
          %p365 = pneg %p140
        $region22: #{effi_encoder_msfe_forward.1} parent=11 // pred_check_branch
          %367 = sbr.rel (%p365) target = $region24
        $region23: #{effi_encoder_msfe_forward.1} parent=11 // pred_region
          _
        $region24: #{effi_encoder_msfe_forward.1} parent=11 // pred_fallthru
          _
        // Predicated region
        $region25: #{effi_encoder_msfe_forward.1} parent=11 // pred_check
          %p368 = pneg %p161
        $region26: #{effi_encoder_msfe_forward.1} parent=11 // pred_check_branch
          %370 = sbr.rel (%p368) target = $region28
        $region27: #{effi_encoder_msfe_forward.1} parent=11 // pred_region
          _
        $region28: #{effi_encoder_msfe_forward.1} parent=11 // pred_fallthru
          _
        // Predicated region
        $region29: #{effi_encoder_msfe_forward.1} parent=11 // pred_check
          %p371 = pneg %p182
        $region30: #{effi_encoder_msfe_forward.1} parent=11 // pred_check_branch
          %373 = sbr.rel (%p371) target = $region32
        $region31: #{effi_encoder_msfe_forward.1} parent=11 // pred_region
          _
        $region32: #{effi_encoder_msfe_forward.1} parent=11 // pred_fallthru
          _
        // Predicated region
        $region33: #{effi_encoder_msfe_forward.1} parent=11 // pred_check
          %p374 = pneg %p203
        $region34: #{effi_encoder_msfe_forward.1} parent=11 // pred_check_branch
          %376 = sbr.rel (%p374) target = $region36
        $region35: #{effi_encoder_msfe_forward.1} parent=11 // pred_region
          _
        $region36: #{effi_encoder_msfe_forward.1} parent=11 // pred_fallthru
          _
        // Predicated region
        $region37: #{effi_encoder_msfe_forward.1} parent=11 // pred_check
          %p377 = pneg %p224
        $region38: #{effi_encoder_msfe_forward.1} parent=11 // pred_check_branch
          %379 = sbr.rel (%p377) target = $region40
        $region39: #{effi_encoder_msfe_forward.1} parent=11 // pred_region
          _
        $region40: #{effi_encoder_msfe_forward.1} parent=11 // pred_fallthru
          _
        // Predicated region
        $region41: #{effi_encoder_msfe_forward.1} parent=11 // pred_check
          %p380 = pneg %p245
        $region42: #{effi_encoder_msfe_forward.1} parent=11 // pred_check_branch
          %382 = sbr.rel (%p380) target = $region44
        $region43: #{effi_encoder_msfe_forward.1} parent=11 // pred_region
          _
        $region44: #{effi_encoder_msfe_forward.1} parent=11 // pred_fallthru
          _
        // Predicated region
        $region45: #{effi_encoder_msfe_forward.1} parent=11 // pred_check
          %p383 = pneg %p266
        $region46: #{effi_encoder_msfe_forward.1} parent=11 // pred_check_branch
          %385 = sbr.rel (%p383) target = $region48
        $region47: #{effi_encoder_msfe_forward.1} parent=11 // pred_region
          _
        $region48: #{effi_encoder_msfe_forward.1} parent=11 // pred_fallthru
          _
      $region12: #{effi_encoder_msfe_forward.1} parent=5 // pred_fallthru
        _
      %p386 = scmp.lt.s32.totalorder %s25, 2
      // Predicated region
      $region49: #{effi_encoder_msfe_forward.1} parent=5 // pred_check
        %p387 = pneg %p386
      $region50: #{effi_encoder_msfe_forward.1} parent=5 // pred_check_branch
        %389 = sbr.rel (%p387) target = $region52
      $region51: #{effi_encoder_msfe_forward.1} parent=5 // pred_region
        // Predicated region
        $region53: #{effi_encoder_msfe_forward.1} parent=51 // pred_check
          %p390 = pneg %p45
        $region54: #{effi_encoder_msfe_forward.1} parent=51 // pred_check_branch
          %392 = sbr.rel (%p390) target = $region56
        $region55: #{effi_encoder_msfe_forward.1} parent=51 // pred_region
          %s393 = smul.u32 2, %s25
          %p394 = scmp.lt.s32.totalorder %s393, 3
          %s395 = scalar_select %p394, %s393, 3
          %s396 = smul.addr %s395, 50
          %s397 = smul.addr %s396, 4
          %s398 = scalar_lea.vmem %s0, %s397
          %s399 = smul.u32 2, %s25
        $region56: #{effi_encoder_msfe_forward.1} parent=51 // pred_fallthru
          _
        // Predicated region
        $region57: #{effi_encoder_msfe_forward.1} parent=51 // pred_check
          %p400 = pneg %p71
        $region58: #{effi_encoder_msfe_forward.1} parent=51 // pred_check_branch
          %402 = sbr.rel (%p400) target = $region60
        $region59: #{effi_encoder_msfe_forward.1} parent=51 // pred_region
          %s403 = smul.u32 2, %s25
          %p404 = scmp.lt.s32.totalorder %s403, 3
          %s405 = scalar_select %p404, %s403, 3
          %s406 = smul.addr %s405, 21
          %s407 = smul.addr %s406, 4
          %s408 = scalar_lea.vmem %s1, %s407
          %s409 = smul.u32 2, %s25
        $region60: #{effi_encoder_msfe_forward.1} parent=51 // pred_fallthru
          _
      $region52: #{effi_encoder_msfe_forward.1} parent=5 // pred_fallthru
        _
      %p410 = scmp.le.s32.totalorder 1, %s25
      %p411 = scmp.lt.s32.totalorder %s25, 3
      %p412 = pnand %p410, %p411
      %p413 = pneg %p412
      // Predicated region
      $region61: #{effi_encoder_msfe_forward.1} parent=5 // pred_check
        _
      $region62: #{effi_encoder_msfe_forward.1} parent=5 // pred_check_branch
        %415 = sbr.rel (%p412) target = $region64
      $region63: #{effi_encoder_msfe_forward.1} parent=5 // pred_region
        %s416 = ssub.s32 %s25, 1
        %s417 = smul.u32 2, %s30
        %p418 = scmp.lt.s32.totalorder %s417, 3
        %s419 = scalar_select %p418, %s417, 3
        %s420 = smul.addr %s419, 50
        %s421 = smul.addr %s420, 4
        %s422 = scalar_lea.vmem %s0, %s421
        %p423 = pneg %p51
        %p424 = pneg %p48
        %s425 = smul.u32 2, %s30
        %p426 = scmp.lt.s32.totalorder %s425, 3
        %s427 = scalar_select %p426, %s425, 3
        %s428 = smul.addr %s427, 21
        %s429 = smul.addr %s428, 4
        %s430 = scalar_lea.vmem %s1, %s429
        %p431 = pneg %p77
        %p432 = pneg %p74
        %p433 = pneg %p98
        %p434 = pneg %p95
        %p435 = pneg %p119
        %p436 = pneg %p116
        %p437 = pneg %p140
        %p438 = pneg %p137
        %p439 = pneg %p161
        %p440 = pneg %p158
        %p441 = pneg %p182
        %p442 = pneg %p179
        %p443 = pneg %p203
        %p444 = pneg %p200
        %p445 = pneg %p224
        %p446 = pneg %p221
        %p447 = pneg %p245
        %p448 = pneg %p242
        %p449 = pneg %p266
        %p450 = pneg %p263
        %p451 = pneg %p292
        %p452 = pneg %p289
        %s453 = smul.u32 2, %s30
        %p454 = scmp.lt.s32.totalorder %s453, 3
        %s455 = scalar_select %p454, %s453, 3
        %s456 = smul.addr %s455, 4
        %s457 = smul.addr %s456, 8
        %s458 = scalar_lea.vmem %s11, %s457
        %p459 = pneg %p318
        %p460 = pneg %p315
        %s461 = sand.u32 %s305, 1
        %s462 = scalar_lea.sflag [#allocation4], %s461
        %s463 = sand.u32 %s305, 1
        %s464 = smul.addr %s463, 1024
        %s465 = scalar_lea.vmem [#allocation3], %s464
        %p466 = pneg %p344
        %p467 = pneg %p341
        %s468 = smul.u32 2, %s30
        %p469 = scmp.lt.s32.totalorder %s468, 3
        %s470 = scalar_select %p469, %s468, 3
        %s471 = smul.addr %s470, 16
        %s472 = scalar_lea.vmem %s13, %s471
        %s473 = smul.u32 2, %s30
        %p474 = scmp.lt.s32.totalorder %s473, 3
        %s475 = scalar_select %p474, %s473, 3
        %s476 = smul.addr %s475, 50
        %s477 = smul.addr %s476, 4
        %s478 = scalar_lea.vmem %s0, %s477
        %s479 = smul.u32 2, %s30
        %s480 = smul.u32 2, %s30
        %p481 = scmp.lt.s32.totalorder %s480, 3
        %s482 = scalar_select %p481, %s480, 3
        %s483 = smul.addr %s482, 21
        %s484 = smul.addr %s483, 4
        %s485 = scalar_lea.vmem %s1, %s484
        %s486 = smul.u32 2, %s30
        %s487 = smul.u32 2, %s30
        %p488 = scmp.lt.s32.totalorder %s487, 3
        %s489 = scalar_select %p488, %s487, 3
        %s490 = smul.addr %s489, 4
        %s491 = smul.addr %s490, 8
        %s492 = scalar_lea.vmem %s11, %s491
        %s493 = smul.u32 2, %s30
        %s494 = smul.u32 2, %s30
        %s495 = smul.u32 2, %s30
        %p496 = scmp.lt.s32.totalorder %s495, 3
        %s497 = scalar_select %p496, %s495, 3
        %s498 = smul.addr %s497, 16
        %s499 = scalar_lea.vmem %s13, %s498
        %s500 = smul.u32 2, %s30
        %v502 = vld [vmem:[%s2] sm:$0xf]
        %v503 = vld [vmem:[%s2 + $0x4] sm:$0xf]
        %v504 = vld [vmem:[%s2 + $0x8] sm:$0xf]
        %v505 = vld [vmem:[%s2 + $0xc] sm:$0xf]
        %v506 = vld [vmem:[%s2 + $0x10] sm:$0xf]
        %v507 = vld [vmem:[%s2 + $0x14] sm:$0xf]
        %v508 = vld [vmem:[%s2 + $0x18] sm:$0xf]
        %v509 = vld [vmem:[%s2 + $0x1c] sm:$0xf]
        %v510 = vld [vmem:[%s2 + $0x20] sm:$0xf]
        %v511 = vld [vmem:[%s2 + $0x24] sm:$0xf]
        %v512 = vld [vmem:[%s2 + $0x28] sm:$0xf]
        %v513 = vld [vmem:[%s2 + $0x2c] sm:$0xf]
        %v514 = vld [vmem:[%s2 + $0x30] sm:$0xf]
        %v515 = vld [vmem:[%s2 + $0x34] sm:$0xf]
        %v516 = vld [vmem:[%s2 + $0x38] sm:$0xf]
        %v517 = vld [vmem:[%s2 + $0x3c] sm:$0xf]
        %v518 = vld [vmem:[%s2 + $0x40] sm:$0xf]
        %v519 = vld [vmem:[%s3] sm:$0x1]
        %v520 = vld [vmem:[%s4] sm:$0xff]
        %v521 = vld [vmem:[%s4 + $0x8] sm:$0xff]
        %v522 = vld [vmem:[%s4 + $0x10] sm:$0xff]
        %v523 = vld [vmem:[%s4 + $0x18] sm:$0xff]
        %v524 = vld [vmem:[%s4 + $0x20] sm:$0xff]
        %v525 = vld [vmem:[%s4 + $0x28] sm:$0xff]
        %v526 = vld [vmem:[%s4 + $0x30] sm:$0xff]
        %v527 = vld [vmem:[%s4 + $0x38] sm:$0xff]
        %v528 = vld [vmem:[%s4 + $0x40] sm:$0xff]
        %v529 = vld [vmem:[%s4 + $0x48] sm:$0xff]
        %v530 = vld [vmem:[%s4 + $0x50] sm:$0xff]
        %v531 = vld [vmem:[%s4 + $0x58] sm:$0xff]
        %v532 = vld [vmem:[%s4 + $0x60] sm:$0xff]
        %v533 = vld [vmem:[%s4 + $0x68] sm:$0xff]
        %v534 = vld [vmem:[%s4 + $0x70] sm:$0xff]
        %v535 = vld [vmem:[%s4 + $0x78] sm:$0xff]
        %v536 = vld [vmem:[%s4 + $0x80] sm:$0xff]
        %v537 = vld [vmem:[%s4 + $0x88] sm:$0xff]
        %v538 = vld [vmem:[%s4 + $0x90] sm:$0xff]
        %v539 = vld [vmem:[%s4 + $0x98] sm:$0xff]
        %v540 = vld [vmem:[%s4 + $0xa0] sm:$0xff]
        %v541 = vld [vmem:[%s4 + $0xa8] sm:$0xff]
        %v542 = vld [vmem:[%s4 + $0xb0] sm:$0xff]
        %v543 = vld [vmem:[%s4 + $0xb8] sm:$0xff]
        %v544 = vld [vmem:[%s4 + $0xc0] sm:$0xff]
        %v545 = vld [vmem:[%s4 + $0xc8] sm:$0xff]
        %v546 = vld [vmem:[%s4 + $0xd0] sm:$0xff]
        %v547 = vld [vmem:[%s4 + $0xd8] sm:$0xff]
        %v548 = vld [vmem:[%s4 + $0xe0] sm:$0xff]
        %v549 = vld [vmem:[%s4 + $0xe8] sm:$0xff]
        %v550 = vld [vmem:[%s4 + $0xf0] sm:$0xff]
        %v551 = vld [vmem:[%s4 + $0xf8] sm:$0xff]
        %v552 = vld [vmem:[%s4 + $0x100] sm:$0xff]
        %v553 = vld [vmem:[%s4 + $0x108] sm:$0xff]
        %v554 = vld [vmem:[%s4 + $0x110] sm:$0xff]
        %v555 = vld [vmem:[%s4 + $0x118] sm:$0xff]
        %v556 = vld [vmem:[%s4 + $0x120] sm:$0xff]
        %v557 = vld [vmem:[%s4 + $0x128] sm:$0xff]
        %v558 = vld [vmem:[%s4 + $0x130] sm:$0xff]
        %v559 = vld [vmem:[%s4 + $0x138] sm:$0xff]
        %v560 = vld [vmem:[%s4 + $0x140] sm:$0xff]
        %v561 = vld [vmem:[%s4 + $0x148] sm:$0xff]
        %v562 = vld [vmem:[%s4 + $0x150] sm:$0xff]
        %v563 = vld [vmem:[%s4 + $0x158] sm:$0xff]
        %v564 = vld [vmem:[%s4 + $0x160] sm:$0xff]
        %v565 = vld [vmem:[%s4 + $0x168] sm:$0xff]
        %v566 = vld [vmem:[%s4 + $0x170] sm:$0xff]
        %v567 = vld [vmem:[%s4 + $0x178] sm:$0xff]
        %v568 = vld [vmem:[%s4 + $0x180] sm:$0xff]
        %v569 = vld [vmem:[%s4 + $0x188] sm:$0xff]
        %v570 = vld [vmem:[%s4 + $0x190] sm:$0xff]
        %v571 = vld [vmem:[%s4 + $0x198] sm:$0xff]
        %v572 = vld [vmem:[%s4 + $0x1a0] sm:$0xff]
        %v573 = vld [vmem:[%s4 + $0x1a8] sm:$0xff]
        %v574 = vld [vmem:[%s4 + $0x1b0] sm:$0xff]
        %v575 = vld [vmem:[%s4 + $0x1b8] sm:$0xff]
        %v576 = vld [vmem:[%s4 + $0x1c0] sm:$0xff]
        %v577 = vld [vmem:[%s4 + $0x1c8] sm:$0xff]
        %v578 = vld [vmem:[%s4 + $0x1d0] sm:$0xff]
        %v579 = vld [vmem:[%s4 + $0x1d8] sm:$0xff]
        %v580 = vld [vmem:[%s4 + $0x1e0] sm:$0xff]
        %v581 = vld [vmem:[%s4 + $0x1e8] sm:$0xff]
        %v582 = vld [vmem:[%s4 + $0x1f0] sm:$0xff]
        %v583 = vld [vmem:[%s4 + $0x1f8] sm:$0xff]
        %v584 = vld [vmem:[%s4 + $0x200] sm:$0xff]
        %v585 = vld [vmem:[%s4 + $0x208] sm:$0xff]
        %v586 = vld [vmem:[%s4 + $0x210] sm:$0xff]
        %v587 = vld [vmem:[%s4 + $0x218] sm:$0xff]
        %v588 = vld [vmem:[%s4 + $0x220] sm:$0xff]
        %v589 = vld [vmem:[%s4 + $0x228] sm:$0xff]
        %v590 = vld [vmem:[%s4 + $0x230] sm:$0xff]
        %v591 = vld [vmem:[%s4 + $0x238] sm:$0xff]
        %v592 = vld [vmem:[%s4 + $0x240] sm:$0xff]
        %v593 = vld [vmem:[%s4 + $0x248] sm:$0xff]
        %v594 = vld [vmem:[%s4 + $0x250] sm:$0xff]
        %v595 = vld [vmem:[%s4 + $0x258] sm:$0xff]
        %v596 = vld [vmem:[%s4 + $0x260] sm:$0xff]
        %v597 = vld [vmem:[%s4 + $0x268] sm:$0xff]
        %v598 = vld [vmem:[%s4 + $0x270] sm:$0xff]
        %v599 = vld [vmem:[%s4 + $0x278] sm:$0xff]
        %v600 = vld [vmem:[%s4 + $0x280] sm:$0xff]
        %v601 = vld [vmem:[%s4 + $0x288] sm:$0xff]
        %v602 = vld [vmem:[%s4 + $0x290] sm:$0xff]
        %v603 = vld [vmem:[%s4 + $0x298] sm:$0xff]
        %v604 = vld [vmem:[%s4 + $0x2a0] sm:$0xff]
        %v605 = vld [vmem:[%s4 + $0x2a8] sm:$0xff]
        %v606 = vld [vmem:[%s4 + $0x2b0] sm:$0xff]
        %v607 = vld [vmem:[%s4 + $0x2b8] sm:$0xff]
        %v608 = vld [vmem:[%s4 + $0x2c0] sm:$0xff]
        %v609 = vld [vmem:[%s4 + $0x2c8] sm:$0xff]
        %v610 = vld [vmem:[%s4 + $0x2d0] sm:$0xff]
        %v611 = vld [vmem:[%s4 + $0x2d8] sm:$0xff]
        %v612 = vld [vmem:[%s4 + $0x2e0] sm:$0xff]
        %v613 = vld [vmem:[%s4 + $0x2e8] sm:$0xff]
        %v614 = vld [vmem:[%s4 + $0x2f0] sm:$0xff]
        %v615 = vld [vmem:[%s4 + $0x2f8] sm:$0xff]
        %v616 = vld [vmem:[%s4 + $0x300] sm:$0xff]
        %v617 = vld [vmem:[%s4 + $0x308] sm:$0xff]
        %v618 = vld [vmem:[%s4 + $0x310] sm:$0xff]
        %v619 = vld [vmem:[%s4 + $0x318] sm:$0xff]
        %v620 = vld [vmem:[%s4 + $0x320] sm:$0xff]
        %v621 = vld [vmem:[%s4 + $0x328] sm:$0xff]
        %v622 = vld [vmem:[%s4 + $0x330] sm:$0xff]
        %v623 = vld [vmem:[%s4 + $0x338] sm:$0xff]
        %v624 = vld [vmem:[%s4 + $0x340] sm:$0xff]
        %v625 = vld [vmem:[%s4 + $0x348] sm:$0xff]
        %v626 = vld [vmem:[%s4 + $0x350] sm:$0xff]
        %v627 = vld [vmem:[%s4 + $0x358] sm:$0xff]
        %v628 = vld [vmem:[%s4 + $0x360] sm:$0xff]
        %v629 = vld [vmem:[%s4 + $0x368] sm:$0xff]
        %v630 = vld [vmem:[%s4 + $0x370] sm:$0xff]
        %v631 = vld [vmem:[%s4 + $0x378] sm:$0xff]
        %v632 = vld [vmem:[%s4 + $0x380] sm:$0xff]
        %v633 = vld [vmem:[%s4 + $0x388] sm:$0xff]
        %v634 = vld [vmem:[%s4 + $0x390] sm:$0xff]
        %v635 = vld [vmem:[%s4 + $0x398] sm:$0xff]
        %v636 = vld [vmem:[%s4 + $0x3a0] sm:$0xff]
        %v637 = vld [vmem:[%s4 + $0x3a8] sm:$0xff]
        %v638 = vld [vmem:[%s4 + $0x3b0] sm:$0xff]
        %v639 = vld [vmem:[%s4 + $0x3b8] sm:$0xff]
        %v640 = vld [vmem:[%s4 + $0x3c0] sm:$0xff]
        %v641 = vld [vmem:[%s4 + $0x3c8] sm:$0xff]
        %v642 = vld [vmem:[%s4 + $0x3d0] sm:$0xff]
        %v643 = vld [vmem:[%s4 + $0x3d8] sm:$0xff]
        %v644 = vld [vmem:[%s4 + $0x3e0] sm:$0xff]
        %v645 = vld [vmem:[%s4 + $0x3e8] sm:$0xff]
        %v646 = vld [vmem:[%s4 + $0x3f0] sm:$0xff]
        %v647 = vld [vmem:[%s4 + $0x3f8] sm:$0xff]
        %v648 = vld [vmem:[%s4 + $0x400] sm:$0xff]
        %v649 = vld [vmem:[%s4 + $0x408] sm:$0xff]
        %v650 = vld [vmem:[%s4 + $0x410] sm:$0xff]
        %v651 = vld [vmem:[%s4 + $0x418] sm:$0xff]
        %v652 = vld [vmem:[%s4 + $0x420] sm:$0xff]
        %v653 = vld [vmem:[%s4 + $0x428] sm:$0xff]
        %v654 = vld [vmem:[%s4 + $0x430] sm:$0xff]
        %v655 = vld [vmem:[%s4 + $0x438] sm:$0xff]
        %v656 = vld [vmem:[%s4 + $0x440] sm:$0xff]
        %v657 = vld [vmem:[%s4 + $0x448] sm:$0xff]
        %v658 = vld [vmem:[%s4 + $0x450] sm:$0xff]
        %v659 = vld [vmem:[%s4 + $0x458] sm:$0xff]
        %v660 = vld [vmem:[%s4 + $0x460] sm:$0xff]
        %v661 = vld [vmem:[%s4 + $0x468] sm:$0xff]
        %v662 = vld [vmem:[%s4 + $0x470] sm:$0xff]
        %v663 = vld [vmem:[%s4 + $0x478] sm:$0xff]
        %v664 = vld [vmem:[%s4 + $0x480] sm:$0xff]
        %v665 = vld [vmem:[%s4 + $0x488] sm:$0xff]
        %v666 = vld [vmem:[%s4 + $0x490] sm:$0xff]
        %v667 = vld [vmem:[%s4 + $0x498] sm:$0xff]
        %v668 = vld [vmem:[%s4 + $0x4a0] sm:$0xff]
        %v669 = vld [vmem:[%s4 + $0x4a8] sm:$0xff]
        %v670 = vld [vmem:[%s4 + $0x4b0] sm:$0xff]
        %v671 = vld [vmem:[%s4 + $0x4b8] sm:$0xff]
        %v672 = vld [vmem:[%s4 + $0x4c0] sm:$0xff]
        %v673 = vld [vmem:[%s4 + $0x4c8] sm:$0xff]
        %v674 = vld [vmem:[%s4 + $0x4d0] sm:$0xff]
        %v675 = vld [vmem:[%s4 + $0x4d8] sm:$0xff]
        %v676 = vld [vmem:[%s4 + $0x4e0] sm:$0xff]
        %v677 = vld [vmem:[%s4 + $0x4e8] sm:$0xff]
        %v678 = vld [vmem:[%s4 + $0x4f0] sm:$0xff]
        %v679 = vld [vmem:[%s4 + $0x4f8] sm:$0xff]
        %v680 = vld [vmem:[%s4 + $0x500] sm:$0xff]
        %v681 = vld [vmem:[%s4 + $0x508] sm:$0xff]
        %v682 = vld [vmem:[%s4 + $0x510] sm:$0xff]
        %v683 = vld [vmem:[%s4 + $0x518] sm:$0xff]
        %v684 = vld [vmem:[%s4 + $0x520] sm:$0xff]
        %v685 = vld [vmem:[%s4 + $0x528] sm:$0xff]
        %v686 = vld [vmem:[%s4 + $0x530] sm:$0xff]
        %v687 = vld [vmem:[%s4 + $0x538] sm:$0xff]
        %v688 = vld [vmem:[%s4 + $0x540] sm:$0xff]
        %v689 = vld [vmem:[%s4 + $0x548] sm:$0xff]
        %v690 = vld [vmem:[%s4 + $0x550] sm:$0xff]
        %v691 = vld [vmem:[%s4 + $0x558] sm:$0xff]
        %v692 = vld [vmem:[%s4 + $0x560] sm:$0xff]
        %v693 = vld [vmem:[%s4 + $0x568] sm:$0xff]
        %v694 = vld [vmem:[%s4 + $0x570] sm:$0xff]
        %v695 = vld [vmem:[%s4 + $0x578] sm:$0xff]
        %v696 = vld [vmem:[%s4 + $0x580] sm:$0xff]
        %v697 = vld [vmem:[%s4 + $0x588] sm:$0xff]
        %v698 = vld [vmem:[%s4 + $0x590] sm:$0xff]
        %v699 = vld [vmem:[%s4 + $0x598] sm:$0xff]
        %v700 = vld [vmem:[%s4 + $0x5a0] sm:$0xff]
        %v701 = vld [vmem:[%s4 + $0x5a8] sm:$0xff]
        %v702 = vld [vmem:[%s4 + $0x5b0] sm:$0xff]
        %v703 = vld [vmem:[%s4 + $0x5b8] sm:$0xff]
        %v704 = vld [vmem:[%s4 + $0x5c0] sm:$0xff]
        %v705 = vld [vmem:[%s4 + $0x5c8] sm:$0xff]
        %v706 = vld [vmem:[%s4 + $0x5d0] sm:$0xff]
        %v707 = vld [vmem:[%s4 + $0x5d8] sm:$0xff]
        %v708 = vld [vmem:[%s4 + $0x5e0] sm:$0xff]
        %v709 = vld [vmem:[%s4 + $0x5e8] sm:$0xff]
        %v710 = vld [vmem:[%s4 + $0x5f0] sm:$0xff]
        %v711 = vld [vmem:[%s4 + $0x5f8] sm:$0xff]
        %v712 = vld [vmem:[%s4 + $0x600] sm:$0xff]
        %v713 = vld [vmem:[%s4 + $0x608] sm:$0xff]
        %v714 = vld [vmem:[%s4 + $0x610] sm:$0xff]
        %v715 = vld [vmem:[%s4 + $0x618] sm:$0xff]
        %v716 = vld [vmem:[%s4 + $0x620] sm:$0xff]
        %v717 = vld [vmem:[%s4 + $0x628] sm:$0xff]
        %v718 = vld [vmem:[%s4 + $0x630] sm:$0xff]
        %v719 = vld [vmem:[%s4 + $0x638] sm:$0xff]
        %v720 = vld [vmem:[%s4 + $0x640] sm:$0xff]
        %v721 = vld [vmem:[%s4 + $0x648] sm:$0xff]
        %v722 = vld [vmem:[%s4 + $0x650] sm:$0xff]
        %v723 = vld [vmem:[%s4 + $0x658] sm:$0xff]
        %v724 = vld [vmem:[%s4 + $0x660] sm:$0xff]
        %v725 = vld [vmem:[%s4 + $0x668] sm:$0xff]
        %v726 = vld [vmem:[%s4 + $0x670] sm:$0xff]
        %v727 = vld [vmem:[%s4 + $0x678] sm:$0xff]
        %v728 = vld [vmem:[%s4 + $0x680] sm:$0xff]
        %v729 = vld [vmem:[%s4 + $0x688] sm:$0xff]
        %v730 = vld [vmem:[%s4 + $0x690] sm:$0xff]
        %v731 = vld [vmem:[%s4 + $0x698] sm:$0xff]
        %v732 = vld [vmem:[%s4 + $0x6a0] sm:$0xff]
        %v733 = vld [vmem:[%s4 + $0x6a8] sm:$0xff]
        %v734 = vld [vmem:[%s4 + $0x6b0] sm:$0xff]
        %v735 = vld [vmem:[%s4 + $0x6b8] sm:$0xff]
        %v736 = vld [vmem:[%s4 + $0x6c0] sm:$0xff]
        %v737 = vld [vmem:[%s4 + $0x6c8] sm:$0xff]
        %v738 = vld [vmem:[%s4 + $0x6d0] sm:$0xff]
        %v739 = vld [vmem:[%s4 + $0x6d8] sm:$0xff]
        %v740 = vld [vmem:[%s4 + $0x6e0] sm:$0xff]
        %v741 = vld [vmem:[%s4 + $0x6e8] sm:$0xff]
        %v742 = vld [vmem:[%s4 + $0x6f0] sm:$0xff]
        %v743 = vld [vmem:[%s4 + $0x6f8] sm:$0xff]
        %v744 = vld [vmem:[%s4 + $0x700] sm:$0xff]
        %v745 = vld [vmem:[%s4 + $0x708] sm:$0xff]
        %v746 = vld [vmem:[%s4 + $0x710] sm:$0xff]
        %v747 = vld [vmem:[%s4 + $0x718] sm:$0xff]
        %v748 = vld [vmem:[%s4 + $0x720] sm:$0xff]
        %v749 = vld [vmem:[%s4 + $0x728] sm:$0xff]
        %v750 = vld [vmem:[%s4 + $0x730] sm:$0xff]
        %v751 = vld [vmem:[%s4 + $0x738] sm:$0xff]
        %v752 = vld [vmem:[%s4 + $0x740] sm:$0xff]
        %v753 = vld [vmem:[%s4 + $0x748] sm:$0xff]
        %v754 = vld [vmem:[%s4 + $0x750] sm:$0xff]
        %v755 = vld [vmem:[%s4 + $0x758] sm:$0xff]
        %v756 = vld [vmem:[%s4 + $0x760] sm:$0xff]
        %v757 = vld [vmem:[%s4 + $0x768] sm:$0xff]
        %v758 = vld [vmem:[%s4 + $0x770] sm:$0xff]
        %v759 = vld [vmem:[%s4 + $0x778] sm:$0xff]
        %v760 = vld [vmem:[%s4 + $0x780] sm:$0xff]
        %v761 = vld [vmem:[%s4 + $0x788] sm:$0xff]
        %v762 = vld [vmem:[%s4 + $0x790] sm:$0xff]
        %v763 = vld [vmem:[%s4 + $0x798] sm:$0xff]
        %v764 = vld [vmem:[%s4 + $0x7a0] sm:$0xff]
        %v765 = vld [vmem:[%s4 + $0x7a8] sm:$0xff]
        %v766 = vld [vmem:[%s4 + $0x7b0] sm:$0xff]
        %v767 = vld [vmem:[%s4 + $0x7b8] sm:$0xff]
        %v768 = vld [vmem:[%s4 + $0x7c0] sm:$0xff]
        %v769 = vld [vmem:[%s4 + $0x7c8] sm:$0xff]
        %v770 = vld [vmem:[%s4 + $0x7d0] sm:$0xff]
        %v771 = vld [vmem:[%s4 + $0x7d8] sm:$0xff]
        %v772 = vld [vmem:[%s4 + $0x7e0] sm:$0xff]
        %v773 = vld [vmem:[%s4 + $0x7e8] sm:$0xff]
        %v774 = vld [vmem:[%s4 + $0x7f0] sm:$0xff]
        %v775 = vld [vmem:[%s4 + $0x7f8] sm:$0xff]
        %v776 = vld [vmem:[%s4 + $0x800] sm:$0xff]
        %v777 = vld [vmem:[%s4 + $0x808] sm:$0xff]
        %v778 = vld [vmem:[%s4 + $0x810] sm:$0xff]
        %v779 = vld [vmem:[%s4 + $0x818] sm:$0xff]
        %v780 = vld [vmem:[%s4 + $0x820] sm:$0xff]
        %v781 = vld [vmem:[%s4 + $0x828] sm:$0xff]
        %v782 = vld [vmem:[%s4 + $0x830] sm:$0xff]
        %v783 = vld [vmem:[%s4 + $0x838] sm:$0xff]
        %v784 = vld [vmem:[%s4 + $0x840] sm:$0xff]
        %v785 = vld [vmem:[%s4 + $0x848] sm:$0xff]
        %v786 = vld [vmem:[%s4 + $0x850] sm:$0xff]
        %v787 = vld [vmem:[%s4 + $0x858] sm:$0xff]
        %v788 = vld [vmem:[%s4 + $0x860] sm:$0xff]
        %v789 = vld [vmem:[%s4 + $0x868] sm:$0xff]
        %v790 = vld [vmem:[%s4 + $0x870] sm:$0xff]
        %v791 = vld [vmem:[%s4 + $0x878] sm:$0xff]
        %v792 = vld [vmem:[%s4 + $0x880] sm:$0xff]
        %v793 = vld [vmem:[%s4 + $0x888] sm:$0xff]
        %v794 = vld [vmem:[%s4 + $0x890] sm:$0xff]
        %v795 = vld [vmem:[%s4 + $0x898] sm:$0xff]
        %v796 = vld [vmem:[%s4 + $0x8a0] sm:$0xff]
        %v797 = vld [vmem:[%s4 + $0x8a8] sm:$0xff]
        %v798 = vld [vmem:[%s4 + $0x8b0] sm:$0xff]
        %v799 = vld [vmem:[%s4 + $0x8b8] sm:$0xff]
        %v800 = vld [vmem:[%s4 + $0x8c0] sm:$0xff]
        %v801 = vld [vmem:[%s4 + $0x8c8] sm:$0xff]
        %v802 = vld [vmem:[%s4 + $0x8d0] sm:$0xff]
        %v803 = vld [vmem:[%s4 + $0x8d8] sm:$0xff]
        %v804 = vld [vmem:[%s4 + $0x8e0] sm:$0xff]
        %v805 = vld [vmem:[%s4 + $0x8e8] sm:$0xff]
        %v806 = vld [vmem:[%s4 + $0x8f0] sm:$0xff]
        %v807 = vld [vmem:[%s4 + $0x8f8] sm:$0xff]
        %v808 = vld [vmem:[%s4 + $0x900] sm:$0xff]
        %v809 = vld [vmem:[%s4 + $0x908] sm:$0xff]
        %v810 = vld [vmem:[%s4 + $0x910] sm:$0xff]
        %v811 = vld [vmem:[%s4 + $0x918] sm:$0xff]
        %v812 = vld [vmem:[%s4 + $0x920] sm:$0xff]
        %v813 = vld [vmem:[%s4 + $0x928] sm:$0xff]
        %v814 = vld [vmem:[%s4 + $0x930] sm:$0xff]
        %v815 = vld [vmem:[%s4 + $0x938] sm:$0xff]
        %v816 = vld [vmem:[%s4 + $0x940] sm:$0xff]
        %v817 = vld [vmem:[%s4 + $0x948] sm:$0xff]
        %v818 = vld [vmem:[%s4 + $0x950] sm:$0xff]
        %v819 = vld [vmem:[%s4 + $0x958] sm:$0xff]
        %v820 = vld [vmem:[%s4 + $0x960] sm:$0xff]
        %v821 = vld [vmem:[%s4 + $0x968] sm:$0xff]
        %v822 = vld [vmem:[%s4 + $0x970] sm:$0xff]
        %v823 = vld [vmem:[%s4 + $0x978] sm:$0xff]
        %v824 = vld [vmem:[%s4 + $0x980] sm:$0xff]
        %v825 = vld [vmem:[%s4 + $0x988] sm:$0xff]
        %v826 = vld [vmem:[%s4 + $0x990] sm:$0xff]
        %v827 = vld [vmem:[%s4 + $0x998] sm:$0xff]
        %v828 = vld [vmem:[%s4 + $0x9a0] sm:$0xff]
        %v829 = vld [vmem:[%s4 + $0x9a8] sm:$0xff]
        %v830 = vld [vmem:[%s4 + $0x9b0] sm:$0xff]
        %v831 = vld [vmem:[%s4 + $0x9b8] sm:$0xff]
        %v832 = vld [vmem:[%s4 + $0x9c0] sm:$0xff]
        %v833 = vld [vmem:[%s4 + $0x9c8] sm:$0xff]
        %v834 = vld [vmem:[%s4 + $0x9d0] sm:$0xff]
        %v835 = vld [vmem:[%s4 + $0x9d8] sm:$0xff]
        %v836 = vld [vmem:[%s4 + $0x9e0] sm:$0xff]
        %v837 = vld [vmem:[%s4 + $0x9e8] sm:$0xff]
        %v838 = vld [vmem:[%s4 + $0x9f0] sm:$0xff]
        %v839 = vld [vmem:[%s4 + $0x9f8] sm:$0xff]
        %v840 = vld [vmem:[%s4 + $0xa00] sm:$0xff]
        %v841 = vld [vmem:[%s4 + $0xa08] sm:$0xff]
        %v842 = vld [vmem:[%s4 + $0xa10] sm:$0xff]
        %v843 = vld [vmem:[%s4 + $0xa18] sm:$0xff]
        %v844 = vld [vmem:[%s4 + $0xa20] sm:$0xff]
        %v845 = vld [vmem:[%s4 + $0xa28] sm:$0xff]
        %v846 = vld [vmem:[%s4 + $0xa30] sm:$0xff]
        %v847 = vld [vmem:[%s4 + $0xa38] sm:$0xff]
        %v848 = vld [vmem:[%s4 + $0xa40] sm:$0xff]
        %v849 = vld [vmem:[%s4 + $0xa48] sm:$0xff]
        %v850 = vld [vmem:[%s4 + $0xa50] sm:$0xff]
        %v851 = vld [vmem:[%s4 + $0xa58] sm:$0xff]
        %v852 = vld [vmem:[%s4 + $0xa60] sm:$0xff]
        %v853 = vld [vmem:[%s4 + $0xa68] sm:$0xff]
        %v854 = vld [vmem:[%s4 + $0xa70] sm:$0xff]
        %v855 = vld [vmem:[%s4 + $0xa78] sm:$0xff]
        %v856 = vld [vmem:[%s4 + $0xa80] sm:$0xff]
        %v857 = vld [vmem:[%s4 + $0xa88] sm:$0xff]
        %v858 = vld [vmem:[%s4 + $0xa90] sm:$0xff]
        %v859 = vld [vmem:[%s4 + $0xa98] sm:$0xff]
        %v860 = vld [vmem:[%s4 + $0xaa0] sm:$0xff]
        %v861 = vld [vmem:[%s4 + $0xaa8] sm:$0xff]
        %v862 = vld [vmem:[%s4 + $0xab0] sm:$0xff]
        %v863 = vld [vmem:[%s4 + $0xab8] sm:$0xff]
        %v864 = vld [vmem:[%s4 + $0xac0] sm:$0xff]
        %v865 = vld [vmem:[%s4 + $0xac8] sm:$0xff]
        %v866 = vld [vmem:[%s4 + $0xad0] sm:$0xff]
        %v867 = vld [vmem:[%s4 + $0xad8] sm:$0xff]
        %v868 = vld [vmem:[%s4 + $0xae0] sm:$0xff]
        %v869 = vld [vmem:[%s4 + $0xae8] sm:$0xff]
        %v870 = vld [vmem:[%s4 + $0xaf0] sm:$0xff]
        %v871 = vld [vmem:[%s4 + $0xaf8] sm:$0xff]
        %v872 = vld [vmem:[%s4 + $0xb00] sm:$0xff]
        %v873 = vld [vmem:[%s4 + $0xb08] sm:$0xff]
        %v874 = vld [vmem:[%s4 + $0xb10] sm:$0xff]
        %v875 = vld [vmem:[%s4 + $0xb18] sm:$0xff]
        %v876 = vld [vmem:[%s4 + $0xb20] sm:$0xff]
        %v877 = vld [vmem:[%s4 + $0xb28] sm:$0xff]
        %v878 = vld [vmem:[%s4 + $0xb30] sm:$0xff]
        %v879 = vld [vmem:[%s4 + $0xb38] sm:$0xff]
        %v880 = vld [vmem:[%s4 + $0xb40] sm:$0xff]
        %v881 = vld [vmem:[%s4 + $0xb48] sm:$0xff]
        %v882 = vld [vmem:[%s4 + $0xb50] sm:$0xff]
        %v883 = vld [vmem:[%s4 + $0xb58] sm:$0xff]
        %v884 = vld [vmem:[%s4 + $0xb60] sm:$0xff]
        %v885 = vld [vmem:[%s4 + $0xb68] sm:$0xff]
        %v886 = vld [vmem:[%s4 + $0xb70] sm:$0xff]
        %v887 = vld [vmem:[%s4 + $0xb78] sm:$0xff]
        %v888 = vld [vmem:[%s4 + $0xb80] sm:$0xff]
        %v889 = vld [vmem:[%s4 + $0xb88] sm:$0xff]
        %v890 = vld [vmem:[%s4 + $0xb90] sm:$0xff]
        %v891 = vld [vmem:[%s4 + $0xb98] sm:$0xff]
        %v892 = vld [vmem:[%s4 + $0xba0] sm:$0xff]
        %v893 = vld [vmem:[%s4 + $0xba8] sm:$0xff]
        %v894 = vld [vmem:[%s4 + $0xbb0] sm:$0xff]
        %v895 = vld [vmem:[%s4 + $0xbb8] sm:$0xff]
        %v896 = vld [vmem:[%s4 + $0xbc0] sm:$0xff]
        %v897 = vld [vmem:[%s4 + $0xbc8] sm:$0xff]
        %v898 = vld [vmem:[%s4 + $0xbd0] sm:$0xff]
        %v899 = vld [vmem:[%s4 + $0xbd8] sm:$0xff]
        %v900 = vld [vmem:[%s4 + $0xbe0] sm:$0xff]
        %v901 = vld [vmem:[%s4 + $0xbe8] sm:$0xff]
        %v902 = vld [vmem:[%s4 + $0xbf0] sm:$0xff]
        %v903 = vld [vmem:[%s4 + $0xbf8] sm:$0xff]
        %v904 = vld [vmem:[%s5] sm:$0xff]
        %v905 = vld [vmem:[%s5 + $0x8] sm:$0xff]
        %v906 = vld [vmem:[%s6] sm:$0xf]
        %v907 = vld [vmem:[%s6 + $0x4] sm:$0xf]
        %v908 = vld [vmem:[%s6 + $0x8] sm:$0xf]
        %v909 = vld [vmem:[%s6 + $0xc] sm:$0xf]
        %v910 = vld [vmem:[%s6 + $0x10] sm:$0xf]
        %v911 = vld [vmem:[%s6 + $0x14] sm:$0xf]
        %v912 = vld [vmem:[%s6 + $0x18] sm:$0xf]
        %v913 = vld [vmem:[%s6 + $0x1c] sm:$0xf]
        %v914 = vld [vmem:[%s6 + $0x20] sm:$0xf]
        %v915 = vld [vmem:[%s6 + $0x24] sm:$0xf]
        %v916 = vld [vmem:[%s6 + $0x28] sm:$0xf]
        %v917 = vld [vmem:[%s6 + $0x2c] sm:$0xf]
        %v918 = vld [vmem:[%s6 + $0x30] sm:$0xf]
        %v919 = vld [vmem:[%s6 + $0x34] sm:$0xf]
        %v920 = vld [vmem:[%s6 + $0x38] sm:$0xf]
        %v921 = vld [vmem:[%s6 + $0x3c] sm:$0xf]
        %v922 = vld [vmem:[%s6 + $0x40] sm:$0xf]
        %v923 = vld [vmem:[%s6 + $0x44] sm:$0xf]
        %v924 = vld [vmem:[%s6 + $0x48] sm:$0xf]
        %v925 = vld [vmem:[%s6 + $0x4c] sm:$0xf]
        %v926 = vld [vmem:[%s6 + $0x50] sm:$0xf]
        %v927 = vld [vmem:[%s6 + $0x54] sm:$0xf]
        %v928 = vld [vmem:[%s6 + $0x58] sm:$0xf]
        %v929 = vld [vmem:[%s6 + $0x5c] sm:$0xf]
        %v930 = vld [vmem:[%s6 + $0x60] sm:$0xf]
        %v931 = vld [vmem:[%s6 + $0x64] sm:$0xf]
        %v932 = vld [vmem:[%s6 + $0x68] sm:$0xf]
        %v933 = vld [vmem:[%s6 + $0x6c] sm:$0xf]
        %v934 = vld [vmem:[%s6 + $0x70] sm:$0xf]
        %v935 = vld [vmem:[%s6 + $0x74] sm:$0xf]
        %v936 = vld [vmem:[%s6 + $0x78] sm:$0xf]
        %v937 = vld [vmem:[%s6 + $0x7c] sm:$0xf]
        %v938 = vld [vmem:[%s6 + $0x80] sm:$0xf]
        %v939 = vld [vmem:[%s6 + $0x84] sm:$0xf]
        %v940 = vld [vmem:[%s6 + $0x88] sm:$0xf]
        %v941 = vld [vmem:[%s6 + $0x8c] sm:$0xf]
        %v942 = vld [vmem:[%s6 + $0x90] sm:$0xf]
        %v943 = vld [vmem:[%s6 + $0x94] sm:$0xf]
        %v944 = vld [vmem:[%s6 + $0x98] sm:$0xf]
        %v945 = vld [vmem:[%s6 + $0x9c] sm:$0xf]
        %v946 = vld [vmem:[%s6 + $0xa0] sm:$0xf]
        %v947 = vld [vmem:[%s6 + $0xa4] sm:$0xf]
        %v948 = vld [vmem:[%s6 + $0xa8] sm:$0xf]
        %v949 = vld [vmem:[%s6 + $0xac] sm:$0xf]
        %v950 = vld [vmem:[%s6 + $0xb0] sm:$0xf]
        %v951 = vld [vmem:[%s6 + $0xb4] sm:$0xf]
        %v952 = vld [vmem:[%s6 + $0xb8] sm:$0xf]
        %v953 = vld [vmem:[%s6 + $0xbc] sm:$0xf]
        %v954 = vld [vmem:[%s7] sm:$0x1]
        %v955 = vld [vmem:[%s8] sm:$0xff]
        %v956 = vld [vmem:[%s8 + $0x8] sm:$0xff]
        %v957 = vld [vmem:[%s8 + $0x10] sm:$0xff]
        %v958 = vld [vmem:[%s8 + $0x18] sm:$0xff]
        %v959 = vld [vmem:[%s8 + $0x20] sm:$0xff]
        %v960 = vld [vmem:[%s8 + $0x28] sm:$0xff]
        %v961 = vld [vmem:[%s8 + $0x30] sm:$0x11]
        %v962 = vld [vmem:[%s9] sm:$0xff]
        %v963 = vld [vmem:[%s9 + $0x8] sm:$0xff]
        %v964 = vld [vmem:[%s9 + $0x10] sm:$0xff]
        %v965 = vld [vmem:[%s9 + $0x18] sm:$0xff]
        %v966 = vld [vmem:[#allocation2] sm:$0x1]
        %v967 = vld [vmem:[%s478] sm:$0xff]
        %v968 = vld [vmem:[%s478 + $0x8] sm:$0xff]
        %v969 = vld [vmem:[%s478 + $0x10] sm:$0xff]
        %v970 = vld [vmem:[%s478 + $0x18] sm:$0xff]
        %v971 = vld [vmem:[%s478 + $0x20] sm:$0xff]
        %v972 = vld [vmem:[%s478 + $0x28] sm:$0xff]
        %v973 = vld [vmem:[%s478 + $0x30] sm:$0xff]
        %v974 = vld [vmem:[%s478 + $0x38] sm:$0xff]
        %v975 = vld [vmem:[%s478 + $0x40] sm:$0xff]
        %v976 = vld [vmem:[%s478 + $0x48] sm:$0xff]
        %v977 = vld [vmem:[%s478 + $0x50] sm:$0xff]
        %v978 = vld [vmem:[%s478 + $0x58] sm:$0xff]
        %v979 = vld [vmem:[%s478 + $0x60] sm:$0xff]
        %v980 = vld [vmem:[%s478 + $0x68] sm:$0xff]
        %v981 = vld [vmem:[%s478 + $0x70] sm:$0xff]
        %v982 = vld [vmem:[%s478 + $0x78] sm:$0xff]
        %v983 = vld [vmem:[%s478 + $0x80] sm:$0xff]
        %v984 = vld [vmem:[%s478 + $0x88] sm:$0xff]
        %v985 = vld [vmem:[%s478 + $0x90] sm:$0xff]
        %v986 = vld [vmem:[%s478 + $0x98] sm:$0xff]
        %v987 = vld [vmem:[%s478 + $0xa0] sm:$0xff]
        %v988 = vld [vmem:[%s478 + $0xa8] sm:$0xff]
        %v989 = vld [vmem:[%s478 + $0xb0] sm:$0xff]
        %v990 = vld [vmem:[%s478 + $0xb8] sm:$0xff]
        %v991 = vld [vmem:[%s478 + $0xc0] sm:$0x33]
        %v992 = vld [vmem:[%s485] sm:$0xff]
        %v993 = vld [vmem:[%s485 + $0x8] sm:$0xf]
        %v994 = vld [vmem:[%s485 + $0xc] sm:$0xff]
        %v995 = vld [vmem:[%s485 + $0x14] sm:$0xf]
        %v996 = vld [vmem:[%s485 + $0x18] sm:$0xff]
        %v997 = vld [vmem:[%s485 + $0x20] sm:$0xf]
        %v998 = vld [vmem:[%s485 + $0x24] sm:$0xff]
        %v999 = vld [vmem:[%s485 + $0x2c] sm:$0xf]
        %v1000 = vld [vmem:[%s485 + $0x30] sm:$0xff]
        %v1001 = vld [vmem:[%s485 + $0x38] sm:$0xf]
        %v1002 = vld [vmem:[%s485 + $0x3c] sm:$0xff]
        %v1003 = vld [vmem:[%s485 + $0x44] sm:$0xf]
        %v1004 = vld [vmem:[%s485 + $0x48] sm:$0x11]
        %v1005 = vld [vmem:[%s485 + $0x50] sm:$0x1]
        %v1007 = vlaneseq
        %v1008 = vshrl.u32 %v1007, 7
        %v1009 = vsub.s32 0, %v1008
        %v1010 = vrot.slane %v519, %v1009
        %v1037 = vunpack.c.l.b16 %v967
        %v1038 = vunpack.c.h.b16 %v967
        %v1039 = vunpack.c.l.b16 %v968
        %v1040 = vunpack.c.h.b16 %v968
        %v1041 = vunpack.c.l.b16 %v969
        %v1042 = vunpack.c.h.b16 %v969
        %v1043 = vunpack.c.l.b16 %v970
        %v1044 = vunpack.c.h.b16 %v970
        %v1045 = vunpack.c.l.b16 %v971
        %v1046 = vunpack.c.h.b16 %v971
        %v1047 = vunpack.c.l.b16 %v972
        %v1048 = vunpack.c.h.b16 %v972
        %v1049 = vunpack.c.l.b16 %v973
        %v1050 = vunpack.c.h.b16 %v973
        %v1051 = vunpack.c.l.b16 %v974
        %v1052 = vunpack.c.h.b16 %v974
        %v1053 = vunpack.c.l.b16 %v975
        %v1054 = vunpack.c.h.b16 %v975
        %v1055 = vunpack.c.l.b16 %v976
        %v1056 = vunpack.c.h.b16 %v976
        %v1057 = vunpack.c.l.b16 %v977
        %v1058 = vunpack.c.h.b16 %v977
        %v1059 = vunpack.c.l.b16 %v978
        %v1060 = vunpack.c.h.b16 %v978
        %v1061 = vunpack.c.l.b16 %v979
        %v1062 = vunpack.c.h.b16 %v979
        %v1063 = vunpack.c.l.b16 %v980
        %v1064 = vunpack.c.h.b16 %v980
        %v1065 = vunpack.c.l.b16 %v981
        %v1066 = vunpack.c.h.b16 %v981
        %v1067 = vunpack.c.l.b16 %v982
        %v1068 = vunpack.c.h.b16 %v982
        %v1069 = vunpack.c.l.b16 %v983
        %v1070 = vunpack.c.h.b16 %v983
        %v1071 = vunpack.c.l.b16 %v984
        %v1072 = vunpack.c.h.b16 %v984
        %v1073 = vunpack.c.l.b16 %v985
        %v1074 = vunpack.c.h.b16 %v985
        %v1075 = vunpack.c.l.b16 %v986
        %v1076 = vunpack.c.h.b16 %v986
        %v1077 = vunpack.c.l.b16 %v987
        %v1078 = vunpack.c.h.b16 %v987
        %v1079 = vunpack.c.l.b16 %v988
        %v1080 = vunpack.c.h.b16 %v988
        %v1081 = vunpack.c.l.b16 %v989
        %v1082 = vunpack.c.h.b16 %v989
        %v1083 = vunpack.c.l.b16 %v990
        %v1084 = vunpack.c.h.b16 %v990
        %v1085 = vunpack.c.l.b16 %v991
        %v1086 = vunpack.c.h.b16 %v991
        %v1087 = vpack.c.b16 %v1039, %v1037
        %v1088 = vpack.c.b16 %v1040, %v1038
        %v1089 = vpack.c.b16 %v1043, %v1041
        %v1090 = vpack.c.b16 %v1044, %v1042
        %v1091 = vpack.c.b16 %v1047, %v1045
        %v1092 = vpack.c.b16 %v1048, %v1046
        %v1093 = vpack.c.b16 %v1051, %v1049
        %v1094 = vpack.c.b16 %v1052, %v1050
        %v1095 = vpack.c.b16 %v1055, %v1053
        %v1096 = vpack.c.b16 %v1056, %v1054
        %v1097 = vpack.c.b16 %v1059, %v1057
        %v1098 = vpack.c.b16 %v1060, %v1058
        %v1099 = vpack.c.b16 %v1063, %v1061
        %v1100 = vpack.c.b16 %v1064, %v1062
        %v1101 = vpack.c.b16 %v1067, %v1065
        %v1102 = vpack.c.b16 %v1068, %v1066
        %v1103 = vpack.c.b16 %v1071, %v1069
        %v1104 = vpack.c.b16 %v1072, %v1070
        %v1105 = vpack.c.b16 %v1075, %v1073
        %v1106 = vpack.c.b16 %v1076, %v1074
        %v1107 = vpack.c.b16 %v1079, %v1077
        %v1108 = vpack.c.b16 %v1080, %v1078
        %v1109 = vpack.c.b16 %v1083, %v1081
        %v1110 = vpack.c.b16 %v1084, %v1082
        %v1111 = vpack.c.b16 %v1085, %v1085
        %v1112 = vpack.c.b16 %v1086, %v1086
        %v1143 = vunpack.c.l.b16 %v502
        %v1144 = vunpack.c.l.b16 %v503
        %v1145 = vunpack.c.l.b16 %v504
        %v1146 = vunpack.c.l.b16 %v505
        %v1147 = vunpack.c.l.b16 %v506
        %v1148 = vunpack.c.l.b16 %v507
        %v1149 = vunpack.c.l.b16 %v508
        %v1150 = vunpack.c.l.b16 %v509
        %v1151 = vunpack.c.l.b16 %v510
        %v1152 = vunpack.c.l.b16 %v511
        %v1153 = vunpack.c.l.b16 %v512
        %v1154 = vunpack.c.l.b16 %v513
        %v1155 = vunpack.c.l.b16 %v514
        %v1156 = vunpack.c.l.b16 %v515
        %v1157 = vunpack.c.l.b16 %v516
        %v1158 = vunpack.c.l.b16 %v517
        %v1159 = vunpack.c.l.b16 %v518
        %v1160 = vpack.c.b16 %v1144, %v1143
        %v1161 = vpack.c.b16 %v1146, %v1145
        %v1162 = vpack.c.b16 %v1148, %v1147
        %v1163 = vpack.c.b16 %v1150, %v1149
        %v1164 = vpack.c.b16 %v1152, %v1151
        %v1165 = vpack.c.b16 %v1154, %v1153
        %v1166 = vpack.c.b16 %v1156, %v1155
        %v1167 = vpack.c.b16 %v1158, %v1157
        %v1168 = vpack.c.b16 %v1159, %v1159
        %vm1177 = vcmask 64512
        %v1179 = vsel %vm1177, %v1088, 0
        %v1182 = vsel %vm1177, %v1090, 0
        %v1185 = vsel %vm1177, %v1092, 0
        %v1188 = vsel %vm1177, %v1094, 0
        %v1191 = vsel %vm1177, %v1096, 0
        %v1194 = vsel %vm1177, %v1098, 0
        %v1197 = vsel %vm1177, %v1100, 0
        %v1200 = vsel %vm1177, %v1102, 0
        %v1203 = vsel %vm1177, %v1104, 0
        %v1206 = vsel %vm1177, %v1106, 0
        %v1209 = vsel %vm1177, %v1108, 0
        %v1212 = vsel %vm1177, %v1110, 0
        %v1215 = vsel %vm1177, %v1112, 0
        %vm1217 = vcmask 1043456
        %v1219 = vsel %vm1217, %v1168, 0
        %1221 = vmatprep.subr.bf16.mxu0 0
        %1222 = vmatpush1.bf16.msra.mxu0 %v1160
        %1223 = vmatprep.subr.bf16.mxu0 0
        %1224 = vmatpush1.bf16.msra.mxu0 %v1161
        %1225 = vmatprep.subr.bf16.mxu0 0
        %1226 = vmatpush1.bf16.msra.mxu0 %v1162
        %1227 = vmatprep.subr.bf16.mxu0 0
        %1228 = vmatpush1.bf16.msra.mxu0 %v1163
        %1229 = vmatprep.subr.bf16.mxu0 0
        %1230 = vmatpush1.bf16.msra.mxu0 %v1164
        %1231 = vmatprep.subr.bf16.mxu0 0
        %1232 = vmatpush1.bf16.msra.mxu0 %v1165
        %1233 = vmatprep.subr.bf16.mxu0 0
        %1234 = vmatpush1.bf16.msra.mxu0 %v1166
        %1235 = vmatprep.subr.bf16.mxu0 0
        %1236 = vmatpush1.bf16.msra.mxu0 %v1167
        %1237 = vmatprep.subr.bf16.mxu0 0
        %1238 = vmatpush1.bf16.msra.mxu0 %v1219
        %1239 = vmatprep.subr.bf16.mxu0 0
        %1240 = vmatpush1.bf16.msra.mxu0 0
        %1241 = vmatprep.subr.bf16.mxu0 0
        %1242 = vmatpush1.bf16.msra.mxu0 0
        %1243 = vmatprep.subr.bf16.mxu0 0
        %1244 = vmatpush1.bf16.msra.mxu0 0
        %1245 = vmatprep.subr.bf16.mxu0 0
        %1246 = vmatpush1.bf16.msra.mxu0 0
        %1247 = vmatprep.subr.bf16.mxu0 0
        %1248 = vmatpush1.bf16.msra.mxu0 0
        %1249 = vmatprep.subr.bf16.mxu0 0
        %1250 = vmatpush1.bf16.msra.mxu0 0
        %1251 = vmatprep.subr.bf16.mxu0 0
        %1252 = vmatpush1.bf16.msra.mxu0 0
        %1253 = vmatprep.mubr.bf16.mxu0 %v1179
        %1254 = vmatmul.mubr.bf16.gmra.mrb[0].mxu0 %v1087
        %v1255 = vpop.f32.mrb[0].mxu0
        %v1256 = vadd.f32 %v1010, %v1255
        %v1257 = vpop.f32.mrb[0].mxu0
        %v1258 = vpop.f32.mrb[0].mxu0
        %v1259 = vadd.f32 %v1010, %v1258
        %v1260 = vpop.f32.mrb[0].mxu0
        %1261 = vmatprep.mubr.bf16.mxu0 %v1182
        %1262 = vmatmul.mubr.bf16.gmra.mrb[0].mxu0 %v1089
        %v1263 = vpop.f32.mrb[0].mxu0
        %v1264 = vadd.f32 %v1010, %v1263
        %v1265 = vpop.f32.mrb[0].mxu0
        %v1266 = vpop.f32.mrb[0].mxu0
        %v1267 = vadd.f32 %v1010, %v1266
        %v1268 = vpop.f32.mrb[0].mxu0
        %1269 = vmatprep.mubr.bf16.mxu0 %v1185
        %1270 = vmatmul.mubr.bf16.gmra.mrb[0].mxu0 %v1091
        %v1271 = vpop.f32.mrb[0].mxu0
        %v1272 = vadd.f32 %v1010, %v1271
        %v1273 = vpop.f32.mrb[0].mxu0
        %v1274 = vpop.f32.mrb[0].mxu0
        %v1275 = vadd.f32 %v1010, %v1274
        %v1276 = vpop.f32.mrb[0].mxu0
        %1277 = vmatprep.mubr.bf16.mxu0 %v1188
        %1278 = vmatmul.mubr.bf16.gmra.mrb[0].mxu0 %v1093
        %v1279 = vpop.f32.mrb[0].mxu0
        %v1280 = vadd.f32 %v1010, %v1279
        %v1281 = vpop.f32.mrb[0].mxu0
        %v1282 = vpop.f32.mrb[0].mxu0
        %v1283 = vadd.f32 %v1010, %v1282
        %v1284 = vpop.f32.mrb[0].mxu0
        %1285 = vmatprep.mubr.bf16.mxu0 %v1191
        %1286 = vmatmul.mubr.bf16.gmra.mrb[0].mxu0 %v1095
        %v1287 = vpop.f32.mrb[0].mxu0
        %v1288 = vadd.f32 %v1010, %v1287
        %v1289 = vpop.f32.mrb[0].mxu0
        %v1290 = vpop.f32.mrb[0].mxu0
        %v1291 = vadd.f32 %v1010, %v1290
        %v1292 = vpop.f32.mrb[0].mxu0
        %1293 = vmatprep.mubr.bf16.mxu0 %v1194
        %1294 = vmatmul.mubr.bf16.gmra.mrb[0].mxu0 %v1097
        %v1295 = vpop.f32.mrb[0].mxu0
        %v1296 = vadd.f32 %v1010, %v1295
        %v1297 = vpop.f32.mrb[0].mxu0
        %v1298 = vpop.f32.mrb[0].mxu0
        %v1299 = vadd.f32 %v1010, %v1298
        %v1300 = vpop.f32.mrb[0].mxu0
        %1301 = vmatprep.mubr.bf16.mxu0 %v1197
        %1302 = vmatmul.mubr.bf16.gmra.mrb[0].mxu0 %v1099
        %v1303 = vpop.f32.mrb[0].mxu0
        %v1304 = vadd.f32 %v1010, %v1303
        %v1305 = vpop.f32.mrb[0].mxu0
        %v1306 = vpop.f32.mrb[0].mxu0
        %v1307 = vadd.f32 %v1010, %v1306
        %v1308 = vpop.f32.mrb[0].mxu0
        %1309 = vmatprep.mubr.bf16.mxu0 %v1200
        %1310 = vmatmul.mubr.bf16.gmra.mrb[0].mxu0 %v1101
        %v1311 = vpop.f32.mrb[0].mxu0
        %v1312 = vadd.f32 %v1010, %v1311
        %v1313 = vpop.f32.mrb[0].mxu0
        %v1314 = vpop.f32.mrb[0].mxu0
        %v1315 = vadd.f32 %v1010, %v1314
        %v1316 = vpop.f32.mrb[0].mxu0
        %1317 = vmatprep.mubr.bf16.mxu0 %v1203
        %1318 = vmatmul.mubr.bf16.gmra.mrb[0].mxu0 %v1103
        %v1319 = vpop.f32.mrb[0].mxu0
        %v1320 = vadd.f32 %v1010, %v1319
        %v1321 = vpop.f32.mrb[0].mxu0
        %v1322 = vpop.f32.mrb[0].mxu0
        %v1323 = vadd.f32 %v1010, %v1322
        %v1324 = vpop.f32.mrb[0].mxu0
        %1325 = vmatprep.mubr.bf16.mxu0 %v1206
        %1326 = vmatmul.mubr.bf16.gmra.mrb[0].mxu0 %v1105
        %v1327 = vpop.f32.mrb[0].mxu0
        %v1328 = vadd.f32 %v1010, %v1327
        %v1329 = vpop.f32.mrb[0].mxu0
        %v1330 = vpop.f32.mrb[0].mxu0
        %v1331 = vadd.f32 %v1010, %v1330
        %v1332 = vpop.f32.mrb[0].mxu0
        %1333 = vmatprep.mubr.bf16.mxu0 %v1209
        %1334 = vmatmul.mubr.bf16.gmra.mrb[0].mxu0 %v1107
        %v1335 = vpop.f32.mrb[0].mxu0
        %v1336 = vadd.f32 %v1010, %v1335
        %v1337 = vpop.f32.mrb[0].mxu0
        %v1338 = vpop.f32.mrb[0].mxu0
        %v1339 = vadd.f32 %v1010, %v1338
        %v1340 = vpop.f32.mrb[0].mxu0
        %1341 = vmatprep.mubr.bf16.mxu0 %v1212
        %1342 = vmatmul.mubr.bf16.gmra.mrb[0].mxu0 %v1109
        %v1343 = vpop.f32.mrb[0].mxu0
        %v1344 = vadd.f32 %v1010, %v1343
        %v1345 = vpop.f32.mrb[0].mxu0
        %v1346 = vpop.f32.mrb[0].mxu0
        %v1347 = vadd.f32 %v1010, %v1346
        %v1348 = vpop.f32.mrb[0].mxu0
        %1349 = vmatprep.mubr.bf16.mxu0 %v1215
        %1350 = vmatmul.mubr.bf16.gmra.mrb[0].mxu0 %v1111
        %v1351 = vpop.f32.mrb[0].mxu0
        %v1352 = vadd.f32 %v1010, %v1351
        %v1353 = vpop.f32.mrb[0].mxu0
        %v1354 = vpop.f32.mrb[0].mxu0
        %v1355 = vpop.f32.mrb[0].mxu0
        %1356 = vdwg.mxu0
        %v1357 = vmax.f32 %v1256, 0.0
        %v1358 = vmax.f32 %v1259, 0.0
        %v1359 = vmax.f32 %v1264, 0.0
        %v1360 = vmax.f32 %v1267, 0.0
        %v1361 = vmax.f32 %v1272, 0.0
        %v1362 = vmax.f32 %v1275, 0.0
        %v1363 = vmax.f32 %v1280, 0.0
        %v1364 = vmax.f32 %v1283, 0.0
        %v1365 = vmax.f32 %v1288, 0.0
        %v1366 = vmax.f32 %v1291, 0.0
        %v1367 = vmax.f32 %v1296, 0.0
        %v1368 = vmax.f32 %v1299, 0.0
        %v1369 = vmax.f32 %v1304, 0.0
        %v1370 = vmax.f32 %v1307, 0.0
        %v1371 = vmax.f32 %v1312, 0.0
        %v1372 = vmax.f32 %v1315, 0.0
        %v1373 = vmax.f32 %v1320, 0.0
        %v1374 = vmax.f32 %v1323, 0.0
        %v1375 = vmax.f32 %v1328, 0.0
        %v1376 = vmax.f32 %v1331, 0.0
        %v1377 = vmax.f32 %v1336, 0.0
        %v1378 = vmax.f32 %v1339, 0.0
        %v1379 = vmax.f32 %v1344, 0.0
        %v1380 = vmax.f32 %v1347, 0.0
        %v1381 = vmax.f32 %v1352, 0.0
        %v1382 = vpack.c.bf16 %v1358, %v1357
        %v1383 = vpack.c.bf16 %v1360, %v1359
        %v1384 = vpack.c.bf16 %v1362, %v1361
        %v1385 = vpack.c.bf16 %v1364, %v1363
        %v1386 = vpack.c.bf16 %v1366, %v1365
        %v1387 = vpack.c.bf16 %v1368, %v1367
        %v1388 = vpack.c.bf16 %v1370, %v1369
        %v1389 = vpack.c.bf16 %v1372, %v1371
        %v1390 = vpack.c.bf16 %v1374, %v1373
        %v1391 = vpack.c.bf16 %v1376, %v1375
        %v1392 = vpack.c.bf16 %v1378, %v1377
        %v1393 = vpack.c.bf16 %v1380, %v1379
        %v1394 = vpack.c.bf16 %v1381, %v1381
        %v1402 = vunpack.c.l.b16 %v955
        %v1403 = vunpack.c.h.b16 %v955
        %v1404 = vunpack.c.l.b16 %v956
        %v1405 = vunpack.c.h.b16 %v956
        %v1406 = vunpack.c.l.b16 %v957
        %v1407 = vunpack.c.h.b16 %v957
        %v1408 = vunpack.c.l.b16 %v958
        %v1409 = vunpack.c.h.b16 %v958
        %v1410 = vunpack.c.l.b16 %v959
        %v1411 = vunpack.c.h.b16 %v959
        %v1412 = vunpack.c.l.b16 %v960
        %v1413 = vunpack.c.h.b16 %v960
        %v1414 = vunpack.c.l.b16 %v961
        %v1415 = vunpack.c.h.b16 %v961
        %v1416 = vpack.c.b16 %v1404, %v1402
        %v1417 = vpack.c.b16 %v1405, %v1403
        %v1418 = vpack.c.b16 %v1408, %v1406
        %v1419 = vpack.c.b16 %v1409, %v1407
        %v1420 = vpack.c.b16 %v1412, %v1410
        %v1421 = vpack.c.b16 %v1413, %v1411
        %v1422 = vpack.c.b16 %v1414, %v1414
        %v1423 = vpack.c.b16 %v1415, %v1415
        %vm1428 = vcmask 556032
        %v1430 = vsel %vm1428, %v1417, 0
        %v1433 = vsel %vm1428, %v1419, 0
        %v1436 = vsel %vm1428, %v1421, 0
        %v1439 = vsel %vm1428, %v1423, 0
        %vm1441 = vcmask 1041408
        %v1443 = vsel %vm1441, %v1394, 0
        %1445 = vmatprep.subr.bf16.mxu0 0
        %1446 = vmatpush1.bf16.msra.mxu0 %v1382
        %1447 = vmatprep.subr.bf16.mxu0 0
        %1448 = vmatpush1.bf16.msra.mxu0 %v1383
        %1449 = vmatprep.subr.bf16.mxu0 0
        %1450 = vmatpush1.bf16.msra.mxu0 %v1384
        %1451 = vmatprep.subr.bf16.mxu0 0
        %1452 = vmatpush1.bf16.msra.mxu0 %v1385
        %1453 = vmatprep.subr.bf16.mxu0 0
        %1454 = vmatpush1.bf16.msra.mxu0 %v1386
        %1455 = vmatprep.subr.bf16.mxu0 0
        %1456 = vmatpush1.bf16.msra.mxu0 %v1387
        %1457 = vmatprep.subr.bf16.mxu0 0
        %1458 = vmatpush1.bf16.msra.mxu0 %v1388
        %1459 = vmatprep.subr.bf16.mxu0 0
        %1460 = vmatpush1.bf16.msra.mxu0 %v1389
        %1461 = vmatprep.subr.bf16.mxu0 0
        %1462 = vmatpush1.bf16.msra.mxu0 %v1390
        %1463 = vmatprep.subr.bf16.mxu0 0
        %1464 = vmatpush1.bf16.msra.mxu0 %v1391
        %1465 = vmatprep.subr.bf16.mxu0 0
        %1466 = vmatpush1.bf16.msra.mxu0 %v1392
        %1467 = vmatprep.subr.bf16.mxu0 0
        %1468 = vmatpush1.bf16.msra.mxu0 %v1393
        %1469 = vmatprep.subr.bf16.mxu0 0
        %1470 = vmatpush1.bf16.msra.mxu0 %v1443
        %1471 = vmatprep.subr.bf16.mxu0 0
        %1472 = vmatpush1.bf16.msra.mxu0 0
        %1473 = vmatprep.subr.bf16.mxu0 0
        %1474 = vmatpush1.bf16.msra.mxu0 0
        %1475 = vmatprep.subr.bf16.mxu0 0
        %1476 = vmatpush1.bf16.msra.mxu0 0
        %1477 = vmatprep.mubr.bf16.mxu0 %v1430
        %1478 = vmatmul.mubr.bf16.gmra.mrb[0].mxu0 %v1416
        %v1479 = vpop.f32.mrb[0].mxu0
        %v1480 = vadd.f32 0.0, %v1479
        %v1481 = vpop.f32.mrb[0].mxu0
        %v1482 = vpop.f32.mrb[0].mxu0
        %v1483 = vadd.f32 0.0, %v1482
        %v1484 = vpop.f32.mrb[0].mxu0
        %1485 = vmatprep.mubr.bf16.mxu0 %v1433
        %1486 = vmatmul.mubr.bf16.gmra.mrb[0].mxu0 %v1418
        %v1487 = vpop.f32.mrb[0].mxu0
        %v1488 = vadd.f32 0.0, %v1487
        %v1489 = vpop.f32.mrb[0].mxu0
        %v1490 = vpop.f32.mrb[0].mxu0
        %v1491 = vadd.f32 0.0, %v1490
        %v1492 = vpop.f32.mrb[0].mxu0
        %1493 = vmatprep.mubr.bf16.mxu0 %v1436
        %1494 = vmatmul.mubr.bf16.gmra.mrb[0].mxu0 %v1420
        %v1495 = vpop.f32.mrb[0].mxu0
        %v1496 = vadd.f32 0.0, %v1495
        %v1497 = vpop.f32.mrb[0].mxu0
        %v1498 = vpop.f32.mrb[0].mxu0
        %v1499 = vadd.f32 0.0, %v1498
        %v1500 = vpop.f32.mrb[0].mxu0
        %1501 = vmatprep.mubr.bf16.mxu0 %v1439
        %1502 = vmatmul.mubr.bf16.gmra.mrb[0].mxu0 %v1422
        %v1503 = vpop.f32.mrb[0].mxu0
        %v1504 = vadd.f32 0.0, %v1503
        %v1505 = vpop.f32.mrb[0].mxu0
        %v1506 = vpop.f32.mrb[0].mxu0
        %v1507 = vpop.f32.mrb[0].mxu0
        %1508 = vdwg.mxu0
        %v1511 = vlaneseq
        %v1512 = vshrl.u32 %v1511, 7
        %v1513 = vsub.s32 0, %v1512
        %v1514 = vrot.slane %v904, %v1513
        %v1515 = vlaneseq
        %v1516 = vshrl.u32 %v1515, 7
        %v1517 = vsub.s32 1, %v1516
        %v1518 = vrot.slane %v904, %v1517
        %v1519 = vlaneseq
        %v1520 = vshrl.u32 %v1519, 7
        %v1521 = vsub.s32 2, %v1520
        %v1522 = vrot.slane %v904, %v1521
        %v1523 = vlaneseq
        %v1524 = vshrl.u32 %v1523, 7
        %v1525 = vsub.s32 3, %v1524
        %v1526 = vrot.slane %v904, %v1525
        %v1527 = vlaneseq
        %v1528 = vshrl.u32 %v1527, 7
        %v1529 = vsub.s32 4, %v1528
        %v1530 = vrot.slane %v904, %v1529
        %v1531 = vlaneseq
        %v1532 = vshrl.u32 %v1531, 7
        %v1533 = vsub.s32 5, %v1532
        %v1534 = vrot.slane %v904, %v1533
        %v1535 = vlaneseq
        %v1536 = vshrl.u32 %v1535, 7
        %v1537 = vsub.s32 6, %v1536
        %v1538 = vrot.slane %v904, %v1537
        %v1539 = vlaneseq
        %v1540 = vshrl.u32 %v1539, 7
        %v1541 = vsub.s32 7, %v1540
        %v1542 = vrot.slane %v904, %v1541
        %v1543 = vlaneseq
        %v1544 = vshrl.u32 %v1543, 7
        %v1545 = vsub.s32 0, %v1544
        %v1546 = vrot.slane %v905, %v1545
        %v1547 = vlaneseq
        %v1548 = vshrl.u32 %v1547, 7
        %v1549 = vsub.s32 1, %v1548
        %v1550 = vrot.slane %v905, %v1549
        %v1551 = vlaneseq
        %v1552 = vshrl.u32 %v1551, 7
        %v1553 = vsub.s32 2, %v1552
        %v1554 = vrot.slane %v905, %v1553
        %v1555 = vlaneseq
        %v1556 = vshrl.u32 %v1555, 7
        %v1557 = vsub.s32 3, %v1556
        %v1558 = vrot.slane %v905, %v1557
        %v1559 = vlaneseq
        %v1560 = vshrl.u32 %v1559, 7
        %v1561 = vsub.s32 4, %v1560
        %v1562 = vrot.slane %v905, %v1561
        %v1563 = vlaneseq
        %v1564 = vshrl.u32 %v1563, 7
        %v1565 = vsub.s32 5, %v1564
        %v1566 = vrot.slane %v905, %v1565
        %v1567 = vlaneseq
        %v1568 = vshrl.u32 %v1567, 7
        %v1569 = vsub.s32 6, %v1568
        %v1570 = vrot.slane %v905, %v1569
        %v1571 = vlaneseq
        %v1572 = vshrl.u32 %v1571, 7
        %v1573 = vsub.s32 7, %v1572
        %v1574 = vrot.slane %v905, %v1573
        %v1605 = vunpack.c.l.b16 %v992
        %v1606 = vunpack.c.h.b16 %v992
        %v1607 = vunpack.c.l.b16 %v993
        %v1608 = vunpack.c.l.b16 %v994
        %v1609 = vunpack.c.h.b16 %v994
        %v1610 = vunpack.c.l.b16 %v995
        %v1611 = vunpack.c.l.b16 %v996
        %v1612 = vunpack.c.h.b16 %v996
        %v1613 = vunpack.c.l.b16 %v997
        %v1614 = vunpack.c.l.b16 %v998
        %v1615 = vunpack.c.h.b16 %v998
        %v1616 = vunpack.c.l.b16 %v999
        %v1617 = vunpack.c.l.b16 %v1000
        %v1618 = vunpack.c.h.b16 %v1000
        %v1619 = vunpack.c.l.b16 %v1001
        %v1620 = vunpack.c.l.b16 %v1002
        %v1621 = vunpack.c.h.b16 %v1002
        %v1622 = vunpack.c.l.b16 %v1003
        %v1623 = vunpack.c.l.b16 %v1004
        %v1624 = vunpack.c.h.b16 %v1004
        %v1625 = vunpack.c.l.b16 %v1005
        %v1626 = vpack.c.b16 %v1608, %v1605
        %v1627 = vpack.c.b16 %v1609, %v1606
        %v1628 = vpack.c.b16 %v1610, %v1607
        %v1629 = vpack.c.b16 %v1614, %v1611
        %v1630 = vpack.c.b16 %v1615, %v1612
        %v1631 = vpack.c.b16 %v1616, %v1613
        %v1632 = vpack.c.b16 %v1620, %v1617
        %v1633 = vpack.c.b16 %v1621, %v1618
        %v1634 = vpack.c.b16 %v1622, %v1619
        %v1635 = vpack.c.b16 %v1623, %v1623
        %v1636 = vpack.c.b16 %v1624, %v1624
        %v1637 = vpack.c.b16 %v1625, %v1625
        %v2034 = vunpack.c.l.b16 %v520
        %v2035 = vunpack.c.h.b16 %v520
        %v2036 = vunpack.c.l.b16 %v521
        %v2037 = vunpack.c.h.b16 %v521
        %v2038 = vunpack.c.l.b16 %v522
        %v2039 = vunpack.c.h.b16 %v522
        %v2040 = vunpack.c.l.b16 %v523
        %v2041 = vunpack.c.h.b16 %v523
        %v2042 = vunpack.c.l.b16 %v524
        %v2043 = vunpack.c.h.b16 %v524
        %v2044 = vunpack.c.l.b16 %v525
        %v2045 = vunpack.c.h.b16 %v525
        %v2046 = vunpack.c.l.b16 %v526
        %v2047 = vunpack.c.h.b16 %v526
        %v2048 = vunpack.c.l.b16 %v527
        %v2049 = vunpack.c.h.b16 %v527
        %v2050 = vunpack.c.l.b16 %v528
        %v2051 = vunpack.c.h.b16 %v528
        %v2052 = vunpack.c.l.b16 %v529
        %v2053 = vunpack.c.h.b16 %v529
        %v2054 = vunpack.c.l.b16 %v530
        %v2055 = vunpack.c.h.b16 %v530
        %v2056 = vunpack.c.l.b16 %v531
        %v2057 = vunpack.c.h.b16 %v531
        %v2058 = vunpack.c.l.b16 %v532
        %v2059 = vunpack.c.h.b16 %v532
        %v2060 = vunpack.c.l.b16 %v533
        %v2061 = vunpack.c.h.b16 %v533
        %v2062 = vunpack.c.l.b16 %v534
        %v2063 = vunpack.c.h.b16 %v534
        %v2064 = vunpack.c.l.b16 %v535
        %v2065 = vunpack.c.h.b16 %v535
        %v2066 = vunpack.c.l.b16 %v536
        %v2067 = vunpack.c.h.b16 %v536
        %v2068 = vunpack.c.l.b16 %v537
        %v2069 = vunpack.c.h.b16 %v537
        %v2070 = vunpack.c.l.b16 %v538
        %v2071 = vunpack.c.h.b16 %v538
        %v2072 = vunpack.c.l.b16 %v539
        %v2073 = vunpack.c.h.b16 %v539
        %v2074 = vunpack.c.l.b16 %v540
        %v2075 = vunpack.c.h.b16 %v540
        %v2076 = vunpack.c.l.b16 %v541
        %v2077 = vunpack.c.h.b16 %v541
        %v2078 = vunpack.c.l.b16 %v542
        %v2079 = vunpack.c.h.b16 %v542
        %v2080 = vunpack.c.l.b16 %v543
        %v2081 = vunpack.c.h.b16 %v543
        %v2082 = vunpack.c.l.b16 %v544
        %v2083 = vunpack.c.h.b16 %v544
        %v2084 = vunpack.c.l.b16 %v545
        %v2085 = vunpack.c.h.b16 %v545
        %v2086 = vunpack.c.l.b16 %v546
        %v2087 = vunpack.c.h.b16 %v546
        %v2088 = vunpack.c.l.b16 %v547
        %v2089 = vunpack.c.h.b16 %v547
        %v2090 = vunpack.c.l.b16 %v548
        %v2091 = vunpack.c.h.b16 %v548
        %v2092 = vunpack.c.l.b16 %v549
        %v2093 = vunpack.c.h.b16 %v549
        %v2094 = vunpack.c.l.b16 %v550
        %v2095 = vunpack.c.h.b16 %v550
        %v2096 = vunpack.c.l.b16 %v551
        %v2097 = vunpack.c.h.b16 %v551
        %v2098 = vunpack.c.l.b16 %v552
        %v2099 = vunpack.c.h.b16 %v552
        %v2100 = vunpack.c.l.b16 %v553
        %v2101 = vunpack.c.h.b16 %v553
        %v2102 = vunpack.c.l.b16 %v554
        %v2103 = vunpack.c.h.b16 %v554
        %v2104 = vunpack.c.l.b16 %v555
        %v2105 = vunpack.c.h.b16 %v555
        %v2106 = vunpack.c.l.b16 %v556
        %v2107 = vunpack.c.h.b16 %v556
        %v2108 = vunpack.c.l.b16 %v557
        %v2109 = vunpack.c.h.b16 %v557
        %v2110 = vunpack.c.l.b16 %v558
        %v2111 = vunpack.c.h.b16 %v558
        %v2112 = vunpack.c.l.b16 %v559
        %v2113 = vunpack.c.h.b16 %v559
        %v2114 = vunpack.c.l.b16 %v560
        %v2115 = vunpack.c.h.b16 %v560
        %v2116 = vunpack.c.l.b16 %v561
        %v2117 = vunpack.c.h.b16 %v561
        %v2118 = vunpack.c.l.b16 %v562
        %v2119 = vunpack.c.h.b16 %v562
        %v2120 = vunpack.c.l.b16 %v563
        %v2121 = vunpack.c.h.b16 %v563
        %v2122 = vunpack.c.l.b16 %v564
        %v2123 = vunpack.c.h.b16 %v564
        %v2124 = vunpack.c.l.b16 %v565
        %v2125 = vunpack.c.h.b16 %v565
        %v2126 = vunpack.c.l.b16 %v566
        %v2127 = vunpack.c.h.b16 %v566
        %v2128 = vunpack.c.l.b16 %v567
        %v2129 = vunpack.c.h.b16 %v567
        %v2130 = vunpack.c.l.b16 %v568
        %v2131 = vunpack.c.h.b16 %v568
        %v2132 = vunpack.c.l.b16 %v569
        %v2133 = vunpack.c.h.b16 %v569
        %v2134 = vunpack.c.l.b16 %v570
        %v2135 = vunpack.c.h.b16 %v570
        %v2136 = vunpack.c.l.b16 %v571
        %v2137 = vunpack.c.h.b16 %v571
        %v2138 = vunpack.c.l.b16 %v572
        %v2139 = vunpack.c.h.b16 %v572
        %v2140 = vunpack.c.l.b16 %v573
        %v2141 = vunpack.c.h.b16 %v573
        %v2142 = vunpack.c.l.b16 %v574
        %v2143 = vunpack.c.h.b16 %v574
        %v2144 = vunpack.c.l.b16 %v575
        %v2145 = vunpack.c.h.b16 %v575
        %v2146 = vunpack.c.l.b16 %v576
        %v2147 = vunpack.c.h.b16 %v576
        %v2148 = vunpack.c.l.b16 %v577
        %v2149 = vunpack.c.h.b16 %v577
        %v2150 = vunpack.c.l.b16 %v578
        %v2151 = vunpack.c.h.b16 %v578
        %v2152 = vunpack.c.l.b16 %v579
        %v2153 = vunpack.c.h.b16 %v579
        %v2154 = vunpack.c.l.b16 %v580
        %v2155 = vunpack.c.h.b16 %v580
        %v2156 = vunpack.c.l.b16 %v581
        %v2157 = vunpack.c.h.b16 %v581
        %v2158 = vunpack.c.l.b16 %v582
        %v2159 = vunpack.c.h.b16 %v582
        %v2160 = vunpack.c.l.b16 %v583
        %v2161 = vunpack.c.h.b16 %v583
        %v2162 = vunpack.c.l.b16 %v584
        %v2163 = vunpack.c.h.b16 %v584
        %v2164 = vunpack.c.l.b16 %v585
        %v2165 = vunpack.c.h.b16 %v585
        %v2166 = vunpack.c.l.b16 %v586
        %v2167 = vunpack.c.h.b16 %v586
        %v2168 = vunpack.c.l.b16 %v587
        %v2169 = vunpack.c.h.b16 %v587
        %v2170 = vunpack.c.l.b16 %v588
        %v2171 = vunpack.c.h.b16 %v588
        %v2172 = vunpack.c.l.b16 %v589
        %v2173 = vunpack.c.h.b16 %v589
        %v2174 = vunpack.c.l.b16 %v590
        %v2175 = vunpack.c.h.b16 %v590
        %v2176 = vunpack.c.l.b16 %v591
        %v2177 = vunpack.c.h.b16 %v591
        %v2178 = vunpack.c.l.b16 %v592
        %v2179 = vunpack.c.h.b16 %v592
        %v2180 = vunpack.c.l.b16 %v593
        %v2181 = vunpack.c.h.b16 %v593
        %v2182 = vunpack.c.l.b16 %v594
        %v2183 = vunpack.c.h.b16 %v594
        %v2184 = vunpack.c.l.b16 %v595
        %v2185 = vunpack.c.h.b16 %v595
        %v2186 = vunpack.c.l.b16 %v596
        %v2187 = vunpack.c.h.b16 %v596
        %v2188 = vunpack.c.l.b16 %v597
        %v2189 = vunpack.c.h.b16 %v597
        %v2190 = vunpack.c.l.b16 %v598
        %v2191 = vunpack.c.h.b16 %v598
        %v2192 = vunpack.c.l.b16 %v599
        %v2193 = vunpack.c.h.b16 %v599
        %v2194 = vunpack.c.l.b16 %v600
        %v2195 = vunpack.c.h.b16 %v600
        %v2196 = vunpack.c.l.b16 %v601
        %v2197 = vunpack.c.h.b16 %v601
        %v2198 = vunpack.c.l.b16 %v602
        %v2199 = vunpack.c.h.b16 %v602
        %v2200 = vunpack.c.l.b16 %v603
        %v2201 = vunpack.c.h.b16 %v603
        %v2202 = vunpack.c.l.b16 %v604
        %v2203 = vunpack.c.h.b16 %v604
        %v2204 = vunpack.c.l.b16 %v605
        %v2205 = vunpack.c.h.b16 %v605
        %v2206 = vunpack.c.l.b16 %v606
        %v2207 = vunpack.c.h.b16 %v606
        %v2208 = vunpack.c.l.b16 %v607
        %v2209 = vunpack.c.h.b16 %v607
        %v2210 = vunpack.c.l.b16 %v608
        %v2211 = vunpack.c.h.b16 %v608
        %v2212 = vunpack.c.l.b16 %v609
        %v2213 = vunpack.c.h.b16 %v609
        %v2214 = vunpack.c.l.b16 %v610
        %v2215 = vunpack.c.h.b16 %v610
        %v2216 = vunpack.c.l.b16 %v611
        %v2217 = vunpack.c.h.b16 %v611
        %v2218 = vunpack.c.l.b16 %v612
        %v2219 = vunpack.c.h.b16 %v612
        %v2220 = vunpack.c.l.b16 %v613
        %v2221 = vunpack.c.h.b16 %v613
        %v2222 = vunpack.c.l.b16 %v614
        %v2223 = vunpack.c.h.b16 %v614
        %v2224 = vunpack.c.l.b16 %v615
        %v2225 = vunpack.c.h.b16 %v615
        %v2226 = vunpack.c.l.b16 %v616
        %v2227 = vunpack.c.h.b16 %v616
        %v2228 = vunpack.c.l.b16 %v617
        %v2229 = vunpack.c.h.b16 %v617
        %v2230 = vunpack.c.l.b16 %v618
        %v2231 = vunpack.c.h.b16 %v618
        %v2232 = vunpack.c.l.b16 %v619
        %v2233 = vunpack.c.h.b16 %v619
        %v2234 = vunpack.c.l.b16 %v620
        %v2235 = vunpack.c.h.b16 %v620
        %v2236 = vunpack.c.l.b16 %v621
        %v2237 = vunpack.c.h.b16 %v621
        %v2238 = vunpack.c.l.b16 %v622
        %v2239 = vunpack.c.h.b16 %v622
        %v2240 = vunpack.c.l.b16 %v623
        %v2241 = vunpack.c.h.b16 %v623
        %v2242 = vunpack.c.l.b16 %v624
        %v2243 = vunpack.c.h.b16 %v624
        %v2244 = vunpack.c.l.b16 %v625
        %v2245 = vunpack.c.h.b16 %v625
        %v2246 = vunpack.c.l.b16 %v626
        %v2247 = vunpack.c.h.b16 %v626
        %v2248 = vunpack.c.l.b16 %v627
        %v2249 = vunpack.c.h.b16 %v627
        %v2250 = vunpack.c.l.b16 %v628
        %v2251 = vunpack.c.h.b16 %v628
        %v2252 = vunpack.c.l.b16 %v629
        %v2253 = vunpack.c.h.b16 %v629
        %v2254 = vunpack.c.l.b16 %v630
        %v2255 = vunpack.c.h.b16 %v630
        %v2256 = vunpack.c.l.b16 %v631
        %v2257 = vunpack.c.h.b16 %v631
        %v2258 = vunpack.c.l.b16 %v632
        %v2259 = vunpack.c.h.b16 %v632
        %v2260 = vunpack.c.l.b16 %v633
        %v2261 = vunpack.c.h.b16 %v633
        %v2262 = vunpack.c.l.b16 %v634
        %v2263 = vunpack.c.h.b16 %v634
        %v2264 = vunpack.c.l.b16 %v635
        %v2265 = vunpack.c.h.b16 %v635
        %v2266 = vunpack.c.l.b16 %v636
        %v2267 = vunpack.c.h.b16 %v636
        %v2268 = vunpack.c.l.b16 %v637
        %v2269 = vunpack.c.h.b16 %v637
        %v2270 = vunpack.c.l.b16 %v638
        %v2271 = vunpack.c.h.b16 %v638
        %v2272 = vunpack.c.l.b16 %v639
        %v2273 = vunpack.c.h.b16 %v639
        %v2274 = vunpack.c.l.b16 %v640
        %v2275 = vunpack.c.h.b16 %v640
        %v2276 = vunpack.c.l.b16 %v641
        %v2277 = vunpack.c.h.b16 %v641
        %v2278 = vunpack.c.l.b16 %v642
        %v2279 = vunpack.c.h.b16 %v642
        %v2280 = vunpack.c.l.b16 %v643
        %v2281 = vunpack.c.h.b16 %v643
        %v2282 = vunpack.c.l.b16 %v644
        %v2283 = vunpack.c.h.b16 %v644
        %v2284 = vunpack.c.l.b16 %v645
        %v2285 = vunpack.c.h.b16 %v645
        %v2286 = vunpack.c.l.b16 %v646
        %v2287 = vunpack.c.h.b16 %v646
        %v2288 = vunpack.c.l.b16 %v647
        %v2289 = vunpack.c.h.b16 %v647
        %v2290 = vunpack.c.l.b16 %v648
        %v2291 = vunpack.c.h.b16 %v648
        %v2292 = vunpack.c.l.b16 %v649
        %v2293 = vunpack.c.h.b16 %v649
        %v2294 = vunpack.c.l.b16 %v650
        %v2295 = vunpack.c.h.b16 %v650
        %v2296 = vunpack.c.l.b16 %v651
        %v2297 = vunpack.c.h.b16 %v651
        %v2298 = vunpack.c.l.b16 %v652
        %v2299 = vunpack.c.h.b16 %v652
        %v2300 = vunpack.c.l.b16 %v653
        %v2301 = vunpack.c.h.b16 %v653
        %v2302 = vunpack.c.l.b16 %v654
        %v2303 = vunpack.c.h.b16 %v654
        %v2304 = vunpack.c.l.b16 %v655
        %v2305 = vunpack.c.h.b16 %v655
        %v2306 = vunpack.c.l.b16 %v656
        %v2307 = vunpack.c.h.b16 %v656
        %v2308 = vunpack.c.l.b16 %v657
        %v2309 = vunpack.c.h.b16 %v657
        %v2310 = vunpack.c.l.b16 %v658
        %v2311 = vunpack.c.h.b16 %v658
        %v2312 = vunpack.c.l.b16 %v659
        %v2313 = vunpack.c.h.b16 %v659
        %v2314 = vunpack.c.l.b16 %v660
        %v2315 = vunpack.c.h.b16 %v660
        %v2316 = vunpack.c.l.b16 %v661
        %v2317 = vunpack.c.h.b16 %v661
        %v2318 = vunpack.c.l.b16 %v662
        %v2319 = vunpack.c.h.b16 %v662
        %v2320 = vunpack.c.l.b16 %v663
        %v2321 = vunpack.c.h.b16 %v663
        %v2322 = vunpack.c.l.b16 %v664
        %v2323 = vunpack.c.h.b16 %v664
        %v2324 = vunpack.c.l.b16 %v665
        %v2325 = vunpack.c.h.b16 %v665
        %v2326 = vunpack.c.l.b16 %v666
        %v2327 = vunpack.c.h.b16 %v666
        %v2328 = vunpack.c.l.b16 %v667
        %v2329 = vunpack.c.h.b16 %v667
        %v2330 = vunpack.c.l.b16 %v668
        %v2331 = vunpack.c.h.b16 %v668
        %v2332 = vunpack.c.l.b16 %v669
        %v2333 = vunpack.c.h.b16 %v669
        %v2334 = vunpack.c.l.b16 %v670
        %v2335 = vunpack.c.h.b16 %v670
        %v2336 = vunpack.c.l.b16 %v671
        %v2337 = vunpack.c.h.b16 %v671
        %v2338 = vunpack.c.l.b16 %v672
        %v2339 = vunpack.c.h.b16 %v672
        %v2340 = vunpack.c.l.b16 %v673
        %v2341 = vunpack.c.h.b16 %v673
        %v2342 = vunpack.c.l.b16 %v674
        %v2343 = vunpack.c.h.b16 %v674
        %v2344 = vunpack.c.l.b16 %v675
        %v2345 = vunpack.c.h.b16 %v675
        %v2346 = vunpack.c.l.b16 %v676
        %v2347 = vunpack.c.h.b16 %v676
        %v2348 = vunpack.c.l.b16 %v677
        %v2349 = vunpack.c.h.b16 %v677
        %v2350 = vunpack.c.l.b16 %v678
        %v2351 = vunpack.c.h.b16 %v678
        %v2352 = vunpack.c.l.b16 %v679
        %v2353 = vunpack.c.h.b16 %v679
        %v2354 = vunpack.c.l.b16 %v680
        %v2355 = vunpack.c.h.b16 %v680
        %v2356 = vunpack.c.l.b16 %v681
        %v2357 = vunpack.c.h.b16 %v681
        %v2358 = vunpack.c.l.b16 %v682
        %v2359 = vunpack.c.h.b16 %v682
        %v2360 = vunpack.c.l.b16 %v683
        %v2361 = vunpack.c.h.b16 %v683
        %v2362 = vunpack.c.l.b16 %v684
        %v2363 = vunpack.c.h.b16 %v684
        %v2364 = vunpack.c.l.b16 %v685
        %v2365 = vunpack.c.h.b16 %v685
        %v2366 = vunpack.c.l.b16 %v686
        %v2367 = vunpack.c.h.b16 %v686
        %v2368 = vunpack.c.l.b16 %v687
        %v2369 = vunpack.c.h.b16 %v687
        %v2370 = vunpack.c.l.b16 %v688
        %v2371 = vunpack.c.h.b16 %v688
        %v2372 = vunpack.c.l.b16 %v689
        %v2373 = vunpack.c.h.b16 %v689
        %v2374 = vunpack.c.l.b16 %v690
        %v2375 = vunpack.c.h.b16 %v690
        %v2376 = vunpack.c.l.b16 %v691
        %v2377 = vunpack.c.h.b16 %v691
        %v2378 = vunpack.c.l.b16 %v692
        %v2379 = vunpack.c.h.b16 %v692
        %v2380 = vunpack.c.l.b16 %v693
        %v2381 = vunpack.c.h.b16 %v693
        %v2382 = vunpack.c.l.b16 %v694
        %v2383 = vunpack.c.h.b16 %v694
        %v2384 = vunpack.c.l.b16 %v695
        %v2385 = vunpack.c.h.b16 %v695
        %v2386 = vunpack.c.l.b16 %v696
        %v2387 = vunpack.c.h.b16 %v696
        %v2388 = vunpack.c.l.b16 %v697
        %v2389 = vunpack.c.h.b16 %v697
        %v2390 = vunpack.c.l.b16 %v698
        %v2391 = vunpack.c.h.b16 %v698
        %v2392 = vunpack.c.l.b16 %v699
        %v2393 = vunpack.c.h.b16 %v699
        %v2394 = vunpack.c.l.b16 %v700
        %v2395 = vunpack.c.h.b16 %v700
        %v2396 = vunpack.c.l.b16 %v701
        %v2397 = vunpack.c.h.b16 %v701
        %v2398 = vunpack.c.l.b16 %v702
        %v2399 = vunpack.c.h.b16 %v702
        %v2400 = vunpack.c.l.b16 %v703
        %v2401 = vunpack.c.h.b16 %v703
        %v2402 = vunpack.c.l.b16 %v704
        %v2403 = vunpack.c.h.b16 %v704
        %v2404 = vunpack.c.l.b16 %v705
        %v2405 = vunpack.c.h.b16 %v705
        %v2406 = vunpack.c.l.b16 %v706
        %v2407 = vunpack.c.h.b16 %v706
        %v2408 = vunpack.c.l.b16 %v707
        %v2409 = vunpack.c.h.b16 %v707
        %v2410 = vunpack.c.l.b16 %v708
        %v2411 = vunpack.c.h.b16 %v708
        %v2412 = vunpack.c.l.b16 %v709
        %v2413 = vunpack.c.h.b16 %v709
        %v2414 = vunpack.c.l.b16 %v710
        %v2415 = vunpack.c.h.b16 %v710
        %v2416 = vunpack.c.l.b16 %v711
        %v2417 = vunpack.c.h.b16 %v711
        %v2418 = vunpack.c.l.b16 %v712
        %v2419 = vunpack.c.h.b16 %v712
        %v2420 = vunpack.c.l.b16 %v713
        %v2421 = vunpack.c.h.b16 %v713
        %v2422 = vunpack.c.l.b16 %v714
        %v2423 = vunpack.c.h.b16 %v714
        %v2424 = vunpack.c.l.b16 %v715
        %v2425 = vunpack.c.h.b16 %v715
        %v2426 = vunpack.c.l.b16 %v716
        %v2427 = vunpack.c.h.b16 %v716
        %v2428 = vunpack.c.l.b16 %v717
        %v2429 = vunpack.c.h.b16 %v717
        %v2430 = vunpack.c.l.b16 %v718
        %v2431 = vunpack.c.h.b16 %v718
        %v2432 = vunpack.c.l.b16 %v719
        %v2433 = vunpack.c.h.b16 %v719
        %v2434 = vunpack.c.l.b16 %v720
        %v2435 = vunpack.c.h.b16 %v720
        %v2436 = vunpack.c.l.b16 %v721
        %v2437 = vunpack.c.h.b16 %v721
        %v2438 = vunpack.c.l.b16 %v722
        %v2439 = vunpack.c.h.b16 %v722
        %v2440 = vunpack.c.l.b16 %v723
        %v2441 = vunpack.c.h.b16 %v723
        %v2442 = vunpack.c.l.b16 %v724
        %v2443 = vunpack.c.h.b16 %v724
        %v2444 = vunpack.c.l.b16 %v725
        %v2445 = vunpack.c.h.b16 %v725
        %v2446 = vunpack.c.l.b16 %v726
        %v2447 = vunpack.c.h.b16 %v726
        %v2448 = vunpack.c.l.b16 %v727
        %v2449 = vunpack.c.h.b16 %v727
        %v2450 = vunpack.c.l.b16 %v728
        %v2451 = vunpack.c.h.b16 %v728
        %v2452 = vunpack.c.l.b16 %v729
        %v2453 = vunpack.c.h.b16 %v729
        %v2454 = vunpack.c.l.b16 %v730
        %v2455 = vunpack.c.h.b16 %v730
        %v2456 = vunpack.c.l.b16 %v731
        %v2457 = vunpack.c.h.b16 %v731
        %v2458 = vunpack.c.l.b16 %v732
        %v2459 = vunpack.c.h.b16 %v732
        %v2460 = vunpack.c.l.b16 %v733
        %v2461 = vunpack.c.h.b16 %v733
        %v2462 = vunpack.c.l.b16 %v734
        %v2463 = vunpack.c.h.b16 %v734
        %v2464 = vunpack.c.l.b16 %v735
        %v2465 = vunpack.c.h.b16 %v735
        %v2466 = vunpack.c.l.b16 %v736
        %v2467 = vunpack.c.h.b16 %v736
        %v2468 = vunpack.c.l.b16 %v737
        %v2469 = vunpack.c.h.b16 %v737
        %v2470 = vunpack.c.l.b16 %v738
        %v2471 = vunpack.c.h.b16 %v738
        %v2472 = vunpack.c.l.b16 %v739
        %v2473 = vunpack.c.h.b16 %v739
        %v2474 = vunpack.c.l.b16 %v740
        %v2475 = vunpack.c.h.b16 %v740
        %v2476 = vunpack.c.l.b16 %v741
        %v2477 = vunpack.c.h.b16 %v741
        %v2478 = vunpack.c.l.b16 %v742
        %v2479 = vunpack.c.h.b16 %v742
        %v2480 = vunpack.c.l.b16 %v743
        %v2481 = vunpack.c.h.b16 %v743
        %v2482 = vunpack.c.l.b16 %v744
        %v2483 = vunpack.c.h.b16 %v744
        %v2484 = vunpack.c.l.b16 %v745
        %v2485 = vunpack.c.h.b16 %v745
        %v2486 = vunpack.c.l.b16 %v746
        %v2487 = vunpack.c.h.b16 %v746
        %v2488 = vunpack.c.l.b16 %v747
        %v2489 = vunpack.c.h.b16 %v747
        %v2490 = vunpack.c.l.b16 %v748
        %v2491 = vunpack.c.h.b16 %v748
        %v2492 = vunpack.c.l.b16 %v749
        %v2493 = vunpack.c.h.b16 %v749
        %v2494 = vunpack.c.l.b16 %v750
        %v2495 = vunpack.c.h.b16 %v750
        %v2496 = vunpack.c.l.b16 %v751
        %v2497 = vunpack.c.h.b16 %v751
        %v2498 = vunpack.c.l.b16 %v752
        %v2499 = vunpack.c.h.b16 %v752
        %v2500 = vunpack.c.l.b16 %v753
        %v2501 = vunpack.c.h.b16 %v753
        %v2502 = vunpack.c.l.b16 %v754
        %v2503 = vunpack.c.h.b16 %v754
        %v2504 = vunpack.c.l.b16 %v755
        %v2505 = vunpack.c.h.b16 %v755
        %v2506 = vunpack.c.l.b16 %v756
        %v2507 = vunpack.c.h.b16 %v756
        %v2508 = vunpack.c.l.b16 %v757
        %v2509 = vunpack.c.h.b16 %v757
        %v2510 = vunpack.c.l.b16 %v758
        %v2511 = vunpack.c.h.b16 %v758
        %v2512 = vunpack.c.l.b16 %v759
        %v2513 = vunpack.c.h.b16 %v759
        %v2514 = vunpack.c.l.b16 %v760
        %v2515 = vunpack.c.h.b16 %v760
        %v2516 = vunpack.c.l.b16 %v761
        %v2517 = vunpack.c.h.b16 %v761
        %v2518 = vunpack.c.l.b16 %v762
        %v2519 = vunpack.c.h.b16 %v762
        %v2520 = vunpack.c.l.b16 %v763
        %v2521 = vunpack.c.h.b16 %v763
        %v2522 = vunpack.c.l.b16 %v764
        %v2523 = vunpack.c.h.b16 %v764
        %v2524 = vunpack.c.l.b16 %v765
        %v2525 = vunpack.c.h.b16 %v765
        %v2526 = vunpack.c.l.b16 %v766
        %v2527 = vunpack.c.h.b16 %v766
        %v2528 = vunpack.c.l.b16 %v767
        %v2529 = vunpack.c.h.b16 %v767
        %v2530 = vunpack.c.l.b16 %v768
        %v2531 = vunpack.c.h.b16 %v768
        %v2532 = vunpack.c.l.b16 %v769
        %v2533 = vunpack.c.h.b16 %v769
        %v2534 = vunpack.c.l.b16 %v770
        %v2535 = vunpack.c.h.b16 %v770
        %v2536 = vunpack.c.l.b16 %v771
        %v2537 = vunpack.c.h.b16 %v771
        %v2538 = vunpack.c.l.b16 %v772
        %v2539 = vunpack.c.h.b16 %v772
        %v2540 = vunpack.c.l.b16 %v773
        %v2541 = vunpack.c.h.b16 %v773
        %v2542 = vunpack.c.l.b16 %v774
        %v2543 = vunpack.c.h.b16 %v774
        %v2544 = vunpack.c.l.b16 %v775
        %v2545 = vunpack.c.h.b16 %v775
        %v2546 = vunpack.c.l.b16 %v776
        %v2547 = vunpack.c.h.b16 %v776
        %v2548 = vunpack.c.l.b16 %v777
        %v2549 = vunpack.c.h.b16 %v777
        %v2550 = vunpack.c.l.b16 %v778
        %v2551 = vunpack.c.h.b16 %v778
        %v2552 = vunpack.c.l.b16 %v779
        %v2553 = vunpack.c.h.b16 %v779
        %v2554 = vunpack.c.l.b16 %v780
        %v2555 = vunpack.c.h.b16 %v780
        %v2556 = vunpack.c.l.b16 %v781
        %v2557 = vunpack.c.h.b16 %v781
        %v2558 = vunpack.c.l.b16 %v782
        %v2559 = vunpack.c.h.b16 %v782
        %v2560 = vunpack.c.l.b16 %v783
        %v2561 = vunpack.c.h.b16 %v783
        %v2562 = vunpack.c.l.b16 %v784
        %v2563 = vunpack.c.h.b16 %v784
        %v2564 = vunpack.c.l.b16 %v785
        %v2565 = vunpack.c.h.b16 %v785
        %v2566 = vunpack.c.l.b16 %v786
        %v2567 = vunpack.c.h.b16 %v786
        %v2568 = vunpack.c.l.b16 %v787
        %v2569 = vunpack.c.h.b16 %v787
        %v2570 = vunpack.c.l.b16 %v788
        %v2571 = vunpack.c.h.b16 %v788
        %v2572 = vunpack.c.l.b16 %v789
        %v2573 = vunpack.c.h.b16 %v789
        %v2574 = vunpack.c.l.b16 %v790
        %v2575 = vunpack.c.h.b16 %v790
        %v2576 = vunpack.c.l.b16 %v791
        %v2577 = vunpack.c.h.b16 %v791
        %v2578 = vunpack.c.l.b16 %v792
        %v2579 = vunpack.c.h.b16 %v792
        %v2580 = vunpack.c.l.b16 %v793
        %v2581 = vunpack.c.h.b16 %v793
        %v2582 = vunpack.c.l.b16 %v794
        %v2583 = vunpack.c.h.b16 %v794
        %v2584 = vunpack.c.l.b16 %v795
        %v2585 = vunpack.c.h.b16 %v795
        %v2586 = vunpack.c.l.b16 %v796
        %v2587 = vunpack.c.h.b16 %v796
        %v2588 = vunpack.c.l.b16 %v797
        %v2589 = vunpack.c.h.b16 %v797
        %v2590 = vunpack.c.l.b16 %v798
        %v2591 = vunpack.c.h.b16 %v798
        %v2592 = vunpack.c.l.b16 %v799
        %v2593 = vunpack.c.h.b16 %v799
        %v2594 = vunpack.c.l.b16 %v800
        %v2595 = vunpack.c.h.b16 %v800
        %v2596 = vunpack.c.l.b16 %v801
        %v2597 = vunpack.c.h.b16 %v801
        %v2598 = vunpack.c.l.b16 %v802
        %v2599 = vunpack.c.h.b16 %v802
        %v2600 = vunpack.c.l.b16 %v803
        %v2601 = vunpack.c.h.b16 %v803
        %v2602 = vunpack.c.l.b16 %v804
        %v2603 = vunpack.c.h.b16 %v804
        %v2604 = vunpack.c.l.b16 %v805
        %v2605 = vunpack.c.h.b16 %v805
        %v2606 = vunpack.c.l.b16 %v806
        %v2607 = vunpack.c.h.b16 %v806
        %v2608 = vunpack.c.l.b16 %v807
        %v2609 = vunpack.c.h.b16 %v807
        %v2610 = vunpack.c.l.b16 %v808
        %v2611 = vunpack.c.h.b16 %v808
        %v2612 = vunpack.c.l.b16 %v809
        %v2613 = vunpack.c.h.b16 %v809
        %v2614 = vunpack.c.l.b16 %v810
        %v2615 = vunpack.c.h.b16 %v810
        %v2616 = vunpack.c.l.b16 %v811
        %v2617 = vunpack.c.h.b16 %v811
        %v2618 = vunpack.c.l.b16 %v812
        %v2619 = vunpack.c.h.b16 %v812
        %v2620 = vunpack.c.l.b16 %v813
        %v2621 = vunpack.c.h.b16 %v813
        %v2622 = vunpack.c.l.b16 %v814
        %v2623 = vunpack.c.h.b16 %v814
        %v2624 = vunpack.c.l.b16 %v815
        %v2625 = vunpack.c.h.b16 %v815
        %v2626 = vunpack.c.l.b16 %v816
        %v2627 = vunpack.c.h.b16 %v816
        %v2628 = vunpack.c.l.b16 %v817
        %v2629 = vunpack.c.h.b16 %v817
        %v2630 = vunpack.c.l.b16 %v818
        %v2631 = vunpack.c.h.b16 %v818
        %v2632 = vunpack.c.l.b16 %v819
        %v2633 = vunpack.c.h.b16 %v819
        %v2634 = vunpack.c.l.b16 %v820
        %v2635 = vunpack.c.h.b16 %v820
        %v2636 = vunpack.c.l.b16 %v821
        %v2637 = vunpack.c.h.b16 %v821
        %v2638 = vunpack.c.l.b16 %v822
        %v2639 = vunpack.c.h.b16 %v822
        %v2640 = vunpack.c.l.b16 %v823
        %v2641 = vunpack.c.h.b16 %v823
        %v2642 = vunpack.c.l.b16 %v824
        %v2643 = vunpack.c.h.b16 %v824
        %v2644 = vunpack.c.l.b16 %v825
        %v2645 = vunpack.c.h.b16 %v825
        %v2646 = vunpack.c.l.b16 %v826
        %v2647 = vunpack.c.h.b16 %v826
        %v2648 = vunpack.c.l.b16 %v827
        %v2649 = vunpack.c.h.b16 %v827
        %v2650 = vunpack.c.l.b16 %v828
        %v2651 = vunpack.c.h.b16 %v828
        %v2652 = vunpack.c.l.b16 %v829
        %v2653 = vunpack.c.h.b16 %v829
        %v2654 = vunpack.c.l.b16 %v830
        %v2655 = vunpack.c.h.b16 %v830
        %v2656 = vunpack.c.l.b16 %v831
        %v2657 = vunpack.c.h.b16 %v831
        %v2658 = vunpack.c.l.b16 %v832
        %v2659 = vunpack.c.h.b16 %v832
        %v2660 = vunpack.c.l.b16 %v833
        %v2661 = vunpack.c.h.b16 %v833
        %v2662 = vunpack.c.l.b16 %v834
        %v2663 = vunpack.c.h.b16 %v834
        %v2664 = vunpack.c.l.b16 %v835
        %v2665 = vunpack.c.h.b16 %v835
        %v2666 = vunpack.c.l.b16 %v836
        %v2667 = vunpack.c.h.b16 %v836
        %v2668 = vunpack.c.l.b16 %v837
        %v2669 = vunpack.c.h.b16 %v837
        %v2670 = vunpack.c.l.b16 %v838
        %v2671 = vunpack.c.h.b16 %v838
        %v2672 = vunpack.c.l.b16 %v839
        %v2673 = vunpack.c.h.b16 %v839
        %v2674 = vunpack.c.l.b16 %v840
        %v2675 = vunpack.c.h.b16 %v840
        %v2676 = vunpack.c.l.b16 %v841
        %v2677 = vunpack.c.h.b16 %v841
        %v2678 = vunpack.c.l.b16 %v842
        %v2679 = vunpack.c.h.b16 %v842
        %v2680 = vunpack.c.l.b16 %v843
        %v2681 = vunpack.c.h.b16 %v843
        %v2682 = vunpack.c.l.b16 %v844
        %v2683 = vunpack.c.h.b16 %v844
        %v2684 = vunpack.c.l.b16 %v845
        %v2685 = vunpack.c.h.b16 %v845
        %v2686 = vunpack.c.l.b16 %v846
        %v2687 = vunpack.c.h.b16 %v846
        %v2688 = vunpack.c.l.b16 %v847
        %v2689 = vunpack.c.h.b16 %v847
        %v2690 = vunpack.c.l.b16 %v848
        %v2691 = vunpack.c.h.b16 %v848
        %v2692 = vunpack.c.l.b16 %v849
        %v2693 = vunpack.c.h.b16 %v849
        %v2694 = vunpack.c.l.b16 %v850
        %v2695 = vunpack.c.h.b16 %v850
        %v2696 = vunpack.c.l.b16 %v851
        %v2697 = vunpack.c.h.b16 %v851
        %v2698 = vunpack.c.l.b16 %v852
        %v2699 = vunpack.c.h.b16 %v852
        %v2700 = vunpack.c.l.b16 %v853
        %v2701 = vunpack.c.h.b16 %v853
        %v2702 = vunpack.c.l.b16 %v854
        %v2703 = vunpack.c.h.b16 %v854
        %v2704 = vunpack.c.l.b16 %v855
        %v2705 = vunpack.c.h.b16 %v855
        %v2706 = vunpack.c.l.b16 %v856
        %v2707 = vunpack.c.h.b16 %v856
        %v2708 = vunpack.c.l.b16 %v857
        %v2709 = vunpack.c.h.b16 %v857
        %v2710 = vunpack.c.l.b16 %v858
        %v2711 = vunpack.c.h.b16 %v858
        %v2712 = vunpack.c.l.b16 %v859
        %v2713 = vunpack.c.h.b16 %v859
        %v2714 = vunpack.c.l.b16 %v860
        %v2715 = vunpack.c.h.b16 %v860
        %v2716 = vunpack.c.l.b16 %v861
        %v2717 = vunpack.c.h.b16 %v861
        %v2718 = vunpack.c.l.b16 %v862
        %v2719 = vunpack.c.h.b16 %v862
        %v2720 = vunpack.c.l.b16 %v863
        %v2721 = vunpack.c.h.b16 %v863
        %v2722 = vunpack.c.l.b16 %v864
        %v2723 = vunpack.c.h.b16 %v864
        %v2724 = vunpack.c.l.b16 %v865
        %v2725 = vunpack.c.h.b16 %v865
        %v2726 = vunpack.c.l.b16 %v866
        %v2727 = vunpack.c.h.b16 %v866
        %v2728 = vunpack.c.l.b16 %v867
        %v2729 = vunpack.c.h.b16 %v867
        %v2730 = vunpack.c.l.b16 %v868
        %v2731 = vunpack.c.h.b16 %v868
        %v2732 = vunpack.c.l.b16 %v869
        %v2733 = vunpack.c.h.b16 %v869
        %v2734 = vunpack.c.l.b16 %v870
        %v2735 = vunpack.c.h.b16 %v870
        %v2736 = vunpack.c.l.b16 %v871
        %v2737 = vunpack.c.h.b16 %v871
        %v2738 = vunpack.c.l.b16 %v872
        %v2739 = vunpack.c.h.b16 %v872
        %v2740 = vunpack.c.l.b16 %v873
        %v2741 = vunpack.c.h.b16 %v873
        %v2742 = vunpack.c.l.b16 %v874
        %v2743 = vunpack.c.h.b16 %v874
        %v2744 = vunpack.c.l.b16 %v875
        %v2745 = vunpack.c.h.b16 %v875
        %v2746 = vunpack.c.l.b16 %v876
        %v2747 = vunpack.c.h.b16 %v876
        %v2748 = vunpack.c.l.b16 %v877
        %v2749 = vunpack.c.h.b16 %v877
        %v2750 = vunpack.c.l.b16 %v878
        %v2751 = vunpack.c.h.b16 %v878
        %v2752 = vunpack.c.l.b16 %v879
        %v2753 = vunpack.c.h.b16 %v879
        %v2754 = vunpack.c.l.b16 %v880
        %v2755 = vunpack.c.h.b16 %v880
        %v2756 = vunpack.c.l.b16 %v881
        %v2757 = vunpack.c.h.b16 %v881
        %v2758 = vunpack.c.l.b16 %v882
        %v2759 = vunpack.c.h.b16 %v882
        %v2760 = vunpack.c.l.b16 %v883
        %v2761 = vunpack.c.h.b16 %v883
        %v2762 = vunpack.c.l.b16 %v884
        %v2763 = vunpack.c.h.b16 %v884
        %v2764 = vunpack.c.l.b16 %v885
        %v2765 = vunpack.c.h.b16 %v885
        %v2766 = vunpack.c.l.b16 %v886
        %v2767 = vunpack.c.h.b16 %v886
        %v2768 = vunpack.c.l.b16 %v887
        %v2769 = vunpack.c.h.b16 %v887
        %v2770 = vunpack.c.l.b16 %v888
        %v2771 = vunpack.c.h.b16 %v888
        %v2772 = vunpack.c.l.b16 %v889
        %v2773 = vunpack.c.h.b16 %v889
        %v2774 = vunpack.c.l.b16 %v890
        %v2775 = vunpack.c.h.b16 %v890
        %v2776 = vunpack.c.l.b16 %v891
        %v2777 = vunpack.c.h.b16 %v891
        %v2778 = vunpack.c.l.b16 %v892
        %v2779 = vunpack.c.h.b16 %v892
        %v2780 = vunpack.c.l.b16 %v893
        %v2781 = vunpack.c.h.b16 %v893
        %v2782 = vunpack.c.l.b16 %v894
        %v2783 = vunpack.c.h.b16 %v894
        %v2784 = vunpack.c.l.b16 %v895
        %v2785 = vunpack.c.h.b16 %v895
        %v2786 = vunpack.c.l.b16 %v896
        %v2787 = vunpack.c.h.b16 %v896
        %v2788 = vunpack.c.l.b16 %v897
        %v2789 = vunpack.c.h.b16 %v897
        %v2790 = vunpack.c.l.b16 %v898
        %v2791 = vunpack.c.h.b16 %v898
        %v2792 = vunpack.c.l.b16 %v899
        %v2793 = vunpack.c.h.b16 %v899
        %v2794 = vunpack.c.l.b16 %v900
        %v2795 = vunpack.c.h.b16 %v900
        %v2796 = vunpack.c.l.b16 %v901
        %v2797 = vunpack.c.h.b16 %v901
        %v2798 = vunpack.c.l.b16 %v902
        %v2799 = vunpack.c.h.b16 %v902
        %v2800 = vunpack.c.l.b16 %v903
        %v2801 = vunpack.c.h.b16 %v903
        %v2802 = vpack.c.b16 %v2050, %v2034
        %v2803 = vpack.c.b16 %v2051, %v2035
        %v2804 = vpack.c.b16 %v2052, %v2036
        %v2805 = vpack.c.b16 %v2053, %v2037
        %v2806 = vpack.c.b16 %v2054, %v2038
        %v2807 = vpack.c.b16 %v2055, %v2039
        %v2808 = vpack.c.b16 %v2056, %v2040
        %v2809 = vpack.c.b16 %v2057, %v2041
        %v2810 = vpack.c.b16 %v2058, %v2042
        %v2811 = vpack.c.b16 %v2059, %v2043
        %v2812 = vpack.c.b16 %v2060, %v2044
        %v2813 = vpack.c.b16 %v2061, %v2045
        %v2814 = vpack.c.b16 %v2062, %v2046
        %v2815 = vpack.c.b16 %v2063, %v2047
        %v2816 = vpack.c.b16 %v2064, %v2048
        %v2817 = vpack.c.b16 %v2065, %v2049
        %v2818 = vpack.c.b16 %v2082, %v2066
        %v2819 = vpack.c.b16 %v2083, %v2067
        %v2820 = vpack.c.b16 %v2084, %v2068
        %v2821 = vpack.c.b16 %v2085, %v2069
        %v2822 = vpack.c.b16 %v2086, %v2070
        %v2823 = vpack.c.b16 %v2087, %v2071
        %v2824 = vpack.c.b16 %v2088, %v2072
        %v2825 = vpack.c.b16 %v2089, %v2073
        %v2826 = vpack.c.b16 %v2090, %v2074
        %v2827 = vpack.c.b16 %v2091, %v2075
        %v2828 = vpack.c.b16 %v2092, %v2076
        %v2829 = vpack.c.b16 %v2093, %v2077
        %v2830 = vpack.c.b16 %v2094, %v2078
        %v2831 = vpack.c.b16 %v2095, %v2079
        %v2832 = vpack.c.b16 %v2096, %v2080
        %v2833 = vpack.c.b16 %v2097, %v2081
        %v2834 = vpack.c.b16 %v2114, %v2098
        %v2835 = vpack.c.b16 %v2115, %v2099
        %v2836 = vpack.c.b16 %v2116, %v2100
        %v2837 = vpack.c.b16 %v2117, %v2101
        %v2838 = vpack.c.b16 %v2118, %v2102
        %v2839 = vpack.c.b16 %v2119, %v2103
        %v2840 = vpack.c.b16 %v2120, %v2104
        %v2841 = vpack.c.b16 %v2121, %v2105
        %v2842 = vpack.c.b16 %v2122, %v2106
        %v2843 = vpack.c.b16 %v2123, %v2107
        %v2844 = vpack.c.b16 %v2124, %v2108
        %v2845 = vpack.c.b16 %v2125, %v2109
        %v2846 = vpack.c.b16 %v2126, %v2110
        %v2847 = vpack.c.b16 %v2127, %v2111
        %v2848 = vpack.c.b16 %v2128, %v2112
        %v2849 = vpack.c.b16 %v2129, %v2113
        %v2850 = vpack.c.b16 %v2146, %v2130
        %v2851 = vpack.c.b16 %v2147, %v2131
        %v2852 = vpack.c.b16 %v2148, %v2132
        %v2853 = vpack.c.b16 %v2149, %v2133
        %v2854 = vpack.c.b16 %v2150, %v2134
        %v2855 = vpack.c.b16 %v2151, %v2135
        %v2856 = vpack.c.b16 %v2152, %v2136
        %v2857 = vpack.c.b16 %v2153, %v2137
        %v2858 = vpack.c.b16 %v2154, %v2138
        %v2859 = vpack.c.b16 %v2155, %v2139
        %v2860 = vpack.c.b16 %v2156, %v2140
        %v2861 = vpack.c.b16 %v2157, %v2141
        %v2862 = vpack.c.b16 %v2158, %v2142
        %v2863 = vpack.c.b16 %v2159, %v2143
        %v2864 = vpack.c.b16 %v2160, %v2144
        %v2865 = vpack.c.b16 %v2161, %v2145
        %v2866 = vpack.c.b16 %v2178, %v2162
        %v2867 = vpack.c.b16 %v2179, %v2163
        %v2868 = vpack.c.b16 %v2180, %v2164
        %v2869 = vpack.c.b16 %v2181, %v2165
        %v2870 = vpack.c.b16 %v2182, %v2166
        %v2871 = vpack.c.b16 %v2183, %v2167
        %v2872 = vpack.c.b16 %v2184, %v2168
        %v2873 = vpack.c.b16 %v2185, %v2169
        %v2874 = vpack.c.b16 %v2186, %v2170
        %v2875 = vpack.c.b16 %v2187, %v2171
        %v2876 = vpack.c.b16 %v2188, %v2172
        %v2877 = vpack.c.b16 %v2189, %v2173
        %v2878 = vpack.c.b16 %v2190, %v2174
        %v2879 = vpack.c.b16 %v2191, %v2175
        %v2880 = vpack.c.b16 %v2192, %v2176
        %v2881 = vpack.c.b16 %v2193, %v2177
        %v2882 = vpack.c.b16 %v2210, %v2194
        %v2883 = vpack.c.b16 %v2211, %v2195
        %v2884 = vpack.c.b16 %v2212, %v2196
        %v2885 = vpack.c.b16 %v2213, %v2197
        %v2886 = vpack.c.b16 %v2214, %v2198
        %v2887 = vpack.c.b16 %v2215, %v2199
        %v2888 = vpack.c.b16 %v2216, %v2200
        %v2889 = vpack.c.b16 %v2217, %v2201
        %v2890 = vpack.c.b16 %v2218, %v2202
        %v2891 = vpack.c.b16 %v2219, %v2203
        %v2892 = vpack.c.b16 %v2220, %v2204
        %v2893 = vpack.c.b16 %v2221, %v2205
        %v2894 = vpack.c.b16 %v2222, %v2206
        %v2895 = vpack.c.b16 %v2223, %v2207
        %v2896 = vpack.c.b16 %v2224, %v2208
        %v2897 = vpack.c.b16 %v2225, %v2209
        %v2898 = vpack.c.b16 %v2242, %v2226
        %v2899 = vpack.c.b16 %v2243, %v2227
        %v2900 = vpack.c.b16 %v2244, %v2228
        %v2901 = vpack.c.b16 %v2245, %v2229
        %v2902 = vpack.c.b16 %v2246, %v2230
        %v2903 = vpack.c.b16 %v2247, %v2231
        %v2904 = vpack.c.b16 %v2248, %v2232
        %v2905 = vpack.c.b16 %v2249, %v2233
        %v2906 = vpack.c.b16 %v2250, %v2234
        %v2907 = vpack.c.b16 %v2251, %v2235
        %v2908 = vpack.c.b16 %v2252, %v2236
        %v2909 = vpack.c.b16 %v2253, %v2237
        %v2910 = vpack.c.b16 %v2254, %v2238
        %v2911 = vpack.c.b16 %v2255, %v2239
        %v2912 = vpack.c.b16 %v2256, %v2240
        %v2913 = vpack.c.b16 %v2257, %v2241
        %v2914 = vpack.c.b16 %v2274, %v2258
        %v2915 = vpack.c.b16 %v2275, %v2259
        %v2916 = vpack.c.b16 %v2276, %v2260
        %v2917 = vpack.c.b16 %v2277, %v2261
        %v2918 = vpack.c.b16 %v2278, %v2262
        %v2919 = vpack.c.b16 %v2279, %v2263
        %v2920 = vpack.c.b16 %v2280, %v2264
        %v2921 = vpack.c.b16 %v2281, %v2265
        %v2922 = vpack.c.b16 %v2282, %v2266
        %v2923 = vpack.c.b16 %v2283, %v2267
        %v2924 = vpack.c.b16 %v2284, %v2268
        %v2925 = vpack.c.b16 %v2285, %v2269
        %v2926 = vpack.c.b16 %v2286, %v2270
        %v2927 = vpack.c.b16 %v2287, %v2271
        %v2928 = vpack.c.b16 %v2288, %v2272
        %v2929 = vpack.c.b16 %v2289, %v2273
        %v2930 = vpack.c.b16 %v2306, %v2290
        %v2931 = vpack.c.b16 %v2307, %v2291
        %v2932 = vpack.c.b16 %v2308, %v2292
        %v2933 = vpack.c.b16 %v2309, %v2293
        %v2934 = vpack.c.b16 %v2310, %v2294
        %v2935 = vpack.c.b16 %v2311, %v2295
        %v2936 = vpack.c.b16 %v2312, %v2296
        %v2937 = vpack.c.b16 %v2313, %v2297
        %v2938 = vpack.c.b16 %v2314, %v2298
        %v2939 = vpack.c.b16 %v2315, %v2299
        %v2940 = vpack.c.b16 %v2316, %v2300
        %v2941 = vpack.c.b16 %v2317, %v2301
        %v2942 = vpack.c.b16 %v2318, %v2302
        %v2943 = vpack.c.b16 %v2319, %v2303
        %v2944 = vpack.c.b16 %v2320, %v2304
        %v2945 = vpack.c.b16 %v2321, %v2305
        %v2946 = vpack.c.b16 %v2338, %v2322
        %v2947 = vpack.c.b16 %v2339, %v2323
        %v2948 = vpack.c.b16 %v2340, %v2324
        %v2949 = vpack.c.b16 %v2341, %v2325
        %v2950 = vpack.c.b16 %v2342, %v2326
        %v2951 = vpack.c.b16 %v2343, %v2327
        %v2952 = vpack.c.b16 %v2344, %v2328
        %v2953 = vpack.c.b16 %v2345, %v2329
        %v2954 = vpack.c.b16 %v2346, %v2330
        %v2955 = vpack.c.b16 %v2347, %v2331
        %v2956 = vpack.c.b16 %v2348, %v2332
        %v2957 = vpack.c.b16 %v2349, %v2333
        %v2958 = vpack.c.b16 %v2350, %v2334
        %v2959 = vpack.c.b16 %v2351, %v2335
        %v2960 = vpack.c.b16 %v2352, %v2336
        %v2961 = vpack.c.b16 %v2353, %v2337
        %v2962 = vpack.c.b16 %v2370, %v2354
        %v2963 = vpack.c.b16 %v2371, %v2355
        %v2964 = vpack.c.b16 %v2372, %v2356
        %v2965 = vpack.c.b16 %v2373, %v2357
        %v2966 = vpack.c.b16 %v2374, %v2358
        %v2967 = vpack.c.b16 %v2375, %v2359
        %v2968 = vpack.c.b16 %v2376, %v2360
        %v2969 = vpack.c.b16 %v2377, %v2361
        %v2970 = vpack.c.b16 %v2378, %v2362
        %v2971 = vpack.c.b16 %v2379, %v2363
        %v2972 = vpack.c.b16 %v2380, %v2364
        %v2973 = vpack.c.b16 %v2381, %v2365
        %v2974 = vpack.c.b16 %v2382, %v2366
        %v2975 = vpack.c.b16 %v2383, %v2367
        %v2976 = vpack.c.b16 %v2384, %v2368
        %v2977 = vpack.c.b16 %v2385, %v2369
        %v2978 = vpack.c.b16 %v2402, %v2386
        %v2979 = vpack.c.b16 %v2403, %v2387
        %v2980 = vpack.c.b16 %v2404, %v2388
        %v2981 = vpack.c.b16 %v2405, %v2389
        %v2982 = vpack.c.b16 %v2406, %v2390
        %v2983 = vpack.c.b16 %v2407, %v2391
        %v2984 = vpack.c.b16 %v2408, %v2392
        %v2985 = vpack.c.b16 %v2409, %v2393
        %v2986 = vpack.c.b16 %v2410, %v2394
        %v2987 = vpack.c.b16 %v2411, %v2395
        %v2988 = vpack.c.b16 %v2412, %v2396
        %v2989 = vpack.c.b16 %v2413, %v2397
        %v2990 = vpack.c.b16 %v2414, %v2398
        %v2991 = vpack.c.b16 %v2415, %v2399
        %v2992 = vpack.c.b16 %v2416, %v2400
        %v2993 = vpack.c.b16 %v2417, %v2401
        %v2994 = vpack.c.b16 %v2434, %v2418
        %v2995 = vpack.c.b16 %v2435, %v2419
        %v2996 = vpack.c.b16 %v2436, %v2420
        %v2997 = vpack.c.b16 %v2437, %v2421
        %v2998 = vpack.c.b16 %v2438, %v2422
        %v2999 = vpack.c.b16 %v2439, %v2423
        %v3000 = vpack.c.b16 %v2440, %v2424
        %v3001 = vpack.c.b16 %v2441, %v2425
        %v3002 = vpack.c.b16 %v2442, %v2426
        %v3003 = vpack.c.b16 %v2443, %v2427
        %v3004 = vpack.c.b16 %v2444, %v2428
        %v3005 = vpack.c.b16 %v2445, %v2429
        %v3006 = vpack.c.b16 %v2446, %v2430
        %v3007 = vpack.c.b16 %v2447, %v2431
        %v3008 = vpack.c.b16 %v2448, %v2432
        %v3009 = vpack.c.b16 %v2449, %v2433
        %v3010 = vpack.c.b16 %v2466, %v2450
        %v3011 = vpack.c.b16 %v2467, %v2451
        %v3012 = vpack.c.b16 %v2468, %v2452
        %v3013 = vpack.c.b16 %v2469, %v2453
        %v3014 = vpack.c.b16 %v2470, %v2454
        %v3015 = vpack.c.b16 %v2471, %v2455
        %v3016 = vpack.c.b16 %v2472, %v2456
        %v3017 = vpack.c.b16 %v2473, %v2457
        %v3018 = vpack.c.b16 %v2474, %v2458
        %v3019 = vpack.c.b16 %v2475, %v2459
        %v3020 = vpack.c.b16 %v2476, %v2460
        %v3021 = vpack.c.b16 %v2477, %v2461
        %v3022 = vpack.c.b16 %v2478, %v2462
        %v3023 = vpack.c.b16 %v2479, %v2463
        %v3024 = vpack.c.b16 %v2480, %v2464
        %v3025 = vpack.c.b16 %v2481, %v2465
        %v3026 = vpack.c.b16 %v2498, %v2482
        %v3027 = vpack.c.b16 %v2499, %v2483
        %v3028 = vpack.c.b16 %v2500, %v2484
        %v3029 = vpack.c.b16 %v2501, %v2485
        %v3030 = vpack.c.b16 %v2502, %v2486
        %v3031 = vpack.c.b16 %v2503, %v2487
        %v3032 = vpack.c.b16 %v2504, %v2488
        %v3033 = vpack.c.b16 %v2505, %v2489
        %v3034 = vpack.c.b16 %v2506, %v2490
        %v3035 = vpack.c.b16 %v2507, %v2491
        %v3036 = vpack.c.b16 %v2508, %v2492
        %v3037 = vpack.c.b16 %v2509, %v2493
        %v3038 = vpack.c.b16 %v2510, %v2494
        %v3039 = vpack.c.b16 %v2511, %v2495
        %v3040 = vpack.c.b16 %v2512, %v2496
        %v3041 = vpack.c.b16 %v2513, %v2497
        %v3042 = vpack.c.b16 %v2530, %v2514
        %v3043 = vpack.c.b16 %v2531, %v2515
        %v3044 = vpack.c.b16 %v2532, %v2516
        %v3045 = vpack.c.b16 %v2533, %v2517
        %v3046 = vpack.c.b16 %v2534, %v2518
        %v3047 = vpack.c.b16 %v2535, %v2519
        %v3048 = vpack.c.b16 %v2536, %v2520
        %v3049 = vpack.c.b16 %v2537, %v2521
        %v3050 = vpack.c.b16 %v2538, %v2522
        %v3051 = vpack.c.b16 %v2539, %v2523
        %v3052 = vpack.c.b16 %v2540, %v2524
        %v3053 = vpack.c.b16 %v2541, %v2525
        %v3054 = vpack.c.b16 %v2542, %v2526
        %v3055 = vpack.c.b16 %v2543, %v2527
        %v3056 = vpack.c.b16 %v2544, %v2528
        %v3057 = vpack.c.b16 %v2545, %v2529
        %v3058 = vpack.c.b16 %v2562, %v2546
        %v3059 = vpack.c.b16 %v2563, %v2547
        %v3060 = vpack.c.b16 %v2564, %v2548
        %v3061 = vpack.c.b16 %v2565, %v2549
        %v3062 = vpack.c.b16 %v2566, %v2550
        %v3063 = vpack.c.b16 %v2567, %v2551
        %v3064 = vpack.c.b16 %v2568, %v2552
        %v3065 = vpack.c.b16 %v2569, %v2553
        %v3066 = vpack.c.b16 %v2570, %v2554
        %v3067 = vpack.c.b16 %v2571, %v2555
        %v3068 = vpack.c.b16 %v2572, %v2556
        %v3069 = vpack.c.b16 %v2573, %v2557
        %v3070 = vpack.c.b16 %v2574, %v2558
        %v3071 = vpack.c.b16 %v2575, %v2559
        %v3072 = vpack.c.b16 %v2576, %v2560
        %v3073 = vpack.c.b16 %v2577, %v2561
        %v3074 = vpack.c.b16 %v2594, %v2578
        %v3075 = vpack.c.b16 %v2595, %v2579
        %v3076 = vpack.c.b16 %v2596, %v2580
        %v3077 = vpack.c.b16 %v2597, %v2581
        %v3078 = vpack.c.b16 %v2598, %v2582
        %v3079 = vpack.c.b16 %v2599, %v2583
        %v3080 = vpack.c.b16 %v2600, %v2584
        %v3081 = vpack.c.b16 %v2601, %v2585
        %v3082 = vpack.c.b16 %v2602, %v2586
        %v3083 = vpack.c.b16 %v2603, %v2587
        %v3084 = vpack.c.b16 %v2604, %v2588
        %v3085 = vpack.c.b16 %v2605, %v2589
        %v3086 = vpack.c.b16 %v2606, %v2590
        %v3087 = vpack.c.b16 %v2607, %v2591
        %v3088 = vpack.c.b16 %v2608, %v2592
        %v3089 = vpack.c.b16 %v2609, %v2593
        %v3090 = vpack.c.b16 %v2626, %v2610
        %v3091 = vpack.c.b16 %v2627, %v2611
        %v3092 = vpack.c.b16 %v2628, %v2612
        %v3093 = vpack.c.b16 %v2629, %v2613
        %v3094 = vpack.c.b16 %v2630, %v2614
        %v3095 = vpack.c.b16 %v2631, %v2615
        %v3096 = vpack.c.b16 %v2632, %v2616
        %v3097 = vpack.c.b16 %v2633, %v2617
        %v3098 = vpack.c.b16 %v2634, %v2618
        %v3099 = vpack.c.b16 %v2635, %v2619
        %v3100 = vpack.c.b16 %v2636, %v2620
        %v3101 = vpack.c.b16 %v2637, %v2621
        %v3102 = vpack.c.b16 %v2638, %v2622
        %v3103 = vpack.c.b16 %v2639, %v2623
        %v3104 = vpack.c.b16 %v2640, %v2624
        %v3105 = vpack.c.b16 %v2641, %v2625
        %v3106 = vpack.c.b16 %v2658, %v2642
        %v3107 = vpack.c.b16 %v2659, %v2643
        %v3108 = vpack.c.b16 %v2660, %v2644
        %v3109 = vpack.c.b16 %v2661, %v2645
        %v3110 = vpack.c.b16 %v2662, %v2646
        %v3111 = vpack.c.b16 %v2663, %v2647
        %v3112 = vpack.c.b16 %v2664, %v2648
        %v3113 = vpack.c.b16 %v2665, %v2649
        %v3114 = vpack.c.b16 %v2666, %v2650
        %v3115 = vpack.c.b16 %v2667, %v2651
        %v3116 = vpack.c.b16 %v2668, %v2652
        %v3117 = vpack.c.b16 %v2669, %v2653
        %v3118 = vpack.c.b16 %v2670, %v2654
        %v3119 = vpack.c.b16 %v2671, %v2655
        %v3120 = vpack.c.b16 %v2672, %v2656
        %v3121 = vpack.c.b16 %v2673, %v2657
        %v3122 = vpack.c.b16 %v2690, %v2674
        %v3123 = vpack.c.b16 %v2691, %v2675
        %v3124 = vpack.c.b16 %v2692, %v2676
        %v3125 = vpack.c.b16 %v2693, %v2677
        %v3126 = vpack.c.b16 %v2694, %v2678
        %v3127 = vpack.c.b16 %v2695, %v2679
        %v3128 = vpack.c.b16 %v2696, %v2680
        %v3129 = vpack.c.b16 %v2697, %v2681
        %v3130 = vpack.c.b16 %v2698, %v2682
        %v3131 = vpack.c.b16 %v2699, %v2683
        %v3132 = vpack.c.b16 %v2700, %v2684
        %v3133 = vpack.c.b16 %v2701, %v2685
        %v3134 = vpack.c.b16 %v2702, %v2686
        %v3135 = vpack.c.b16 %v2703, %v2687
        %v3136 = vpack.c.b16 %v2704, %v2688
        %v3137 = vpack.c.b16 %v2705, %v2689
        %v3138 = vpack.c.b16 %v2722, %v2706
        %v3139 = vpack.c.b16 %v2723, %v2707
        %v3140 = vpack.c.b16 %v2724, %v2708
        %v3141 = vpack.c.b16 %v2725, %v2709
        %v3142 = vpack.c.b16 %v2726, %v2710
        %v3143 = vpack.c.b16 %v2727, %v2711
        %v3144 = vpack.c.b16 %v2728, %v2712
        %v3145 = vpack.c.b16 %v2729, %v2713
        %v3146 = vpack.c.b16 %v2730, %v2714
        %v3147 = vpack.c.b16 %v2731, %v2715
        %v3148 = vpack.c.b16 %v2732, %v2716
        %v3149 = vpack.c.b16 %v2733, %v2717
        %v3150 = vpack.c.b16 %v2734, %v2718
        %v3151 = vpack.c.b16 %v2735, %v2719
        %v3152 = vpack.c.b16 %v2736, %v2720
        %v3153 = vpack.c.b16 %v2737, %v2721
        %v3154 = vpack.c.b16 %v2754, %v2738
        %v3155 = vpack.c.b16 %v2755, %v2739
        %v3156 = vpack.c.b16 %v2756, %v2740
        %v3157 = vpack.c.b16 %v2757, %v2741
        %v3158 = vpack.c.b16 %v2758, %v2742
        %v3159 = vpack.c.b16 %v2759, %v2743
        %v3160 = vpack.c.b16 %v2760, %v2744
        %v3161 = vpack.c.b16 %v2761, %v2745
        %v3162 = vpack.c.b16 %v2762, %v2746
        %v3163 = vpack.c.b16 %v2763, %v2747
        %v3164 = vpack.c.b16 %v2764, %v2748
        %v3165 = vpack.c.b16 %v2765, %v2749
        %v3166 = vpack.c.b16 %v2766, %v2750
        %v3167 = vpack.c.b16 %v2767, %v2751
        %v3168 = vpack.c.b16 %v2768, %v2752
        %v3169 = vpack.c.b16 %v2769, %v2753
        %v3170 = vpack.c.b16 %v2786, %v2770
        %v3171 = vpack.c.b16 %v2787, %v2771
        %v3172 = vpack.c.b16 %v2788, %v2772
        %v3173 = vpack.c.b16 %v2789, %v2773
        %v3174 = vpack.c.b16 %v2790, %v2774
        %v3175 = vpack.c.b16 %v2791, %v2775
        %v3176 = vpack.c.b16 %v2792, %v2776
        %v3177 = vpack.c.b16 %v2793, %v2777
        %v3178 = vpack.c.b16 %v2794, %v2778
        %v3179 = vpack.c.b16 %v2795, %v2779
        %v3180 = vpack.c.b16 %v2796, %v2780
        %v3181 = vpack.c.b16 %v2797, %v2781
        %v3182 = vpack.c.b16 %v2798, %v2782
        %v3183 = vpack.c.b16 %v2799, %v2783
        %v3184 = vpack.c.b16 %v2800, %v2784
        %v3185 = vpack.c.b16 %v2801, %v2785
        %3570 = vmatprep.subr.bf16.mxu0 %v2803
        %3571 = vmatpush1.bf16.msra.mxu0 %v2802
        %3572 = vmatprep.subr.bf16.mxu0 %v2819
        %3573 = vmatpush1.bf16.msra.mxu0 %v2818
        %3574 = vmatprep.subr.bf16.mxu0 %v2835
        %3575 = vmatpush1.bf16.msra.mxu0 %v2834
        %3576 = vmatprep.subr.bf16.mxu0 %v2851
        %3577 = vmatpush1.bf16.msra.mxu0 %v2850
        %3578 = vmatprep.subr.bf16.mxu0 %v2867
        %3579 = vmatpush1.bf16.msra.mxu0 %v2866
        %3580 = vmatprep.subr.bf16.mxu0 %v2883
        %3581 = vmatpush1.bf16.msra.mxu0 %v2882
        %3582 = vmatprep.subr.bf16.mxu0 %v2899
        %3583 = vmatpush1.bf16.msra.mxu0 %v2898
        %3584 = vmatprep.subr.bf16.mxu0 %v2915
        %3585 = vmatpush1.bf16.msra.mxu0 %v2914
        %3586 = vmatprep.subr.bf16.mxu0 %v2931
        %3587 = vmatpush1.bf16.msra.mxu0 %v2930
        %3588 = vmatprep.subr.bf16.mxu0 %v2947
        %3589 = vmatpush1.bf16.msra.mxu0 %v2946
        %3590 = vmatprep.subr.bf16.mxu0 %v2963
        %3591 = vmatpush1.bf16.msra.mxu0 %v2962
        %3592 = vmatprep.subr.bf16.mxu0 %v2979
        %3593 = vmatpush1.bf16.msra.mxu0 %v2978
        %3594 = vmatprep.subr.bf16.mxu0 %v2995
        %3595 = vmatpush1.bf16.msra.mxu0 %v2994
        %3596 = vmatprep.subr.bf16.mxu0 %v3011
        %3597 = vmatpush1.bf16.msra.mxu0 %v3010
        %3598 = vmatprep.subr.bf16.mxu0 %v3027
        %3599 = vmatpush1.bf16.msra.mxu0 %v3026
        %3600 = vmatprep.subr.bf16.mxu0 %v3043
        %3601 = vmatpush1.bf16.msra.mxu0 %v3042
        %3602 = vmatprep.mubr.bf16.mxu0 %v1627
        %3603 = vmatmul.mubr.bf16.gmra.mrb[0].mxu0 %v1626
        %v3604 = vpop.f32.mrb[0].mxu0
        %v3605 = vadd.f32 %v1514, %v3604
        %v3606 = vpop.f32.mrb[0].mxu0
        %v3607 = vadd.f32 %v1518, %v3606
        %v3608 = vpop.f32.mrb[0].mxu0
        %v3609 = vadd.f32 %v1514, %v3608
        %v3610 = vpop.f32.mrb[0].mxu0
        %v3611 = vadd.f32 %v1518, %v3610
        %3612 = vmatprep.mubr.bf16.mxu0 %v1630
        %3613 = vmatmul.mubr.bf16.gmra.mrb[0].mxu0 %v1629
        %v3614 = vpop.f32.mrb[0].mxu0
        %v3615 = vadd.f32 %v1514, %v3614
        %v3616 = vpop.f32.mrb[0].mxu0
        %v3617 = vadd.f32 %v1518, %v3616
        %v3618 = vpop.f32.mrb[0].mxu0
        %v3619 = vadd.f32 %v1514, %v3618
        %v3620 = vpop.f32.mrb[0].mxu0
        %v3621 = vadd.f32 %v1518, %v3620
        %3622 = vmatprep.mubr.bf16.mxu0 %v1633
        %3623 = vmatmul.mubr.bf16.gmra.mrb[0].mxu0 %v1632
        %v3624 = vpop.f32.mrb[0].mxu0
        %v3625 = vadd.f32 %v1514, %v3624
        %v3626 = vpop.f32.mrb[0].mxu0
        %v3627 = vadd.f32 %v1518, %v3626
        %v3628 = vpop.f32.mrb[0].mxu0
        %v3629 = vadd.f32 %v1514, %v3628
        %v3630 = vpop.f32.mrb[0].mxu0
        %v3631 = vadd.f32 %v1518, %v3630
        %3632 = vmatprep.mubr.bf16.mxu0 %v1636
        %3633 = vmatmul.mubr.bf16.gmra.mrb[0].mxu0 %v1635
        %v3634 = vpop.f32.mrb[0].mxu0
        %v3635 = vadd.f32 %v1514, %v3634
        %v3636 = vpop.f32.mrb[0].mxu0
        %v3637 = vadd.f32 %v1518, %v3636
        %v3638 = vpop.f32.mrb[0].mxu0
        %v3639 = vpop.f32.mrb[0].mxu0
        %3640 = vdwg.mxu0
        %3641 = vmatprep.subr.bf16.mxu0 %v3059
        %3642 = vmatpush1.bf16.msra.mxu0 %v3058
        %3643 = vmatprep.subr.bf16.mxu0 %v3075
        %3644 = vmatpush1.bf16.msra.mxu0 %v3074
        %3645 = vmatprep.subr.bf16.mxu0 %v3091
        %3646 = vmatpush1.bf16.msra.mxu0 %v3090
        %3647 = vmatprep.subr.bf16.mxu0 %v3107
        %3648 = vmatpush1.bf16.msra.mxu0 %v3106
        %3649 = vmatprep.subr.bf16.mxu0 %v3123
        %3650 = vmatpush1.bf16.msra.mxu0 %v3122
        %3651 = vmatprep.subr.bf16.mxu0 %v3139
        %3652 = vmatpush1.bf16.msra.mxu0 %v3138
        %3653 = vmatprep.subr.bf16.mxu0 %v3155
        %3654 = vmatpush1.bf16.msra.mxu0 %v3154
        %3655 = vmatprep.subr.bf16.mxu0 %v3171
        %3656 = vmatpush1.bf16.msra.mxu0 %v3170
        %3657 = vmatprep.subr.bf16.mxu0 0
        %3658 = vmatpush1.bf16.msra.mxu0 0
        %3659 = vmatprep.subr.bf16.mxu0 0
        %3660 = vmatpush1.bf16.msra.mxu0 0
        %3661 = vmatprep.subr.bf16.mxu0 0
        %3662 = vmatpush1.bf16.msra.mxu0 0
        %3663 = vmatprep.subr.bf16.mxu0 0
        %3664 = vmatpush1.bf16.msra.mxu0 0
        %3665 = vmatprep.subr.bf16.mxu0 0
        %3666 = vmatpush1.bf16.msra.mxu0 0
        %3667 = vmatprep.subr.bf16.mxu0 0
        %3668 = vmatpush1.bf16.msra.mxu0 0
        %3669 = vmatprep.subr.bf16.mxu0 0
        %3670 = vmatpush1.bf16.msra.mxu0 0
        %3671 = vmatprep.subr.bf16.mxu0 0
        %3672 = vmatpush1.bf16.msra.mxu0 0
        %3673 = vmatprep.mubr.bf16.mxu0 0
        %3674 = vmatmul.mubr.bf16.gmra.mrb[0].mxu0 %v1628
        %v3675 = vpop.f32.mrb[0].mxu0
        %v3676 = vadd.f32 %v3605, %v3675
        %v3677 = vpop.f32.mrb[0].mxu0
        %v3678 = vadd.f32 %v3607, %v3677
        %v3679 = vpop.f32.mrb[0].mxu0
        %v3680 = vadd.f32 %v3609, %v3679
        %v3681 = vpop.f32.mrb[0].mxu0
        %v3682 = vadd.f32 %v3611, %v3681
        %3683 = vmatprep.mubr.bf16.mxu0 0
        %3684 = vmatmul.mubr.bf16.gmra.mrb[0].mxu0 %v1631
        %v3685 = vpop.f32.mrb[0].mxu0
        %v3686 = vadd.f32 %v3615, %v3685
        %v3687 = vpop.f32.mrb[0].mxu0
        %v3688 = vadd.f32 %v3617, %v3687
        %v3689 = vpop.f32.mrb[0].mxu0
        %v3690 = vadd.f32 %v3619, %v3689
        %v3691 = vpop.f32.mrb[0].mxu0
        %v3692 = vadd.f32 %v3621, %v3691
        %3693 = vmatprep.mubr.bf16.mxu0 0
        %3694 = vmatmul.mubr.bf16.gmra.mrb[0].mxu0 %v1634
        %v3695 = vpop.f32.mrb[0].mxu0
        %v3696 = vadd.f32 %v3625, %v3695
        %v3697 = vpop.f32.mrb[0].mxu0
        %v3698 = vadd.f32 %v3627, %v3697
        %v3699 = vpop.f32.mrb[0].mxu0
        %v3700 = vadd.f32 %v3629, %v3699
        %v3701 = vpop.f32.mrb[0].mxu0
        %v3702 = vadd.f32 %v3631, %v3701
        %3703 = vmatprep.mubr.bf16.mxu0 0
        %3704 = vmatmul.mubr.bf16.gmra.mrb[0].mxu0 %v1637
        %v3705 = vpop.f32.mrb[0].mxu0
        %v3706 = vadd.f32 %v3635, %v3705
        %v3707 = vpop.f32.mrb[0].mxu0
        %v3708 = vadd.f32 %v3637, %v3707
        %v3709 = vpop.f32.mrb[0].mxu0
        %v3710 = vpop.f32.mrb[0].mxu0
        %3711 = vdwg.mxu0
        %3712 = vmatprep.subr.bf16.mxu0 %v2805
        %3713 = vmatpush1.bf16.msra.mxu0 %v2804
        %3714 = vmatprep.subr.bf16.mxu0 %v2821
        %3715 = vmatpush1.bf16.msra.mxu0 %v2820
        %3716 = vmatprep.subr.bf16.mxu0 %v2837
        %3717 = vmatpush1.bf16.msra.mxu0 %v2836
        %3718 = vmatprep.subr.bf16.mxu0 %v2853
        %3719 = vmatpush1.bf16.msra.mxu0 %v2852
        %3720 = vmatprep.subr.bf16.mxu0 %v2869
        %3721 = vmatpush1.bf16.msra.mxu0 %v2868
        %3722 = vmatprep.subr.bf16.mxu0 %v2885
        %3723 = vmatpush1.bf16.msra.mxu0 %v2884
        %3724 = vmatprep.subr.bf16.mxu0 %v2901
        %3725 = vmatpush1.bf16.msra.mxu0 %v2900
        %3726 = vmatprep.subr.bf16.mxu0 %v2917
        %3727 = vmatpush1.bf16.msra.mxu0 %v2916
        %3728 = vmatprep.subr.bf16.mxu0 %v2933
        %3729 = vmatpush1.bf16.msra.mxu0 %v2932
        %3730 = vmatprep.subr.bf16.mxu0 %v2949
        %3731 = vmatpush1.bf16.msra.mxu0 %v2948
        %3732 = vmatprep.subr.bf16.mxu0 %v2965
        %3733 = vmatpush1.bf16.msra.mxu0 %v2964
        %3734 = vmatprep.subr.bf16.mxu0 %v2981
        %3735 = vmatpush1.bf16.msra.mxu0 %v2980
        %3736 = vmatprep.subr.bf16.mxu0 %v2997
        %3737 = vmatpush1.bf16.msra.mxu0 %v2996
        %3738 = vmatprep.subr.bf16.mxu0 %v3013
        %3739 = vmatpush1.bf16.msra.mxu0 %v3012
        %3740 = vmatprep.subr.bf16.mxu0 %v3029
        %3741 = vmatpush1.bf16.msra.mxu0 %v3028
        %3742 = vmatprep.subr.bf16.mxu0 %v3045
        %3743 = vmatpush1.bf16.msra.mxu0 %v3044
        %3744 = vmatprep.mubr.bf16.mxu0 %v1627
        %3745 = vmatmul.mubr.bf16.gmra.mrb[0].mxu0 %v1626
        %v3746 = vpop.f32.mrb[0].mxu0
        %v3747 = vadd.f32 %v1522, %v3746
        %v3748 = vpop.f32.mrb[0].mxu0
        %v3749 = vadd.f32 %v1526, %v3748
        %v3750 = vpop.f32.mrb[0].mxu0
        %v3751 = vadd.f32 %v1522, %v3750
        %v3752 = vpop.f32.mrb[0].mxu0
        %v3753 = vadd.f32 %v1526, %v3752
        %3754 = vmatprep.mubr.bf16.mxu0 %v1630
        %3755 = vmatmul.mubr.bf16.gmra.mrb[0].mxu0 %v1629
        %v3756 = vpop.f32.mrb[0].mxu0
        %v3757 = vadd.f32 %v1522, %v3756
        %v3758 = vpop.f32.mrb[0].mxu0
        %v3759 = vadd.f32 %v1526, %v3758
        %v3760 = vpop.f32.mrb[0].mxu0
        %v3761 = vadd.f32 %v1522, %v3760
        %v3762 = vpop.f32.mrb[0].mxu0
        %v3763 = vadd.f32 %v1526, %v3762
        %3764 = vmatprep.mubr.bf16.mxu0 %v1633
        %3765 = vmatmul.mubr.bf16.gmra.mrb[0].mxu0 %v1632
        %v3766 = vpop.f32.mrb[0].mxu0
        %v3767 = vadd.f32 %v1522, %v3766
        %v3768 = vpop.f32.mrb[0].mxu0
        %v3769 = vadd.f32 %v1526, %v3768
        %v3770 = vpop.f32.mrb[0].mxu0
        %v3771 = vadd.f32 %v1522, %v3770
        %v3772 = vpop.f32.mrb[0].mxu0
        %v3773 = vadd.f32 %v1526, %v3772
        %3774 = vmatprep.mubr.bf16.mxu0 %v1636
        %3775 = vmatmul.mubr.bf16.gmra.mrb[0].mxu0 %v1635
        %v3776 = vpop.f32.mrb[0].mxu0
        %v3777 = vadd.f32 %v1522, %v3776
        %v3778 = vpop.f32.mrb[0].mxu0
        %v3779 = vadd.f32 %v1526, %v3778
        %v3780 = vpop.f32.mrb[0].mxu0
        %v3781 = vpop.f32.mrb[0].mxu0
        %3782 = vdwg.mxu0
        %3783 = vmatprep.subr.bf16.mxu0 %v3061
        %3784 = vmatpush1.bf16.msra.mxu0 %v3060
        %3785 = vmatprep.subr.bf16.mxu0 %v3077
        %3786 = vmatpush1.bf16.msra.mxu0 %v3076
        %3787 = vmatprep.subr.bf16.mxu0 %v3093
        %3788 = vmatpush1.bf16.msra.mxu0 %v3092
        %3789 = vmatprep.subr.bf16.mxu0 %v3109
        %3790 = vmatpush1.bf16.msra.mxu0 %v3108
        %3791 = vmatprep.subr.bf16.mxu0 %v3125
        %3792 = vmatpush1.bf16.msra.mxu0 %v3124
        %3793 = vmatprep.subr.bf16.mxu0 %v3141
        %3794 = vmatpush1.bf16.msra.mxu0 %v3140
        %3795 = vmatprep.subr.bf16.mxu0 %v3157
        %3796 = vmatpush1.bf16.msra.mxu0 %v3156
        %3797 = vmatprep.subr.bf16.mxu0 %v3173
        %3798 = vmatpush1.bf16.msra.mxu0 %v3172
        %3799 = vmatprep.subr.bf16.mxu0 0
        %3800 = vmatpush1.bf16.msra.mxu0 0
        %3801 = vmatprep.subr.bf16.mxu0 0
        %3802 = vmatpush1.bf16.msra.mxu0 0
        %3803 = vmatprep.subr.bf16.mxu0 0
        %3804 = vmatpush1.bf16.msra.mxu0 0
        %3805 = vmatprep.subr.bf16.mxu0 0
        %3806 = vmatpush1.bf16.msra.mxu0 0
        %3807 = vmatprep.subr.bf16.mxu0 0
        %3808 = vmatpush1.bf16.msra.mxu0 0
        %3809 = vmatprep.subr.bf16.mxu0 0
        %3810 = vmatpush1.bf16.msra.mxu0 0
        %3811 = vmatprep.subr.bf16.mxu0 0
        %3812 = vmatpush1.bf16.msra.mxu0 0
        %3813 = vmatprep.subr.bf16.mxu0 0
        %3814 = vmatpush1.bf16.msra.mxu0 0
        %3815 = vmatprep.mubr.bf16.mxu0 0
        %3816 = vmatmul.mubr.bf16.gmra.mrb[0].mxu0 %v1628
        %v3817 = vpop.f32.mrb[0].mxu0
        %v3818 = vadd.f32 %v3747, %v3817
        %v3819 = vpop.f32.mrb[0].mxu0
        %v3820 = vadd.f32 %v3749, %v3819
        %v3821 = vpop.f32.mrb[0].mxu0
        %v3822 = vadd.f32 %v3751, %v3821
        %v3823 = vpop.f32.mrb[0].mxu0
        %v3824 = vadd.f32 %v3753, %v3823
        %3825 = vmatprep.mubr.bf16.mxu0 0
        %3826 = vmatmul.mubr.bf16.gmra.mrb[0].mxu0 %v1631
        %v3827 = vpop.f32.mrb[0].mxu0
        %v3828 = vadd.f32 %v3757, %v3827
        %v3829 = vpop.f32.mrb[0].mxu0
        %v3830 = vadd.f32 %v3759, %v3829
        %v3831 = vpop.f32.mrb[0].mxu0
        %v3832 = vadd.f32 %v3761, %v3831
        %v3833 = vpop.f32.mrb[0].mxu0
        %v3834 = vadd.f32 %v3763, %v3833
        %3835 = vmatprep.mubr.bf16.mxu0 0
        %3836 = vmatmul.mubr.bf16.gmra.mrb[0].mxu0 %v1634
        %v3837 = vpop.f32.mrb[0].mxu0
        %v3838 = vadd.f32 %v3767, %v3837
        %v3839 = vpop.f32.mrb[0].mxu0
        %v3840 = vadd.f32 %v3769, %v3839
        %v3841 = vpop.f32.mrb[0].mxu0
        %v3842 = vadd.f32 %v3771, %v3841
        %v3843 = vpop.f32.mrb[0].mxu0
        %v3844 = vadd.f32 %v3773, %v3843
        %3845 = vmatprep.mubr.bf16.mxu0 0
        %3846 = vmatmul.mubr.bf16.gmra.mrb[0].mxu0 %v1637
        %v3847 = vpop.f32.mrb[0].mxu0
        %v3848 = vadd.f32 %v3777, %v3847
        %v3849 = vpop.f32.mrb[0].mxu0
        %v3850 = vadd.f32 %v3779, %v3849
        %v3851 = vpop.f32.mrb[0].mxu0
        %v3852 = vpop.f32.mrb[0].mxu0
        %3853 = vdwg.mxu0
        %3854 = vmatprep.subr.bf16.mxu0 %v2807
        %3855 = vmatpush1.bf16.msra.mxu0 %v2806
        %3856 = vmatprep.subr.bf16.mxu0 %v2823
        %3857 = vmatpush1.bf16.msra.mxu0 %v2822
        %3858 = vmatprep.subr.bf16.mxu0 %v2839
        %3859 = vmatpush1.bf16.msra.mxu0 %v2838
        %3860 = vmatprep.subr.bf16.mxu0 %v2855
        %3861 = vmatpush1.bf16.msra.mxu0 %v2854
        %3862 = vmatprep.subr.bf16.mxu0 %v2871
        %3863 = vmatpush1.bf16.msra.mxu0 %v2870
        %3864 = vmatprep.subr.bf16.mxu0 %v2887
        %3865 = vmatpush1.bf16.msra.mxu0 %v2886
        %3866 = vmatprep.subr.bf16.mxu0 %v2903
        %3867 = vmatpush1.bf16.msra.mxu0 %v2902
        %3868 = vmatprep.subr.bf16.mxu0 %v2919
        %3869 = vmatpush1.bf16.msra.mxu0 %v2918
        %3870 = vmatprep.subr.bf16.mxu0 %v2935
        %3871 = vmatpush1.bf16.msra.mxu0 %v2934
        %3872 = vmatprep.subr.bf16.mxu0 %v2951
        %3873 = vmatpush1.bf16.msra.mxu0 %v2950
        %3874 = vmatprep.subr.bf16.mxu0 %v2967
        %3875 = vmatpush1.bf16.msra.mxu0 %v2966
        %3876 = vmatprep.subr.bf16.mxu0 %v2983
        %3877 = vmatpush1.bf16.msra.mxu0 %v2982
        %3878 = vmatprep.subr.bf16.mxu0 %v2999
        %3879 = vmatpush1.bf16.msra.mxu0 %v2998
        %3880 = vmatprep.subr.bf16.mxu0 %v3015
        %3881 = vmatpush1.bf16.msra.mxu0 %v3014
        %3882 = vmatprep.subr.bf16.mxu0 %v3031
        %3883 = vmatpush1.bf16.msra.mxu0 %v3030
        %3884 = vmatprep.subr.bf16.mxu0 %v3047
        %3885 = vmatpush1.bf16.msra.mxu0 %v3046
        %3886 = vmatprep.mubr.bf16.mxu0 %v1627
        %3887 = vmatmul.mubr.bf16.gmra.mrb[0].mxu0 %v1626
        %v3888 = vpop.f32.mrb[0].mxu0
        %v3889 = vadd.f32 %v1530, %v3888
        %v3890 = vpop.f32.mrb[0].mxu0
        %v3891 = vadd.f32 %v1534, %v3890
        %v3892 = vpop.f32.mrb[0].mxu0
        %v3893 = vadd.f32 %v1530, %v3892
        %v3894 = vpop.f32.mrb[0].mxu0
        %v3895 = vadd.f32 %v1534, %v3894
        %3896 = vmatprep.mubr.bf16.mxu0 %v1630
        %3897 = vmatmul.mubr.bf16.gmra.mrb[0].mxu0 %v1629
        %v3898 = vpop.f32.mrb[0].mxu0
        %v3899 = vadd.f32 %v1530, %v3898
        %v3900 = vpop.f32.mrb[0].mxu0
        %v3901 = vadd.f32 %v1534, %v3900
        %v3902 = vpop.f32.mrb[0].mxu0
        %v3903 = vadd.f32 %v1530, %v3902
        %v3904 = vpop.f32.mrb[0].mxu0
        %v3905 = vadd.f32 %v1534, %v3904
        %3906 = vmatprep.mubr.bf16.mxu0 %v1633
        %3907 = vmatmul.mubr.bf16.gmra.mrb[0].mxu0 %v1632
        %v3908 = vpop.f32.mrb[0].mxu0
        %v3909 = vadd.f32 %v1530, %v3908
        %v3910 = vpop.f32.mrb[0].mxu0
        %v3911 = vadd.f32 %v1534, %v3910
        %v3912 = vpop.f32.mrb[0].mxu0
        %v3913 = vadd.f32 %v1530, %v3912
        %v3914 = vpop.f32.mrb[0].mxu0
        %v3915 = vadd.f32 %v1534, %v3914
        %3916 = vmatprep.mubr.bf16.mxu0 %v1636
        %3917 = vmatmul.mubr.bf16.gmra.mrb[0].mxu0 %v1635
        %v3918 = vpop.f32.mrb[0].mxu0
        %v3919 = vadd.f32 %v1530, %v3918
        %v3920 = vpop.f32.mrb[0].mxu0
        %v3921 = vadd.f32 %v1534, %v3920
        %v3922 = vpop.f32.mrb[0].mxu0
        %v3923 = vpop.f32.mrb[0].mxu0
        %3924 = vdwg.mxu0
        %3925 = vmatprep.subr.bf16.mxu0 %v3063
        %3926 = vmatpush1.bf16.msra.mxu0 %v3062
        %3927 = vmatprep.subr.bf16.mxu0 %v3079
        %3928 = vmatpush1.bf16.msra.mxu0 %v3078
        %3929 = vmatprep.subr.bf16.mxu0 %v3095
        %3930 = vmatpush1.bf16.msra.mxu0 %v3094
        %3931 = vmatprep.subr.bf16.mxu0 %v3111
        %3932 = vmatpush1.bf16.msra.mxu0 %v3110
        %3933 = vmatprep.subr.bf16.mxu0 %v3127
        %3934 = vmatpush1.bf16.msra.mxu0 %v3126
        %3935 = vmatprep.subr.bf16.mxu0 %v3143
        %3936 = vmatpush1.bf16.msra.mxu0 %v3142
        %3937 = vmatprep.subr.bf16.mxu0 %v3159
        %3938 = vmatpush1.bf16.msra.mxu0 %v3158
        %3939 = vmatprep.subr.bf16.mxu0 %v3175
        %3940 = vmatpush1.bf16.msra.mxu0 %v3174
        %3941 = vmatprep.subr.bf16.mxu0 0
        %3942 = vmatpush1.bf16.msra.mxu0 0
        %3943 = vmatprep.subr.bf16.mxu0 0
        %3944 = vmatpush1.bf16.msra.mxu0 0
        %3945 = vmatprep.subr.bf16.mxu0 0
        %3946 = vmatpush1.bf16.msra.mxu0 0
        %3947 = vmatprep.subr.bf16.mxu0 0
        %3948 = vmatpush1.bf16.msra.mxu0 0
        %3949 = vmatprep.subr.bf16.mxu0 0
        %3950 = vmatpush1.bf16.msra.mxu0 0
        %3951 = vmatprep.subr.bf16.mxu0 0
        %3952 = vmatpush1.bf16.msra.mxu0 0
        %3953 = vmatprep.subr.bf16.mxu0 0
        %3954 = vmatpush1.bf16.msra.mxu0 0
        %3955 = vmatprep.subr.bf16.mxu0 0
        %3956 = vmatpush1.bf16.msra.mxu0 0
        %3957 = vmatprep.mubr.bf16.mxu0 0
        %3958 = vmatmul.mubr.bf16.gmra.mrb[0].mxu0 %v1628
        %v3959 = vpop.f32.mrb[0].mxu0
        %v3960 = vadd.f32 %v3889, %v3959
        %v3961 = vpop.f32.mrb[0].mxu0
        %v3962 = vadd.f32 %v3891, %v3961
        %v3963 = vpop.f32.mrb[0].mxu0
        %v3964 = vadd.f32 %v3893, %v3963
        %v3965 = vpop.f32.mrb[0].mxu0
        %v3966 = vadd.f32 %v3895, %v3965
        %3967 = vmatprep.mubr.bf16.mxu0 0
        %3968 = vmatmul.mubr.bf16.gmra.mrb[0].mxu0 %v1631
        %v3969 = vpop.f32.mrb[0].mxu0
        %v3970 = vadd.f32 %v3899, %v3969
        %v3971 = vpop.f32.mrb[0].mxu0
        %v3972 = vadd.f32 %v3901, %v3971
        %v3973 = vpop.f32.mrb[0].mxu0
        %v3974 = vadd.f32 %v3903, %v3973
        %v3975 = vpop.f32.mrb[0].mxu0
        %v3976 = vadd.f32 %v3905, %v3975
        %3977 = vmatprep.mubr.bf16.mxu0 0
        %3978 = vmatmul.mubr.bf16.gmra.mrb[0].mxu0 %v1634
        %v3979 = vpop.f32.mrb[0].mxu0
        %v3980 = vadd.f32 %v3909, %v3979
        %v3981 = vpop.f32.mrb[0].mxu0
        %v3982 = vadd.f32 %v3911, %v3981
        %v3983 = vpop.f32.mrb[0].mxu0
        %v3984 = vadd.f32 %v3913, %v3983
        %v3985 = vpop.f32.mrb[0].mxu0
        %v3986 = vadd.f32 %v3915, %v3985
        %3987 = vmatprep.mubr.bf16.mxu0 0
        %3988 = vmatmul.mubr.bf16.gmra.mrb[0].mxu0 %v1637
        %v3989 = vpop.f32.mrb[0].mxu0
        %v3990 = vadd.f32 %v3919, %v3989
        %v3991 = vpop.f32.mrb[0].mxu0
        %v3992 = vadd.f32 %v3921, %v3991
        %v3993 = vpop.f32.mrb[0].mxu0
        %v3994 = vpop.f32.mrb[0].mxu0
        %3995 = vdwg.mxu0
        %3996 = vmatprep.subr.bf16.mxu0 %v2809
        %3997 = vmatpush1.bf16.msra.mxu0 %v2808
        %3998 = vmatprep.subr.bf16.mxu0 %v2825
        %3999 = vmatpush1.bf16.msra.mxu0 %v2824
        %4000 = vmatprep.subr.bf16.mxu0 %v2841
        %4001 = vmatpush1.bf16.msra.mxu0 %v2840
        %4002 = vmatprep.subr.bf16.mxu0 %v2857
        %4003 = vmatpush1.bf16.msra.mxu0 %v2856
        %4004 = vmatprep.subr.bf16.mxu0 %v2873
        %4005 = vmatpush1.bf16.msra.mxu0 %v2872
        %4006 = vmatprep.subr.bf16.mxu0 %v2889
        %4007 = vmatpush1.bf16.msra.mxu0 %v2888
        %4008 = vmatprep.subr.bf16.mxu0 %v2905
        %4009 = vmatpush1.bf16.msra.mxu0 %v2904
        %4010 = vmatprep.subr.bf16.mxu0 %v2921
        %4011 = vmatpush1.bf16.msra.mxu0 %v2920
        %4012 = vmatprep.subr.bf16.mxu0 %v2937
        %4013 = vmatpush1.bf16.msra.mxu0 %v2936
        %4014 = vmatprep.subr.bf16.mxu0 %v2953
        %4015 = vmatpush1.bf16.msra.mxu0 %v2952
        %4016 = vmatprep.subr.bf16.mxu0 %v2969
        %4017 = vmatpush1.bf16.msra.mxu0 %v2968
        %4018 = vmatprep.subr.bf16.mxu0 %v2985
        %4019 = vmatpush1.bf16.msra.mxu0 %v2984
        %4020 = vmatprep.subr.bf16.mxu0 %v3001
        %4021 = vmatpush1.bf16.msra.mxu0 %v3000
        %4022 = vmatprep.subr.bf16.mxu0 %v3017
        %4023 = vmatpush1.bf16.msra.mxu0 %v3016
        %4024 = vmatprep.subr.bf16.mxu0 %v3033
        %4025 = vmatpush1.bf16.msra.mxu0 %v3032
        %4026 = vmatprep.subr.bf16.mxu0 %v3049
        %4027 = vmatpush1.bf16.msra.mxu0 %v3048
        %4028 = vmatprep.mubr.bf16.mxu0 %v1627
        %4029 = vmatmul.mubr.bf16.gmra.mrb[0].mxu0 %v1626
        %v4030 = vpop.f32.mrb[0].mxu0
        %v4031 = vadd.f32 %v1538, %v4030
        %v4032 = vpop.f32.mrb[0].mxu0
        %v4033 = vadd.f32 %v1542, %v4032
        %v4034 = vpop.f32.mrb[0].mxu0
        %v4035 = vadd.f32 %v1538, %v4034
        %v4036 = vpop.f32.mrb[0].mxu0
        %v4037 = vadd.f32 %v1542, %v4036
        %4038 = vmatprep.mubr.bf16.mxu0 %v1630
        %4039 = vmatmul.mubr.bf16.gmra.mrb[0].mxu0 %v1629
        %v4040 = vpop.f32.mrb[0].mxu0
        %v4041 = vadd.f32 %v1538, %v4040
        %v4042 = vpop.f32.mrb[0].mxu0
        %v4043 = vadd.f32 %v1542, %v4042
        %v4044 = vpop.f32.mrb[0].mxu0
        %v4045 = vadd.f32 %v1538, %v4044
        %v4046 = vpop.f32.mrb[0].mxu0
        %v4047 = vadd.f32 %v1542, %v4046
        %4048 = vmatprep.mubr.bf16.mxu0 %v1633
        %4049 = vmatmul.mubr.bf16.gmra.mrb[0].mxu0 %v1632
        %v4050 = vpop.f32.mrb[0].mxu0
        %v4051 = vadd.f32 %v1538, %v4050
        %v4052 = vpop.f32.mrb[0].mxu0
        %v4053 = vadd.f32 %v1542, %v4052
        %v4054 = vpop.f32.mrb[0].mxu0
        %v4055 = vadd.f32 %v1538, %v4054
        %v4056 = vpop.f32.mrb[0].mxu0
        %v4057 = vadd.f32 %v1542, %v4056
        %4058 = vmatprep.mubr.bf16.mxu0 %v1636
        %4059 = vmatmul.mubr.bf16.gmra.mrb[0].mxu0 %v1635
        %v4060 = vpop.f32.mrb[0].mxu0
        %v4061 = vadd.f32 %v1538, %v4060
        %v4062 = vpop.f32.mrb[0].mxu0
        %v4063 = vadd.f32 %v1542, %v4062
        %v4064 = vpop.f32.mrb[0].mxu0
        %v4065 = vpop.f32.mrb[0].mxu0
        %4066 = vdwg.mxu0
        %4067 = vmatprep.subr.bf16.mxu0 %v3065
        %4068 = vmatpush1.bf16.msra.mxu0 %v3064
        %4069 = vmatprep.subr.bf16.mxu0 %v3081
        %4070 = vmatpush1.bf16.msra.mxu0 %v3080
        %4071 = vmatprep.subr.bf16.mxu0 %v3097
        %4072 = vmatpush1.bf16.msra.mxu0 %v3096
        %4073 = vmatprep.subr.bf16.mxu0 %v3113
        %4074 = vmatpush1.bf16.msra.mxu0 %v3112
        %4075 = vmatprep.subr.bf16.mxu0 %v3129
        %4076 = vmatpush1.bf16.msra.mxu0 %v3128
        %4077 = vmatprep.subr.bf16.mxu0 %v3145
        %4078 = vmatpush1.bf16.msra.mxu0 %v3144
        %4079 = vmatprep.subr.bf16.mxu0 %v3161
        %4080 = vmatpush1.bf16.msra.mxu0 %v3160
        %4081 = vmatprep.subr.bf16.mxu0 %v3177
        %4082 = vmatpush1.bf16.msra.mxu0 %v3176
        %4083 = vmatprep.subr.bf16.mxu0 0
        %4084 = vmatpush1.bf16.msra.mxu0 0
        %4085 = vmatprep.subr.bf16.mxu0 0
        %4086 = vmatpush1.bf16.msra.mxu0 0
        %4087 = vmatprep.subr.bf16.mxu0 0
        %4088 = vmatpush1.bf16.msra.mxu0 0
        %4089 = vmatprep.subr.bf16.mxu0 0
        %4090 = vmatpush1.bf16.msra.mxu0 0
        %4091 = vmatprep.subr.bf16.mxu0 0
        %4092 = vmatpush1.bf16.msra.mxu0 0
        %4093 = vmatprep.subr.bf16.mxu0 0
        %4094 = vmatpush1.bf16.msra.mxu0 0
        %4095 = vmatprep.subr.bf16.mxu0 0
        %4096 = vmatpush1.bf16.msra.mxu0 0
        %4097 = vmatprep.subr.bf16.mxu0 0
        %4098 = vmatpush1.bf16.msra.mxu0 0
        %4099 = vmatprep.mubr.bf16.mxu0 0
        %4100 = vmatmul.mubr.bf16.gmra.mrb[0].mxu0 %v1628
        %v4101 = vpop.f32.mrb[0].mxu0
        %v4102 = vadd.f32 %v4031, %v4101
        %v4103 = vpop.f32.mrb[0].mxu0
        %v4104 = vadd.f32 %v4033, %v4103
        %v4105 = vpop.f32.mrb[0].mxu0
        %v4106 = vadd.f32 %v4035, %v4105
        %v4107 = vpop.f32.mrb[0].mxu0
        %v4108 = vadd.f32 %v4037, %v4107
        %4109 = vmatprep.mubr.bf16.mxu0 0
        %4110 = vmatmul.mubr.bf16.gmra.mrb[0].mxu0 %v1631
        %v4111 = vpop.f32.mrb[0].mxu0
        %v4112 = vadd.f32 %v4041, %v4111
        %v4113 = vpop.f32.mrb[0].mxu0
        %v4114 = vadd.f32 %v4043, %v4113
        %v4115 = vpop.f32.mrb[0].mxu0
        %v4116 = vadd.f32 %v4045, %v4115
        %v4117 = vpop.f32.mrb[0].mxu0
        %v4118 = vadd.f32 %v4047, %v4117
        %4119 = vmatprep.mubr.bf16.mxu0 0
        %4120 = vmatmul.mubr.bf16.gmra.mrb[0].mxu0 %v1634
        %v4121 = vpop.f32.mrb[0].mxu0
        %v4122 = vadd.f32 %v4051, %v4121
        %v4123 = vpop.f32.mrb[0].mxu0
        %v4124 = vadd.f32 %v4053, %v4123
        %v4125 = vpop.f32.mrb[0].mxu0
        %v4126 = vadd.f32 %v4055, %v4125
        %v4127 = vpop.f32.mrb[0].mxu0
        %v4128 = vadd.f32 %v4057, %v4127
        %4129 = vmatprep.mubr.bf16.mxu0 0
        %4130 = vmatmul.mubr.bf16.gmra.mrb[0].mxu0 %v1637
        %v4131 = vpop.f32.mrb[0].mxu0
        %v4132 = vadd.f32 %v4061, %v4131
        %v4133 = vpop.f32.mrb[0].mxu0
        %v4134 = vadd.f32 %v4063, %v4133
        %v4135 = vpop.f32.mrb[0].mxu0
        %v4136 = vpop.f32.mrb[0].mxu0
        %4137 = vdwg.mxu0
        %4138 = vmatprep.subr.bf16.mxu0 %v2811
        %4139 = vmatpush1.bf16.msra.mxu0 %v2810
        %4140 = vmatprep.subr.bf16.mxu0 %v2827
        %4141 = vmatpush1.bf16.msra.mxu0 %v2826
        %4142 = vmatprep.subr.bf16.mxu0 %v2843
        %4143 = vmatpush1.bf16.msra.mxu0 %v2842
        %4144 = vmatprep.subr.bf16.mxu0 %v2859
        %4145 = vmatpush1.bf16.msra.mxu0 %v2858
        %4146 = vmatprep.subr.bf16.mxu0 %v2875
        %4147 = vmatpush1.bf16.msra.mxu0 %v2874
        %4148 = vmatprep.subr.bf16.mxu0 %v2891
        %4149 = vmatpush1.bf16.msra.mxu0 %v2890
        %4150 = vmatprep.subr.bf16.mxu0 %v2907
        %4151 = vmatpush1.bf16.msra.mxu0 %v2906
        %4152 = vmatprep.subr.bf16.mxu0 %v2923
        %4153 = vmatpush1.bf16.msra.mxu0 %v2922
        %4154 = vmatprep.subr.bf16.mxu0 %v2939
        %4155 = vmatpush1.bf16.msra.mxu0 %v2938
        %4156 = vmatprep.subr.bf16.mxu0 %v2955
        %4157 = vmatpush1.bf16.msra.mxu0 %v2954
        %4158 = vmatprep.subr.bf16.mxu0 %v2971
        %4159 = vmatpush1.bf16.msra.mxu0 %v2970
        %4160 = vmatprep.subr.bf16.mxu0 %v2987
        %4161 = vmatpush1.bf16.msra.mxu0 %v2986
        %4162 = vmatprep.subr.bf16.mxu0 %v3003
        %4163 = vmatpush1.bf16.msra.mxu0 %v3002
        %4164 = vmatprep.subr.bf16.mxu0 %v3019
        %4165 = vmatpush1.bf16.msra.mxu0 %v3018
        %4166 = vmatprep.subr.bf16.mxu0 %v3035
        %4167 = vmatpush1.bf16.msra.mxu0 %v3034
        %4168 = vmatprep.subr.bf16.mxu0 %v3051
        %4169 = vmatpush1.bf16.msra.mxu0 %v3050
        %4170 = vmatprep.mubr.bf16.mxu0 %v1627
        %4171 = vmatmul.mubr.bf16.gmra.mrb[0].mxu0 %v1626
        %v4172 = vpop.f32.mrb[0].mxu0
        %v4173 = vadd.f32 %v1546, %v4172
        %v4174 = vpop.f32.mrb[0].mxu0
        %v4175 = vadd.f32 %v1550, %v4174
        %v4176 = vpop.f32.mrb[0].mxu0
        %v4177 = vadd.f32 %v1546, %v4176
        %v4178 = vpop.f32.mrb[0].mxu0
        %v4179 = vadd.f32 %v1550, %v4178
        %4180 = vmatprep.mubr.bf16.mxu0 %v1630
        %4181 = vmatmul.mubr.bf16.gmra.mrb[0].mxu0 %v1629
        %v4182 = vpop.f32.mrb[0].mxu0
        %v4183 = vadd.f32 %v1546, %v4182
        %v4184 = vpop.f32.mrb[0].mxu0
        %v4185 = vadd.f32 %v1550, %v4184
        %v4186 = vpop.f32.mrb[0].mxu0
        %v4187 = vadd.f32 %v1546, %v4186
        %v4188 = vpop.f32.mrb[0].mxu0
        %v4189 = vadd.f32 %v1550, %v4188
        %4190 = vmatprep.mubr.bf16.mxu0 %v1633
        %4191 = vmatmul.mubr.bf16.gmra.mrb[0].mxu0 %v1632
        %v4192 = vpop.f32.mrb[0].mxu0
        %v4193 = vadd.f32 %v1546, %v4192
        %v4194 = vpop.f32.mrb[0].mxu0
        %v4195 = vadd.f32 %v1550, %v4194
        %v4196 = vpop.f32.mrb[0].mxu0
        %v4197 = vadd.f32 %v1546, %v4196
        %v4198 = vpop.f32.mrb[0].mxu0
        %v4199 = vadd.f32 %v1550, %v4198
        %4200 = vmatprep.mubr.bf16.mxu0 %v1636
        %4201 = vmatmul.mubr.bf16.gmra.mrb[0].mxu0 %v1635
        %v4202 = vpop.f32.mrb[0].mxu0
        %v4203 = vadd.f32 %v1546, %v4202
        %v4204 = vpop.f32.mrb[0].mxu0
        %v4205 = vadd.f32 %v1550, %v4204
        %v4206 = vpop.f32.mrb[0].mxu0
        %v4207 = vpop.f32.mrb[0].mxu0
        %4208 = vdwg.mxu0
        %4209 = vmatprep.subr.bf16.mxu0 %v3067
        %4210 = vmatpush1.bf16.msra.mxu0 %v3066
        %4211 = vmatprep.subr.bf16.mxu0 %v3083
        %4212 = vmatpush1.bf16.msra.mxu0 %v3082
        %4213 = vmatprep.subr.bf16.mxu0 %v3099
        %4214 = vmatpush1.bf16.msra.mxu0 %v3098
        %4215 = vmatprep.subr.bf16.mxu0 %v3115
        %4216 = vmatpush1.bf16.msra.mxu0 %v3114
        %4217 = vmatprep.subr.bf16.mxu0 %v3131
        %4218 = vmatpush1.bf16.msra.mxu0 %v3130
        %4219 = vmatprep.subr.bf16.mxu0 %v3147
        %4220 = vmatpush1.bf16.msra.mxu0 %v3146
        %4221 = vmatprep.subr.bf16.mxu0 %v3163
        %4222 = vmatpush1.bf16.msra.mxu0 %v3162
        %4223 = vmatprep.subr.bf16.mxu0 %v3179
        %4224 = vmatpush1.bf16.msra.mxu0 %v3178
        %4225 = vmatprep.subr.bf16.mxu0 0
        %4226 = vmatpush1.bf16.msra.mxu0 0
        %4227 = vmatprep.subr.bf16.mxu0 0
        %4228 = vmatpush1.bf16.msra.mxu0 0
        %4229 = vmatprep.subr.bf16.mxu0 0
        %4230 = vmatpush1.bf16.msra.mxu0 0
        %4231 = vmatprep.subr.bf16.mxu0 0
        %4232 = vmatpush1.bf16.msra.mxu0 0
        %4233 = vmatprep.subr.bf16.mxu0 0
        %4234 = vmatpush1.bf16.msra.mxu0 0
        %4235 = vmatprep.subr.bf16.mxu0 0
        %4236 = vmatpush1.bf16.msra.mxu0 0
        %4237 = vmatprep.subr.bf16.mxu0 0
        %4238 = vmatpush1.bf16.msra.mxu0 0
        %4239 = vmatprep.subr.bf16.mxu0 0
        %4240 = vmatpush1.bf16.msra.mxu0 0
        %4241 = vmatprep.mubr.bf16.mxu0 0
        %4242 = vmatmul.mubr.bf16.gmra.mrb[0].mxu0 %v1628
        %v4243 = vpop.f32.mrb[0].mxu0
        %v4244 = vadd.f32 %v4173, %v4243
        %v4245 = vpop.f32.mrb[0].mxu0
        %v4246 = vadd.f32 %v4175, %v4245
        %v4247 = vpop.f32.mrb[0].mxu0
        %v4248 = vadd.f32 %v4177, %v4247
        %v4249 = vpop.f32.mrb[0].mxu0
        %v4250 = vadd.f32 %v4179, %v4249
        %4251 = vmatprep.mubr.bf16.mxu0 0
        %4252 = vmatmul.mubr.bf16.gmra.mrb[0].mxu0 %v1631
        %v4253 = vpop.f32.mrb[0].mxu0
        %v4254 = vadd.f32 %v4183, %v4253
        %v4255 = vpop.f32.mrb[0].mxu0
        %v4256 = vadd.f32 %v4185, %v4255
        %v4257 = vpop.f32.mrb[0].mxu0
        %v4258 = vadd.f32 %v4187, %v4257
        %v4259 = vpop.f32.mrb[0].mxu0
        %v4260 = vadd.f32 %v4189, %v4259
        %4261 = vmatprep.mubr.bf16.mxu0 0
        %4262 = vmatmul.mubr.bf16.gmra.mrb[0].mxu0 %v1634
        %v4263 = vpop.f32.mrb[0].mxu0
        %v4264 = vadd.f32 %v4193, %v4263
        %v4265 = vpop.f32.mrb[0].mxu0
        %v4266 = vadd.f32 %v4195, %v4265
        %v4267 = vpop.f32.mrb[0].mxu0
        %v4268 = vadd.f32 %v4197, %v4267
        %v4269 = vpop.f32.mrb[0].mxu0
        %v4270 = vadd.f32 %v4199, %v4269
        %4271 = vmatprep.mubr.bf16.mxu0 0
        %4272 = vmatmul.mubr.bf16.gmra.mrb[0].mxu0 %v1637
        %v4273 = vpop.f32.mrb[0].mxu0
        %v4274 = vadd.f32 %v4203, %v4273
        %v4275 = vpop.f32.mrb[0].mxu0
        %v4276 = vadd.f32 %v4205, %v4275
        %v4277 = vpop.f32.mrb[0].mxu0
        %v4278 = vpop.f32.mrb[0].mxu0
        %4279 = vdwg.mxu0
        %4280 = vmatprep.subr.bf16.mxu0 %v2813
        %4281 = vmatpush1.bf16.msra.mxu0 %v2812
        %4282 = vmatprep.subr.bf16.mxu0 %v2829
        %4283 = vmatpush1.bf16.msra.mxu0 %v2828
        %4284 = vmatprep.subr.bf16.mxu0 %v2845
        %4285 = vmatpush1.bf16.msra.mxu0 %v2844
        %4286 = vmatprep.subr.bf16.mxu0 %v2861
        %4287 = vmatpush1.bf16.msra.mxu0 %v2860
        %4288 = vmatprep.subr.bf16.mxu0 %v2877
        %4289 = vmatpush1.bf16.msra.mxu0 %v2876
        %4290 = vmatprep.subr.bf16.mxu0 %v2893
        %4291 = vmatpush1.bf16.msra.mxu0 %v2892
        %4292 = vmatprep.subr.bf16.mxu0 %v2909
        %4293 = vmatpush1.bf16.msra.mxu0 %v2908
        %4294 = vmatprep.subr.bf16.mxu0 %v2925
        %4295 = vmatpush1.bf16.msra.mxu0 %v2924
        %4296 = vmatprep.subr.bf16.mxu0 %v2941
        %4297 = vmatpush1.bf16.msra.mxu0 %v2940
        %4298 = vmatprep.subr.bf16.mxu0 %v2957
        %4299 = vmatpush1.bf16.msra.mxu0 %v2956
        %4300 = vmatprep.subr.bf16.mxu0 %v2973
        %4301 = vmatpush1.bf16.msra.mxu0 %v2972
        %4302 = vmatprep.subr.bf16.mxu0 %v2989
        %4303 = vmatpush1.bf16.msra.mxu0 %v2988
        %4304 = vmatprep.subr.bf16.mxu0 %v3005
        %4305 = vmatpush1.bf16.msra.mxu0 %v3004
        %4306 = vmatprep.subr.bf16.mxu0 %v3021
        %4307 = vmatpush1.bf16.msra.mxu0 %v3020
        %4308 = vmatprep.subr.bf16.mxu0 %v3037
        %4309 = vmatpush1.bf16.msra.mxu0 %v3036
        %4310 = vmatprep.subr.bf16.mxu0 %v3053
        %4311 = vmatpush1.bf16.msra.mxu0 %v3052
        %4312 = vmatprep.mubr.bf16.mxu0 %v1627
        %4313 = vmatmul.mubr.bf16.gmra.mrb[0].mxu0 %v1626
        %v4314 = vpop.f32.mrb[0].mxu0
        %v4315 = vadd.f32 %v1554, %v4314
        %v4316 = vpop.f32.mrb[0].mxu0
        %v4317 = vadd.f32 %v1558, %v4316
        %v4318 = vpop.f32.mrb[0].mxu0
        %v4319 = vadd.f32 %v1554, %v4318
        %v4320 = vpop.f32.mrb[0].mxu0
        %v4321 = vadd.f32 %v1558, %v4320
        %4322 = vmatprep.mubr.bf16.mxu0 %v1630
        %4323 = vmatmul.mubr.bf16.gmra.mrb[0].mxu0 %v1629
        %v4324 = vpop.f32.mrb[0].mxu0
        %v4325 = vadd.f32 %v1554, %v4324
        %v4326 = vpop.f32.mrb[0].mxu0
        %v4327 = vadd.f32 %v1558, %v4326
        %v4328 = vpop.f32.mrb[0].mxu0
        %v4329 = vadd.f32 %v1554, %v4328
        %v4330 = vpop.f32.mrb[0].mxu0
        %v4331 = vadd.f32 %v1558, %v4330
        %4332 = vmatprep.mubr.bf16.mxu0 %v1633
        %4333 = vmatmul.mubr.bf16.gmra.mrb[0].mxu0 %v1632
        %v4334 = vpop.f32.mrb[0].mxu0
        %v4335 = vadd.f32 %v1554, %v4334
        %v4336 = vpop.f32.mrb[0].mxu0
        %v4337 = vadd.f32 %v1558, %v4336
        %v4338 = vpop.f32.mrb[0].mxu0
        %v4339 = vadd.f32 %v1554, %v4338
        %v4340 = vpop.f32.mrb[0].mxu0
        %v4341 = vadd.f32 %v1558, %v4340
        %4342 = vmatprep.mubr.bf16.mxu0 %v1636
        %4343 = vmatmul.mubr.bf16.gmra.mrb[0].mxu0 %v1635
        %v4344 = vpop.f32.mrb[0].mxu0
        %v4345 = vadd.f32 %v1554, %v4344
        %v4346 = vpop.f32.mrb[0].mxu0
        %v4347 = vadd.f32 %v1558, %v4346
        %v4348 = vpop.f32.mrb[0].mxu0
        %v4349 = vpop.f32.mrb[0].mxu0
        %4350 = vdwg.mxu0
        %4351 = vmatprep.subr.bf16.mxu0 %v3069
        %4352 = vmatpush1.bf16.msra.mxu0 %v3068
        %4353 = vmatprep.subr.bf16.mxu0 %v3085
        %4354 = vmatpush1.bf16.msra.mxu0 %v3084
        %4355 = vmatprep.subr.bf16.mxu0 %v3101
        %4356 = vmatpush1.bf16.msra.mxu0 %v3100
        %4357 = vmatprep.subr.bf16.mxu0 %v3117
        %4358 = vmatpush1.bf16.msra.mxu0 %v3116
        %4359 = vmatprep.subr.bf16.mxu0 %v3133
        %4360 = vmatpush1.bf16.msra.mxu0 %v3132
        %4361 = vmatprep.subr.bf16.mxu0 %v3149
        %4362 = vmatpush1.bf16.msra.mxu0 %v3148
        %4363 = vmatprep.subr.bf16.mxu0 %v3165
        %4364 = vmatpush1.bf16.msra.mxu0 %v3164
        %4365 = vmatprep.subr.bf16.mxu0 %v3181
        %4366 = vmatpush1.bf16.msra.mxu0 %v3180
        %4367 = vmatprep.subr.bf16.mxu0 0
        %4368 = vmatpush1.bf16.msra.mxu0 0
        %4369 = vmatprep.subr.bf16.mxu0 0
        %4370 = vmatpush1.bf16.msra.mxu0 0
        %4371 = vmatprep.subr.bf16.mxu0 0
        %4372 = vmatpush1.bf16.msra.mxu0 0
        %4373 = vmatprep.subr.bf16.mxu0 0
        %4374 = vmatpush1.bf16.msra.mxu0 0
        %4375 = vmatprep.subr.bf16.mxu0 0
        %4376 = vmatpush1.bf16.msra.mxu0 0
        %4377 = vmatprep.subr.bf16.mxu0 0
        %4378 = vmatpush1.bf16.msra.mxu0 0
        %4379 = vmatprep.subr.bf16.mxu0 0
        %4380 = vmatpush1.bf16.msra.mxu0 0
        %4381 = vmatprep.subr.bf16.mxu0 0
        %4382 = vmatpush1.bf16.msra.mxu0 0
        %4383 = vmatprep.mubr.bf16.mxu0 0
        %4384 = vmatmul.mubr.bf16.gmra.mrb[0].mxu0 %v1628
        %v4385 = vpop.f32.mrb[0].mxu0
        %v4386 = vadd.f32 %v4315, %v4385
        %v4387 = vpop.f32.mrb[0].mxu0
        %v4388 = vadd.f32 %v4317, %v4387
        %v4389 = vpop.f32.mrb[0].mxu0
        %v4390 = vadd.f32 %v4319, %v4389
        %v4391 = vpop.f32.mrb[0].mxu0
        %v4392 = vadd.f32 %v4321, %v4391
        %4393 = vmatprep.mubr.bf16.mxu0 0
        %4394 = vmatmul.mubr.bf16.gmra.mrb[0].mxu0 %v1631
        %v4395 = vpop.f32.mrb[0].mxu0
        %v4396 = vadd.f32 %v4325, %v4395
        %v4397 = vpop.f32.mrb[0].mxu0
        %v4398 = vadd.f32 %v4327, %v4397
        %v4399 = vpop.f32.mrb[0].mxu0
        %v4400 = vadd.f32 %v4329, %v4399
        %v4401 = vpop.f32.mrb[0].mxu0
        %v4402 = vadd.f32 %v4331, %v4401
        %4403 = vmatprep.mubr.bf16.mxu0 0
        %4404 = vmatmul.mubr.bf16.gmra.mrb[0].mxu0 %v1634
        %v4405 = vpop.f32.mrb[0].mxu0
        %v4406 = vadd.f32 %v4335, %v4405
        %v4407 = vpop.f32.mrb[0].mxu0
        %v4408 = vadd.f32 %v4337, %v4407
        %v4409 = vpop.f32.mrb[0].mxu0
        %v4410 = vadd.f32 %v4339, %v4409
        %v4411 = vpop.f32.mrb[0].mxu0
        %v4412 = vadd.f32 %v4341, %v4411
        %4413 = vmatprep.mubr.bf16.mxu0 0
        %4414 = vmatmul.mubr.bf16.gmra.mrb[0].mxu0 %v1637
        %v4415 = vpop.f32.mrb[0].mxu0
        %v4416 = vadd.f32 %v4345, %v4415
        %v4417 = vpop.f32.mrb[0].mxu0
        %v4418 = vadd.f32 %v4347, %v4417
        %v4419 = vpop.f32.mrb[0].mxu0
        %v4420 = vpop.f32.mrb[0].mxu0
        %4421 = vdwg.mxu0
        %4422 = vmatprep.subr.bf16.mxu0 %v2815
        %4423 = vmatpush1.bf16.msra.mxu0 %v2814
        %4424 = vmatprep.subr.bf16.mxu0 %v2831
        %4425 = vmatpush1.bf16.msra.mxu0 %v2830
        %4426 = vmatprep.subr.bf16.mxu0 %v2847
        %4427 = vmatpush1.bf16.msra.mxu0 %v2846
        %4428 = vmatprep.subr.bf16.mxu0 %v2863
        %4429 = vmatpush1.bf16.msra.mxu0 %v2862
        %4430 = vmatprep.subr.bf16.mxu0 %v2879
        %4431 = vmatpush1.bf16.msra.mxu0 %v2878
        %4432 = vmatprep.subr.bf16.mxu0 %v2895
        %4433 = vmatpush1.bf16.msra.mxu0 %v2894
        %4434 = vmatprep.subr.bf16.mxu0 %v2911
        %4435 = vmatpush1.bf16.msra.mxu0 %v2910
        %4436 = vmatprep.subr.bf16.mxu0 %v2927
        %4437 = vmatpush1.bf16.msra.mxu0 %v2926
        %4438 = vmatprep.subr.bf16.mxu0 %v2943
        %4439 = vmatpush1.bf16.msra.mxu0 %v2942
        %4440 = vmatprep.subr.bf16.mxu0 %v2959
        %4441 = vmatpush1.bf16.msra.mxu0 %v2958
        %4442 = vmatprep.subr.bf16.mxu0 %v2975
        %4443 = vmatpush1.bf16.msra.mxu0 %v2974
        %4444 = vmatprep.subr.bf16.mxu0 %v2991
        %4445 = vmatpush1.bf16.msra.mxu0 %v2990
        %4446 = vmatprep.subr.bf16.mxu0 %v3007
        %4447 = vmatpush1.bf16.msra.mxu0 %v3006
        %4448 = vmatprep.subr.bf16.mxu0 %v3023
        %4449 = vmatpush1.bf16.msra.mxu0 %v3022
        %4450 = vmatprep.subr.bf16.mxu0 %v3039
        %4451 = vmatpush1.bf16.msra.mxu0 %v3038
        %4452 = vmatprep.subr.bf16.mxu0 %v3055
        %4453 = vmatpush1.bf16.msra.mxu0 %v3054
        %4454 = vmatprep.mubr.bf16.mxu0 %v1627
        %4455 = vmatmul.mubr.bf16.gmra.mrb[0].mxu0 %v1626
        %v4456 = vpop.f32.mrb[0].mxu0
        %v4457 = vadd.f32 %v1562, %v4456
        %v4458 = vpop.f32.mrb[0].mxu0
        %v4459 = vadd.f32 %v1566, %v4458
        %v4460 = vpop.f32.mrb[0].mxu0
        %v4461 = vadd.f32 %v1562, %v4460
        %v4462 = vpop.f32.mrb[0].mxu0
        %v4463 = vadd.f32 %v1566, %v4462
        %4464 = vmatprep.mubr.bf16.mxu0 %v1630
        %4465 = vmatmul.mubr.bf16.gmra.mrb[0].mxu0 %v1629
        %v4466 = vpop.f32.mrb[0].mxu0
        %v4467 = vadd.f32 %v1562, %v4466
        %v4468 = vpop.f32.mrb[0].mxu0
        %v4469 = vadd.f32 %v1566, %v4468
        %v4470 = vpop.f32.mrb[0].mxu0
        %v4471 = vadd.f32 %v1562, %v4470
        %v4472 = vpop.f32.mrb[0].mxu0
        %v4473 = vadd.f32 %v1566, %v4472
        %4474 = vmatprep.mubr.bf16.mxu0 %v1633
        %4475 = vmatmul.mubr.bf16.gmra.mrb[0].mxu0 %v1632
        %v4476 = vpop.f32.mrb[0].mxu0
        %v4477 = vadd.f32 %v1562, %v4476
        %v4478 = vpop.f32.mrb[0].mxu0
        %v4479 = vadd.f32 %v1566, %v4478
        %v4480 = vpop.f32.mrb[0].mxu0
        %v4481 = vadd.f32 %v1562, %v4480
        %v4482 = vpop.f32.mrb[0].mxu0
        %v4483 = vadd.f32 %v1566, %v4482
        %4484 = vmatprep.mubr.bf16.mxu0 %v1636
        %4485 = vmatmul.mubr.bf16.gmra.mrb[0].mxu0 %v1635
        %v4486 = vpop.f32.mrb[0].mxu0
        %v4487 = vadd.f32 %v1562, %v4486
        %v4488 = vpop.f32.mrb[0].mxu0
        %v4489 = vadd.f32 %v1566, %v4488
        %v4490 = vpop.f32.mrb[0].mxu0
        %v4491 = vpop.f32.mrb[0].mxu0
        %4492 = vdwg.mxu0
        %4493 = vmatprep.subr.bf16.mxu0 %v3071
        %4494 = vmatpush1.bf16.msra.mxu0 %v3070
        %4495 = vmatprep.subr.bf16.mxu0 %v3087
        %4496 = vmatpush1.bf16.msra.mxu0 %v3086
        %4497 = vmatprep.subr.bf16.mxu0 %v3103
        %4498 = vmatpush1.bf16.msra.mxu0 %v3102
        %4499 = vmatprep.subr.bf16.mxu0 %v3119
        %4500 = vmatpush1.bf16.msra.mxu0 %v3118
        %4501 = vmatprep.subr.bf16.mxu0 %v3135
        %4502 = vmatpush1.bf16.msra.mxu0 %v3134
        %4503 = vmatprep.subr.bf16.mxu0 %v3151
        %4504 = vmatpush1.bf16.msra.mxu0 %v3150
        %4505 = vmatprep.subr.bf16.mxu0 %v3167
        %4506 = vmatpush1.bf16.msra.mxu0 %v3166
        %4507 = vmatprep.subr.bf16.mxu0 %v3183
        %4508 = vmatpush1.bf16.msra.mxu0 %v3182
        %4509 = vmatprep.subr.bf16.mxu0 0
        %4510 = vmatpush1.bf16.msra.mxu0 0
        %4511 = vmatprep.subr.bf16.mxu0 0
        %4512 = vmatpush1.bf16.msra.mxu0 0
        %4513 = vmatprep.subr.bf16.mxu0 0
        %4514 = vmatpush1.bf16.msra.mxu0 0
        %4515 = vmatprep.subr.bf16.mxu0 0
        %4516 = vmatpush1.bf16.msra.mxu0 0
        %4517 = vmatprep.subr.bf16.mxu0 0
        %4518 = vmatpush1.bf16.msra.mxu0 0
        %4519 = vmatprep.subr.bf16.mxu0 0
        %4520 = vmatpush1.bf16.msra.mxu0 0
        %4521 = vmatprep.subr.bf16.mxu0 0
        %4522 = vmatpush1.bf16.msra.mxu0 0
        %4523 = vmatprep.subr.bf16.mxu0 0
        %4524 = vmatpush1.bf16.msra.mxu0 0
        %4525 = vmatprep.mubr.bf16.mxu0 0
        %4526 = vmatmul.mubr.bf16.gmra.mrb[0].mxu0 %v1628
        %v4527 = vpop.f32.mrb[0].mxu0
        %v4528 = vadd.f32 %v4457, %v4527
        %v4529 = vpop.f32.mrb[0].mxu0
        %v4530 = vadd.f32 %v4459, %v4529
        %v4531 = vpop.f32.mrb[0].mxu0
        %v4532 = vadd.f32 %v4461, %v4531
        %v4533 = vpop.f32.mrb[0].mxu0
        %v4534 = vadd.f32 %v4463, %v4533
        %4535 = vmatprep.mubr.bf16.mxu0 0
        %4536 = vmatmul.mubr.bf16.gmra.mrb[0].mxu0 %v1631
        %v4537 = vpop.f32.mrb[0].mxu0
        %v4538 = vadd.f32 %v4467, %v4537
        %v4539 = vpop.f32.mrb[0].mxu0
        %v4540 = vadd.f32 %v4469, %v4539
        %v4541 = vpop.f32.mrb[0].mxu0
        %v4542 = vadd.f32 %v4471, %v4541
        %v4543 = vpop.f32.mrb[0].mxu0
        %v4544 = vadd.f32 %v4473, %v4543
        %4545 = vmatprep.mubr.bf16.mxu0 0
        %4546 = vmatmul.mubr.bf16.gmra.mrb[0].mxu0 %v1634
        %v4547 = vpop.f32.mrb[0].mxu0
        %v4548 = vadd.f32 %v4477, %v4547
        %v4549 = vpop.f32.mrb[0].mxu0
        %v4550 = vadd.f32 %v4479, %v4549
        %v4551 = vpop.f32.mrb[0].mxu0
        %v4552 = vadd.f32 %v4481, %v4551
        %v4553 = vpop.f32.mrb[0].mxu0
        %v4554 = vadd.f32 %v4483, %v4553
        %4555 = vmatprep.mubr.bf16.mxu0 0
        %4556 = vmatmul.mubr.bf16.gmra.mrb[0].mxu0 %v1637
        %v4557 = vpop.f32.mrb[0].mxu0
        %v4558 = vadd.f32 %v4487, %v4557
        %v4559 = vpop.f32.mrb[0].mxu0
        %v4560 = vadd.f32 %v4489, %v4559
        %v4561 = vpop.f32.mrb[0].mxu0
        %v4562 = vpop.f32.mrb[0].mxu0
        %4563 = vdwg.mxu0
        %4564 = vmatprep.subr.bf16.mxu0 %v2817
        %4565 = vmatpush1.bf16.msra.mxu0 %v2816
        %4566 = vmatprep.subr.bf16.mxu0 %v2833
        %4567 = vmatpush1.bf16.msra.mxu0 %v2832
        %4568 = vmatprep.subr.bf16.mxu0 %v2849
        %4569 = vmatpush1.bf16.msra.mxu0 %v2848
        %4570 = vmatprep.subr.bf16.mxu0 %v2865
        %4571 = vmatpush1.bf16.msra.mxu0 %v2864
        %4572 = vmatprep.subr.bf16.mxu0 %v2881
        %4573 = vmatpush1.bf16.msra.mxu0 %v2880
        %4574 = vmatprep.subr.bf16.mxu0 %v2897
        %4575 = vmatpush1.bf16.msra.mxu0 %v2896
        %4576 = vmatprep.subr.bf16.mxu0 %v2913
        %4577 = vmatpush1.bf16.msra.mxu0 %v2912
        %4578 = vmatprep.subr.bf16.mxu0 %v2929
        %4579 = vmatpush1.bf16.msra.mxu0 %v2928
        %4580 = vmatprep.subr.bf16.mxu0 %v2945
        %4581 = vmatpush1.bf16.msra.mxu0 %v2944
        %4582 = vmatprep.subr.bf16.mxu0 %v2961
        %4583 = vmatpush1.bf16.msra.mxu0 %v2960
        %4584 = vmatprep.subr.bf16.mxu0 %v2977
        %4585 = vmatpush1.bf16.msra.mxu0 %v2976
        %4586 = vmatprep.subr.bf16.mxu0 %v2993
        %4587 = vmatpush1.bf16.msra.mxu0 %v2992
        %4588 = vmatprep.subr.bf16.mxu0 %v3009
        %4589 = vmatpush1.bf16.msra.mxu0 %v3008
        %4590 = vmatprep.subr.bf16.mxu0 %v3025
        %4591 = vmatpush1.bf16.msra.mxu0 %v3024
        %4592 = vmatprep.subr.bf16.mxu0 %v3041
        %4593 = vmatpush1.bf16.msra.mxu0 %v3040
        %4594 = vmatprep.subr.bf16.mxu0 %v3057
        %4595 = vmatpush1.bf16.msra.mxu0 %v3056
        %4596 = vmatprep.mubr.bf16.mxu0 %v1627
        %4597 = vmatmul.mubr.bf16.gmra.mrb[0].mxu0 %v1626
        %v4598 = vpop.f32.mrb[0].mxu0
        %v4599 = vadd.f32 %v1570, %v4598
        %v4600 = vpop.f32.mrb[0].mxu0
        %v4601 = vadd.f32 %v1574, %v4600
        %v4602 = vpop.f32.mrb[0].mxu0
        %v4603 = vadd.f32 %v1570, %v4602
        %v4604 = vpop.f32.mrb[0].mxu0
        %v4605 = vadd.f32 %v1574, %v4604
        %4606 = vmatprep.mubr.bf16.mxu0 %v1630
        %4607 = vmatmul.mubr.bf16.gmra.mrb[0].mxu0 %v1629
        %v4608 = vpop.f32.mrb[0].mxu0
        %v4609 = vadd.f32 %v1570, %v4608
        %v4610 = vpop.f32.mrb[0].mxu0
        %v4611 = vadd.f32 %v1574, %v4610
        %v4612 = vpop.f32.mrb[0].mxu0
        %v4613 = vadd.f32 %v1570, %v4612
        %v4614 = vpop.f32.mrb[0].mxu0
        %v4615 = vadd.f32 %v1574, %v4614
        %4616 = vmatprep.mubr.bf16.mxu0 %v1633
        %4617 = vmatmul.mubr.bf16.gmra.mrb[0].mxu0 %v1632
        %v4618 = vpop.f32.mrb[0].mxu0
        %v4619 = vadd.f32 %v1570, %v4618
        %v4620 = vpop.f32.mrb[0].mxu0
        %v4621 = vadd.f32 %v1574, %v4620
        %v4622 = vpop.f32.mrb[0].mxu0
        %v4623 = vadd.f32 %v1570, %v4622
        %v4624 = vpop.f32.mrb[0].mxu0
        %v4625 = vadd.f32 %v1574, %v4624
        %4626 = vmatprep.mubr.bf16.mxu0 %v1636
        %4627 = vmatmul.mubr.bf16.gmra.mrb[0].mxu0 %v1635
        %v4628 = vpop.f32.mrb[0].mxu0
        %v4629 = vadd.f32 %v1570, %v4628
        %v4630 = vpop.f32.mrb[0].mxu0
        %v4631 = vadd.f32 %v1574, %v4630
        %v4632 = vpop.f32.mrb[0].mxu0
        %v4633 = vpop.f32.mrb[0].mxu0
        %4634 = vdwg.mxu0
        %4635 = vmatprep.subr.bf16.mxu0 %v3073
        %4636 = vmatpush1.bf16.msra.mxu0 %v3072
        %4637 = vmatprep.subr.bf16.mxu0 %v3089
        %4638 = vmatpush1.bf16.msra.mxu0 %v3088
        %4639 = vmatprep.subr.bf16.mxu0 %v3105
        %4640 = vmatpush1.bf16.msra.mxu0 %v3104
        %4641 = vmatprep.subr.bf16.mxu0 %v3121
        %4642 = vmatpush1.bf16.msra.mxu0 %v3120
        %4643 = vmatprep.subr.bf16.mxu0 %v3137
        %4644 = vmatpush1.bf16.msra.mxu0 %v3136
        %4645 = vmatprep.subr.bf16.mxu0 %v3153
        %4646 = vmatpush1.bf16.msra.mxu0 %v3152
        %4647 = vmatprep.subr.bf16.mxu0 %v3169
        %4648 = vmatpush1.bf16.msra.mxu0 %v3168
        %4649 = vmatprep.subr.bf16.mxu0 %v3185
        %4650 = vmatpush1.bf16.msra.mxu0 %v3184
        %4651 = vmatprep.subr.bf16.mxu0 0
        %4652 = vmatpush1.bf16.msra.mxu0 0
        %4653 = vmatprep.subr.bf16.mxu0 0
        %4654 = vmatpush1.bf16.msra.mxu0 0
        %4655 = vmatprep.subr.bf16.mxu0 0
        %4656 = vmatpush1.bf16.msra.mxu0 0
        %4657 = vmatprep.subr.bf16.mxu0 0
        %4658 = vmatpush1.bf16.msra.mxu0 0
        %4659 = vmatprep.subr.bf16.mxu0 0
        %4660 = vmatpush1.bf16.msra.mxu0 0
        %4661 = vmatprep.subr.bf16.mxu0 0
        %4662 = vmatpush1.bf16.msra.mxu0 0
        %4663 = vmatprep.subr.bf16.mxu0 0
        %4664 = vmatpush1.bf16.msra.mxu0 0
        %4665 = vmatprep.subr.bf16.mxu0 0
        %4666 = vmatpush1.bf16.msra.mxu0 0
        %4667 = vmatprep.mubr.bf16.mxu0 0
        %4668 = vmatmul.mubr.bf16.gmra.mrb[0].mxu0 %v1628
        %v4669 = vpop.f32.mrb[0].mxu0
        %v4670 = vadd.f32 %v4599, %v4669
        %v4671 = vpop.f32.mrb[0].mxu0
        %v4672 = vadd.f32 %v4601, %v4671
        %v4673 = vpop.f32.mrb[0].mxu0
        %v4674 = vadd.f32 %v4603, %v4673
        %v4675 = vpop.f32.mrb[0].mxu0
        %v4676 = vadd.f32 %v4605, %v4675
        %4677 = vmatprep.mubr.bf16.mxu0 0
        %4678 = vmatmul.mubr.bf16.gmra.mrb[0].mxu0 %v1631
        %v4679 = vpop.f32.mrb[0].mxu0
        %v4680 = vadd.f32 %v4609, %v4679
        %v4681 = vpop.f32.mrb[0].mxu0
        %v4682 = vadd.f32 %v4611, %v4681
        %v4683 = vpop.f32.mrb[0].mxu0
        %v4684 = vadd.f32 %v4613, %v4683
        %v4685 = vpop.f32.mrb[0].mxu0
        %v4686 = vadd.f32 %v4615, %v4685
        %4687 = vmatprep.mubr.bf16.mxu0 0
        %4688 = vmatmul.mubr.bf16.gmra.mrb[0].mxu0 %v1634
        %v4689 = vpop.f32.mrb[0].mxu0
        %v4690 = vadd.f32 %v4619, %v4689
        %v4691 = vpop.f32.mrb[0].mxu0
        %v4692 = vadd.f32 %v4621, %v4691
        %v4693 = vpop.f32.mrb[0].mxu0
        %v4694 = vadd.f32 %v4623, %v4693
        %v4695 = vpop.f32.mrb[0].mxu0
        %v4696 = vadd.f32 %v4625, %v4695
        %4697 = vmatprep.mubr.bf16.mxu0 0
        %4698 = vmatmul.mubr.bf16.gmra.mrb[0].mxu0 %v1637
        %v4699 = vpop.f32.mrb[0].mxu0
        %v4700 = vadd.f32 %v4629, %v4699
        %v4701 = vpop.f32.mrb[0].mxu0
        %v4702 = vadd.f32 %v4631, %v4701
        %v4703 = vpop.f32.mrb[0].mxu0
        %v4704 = vpop.f32.mrb[0].mxu0
        %4705 = vdwg.mxu0
        %v4707 = vlaneseq
        %v4708 = vshrl.u32 %v4707, 7
        %v4709 = vsub.s32 0, %v4708
        %v4710 = vrot.slane %v954, %v4709
        %v4760 = vunpack.c.l.b16 %v906
        %v4761 = vunpack.c.l.b16 %v907
        %v4762 = vunpack.c.l.b16 %v908
        %v4763 = vunpack.c.l.b16 %v909
        %v4764 = vunpack.c.l.b16 %v910
        %v4765 = vunpack.c.l.b16 %v911
        %v4766 = vunpack.c.l.b16 %v912
        %v4767 = vunpack.c.l.b16 %v913
        %v4768 = vunpack.c.l.b16 %v914
        %v4769 = vunpack.c.l.b16 %v915
        %v4770 = vunpack.c.l.b16 %v916
        %v4771 = vunpack.c.l.b16 %v917
        %v4772 = vunpack.c.l.b16 %v918
        %v4773 = vunpack.c.l.b16 %v919
        %v4774 = vunpack.c.l.b16 %v920
        %v4775 = vunpack.c.l.b16 %v921
        %v4776 = vunpack.c.l.b16 %v922
        %v4777 = vunpack.c.l.b16 %v923
        %v4778 = vunpack.c.l.b16 %v924
        %v4779 = vunpack.c.l.b16 %v925
        %v4780 = vunpack.c.l.b16 %v926
        %v4781 = vunpack.c.l.b16 %v927
        %v4782 = vunpack.c.l.b16 %v928
        %v4783 = vunpack.c.l.b16 %v929
        %v4784 = vunpack.c.l.b16 %v930
        %v4785 = vunpack.c.l.b16 %v931
        %v4786 = vunpack.c.l.b16 %v932
        %v4787 = vunpack.c.l.b16 %v933
        %v4788 = vunpack.c.l.b16 %v934
        %v4789 = vunpack.c.l.b16 %v935
        %v4790 = vunpack.c.l.b16 %v936
        %v4791 = vunpack.c.l.b16 %v937
        %v4792 = vunpack.c.l.b16 %v938
        %v4793 = vunpack.c.l.b16 %v939
        %v4794 = vunpack.c.l.b16 %v940
        %v4795 = vunpack.c.l.b16 %v941
        %v4796 = vunpack.c.l.b16 %v942
        %v4797 = vunpack.c.l.b16 %v943
        %v4798 = vunpack.c.l.b16 %v944
        %v4799 = vunpack.c.l.b16 %v945
        %v4800 = vunpack.c.l.b16 %v946
        %v4801 = vunpack.c.l.b16 %v947
        %v4802 = vunpack.c.l.b16 %v948
        %v4803 = vunpack.c.l.b16 %v949
        %v4804 = vunpack.c.l.b16 %v950
        %v4805 = vunpack.c.l.b16 %v951
        %v4806 = vunpack.c.l.b16 %v952
        %v4807 = vunpack.c.l.b16 %v953
        %v4808 = vpack.c.b16 %v4761, %v4760
        %v4809 = vpack.c.b16 %v4763, %v4762
        %v4810 = vpack.c.b16 %v4765, %v4764
        %v4811 = vpack.c.b16 %v4767, %v4766
        %v4812 = vpack.c.b16 %v4769, %v4768
        %v4813 = vpack.c.b16 %v4771, %v4770
        %v4814 = vpack.c.b16 %v4773, %v4772
        %v4815 = vpack.c.b16 %v4775, %v4774
        %v4816 = vpack.c.b16 %v4777, %v4776
        %v4817 = vpack.c.b16 %v4779, %v4778
        %v4818 = vpack.c.b16 %v4781, %v4780
        %v4819 = vpack.c.b16 %v4783, %v4782
        %v4820 = vpack.c.b16 %v4785, %v4784
        %v4821 = vpack.c.b16 %v4787, %v4786
        %v4822 = vpack.c.b16 %v4789, %v4788
        %v4823 = vpack.c.b16 %v4791, %v4790
        %v4824 = vpack.c.b16 %v4793, %v4792
        %v4825 = vpack.c.b16 %v4795, %v4794
        %v4826 = vpack.c.b16 %v4797, %v4796
        %v4827 = vpack.c.b16 %v4799, %v4798
        %v4828 = vpack.c.b16 %v4801, %v4800
        %v4829 = vpack.c.b16 %v4803, %v4802
        %v4830 = vpack.c.b16 %v4805, %v4804
        %v4831 = vpack.c.b16 %v4807, %v4806
        %4856 = vmatprep.subr.bf16.mxu0 0
        %4857 = vmatpush1.bf16.msra.mxu0 %v4808
        %4858 = vmatprep.subr.bf16.mxu0 0
        %4859 = vmatpush1.bf16.msra.mxu0 %v4809
        %4860 = vmatprep.subr.bf16.mxu0 0
        %4861 = vmatpush1.bf16.msra.mxu0 %v4810
        %4862 = vmatprep.subr.bf16.mxu0 0
        %4863 = vmatpush1.bf16.msra.mxu0 %v4811
        %4864 = vmatprep.subr.bf16.mxu0 0
        %4865 = vmatpush1.bf16.msra.mxu0 %v4812
        %4866 = vmatprep.subr.bf16.mxu0 0
        %4867 = vmatpush1.bf16.msra.mxu0 %v4813
        %4868 = vmatprep.subr.bf16.mxu0 0
        %4869 = vmatpush1.bf16.msra.mxu0 %v4814
        %4870 = vmatprep.subr.bf16.mxu0 0
        %4871 = vmatpush1.bf16.msra.mxu0 %v4815
        %4872 = vmatprep.subr.bf16.mxu0 0
        %4873 = vmatpush1.bf16.msra.mxu0 %v4816
        %4874 = vmatprep.subr.bf16.mxu0 0
        %4875 = vmatpush1.bf16.msra.mxu0 %v4817
        %4876 = vmatprep.subr.bf16.mxu0 0
        %4877 = vmatpush1.bf16.msra.mxu0 %v4818
        %4878 = vmatprep.subr.bf16.mxu0 0
        %4879 = vmatpush1.bf16.msra.mxu0 %v4819
        %4880 = vmatprep.subr.bf16.mxu0 0
        %4881 = vmatpush1.bf16.msra.mxu0 %v4820
        %4882 = vmatprep.subr.bf16.mxu0 0
        %4883 = vmatpush1.bf16.msra.mxu0 %v4821
        %4884 = vmatprep.subr.bf16.mxu0 0
        %4885 = vmatpush1.bf16.msra.mxu0 %v4822
        %4886 = vmatprep.subr.bf16.mxu0 0
        %4887 = vmatpush1.bf16.msra.mxu0 %v4823
        %4888 = vmatprep.mubr.bf16.mxu0 %v1627
        %4889 = vmatmul.mubr.bf16.gmra.mrb[0].mxu0 %v1626
        %v4890 = vpop.f32.mrb[0].mxu0
        %v4891 = vadd.f32 %v4710, %v4890
        %v4892 = vpop.f32.mrb[0].mxu0
        %v4893 = vpop.f32.mrb[0].mxu0
        %v4894 = vadd.f32 %v4710, %v4893
        %v4895 = vpop.f32.mrb[0].mxu0
        %4896 = vmatprep.mubr.bf16.mxu0 %v1630
        %4897 = vmatmul.mubr.bf16.gmra.mrb[0].mxu0 %v1629
        %v4898 = vpop.f32.mrb[0].mxu0
        %v4899 = vadd.f32 %v4710, %v4898
        %v4900 = vpop.f32.mrb[0].mxu0
        %v4901 = vpop.f32.mrb[0].mxu0
        %v4902 = vadd.f32 %v4710, %v4901
        %v4903 = vpop.f32.mrb[0].mxu0
        %4904 = vmatprep.mubr.bf16.mxu0 %v1633
        %4905 = vmatmul.mubr.bf16.gmra.mrb[0].mxu0 %v1632
        %v4906 = vpop.f32.mrb[0].mxu0
        %v4907 = vadd.f32 %v4710, %v4906
        %v4908 = vpop.f32.mrb[0].mxu0
        %v4909 = vpop.f32.mrb[0].mxu0
        %v4910 = vadd.f32 %v4710, %v4909
        %v4911 = vpop.f32.mrb[0].mxu0
        %4912 = vmatprep.mubr.bf16.mxu0 %v1636
        %4913 = vmatmul.mubr.bf16.gmra.mrb[0].mxu0 %v1635
        %v4914 = vpop.f32.mrb[0].mxu0
        %v4915 = vadd.f32 %v4710, %v4914
        %v4916 = vpop.f32.mrb[0].mxu0
        %v4917 = vpop.f32.mrb[0].mxu0
        %v4918 = vpop.f32.mrb[0].mxu0
        %4919 = vdwg.mxu0
        %4920 = vmatprep.subr.bf16.mxu0 0
        %4921 = vmatpush1.bf16.msra.mxu0 %v4824
        %4922 = vmatprep.subr.bf16.mxu0 0
        %4923 = vmatpush1.bf16.msra.mxu0 %v4825
        %4924 = vmatprep.subr.bf16.mxu0 0
        %4925 = vmatpush1.bf16.msra.mxu0 %v4826
        %4926 = vmatprep.subr.bf16.mxu0 0
        %4927 = vmatpush1.bf16.msra.mxu0 %v4827
        %4928 = vmatprep.subr.bf16.mxu0 0
        %4929 = vmatpush1.bf16.msra.mxu0 %v4828
        %4930 = vmatprep.subr.bf16.mxu0 0
        %4931 = vmatpush1.bf16.msra.mxu0 %v4829
        %4932 = vmatprep.subr.bf16.mxu0 0
        %4933 = vmatpush1.bf16.msra.mxu0 %v4830
        %4934 = vmatprep.subr.bf16.mxu0 0
        %4935 = vmatpush1.bf16.msra.mxu0 %v4831
        %4936 = vmatprep.subr.bf16.mxu0 0
        %4937 = vmatpush1.bf16.msra.mxu0 0
        %4938 = vmatprep.subr.bf16.mxu0 0
        %4939 = vmatpush1.bf16.msra.mxu0 0
        %4940 = vmatprep.subr.bf16.mxu0 0
        %4941 = vmatpush1.bf16.msra.mxu0 0
        %4942 = vmatprep.subr.bf16.mxu0 0
        %4943 = vmatpush1.bf16.msra.mxu0 0
        %4944 = vmatprep.subr.bf16.mxu0 0
        %4945 = vmatpush1.bf16.msra.mxu0 0
        %4946 = vmatprep.subr.bf16.mxu0 0
        %4947 = vmatpush1.bf16.msra.mxu0 0
        %4948 = vmatprep.subr.bf16.mxu0 0
        %4949 = vmatpush1.bf16.msra.mxu0 0
        %4950 = vmatprep.subr.bf16.mxu0 0
        %4951 = vmatpush1.bf16.msra.mxu0 0
        %4952 = vmatprep.mubr.bf16.mxu0 0
        %4953 = vmatmul.mubr.bf16.gmra.mrb[0].mxu0 %v1628
        %v4954 = vpop.f32.mrb[0].mxu0
        %v4955 = vadd.f32 %v4891, %v4954
        %v4956 = vpop.f32.mrb[0].mxu0
        %v4957 = vpop.f32.mrb[0].mxu0
        %v4958 = vadd.f32 %v4894, %v4957
        %v4959 = vpop.f32.mrb[0].mxu0
        %4960 = vmatprep.mubr.bf16.mxu0 0
        %4961 = vmatmul.mubr.bf16.gmra.mrb[0].mxu0 %v1631
        %v4962 = vpop.f32.mrb[0].mxu0
        %v4963 = vadd.f32 %v4899, %v4962
        %v4964 = vpop.f32.mrb[0].mxu0
        %v4965 = vpop.f32.mrb[0].mxu0
        %v4966 = vadd.f32 %v4902, %v4965
        %v4967 = vpop.f32.mrb[0].mxu0
        %4968 = vmatprep.mubr.bf16.mxu0 0
        %4969 = vmatmul.mubr.bf16.gmra.mrb[0].mxu0 %v1634
        %v4970 = vpop.f32.mrb[0].mxu0
        %v4971 = vadd.f32 %v4907, %v4970
        %v4972 = vpop.f32.mrb[0].mxu0
        %v4973 = vpop.f32.mrb[0].mxu0
        %v4974 = vadd.f32 %v4910, %v4973
        %v4975 = vpop.f32.mrb[0].mxu0
        %4976 = vmatprep.mubr.bf16.mxu0 0
        %4977 = vmatmul.mubr.bf16.gmra.mrb[0].mxu0 %v1637
        %v4978 = vpop.f32.mrb[0].mxu0
        %v4979 = vadd.f32 %v4915, %v4978
        %v4980 = vpop.f32.mrb[0].mxu0
        %v4981 = vpop.f32.mrb[0].mxu0
        %v4982 = vpop.f32.mrb[0].mxu0
        %4983 = vdwg.mxu0
        %v4984 = vmax.f32 %v4955, 0.0
        %v4985 = vmax.f32 %v4958, 0.0
        %v4986 = vmax.f32 %v4963, 0.0
        %v4987 = vmax.f32 %v4966, 0.0
        %v4988 = vmax.f32 %v4971, 0.0
        %v4989 = vmax.f32 %v4974, 0.0
        %v4990 = vmax.f32 %v4979, 0.0
        %v4991 = vadd.f32 %v4984, %v1480
        %v4992 = vadd.f32 %v4985, %v1483
        %v4993 = vadd.f32 %v4986, %v1488
        %v4994 = vadd.f32 %v4987, %v1491
        %v4995 = vadd.f32 %v4988, %v1496
        %v4996 = vadd.f32 %v4989, %v1499
        %v4997 = vadd.f32 %v4990, %v1504
        %4998 = vxpose.xlu0.b32.start [1/16] %v4991, 128
        %4999 = vxpose.xlu0.b32.cont [2/16] %v4992, 128
        %5000 = vxpose.xlu0.b32.cont [3/16] %v4993, 128
        %5001 = vxpose.xlu0.b32.cont [4/16] %v4994, 128
        %5002 = vxpose.xlu0.b32.cont [5/16] %v4995, 128
        %5003 = vxpose.xlu0.b32.cont [6/16] %v4996, 128
        %5004 = vxpose.xlu0.b32.cont [7/16] %v4997, 128
        %5005 = vxpose.xlu0.b32.cont [8/16] 0.0, 128
        %5006 = vxpose.xlu0.b32.cont [9/16] 0.0, 128
        %5007 = vxpose.xlu0.b32.cont [10/16] 0.0, 128
        %5008 = vxpose.xlu0.b32.cont [11/16] 0.0, 128
        %5009 = vxpose.xlu0.b32.cont [12/16] 0.0, 128
        %5010 = vxpose.xlu0.b32.cont [13/16] 0.0, 128
        %5011 = vxpose.xlu0.b32.cont [14/16] 0.0, 128
        %5012 = vxpose.xlu0.b32.cont [15/16] 0.0, 128
        %5013 = vxpose.xlu0.b32.end [16/16] 0.0, 128
        %v5014 = vpop.trf.xlu0
        %v5015 = vpop.trf.xlu0
        %v5016 = vpop.trf.xlu0
        %v5017 = vpop.trf.xlu0
        %v5018 = vpop.trf.xlu0
        %v5019 = vpop.trf.xlu0
        %v5020 = vpop.trf.xlu0
        %v5021 = vpop.trf.xlu0
        %v5022 = vpop.trf.xlu0
        %v5023 = vpop.trf.xlu0
        %v5024 = vpop.trf.xlu0
        %v5025 = vpop.trf.xlu0
        %v5026 = vpop.trf.xlu0
        %v5027 = vpop.trf.xlu0
        %v5028 = vpop.trf.xlu0
        %v5029 = vpop.trf.xlu0
        %vm5030 = vcmask 400384
        %5031 = vst.msk [vmem:[%s492] sm:$0xff] %vm5030, %v5014
        %5032 = vst.msk [vmem:[%s492 + $0x8] sm:$0xff] %vm5030, %v5015
        %5033 = vst.msk [vmem:[%s492 + $0x10] sm:$0xff] %vm5030, %v5016
        %5034 = vst.msk [vmem:[%s492 + $0x18] sm:$0xff] %vm5030, %v5017
        %v5035 = vpack.c.bf16 %v5015, %v5014
        %v5036 = vpack.c.bf16 %v5017, %v5016
        %v5037 = vpack.c.bf16 %v3680, %v3676
        %v5038 = vpack.c.bf16 %v3682, %v3678
        %v5039 = vpack.c.bf16 %v3822, %v3818
        %v5040 = vpack.c.bf16 %v3824, %v3820
        %v5041 = vpack.c.bf16 %v3964, %v3960
        %v5042 = vpack.c.bf16 %v3966, %v3962
        %v5043 = vpack.c.bf16 %v4106, %v4102
        %v5044 = vpack.c.bf16 %v4108, %v4104
        %v5045 = vpack.c.bf16 %v4248, %v4244
        %v5046 = vpack.c.bf16 %v4250, %v4246
        %v5047 = vpack.c.bf16 %v4390, %v4386
        %v5048 = vpack.c.bf16 %v4392, %v4388
        %v5049 = vpack.c.bf16 %v4532, %v4528
        %v5050 = vpack.c.bf16 %v4534, %v4530
        %v5051 = vpack.c.bf16 %v4674, %v4670
        %v5052 = vpack.c.bf16 %v4676, %v4672
        %v5053 = vpack.c.bf16 %v3690, %v3686
        %v5054 = vpack.c.bf16 %v3692, %v3688
        %v5055 = vpack.c.bf16 %v3832, %v3828
        %v5056 = vpack.c.bf16 %v3834, %v3830
        %v5057 = vpack.c.bf16 %v3974, %v3970
        %v5058 = vpack.c.bf16 %v3976, %v3972
        %v5059 = vpack.c.bf16 %v4116, %v4112
        %v5060 = vpack.c.bf16 %v4118, %v4114
        %v5061 = vpack.c.bf16 %v4258, %v4254
        %v5062 = vpack.c.bf16 %v4260, %v4256
        %v5063 = vpack.c.bf16 %v4400, %v4396
        %v5064 = vpack.c.bf16 %v4402, %v4398
        %v5065 = vpack.c.bf16 %v4542, %v4538
        %v5066 = vpack.c.bf16 %v4544, %v4540
        %v5067 = vpack.c.bf16 %v4684, %v4680
        %v5068 = vpack.c.bf16 %v4686, %v4682
        %v5069 = vpack.c.bf16 %v3700, %v3696
        %v5070 = vpack.c.bf16 %v3702, %v3698
        %v5071 = vpack.c.bf16 %v3842, %v3838
        %v5072 = vpack.c.bf16 %v3844, %v3840
        %v5073 = vpack.c.bf16 %v3984, %v3980
        %v5074 = vpack.c.bf16 %v3986, %v3982
        %v5075 = vpack.c.bf16 %v4126, %v4122
        %v5076 = vpack.c.bf16 %v4128, %v4124
        %v5077 = vpack.c.bf16 %v4268, %v4264
        %v5078 = vpack.c.bf16 %v4270, %v4266
        %v5079 = vpack.c.bf16 %v4410, %v4406
        %v5080 = vpack.c.bf16 %v4412, %v4408
        %v5081 = vpack.c.bf16 %v4552, %v4548
        %v5082 = vpack.c.bf16 %v4554, %v4550
        %v5083 = vpack.c.bf16 %v4694, %v4690
        %v5084 = vpack.c.bf16 %v4696, %v4692
        %v5085 = vpack.c.bf16 %v3706, %v3706
        %v5086 = vpack.c.bf16 %v3708, %v3708
        %v5087 = vpack.c.bf16 %v3848, %v3848
        %v5088 = vpack.c.bf16 %v3850, %v3850
        %v5089 = vpack.c.bf16 %v3990, %v3990
        %v5090 = vpack.c.bf16 %v3992, %v3992
        %v5091 = vpack.c.bf16 %v4132, %v4132
        %v5092 = vpack.c.bf16 %v4134, %v4134
        %v5093 = vpack.c.bf16 %v4274, %v4274
        %v5094 = vpack.c.bf16 %v4276, %v4276
        %v5095 = vpack.c.bf16 %v4416, %v4416
        %v5096 = vpack.c.bf16 %v4418, %v4418
        %v5097 = vpack.c.bf16 %v4558, %v4558
        %v5098 = vpack.c.bf16 %v4560, %v4560
        %v5099 = vpack.c.bf16 %v4700, %v4700
        %v5100 = vpack.c.bf16 %v4702, %v4702
        %v5102 = vsel %vm5030, %v5035, 0
        %v5105 = vsel %vm5030, %v5036, 0
        %vm5107 = vcmask 1040384
        %v5108 = vsel 0, 4294967295, 65535
        %v5109 = vsel %vm5107, %v5108, 0
        %v5111 = vand.u32 %v5085, %v5109
        %v5114 = vand.u32 %v5086, %v5109
        %v5117 = vand.u32 %v5087, %v5109
        %v5120 = vand.u32 %v5088, %v5109
        %v5123 = vand.u32 %v5089, %v5109
        %v5126 = vand.u32 %v5090, %v5109
        %v5129 = vand.u32 %v5091, %v5109
        %v5132 = vand.u32 %v5092, %v5109
        %v5135 = vand.u32 %v5093, %v5109
        %v5138 = vand.u32 %v5094, %v5109
        %v5141 = vand.u32 %v5095, %v5109
        %v5144 = vand.u32 %v5096, %v5109
        %v5147 = vand.u32 %v5097, %v5109
        %v5150 = vand.u32 %v5098, %v5109
        %v5153 = vand.u32 %v5099, %v5109
        %v5156 = vand.u32 %v5100, %v5109
        %5158 = vmatprep.subr.bf16.mxu0 %v5038
        %5159 = vmatpush1.bf16.msra.mxu0 %v5037
        %5160 = vmatprep.subr.bf16.mxu0 %v5054
        %5161 = vmatpush1.bf16.msra.mxu0 %v5053
        %5162 = vmatprep.subr.bf16.mxu0 %v5070
        %5163 = vmatpush1.bf16.msra.mxu0 %v5069
        %5164 = vmatprep.subr.bf16.mxu0 %v5114
        %5165 = vmatpush1.bf16.msra.mxu0 %v5111
        %5166 = vmatprep.subr.bf16.mxu0 0
        %5167 = vmatpush1.bf16.msra.mxu0 0
        %5168 = vmatprep.subr.bf16.mxu0 0
        %5169 = vmatpush1.bf16.msra.mxu0 0
        %5170 = vmatprep.subr.bf16.mxu0 0
        %5171 = vmatpush1.bf16.msra.mxu0 0
        %5172 = vmatprep.subr.bf16.mxu0 0
        %5173 = vmatpush1.bf16.msra.mxu0 0
        %5174 = vmatprep.subr.bf16.mxu0 0
        %5175 = vmatpush1.bf16.msra.mxu0 0
        %5176 = vmatprep.subr.bf16.mxu0 0
        %5177 = vmatpush1.bf16.msra.mxu0 0
        %5178 = vmatprep.subr.bf16.mxu0 0
        %5179 = vmatpush1.bf16.msra.mxu0 0
        %5180 = vmatprep.subr.bf16.mxu0 0
        %5181 = vmatpush1.bf16.msra.mxu0 0
        %5182 = vmatprep.subr.bf16.mxu0 0
        %5183 = vmatpush1.bf16.msra.mxu0 0
        %5184 = vmatprep.subr.bf16.mxu0 0
        %5185 = vmatpush1.bf16.msra.mxu0 0
        %5186 = vmatprep.subr.bf16.mxu0 0
        %5187 = vmatpush1.bf16.msra.mxu0 0
        %5188 = vmatprep.subr.bf16.mxu0 0
        %5189 = vmatpush1.bf16.msra.mxu0 0
        %5190 = vmatprep.mubr.bf16.mxu0 0
        %5191 = vmatmul.mubr.bf16.gmra.mrb[0].mxu0 %v5102
        %v5192 = vpop.f32.mrb[0].mxu0
        %v5193 = vadd.f32 0.0, %v5192
        %v5194 = vpop.f32.mrb[0].mxu0
        %v5195 = vadd.f32 0.0, %v5194
        %v5196 = vpop.f32.mrb[0].mxu0
        %v5197 = vadd.f32 0.0, %v5196
        %v5198 = vpop.f32.mrb[0].mxu0
        %v5199 = vadd.f32 0.0, %v5198
        %5200 = vmatprep.mubr.bf16.mxu0 0
        %5201 = vmatmul.mubr.bf16.gmra.mrb[0].mxu0 %v5105
        %v5202 = vpop.f32.mrb[0].mxu0
        %v5203 = vadd.f32 0.0, %v5202
        %v5204 = vpop.f32.mrb[0].mxu0
        %v5205 = vadd.f32 0.0, %v5204
        %v5206 = vpop.f32.mrb[0].mxu0
        %v5207 = vadd.f32 0.0, %v5206
        %v5208 = vpop.f32.mrb[0].mxu0
        %v5209 = vadd.f32 0.0, %v5208
        %5210 = vdwg.mxu0
        %5211 = vmatprep.subr.bf16.mxu0 %v5040
        %5212 = vmatpush1.bf16.msra.mxu0 %v5039
        %5213 = vmatprep.subr.bf16.mxu0 %v5056
        %5214 = vmatpush1.bf16.msra.mxu0 %v5055
        %5215 = vmatprep.subr.bf16.mxu0 %v5072
        %5216 = vmatpush1.bf16.msra.mxu0 %v5071
        %5217 = vmatprep.subr.bf16.mxu0 %v5120
        %5218 = vmatpush1.bf16.msra.mxu0 %v5117
        %5219 = vmatprep.subr.bf16.mxu0 0
        %5220 = vmatpush1.bf16.msra.mxu0 0
        %5221 = vmatprep.subr.bf16.mxu0 0
        %5222 = vmatpush1.bf16.msra.mxu0 0
        %5223 = vmatprep.subr.bf16.mxu0 0
        %5224 = vmatpush1.bf16.msra.mxu0 0
        %5225 = vmatprep.subr.bf16.mxu0 0
        %5226 = vmatpush1.bf16.msra.mxu0 0
        %5227 = vmatprep.subr.bf16.mxu0 0
        %5228 = vmatpush1.bf16.msra.mxu0 0
        %5229 = vmatprep.subr.bf16.mxu0 0
        %5230 = vmatpush1.bf16.msra.mxu0 0
        %5231 = vmatprep.subr.bf16.mxu0 0
        %5232 = vmatpush1.bf16.msra.mxu0 0
        %5233 = vmatprep.subr.bf16.mxu0 0
        %5234 = vmatpush1.bf16.msra.mxu0 0
        %5235 = vmatprep.subr.bf16.mxu0 0
        %5236 = vmatpush1.bf16.msra.mxu0 0
        %5237 = vmatprep.subr.bf16.mxu0 0
        %5238 = vmatpush1.bf16.msra.mxu0 0
        %5239 = vmatprep.subr.bf16.mxu0 0
        %5240 = vmatpush1.bf16.msra.mxu0 0
        %5241 = vmatprep.subr.bf16.mxu0 0
        %5242 = vmatpush1.bf16.msra.mxu0 0
        %5243 = vmatprep.mubr.bf16.mxu0 0
        %5244 = vmatmul.mubr.bf16.gmra.mrb[0].mxu0 %v5102
        %v5245 = vpop.f32.mrb[0].mxu0
        %v5246 = vadd.f32 0.0, %v5245
        %v5247 = vpop.f32.mrb[0].mxu0
        %v5248 = vadd.f32 0.0, %v5247
        %v5249 = vpop.f32.mrb[0].mxu0
        %v5250 = vadd.f32 0.0, %v5249
        %v5251 = vpop.f32.mrb[0].mxu0
        %v5252 = vadd.f32 0.0, %v5251
        %5253 = vmatprep.mubr.bf16.mxu0 0
        %5254 = vmatmul.mubr.bf16.gmra.mrb[0].mxu0 %v5105
        %v5255 = vpop.f32.mrb[0].mxu0
        %v5256 = vadd.f32 0.0, %v5255
        %v5257 = vpop.f32.mrb[0].mxu0
        %v5258 = vadd.f32 0.0, %v5257
        %v5259 = vpop.f32.mrb[0].mxu0
        %v5260 = vadd.f32 0.0, %v5259
        %v5261 = vpop.f32.mrb[0].mxu0
        %v5262 = vadd.f32 0.0, %v5261
        %5263 = vdwg.mxu0
        %5264 = vmatprep.subr.bf16.mxu0 %v5042
        %5265 = vmatpush1.bf16.msra.mxu0 %v5041
        %5266 = vmatprep.subr.bf16.mxu0 %v5058
        %5267 = vmatpush1.bf16.msra.mxu0 %v5057
        %5268 = vmatprep.subr.bf16.mxu0 %v5074
        %5269 = vmatpush1.bf16.msra.mxu0 %v5073
        %5270 = vmatprep.subr.bf16.mxu0 %v5126
        %5271 = vmatpush1.bf16.msra.mxu0 %v5123
        %5272 = vmatprep.subr.bf16.mxu0 0
        %5273 = vmatpush1.bf16.msra.mxu0 0
        %5274 = vmatprep.subr.bf16.mxu0 0
        %5275 = vmatpush1.bf16.msra.mxu0 0
        %5276 = vmatprep.subr.bf16.mxu0 0
        %5277 = vmatpush1.bf16.msra.mxu0 0
        %5278 = vmatprep.subr.bf16.mxu0 0
        %5279 = vmatpush1.bf16.msra.mxu0 0
        %5280 = vmatprep.subr.bf16.mxu0 0
        %5281 = vmatpush1.bf16.msra.mxu0 0
        %5282 = vmatprep.subr.bf16.mxu0 0
        %5283 = vmatpush1.bf16.msra.mxu0 0
        %5284 = vmatprep.subr.bf16.mxu0 0
        %5285 = vmatpush1.bf16.msra.mxu0 0
        %5286 = vmatprep.subr.bf16.mxu0 0
        %5287 = vmatpush1.bf16.msra.mxu0 0
        %5288 = vmatprep.subr.bf16.mxu0 0
        %5289 = vmatpush1.bf16.msra.mxu0 0
        %5290 = vmatprep.subr.bf16.mxu0 0
        %5291 = vmatpush1.bf16.msra.mxu0 0
        %5292 = vmatprep.subr.bf16.mxu0 0
        %5293 = vmatpush1.bf16.msra.mxu0 0
        %5294 = vmatprep.subr.bf16.mxu0 0
        %5295 = vmatpush1.bf16.msra.mxu0 0
        %5296 = vmatprep.mubr.bf16.mxu0 0
        %5297 = vmatmul.mubr.bf16.gmra.mrb[0].mxu0 %v5102
        %v5298 = vpop.f32.mrb[0].mxu0
        %v5299 = vadd.f32 0.0, %v5298
        %v5300 = vpop.f32.mrb[0].mxu0
        %v5301 = vadd.f32 0.0, %v5300
        %v5302 = vpop.f32.mrb[0].mxu0
        %v5303 = vadd.f32 0.0, %v5302
        %v5304 = vpop.f32.mrb[0].mxu0
        %v5305 = vadd.f32 0.0, %v5304
        %5306 = vmatprep.mubr.bf16.mxu0 0
        %5307 = vmatmul.mubr.bf16.gmra.mrb[0].mxu0 %v5105
        %v5308 = vpop.f32.mrb[0].mxu0
        %v5309 = vadd.f32 0.0, %v5308
        %v5310 = vpop.f32.mrb[0].mxu0
        %v5311 = vadd.f32 0.0, %v5310
        %v5312 = vpop.f32.mrb[0].mxu0
        %v5313 = vadd.f32 0.0, %v5312
        %v5314 = vpop.f32.mrb[0].mxu0
        %v5315 = vadd.f32 0.0, %v5314
        %5316 = vdwg.mxu0
        %5317 = vmatprep.subr.bf16.mxu0 %v5044
        %5318 = vmatpush1.bf16.msra.mxu0 %v5043
        %5319 = vmatprep.subr.bf16.mxu0 %v5060
        %5320 = vmatpush1.bf16.msra.mxu0 %v5059
        %5321 = vmatprep.subr.bf16.mxu0 %v5076
        %5322 = vmatpush1.bf16.msra.mxu0 %v5075
        %5323 = vmatprep.subr.bf16.mxu0 %v5132
        %5324 = vmatpush1.bf16.msra.mxu0 %v5129
        %5325 = vmatprep.subr.bf16.mxu0 0
        %5326 = vmatpush1.bf16.msra.mxu0 0
        %5327 = vmatprep.subr.bf16.mxu0 0
        %5328 = vmatpush1.bf16.msra.mxu0 0
        %5329 = vmatprep.subr.bf16.mxu0 0
        %5330 = vmatpush1.bf16.msra.mxu0 0
        %5331 = vmatprep.subr.bf16.mxu0 0
        %5332 = vmatpush1.bf16.msra.mxu0 0
        %5333 = vmatprep.subr.bf16.mxu0 0
        %5334 = vmatpush1.bf16.msra.mxu0 0
        %5335 = vmatprep.subr.bf16.mxu0 0
        %5336 = vmatpush1.bf16.msra.mxu0 0
        %5337 = vmatprep.subr.bf16.mxu0 0
        %5338 = vmatpush1.bf16.msra.mxu0 0
        %5339 = vmatprep.subr.bf16.mxu0 0
        %5340 = vmatpush1.bf16.msra.mxu0 0
        %5341 = vmatprep.subr.bf16.mxu0 0
        %5342 = vmatpush1.bf16.msra.mxu0 0
        %5343 = vmatprep.subr.bf16.mxu0 0
        %5344 = vmatpush1.bf16.msra.mxu0 0
        %5345 = vmatprep.subr.bf16.mxu0 0
        %5346 = vmatpush1.bf16.msra.mxu0 0
        %5347 = vmatprep.subr.bf16.mxu0 0
        %5348 = vmatpush1.bf16.msra.mxu0 0
        %5349 = vmatprep.mubr.bf16.mxu0 0
        %5350 = vmatmul.mubr.bf16.gmra.mrb[0].mxu0 %v5102
        %v5351 = vpop.f32.mrb[0].mxu0
        %v5352 = vadd.f32 0.0, %v5351
        %v5353 = vpop.f32.mrb[0].mxu0
        %v5354 = vadd.f32 0.0, %v5353
        %v5355 = vpop.f32.mrb[0].mxu0
        %v5356 = vadd.f32 0.0, %v5355
        %v5357 = vpop.f32.mrb[0].mxu0
        %v5358 = vadd.f32 0.0, %v5357
        %5359 = vmatprep.mubr.bf16.mxu0 0
        %5360 = vmatmul.mubr.bf16.gmra.mrb[0].mxu0 %v5105
        %v5361 = vpop.f32.mrb[0].mxu0
        %v5362 = vadd.f32 0.0, %v5361
        %v5363 = vpop.f32.mrb[0].mxu0
        %v5364 = vadd.f32 0.0, %v5363
        %v5365 = vpop.f32.mrb[0].mxu0
        %v5366 = vadd.f32 0.0, %v5365
        %v5367 = vpop.f32.mrb[0].mxu0
        %v5368 = vadd.f32 0.0, %v5367
        %5369 = vdwg.mxu0
        %5370 = vmatprep.subr.bf16.mxu0 %v5046
        %5371 = vmatpush1.bf16.msra.mxu0 %v5045
        %5372 = vmatprep.subr.bf16.mxu0 %v5062
        %5373 = vmatpush1.bf16.msra.mxu0 %v5061
        %5374 = vmatprep.subr.bf16.mxu0 %v5078
        %5375 = vmatpush1.bf16.msra.mxu0 %v5077
        %5376 = vmatprep.subr.bf16.mxu0 %v5138
        %5377 = vmatpush1.bf16.msra.mxu0 %v5135
        %5378 = vmatprep.subr.bf16.mxu0 0
        %5379 = vmatpush1.bf16.msra.mxu0 0
        %5380 = vmatprep.subr.bf16.mxu0 0
        %5381 = vmatpush1.bf16.msra.mxu0 0
        %5382 = vmatprep.subr.bf16.mxu0 0
        %5383 = vmatpush1.bf16.msra.mxu0 0
        %5384 = vmatprep.subr.bf16.mxu0 0
        %5385 = vmatpush1.bf16.msra.mxu0 0
        %5386 = vmatprep.subr.bf16.mxu0 0
        %5387 = vmatpush1.bf16.msra.mxu0 0
        %5388 = vmatprep.subr.bf16.mxu0 0
        %5389 = vmatpush1.bf16.msra.mxu0 0
        %5390 = vmatprep.subr.bf16.mxu0 0
        %5391 = vmatpush1.bf16.msra.mxu0 0
        %5392 = vmatprep.subr.bf16.mxu0 0
        %5393 = vmatpush1.bf16.msra.mxu0 0
        %5394 = vmatprep.subr.bf16.mxu0 0
        %5395 = vmatpush1.bf16.msra.mxu0 0
        %5396 = vmatprep.subr.bf16.mxu0 0
        %5397 = vmatpush1.bf16.msra.mxu0 0
        %5398 = vmatprep.subr.bf16.mxu0 0
        %5399 = vmatpush1.bf16.msra.mxu0 0
        %5400 = vmatprep.subr.bf16.mxu0 0
        %5401 = vmatpush1.bf16.msra.mxu0 0
        %5402 = vmatprep.mubr.bf16.mxu0 0
        %5403 = vmatmul.mubr.bf16.gmra.mrb[0].mxu0 %v5102
        %v5404 = vpop.f32.mrb[0].mxu0
        %v5405 = vadd.f32 0.0, %v5404
        %v5406 = vpop.f32.mrb[0].mxu0
        %v5407 = vadd.f32 0.0, %v5406
        %v5408 = vpop.f32.mrb[0].mxu0
        %v5409 = vadd.f32 0.0, %v5408
        %v5410 = vpop.f32.mrb[0].mxu0
        %v5411 = vadd.f32 0.0, %v5410
        %5412 = vmatprep.mubr.bf16.mxu0 0
        %5413 = vmatmul.mubr.bf16.gmra.mrb[0].mxu0 %v5105
        %v5414 = vpop.f32.mrb[0].mxu0
        %v5415 = vadd.f32 0.0, %v5414
        %v5416 = vpop.f32.mrb[0].mxu0
        %v5417 = vadd.f32 0.0, %v5416
        %v5418 = vpop.f32.mrb[0].mxu0
        %v5419 = vadd.f32 0.0, %v5418
        %v5420 = vpop.f32.mrb[0].mxu0
        %v5421 = vadd.f32 0.0, %v5420
        %5422 = vdwg.mxu0
        %5423 = vmatprep.subr.bf16.mxu0 %v5048
        %5424 = vmatpush1.bf16.msra.mxu0 %v5047
        %5425 = vmatprep.subr.bf16.mxu0 %v5064
        %5426 = vmatpush1.bf16.msra.mxu0 %v5063
        %5427 = vmatprep.subr.bf16.mxu0 %v5080
        %5428 = vmatpush1.bf16.msra.mxu0 %v5079
        %5429 = vmatprep.subr.bf16.mxu0 %v5144
        %5430 = vmatpush1.bf16.msra.mxu0 %v5141
        %5431 = vmatprep.subr.bf16.mxu0 0
        %5432 = vmatpush1.bf16.msra.mxu0 0
        %5433 = vmatprep.subr.bf16.mxu0 0
        %5434 = vmatpush1.bf16.msra.mxu0 0
        %5435 = vmatprep.subr.bf16.mxu0 0
        %5436 = vmatpush1.bf16.msra.mxu0 0
        %5437 = vmatprep.subr.bf16.mxu0 0
        %5438 = vmatpush1.bf16.msra.mxu0 0
        %5439 = vmatprep.subr.bf16.mxu0 0
        %5440 = vmatpush1.bf16.msra.mxu0 0
        %5441 = vmatprep.subr.bf16.mxu0 0
        %5442 = vmatpush1.bf16.msra.mxu0 0
        %5443 = vmatprep.subr.bf16.mxu0 0
        %5444 = vmatpush1.bf16.msra.mxu0 0
        %5445 = vmatprep.subr.bf16.mxu0 0
        %5446 = vmatpush1.bf16.msra.mxu0 0
        %5447 = vmatprep.subr.bf16.mxu0 0
        %5448 = vmatpush1.bf16.msra.mxu0 0
        %5449 = vmatprep.subr.bf16.mxu0 0
        %5450 = vmatpush1.bf16.msra.mxu0 0
        %5451 = vmatprep.subr.bf16.mxu0 0
        %5452 = vmatpush1.bf16.msra.mxu0 0
        %5453 = vmatprep.subr.bf16.mxu0 0
        %5454 = vmatpush1.bf16.msra.mxu0 0
        %5455 = vmatprep.mubr.bf16.mxu0 0
        %5456 = vmatmul.mubr.bf16.gmra.mrb[0].mxu0 %v5102
        %v5457 = vpop.f32.mrb[0].mxu0
        %v5458 = vadd.f32 0.0, %v5457
        %v5459 = vpop.f32.mrb[0].mxu0
        %v5460 = vadd.f32 0.0, %v5459
        %v5461 = vpop.f32.mrb[0].mxu0
        %v5462 = vadd.f32 0.0, %v5461
        %v5463 = vpop.f32.mrb[0].mxu0
        %v5464 = vadd.f32 0.0, %v5463
        %5465 = vmatprep.mubr.bf16.mxu0 0
        %5466 = vmatmul.mubr.bf16.gmra.mrb[0].mxu0 %v5105
        %v5467 = vpop.f32.mrb[0].mxu0
        %v5468 = vadd.f32 0.0, %v5467
        %v5469 = vpop.f32.mrb[0].mxu0
        %v5470 = vadd.f32 0.0, %v5469
        %v5471 = vpop.f32.mrb[0].mxu0
        %v5472 = vadd.f32 0.0, %v5471
        %v5473 = vpop.f32.mrb[0].mxu0
        %v5474 = vadd.f32 0.0, %v5473
        %5475 = vdwg.mxu0
        %5476 = vmatprep.subr.bf16.mxu0 %v5050
        %5477 = vmatpush1.bf16.msra.mxu0 %v5049
        %5478 = vmatprep.subr.bf16.mxu0 %v5066
        %5479 = vmatpush1.bf16.msra.mxu0 %v5065
        %5480 = vmatprep.subr.bf16.mxu0 %v5082
        %5481 = vmatpush1.bf16.msra.mxu0 %v5081
        %5482 = vmatprep.subr.bf16.mxu0 %v5150
        %5483 = vmatpush1.bf16.msra.mxu0 %v5147
        %5484 = vmatprep.subr.bf16.mxu0 0
        %5485 = vmatpush1.bf16.msra.mxu0 0
        %5486 = vmatprep.subr.bf16.mxu0 0
        %5487 = vmatpush1.bf16.msra.mxu0 0
        %5488 = vmatprep.subr.bf16.mxu0 0
        %5489 = vmatpush1.bf16.msra.mxu0 0
        %5490 = vmatprep.subr.bf16.mxu0 0
        %5491 = vmatpush1.bf16.msra.mxu0 0
        %5492 = vmatprep.subr.bf16.mxu0 0
        %5493 = vmatpush1.bf16.msra.mxu0 0
        %5494 = vmatprep.subr.bf16.mxu0 0
        %5495 = vmatpush1.bf16.msra.mxu0 0
        %5496 = vmatprep.subr.bf16.mxu0 0
        %5497 = vmatpush1.bf16.msra.mxu0 0
        %5498 = vmatprep.subr.bf16.mxu0 0
        %5499 = vmatpush1.bf16.msra.mxu0 0
        %5500 = vmatprep.subr.bf16.mxu0 0
        %5501 = vmatpush1.bf16.msra.mxu0 0
        %5502 = vmatprep.subr.bf16.mxu0 0
        %5503 = vmatpush1.bf16.msra.mxu0 0
        %5504 = vmatprep.subr.bf16.mxu0 0
        %5505 = vmatpush1.bf16.msra.mxu0 0
        %5506 = vmatprep.subr.bf16.mxu0 0
        %5507 = vmatpush1.bf16.msra.mxu0 0
        %5508 = vmatprep.mubr.bf16.mxu0 0
        %5509 = vmatmul.mubr.bf16.gmra.mrb[0].mxu0 %v5102
        %v5510 = vpop.f32.mrb[0].mxu0
        %v5511 = vadd.f32 0.0, %v5510
        %v5512 = vpop.f32.mrb[0].mxu0
        %v5513 = vadd.f32 0.0, %v5512
        %v5514 = vpop.f32.mrb[0].mxu0
        %v5515 = vadd.f32 0.0, %v5514
        %v5516 = vpop.f32.mrb[0].mxu0
        %v5517 = vadd.f32 0.0, %v5516
        %5518 = vmatprep.mubr.bf16.mxu0 0
        %5519 = vmatmul.mubr.bf16.gmra.mrb[0].mxu0 %v5105
        %v5520 = vpop.f32.mrb[0].mxu0
        %v5521 = vadd.f32 0.0, %v5520
        %v5522 = vpop.f32.mrb[0].mxu0
        %v5523 = vadd.f32 0.0, %v5522
        %v5524 = vpop.f32.mrb[0].mxu0
        %v5525 = vadd.f32 0.0, %v5524
        %v5526 = vpop.f32.mrb[0].mxu0
        %v5527 = vadd.f32 0.0, %v5526
        %5528 = vdwg.mxu0
        %5529 = vmatprep.subr.bf16.mxu0 %v5052
        %5530 = vmatpush1.bf16.msra.mxu0 %v5051
        %5531 = vmatprep.subr.bf16.mxu0 %v5068
        %5532 = vmatpush1.bf16.msra.mxu0 %v5067
        %5533 = vmatprep.subr.bf16.mxu0 %v5084
        %5534 = vmatpush1.bf16.msra.mxu0 %v5083
        %5535 = vmatprep.subr.bf16.mxu0 %v5156
        %5536 = vmatpush1.bf16.msra.mxu0 %v5153
        %5537 = vmatprep.subr.bf16.mxu0 0
        %5538 = vmatpush1.bf16.msra.mxu0 0
        %5539 = vmatprep.subr.bf16.mxu0 0
        %5540 = vmatpush1.bf16.msra.mxu0 0
        %5541 = vmatprep.subr.bf16.mxu0 0
        %5542 = vmatpush1.bf16.msra.mxu0 0
        %5543 = vmatprep.subr.bf16.mxu0 0
        %5544 = vmatpush1.bf16.msra.mxu0 0
        %5545 = vmatprep.subr.bf16.mxu0 0
        %5546 = vmatpush1.bf16.msra.mxu0 0
        %5547 = vmatprep.subr.bf16.mxu0 0
        %5548 = vmatpush1.bf16.msra.mxu0 0
        %5549 = vmatprep.subr.bf16.mxu0 0
        %5550 = vmatpush1.bf16.msra.mxu0 0
        %5551 = vmatprep.subr.bf16.mxu0 0
        %5552 = vmatpush1.bf16.msra.mxu0 0
        %5553 = vmatprep.subr.bf16.mxu0 0
        %5554 = vmatpush1.bf16.msra.mxu0 0
        %5555 = vmatprep.subr.bf16.mxu0 0
        %5556 = vmatpush1.bf16.msra.mxu0 0
        %5557 = vmatprep.subr.bf16.mxu0 0
        %5558 = vmatpush1.bf16.msra.mxu0 0
        %5559 = vmatprep.subr.bf16.mxu0 0
        %5560 = vmatpush1.bf16.msra.mxu0 0
        %5561 = vmatprep.mubr.bf16.mxu0 0
        %5562 = vmatmul.mubr.bf16.gmra.mrb[0].mxu0 %v5102
        %v5563 = vpop.f32.mrb[0].mxu0
        %v5564 = vadd.f32 0.0, %v5563
        %v5565 = vpop.f32.mrb[0].mxu0
        %v5566 = vadd.f32 0.0, %v5565
        %v5567 = vpop.f32.mrb[0].mxu0
        %v5568 = vadd.f32 0.0, %v5567
        %v5569 = vpop.f32.mrb[0].mxu0
        %v5570 = vadd.f32 0.0, %v5569
        %5571 = vmatprep.mubr.bf16.mxu0 0
        %5572 = vmatmul.mubr.bf16.gmra.mrb[0].mxu0 %v5105
        %v5573 = vpop.f32.mrb[0].mxu0
        %v5574 = vadd.f32 0.0, %v5573
        %v5575 = vpop.f32.mrb[0].mxu0
        %v5576 = vadd.f32 0.0, %v5575
        %v5577 = vpop.f32.mrb[0].mxu0
        %v5578 = vadd.f32 0.0, %v5577
        %v5579 = vpop.f32.mrb[0].mxu0
        %v5580 = vadd.f32 0.0, %v5579
        %5581 = vdwg.mxu0
        %v5582 = vmul.f32 %v5193, 0.020408163
        %v5583 = vmul.f32 %v5195, 0.020408163
        %v5584 = vmul.f32 %v5246, 0.020408163
        %v5585 = vmul.f32 %v5248, 0.020408163
        %v5586 = vmul.f32 %v5299, 0.020408163
        %v5587 = vmul.f32 %v5301, 0.020408163
        %v5588 = vmul.f32 %v5352, 0.020408163
        %v5589 = vmul.f32 %v5354, 0.020408163
        %v5590 = vmul.f32 %v5405, 0.020408163
        %v5591 = vmul.f32 %v5407, 0.020408163
        %v5592 = vmul.f32 %v5458, 0.020408163
        %v5593 = vmul.f32 %v5460, 0.020408163
        %v5594 = vmul.f32 %v5511, 0.020408163
        %v5595 = vmul.f32 %v5513, 0.020408163
        %v5596 = vmul.f32 %v5564, 0.020408163
        %v5597 = vmul.f32 %v5566, 0.020408163
        %v5598 = vmul.f32 %v5197, 0.020408163
        %v5599 = vmul.f32 %v5199, 0.020408163
        %v5600 = vmul.f32 %v5250, 0.020408163
        %v5601 = vmul.f32 %v5252, 0.020408163
        %v5602 = vmul.f32 %v5303, 0.020408163
        %v5603 = vmul.f32 %v5305, 0.020408163
        %v5604 = vmul.f32 %v5356, 0.020408163
        %v5605 = vmul.f32 %v5358, 0.020408163
        %v5606 = vmul.f32 %v5409, 0.020408163
        %v5607 = vmul.f32 %v5411, 0.020408163
        %v5608 = vmul.f32 %v5462, 0.020408163
        %v5609 = vmul.f32 %v5464, 0.020408163
        %v5610 = vmul.f32 %v5515, 0.020408163
        %v5611 = vmul.f32 %v5517, 0.020408163
        %v5612 = vmul.f32 %v5568, 0.020408163
        %v5613 = vmul.f32 %v5570, 0.020408163
        %v5614 = vmul.f32 %v5203, 0.020408163
        %v5615 = vmul.f32 %v5205, 0.020408163
        %v5616 = vmul.f32 %v5256, 0.020408163
        %v5617 = vmul.f32 %v5258, 0.020408163
        %v5618 = vmul.f32 %v5309, 0.020408163
        %v5619 = vmul.f32 %v5311, 0.020408163
        %v5620 = vmul.f32 %v5362, 0.020408163
        %v5621 = vmul.f32 %v5364, 0.020408163
        %v5622 = vmul.f32 %v5415, 0.020408163
        %v5623 = vmul.f32 %v5417, 0.020408163
        %v5624 = vmul.f32 %v5468, 0.020408163
        %v5625 = vmul.f32 %v5470, 0.020408163
        %v5626 = vmul.f32 %v5521, 0.020408163
        %v5627 = vmul.f32 %v5523, 0.020408163
        %v5628 = vmul.f32 %v5574, 0.020408163
        %v5629 = vmul.f32 %v5576, 0.020408163
        %v5630 = vmul.f32 %v5207, 0.020408163
        %v5631 = vmul.f32 %v5209, 0.020408163
        %v5632 = vmul.f32 %v5260, 0.020408163
        %v5633 = vmul.f32 %v5262, 0.020408163
        %v5634 = vmul.f32 %v5313, 0.020408163
        %v5635 = vmul.f32 %v5315, 0.020408163
        %v5636 = vmul.f32 %v5366, 0.020408163
        %v5637 = vmul.f32 %v5368, 0.020408163
        %v5638 = vmul.f32 %v5419, 0.020408163
        %v5639 = vmul.f32 %v5421, 0.020408163
        %v5640 = vmul.f32 %v5472, 0.020408163
        %v5641 = vmul.f32 %v5474, 0.020408163
        %v5642 = vmul.f32 %v5525, 0.020408163
        %v5643 = vmul.f32 %v5527, 0.020408163
        %v5644 = vmul.f32 %v5578, 0.020408163
        %v5645 = vmul.f32 %v5580, 0.020408163
        %5646 = vst [vmem:[%s465] sm:$0xff] %v5582
        %5647 = vst [vmem:[%s465 + $0x8] sm:$0xff] %v5583
        %5648 = vst [vmem:[%s465 + $0x10] sm:$0xff] %v5584
        %5649 = vst [vmem:[%s465 + $0x18] sm:$0xff] %v5585
        %5650 = vst [vmem:[%s465 + $0x20] sm:$0xff] %v5586
        %5651 = vst [vmem:[%s465 + $0x28] sm:$0xff] %v5587
        %5652 = vst [vmem:[%s465 + $0x30] sm:$0xff] %v5588
        %5653 = vst [vmem:[%s465 + $0x38] sm:$0xff] %v5589
        %5654 = vst [vmem:[%s465 + $0x40] sm:$0xff] %v5590
        %5655 = vst [vmem:[%s465 + $0x48] sm:$0xff] %v5591
        %5656 = vst [vmem:[%s465 + $0x50] sm:$0xff] %v5592
        %5657 = vst [vmem:[%s465 + $0x58] sm:$0xff] %v5593
        %5658 = vst [vmem:[%s465 + $0x60] sm:$0xff] %v5594
        %5659 = vst [vmem:[%s465 + $0x68] sm:$0xff] %v5595
        %5660 = vst [vmem:[%s465 + $0x70] sm:$0xff] %v5596
        %5661 = vst [vmem:[%s465 + $0x78] sm:$0xff] %v5597
        %5662 = vst [vmem:[%s465 + $0x80] sm:$0xff] %v5598
        %5663 = vst [vmem:[%s465 + $0x88] sm:$0xff] %v5599
        %5664 = vst [vmem:[%s465 + $0x90] sm:$0xff] %v5600
        %5665 = vst [vmem:[%s465 + $0x98] sm:$0xff] %v5601
        %5666 = vst [vmem:[%s465 + $0xa0] sm:$0xff] %v5602
        %5667 = vst [vmem:[%s465 + $0xa8] sm:$0xff] %v5603
        %5668 = vst [vmem:[%s465 + $0xb0] sm:$0xff] %v5604
        %5669 = vst [vmem:[%s465 + $0xb8] sm:$0xff] %v5605
        %5670 = vst [vmem:[%s465 + $0xc0] sm:$0xff] %v5606
        %5671 = vst [vmem:[%s465 + $0xc8] sm:$0xff] %v5607
        %5672 = vst [vmem:[%s465 + $0xd0] sm:$0xff] %v5608
        %5673 = vst [vmem:[%s465 + $0xd8] sm:$0xff] %v5609
        %5674 = vst [vmem:[%s465 + $0xe0] sm:$0xff] %v5610
        %5675 = vst [vmem:[%s465 + $0xe8] sm:$0xff] %v5611
        %5676 = vst [vmem:[%s465 + $0xf0] sm:$0xff] %v5612
        %5677 = vst [vmem:[%s465 + $0xf8] sm:$0xff] %v5613
        %5678 = vst [vmem:[%s465 + $0x100] sm:$0xff] %v5614
        %5679 = vst [vmem:[%s465 + $0x108] sm:$0xff] %v5615
        %5680 = vst [vmem:[%s465 + $0x110] sm:$0xff] %v5616
        %5681 = vst [vmem:[%s465 + $0x118] sm:$0xff] %v5617
        %5682 = vst [vmem:[%s465 + $0x120] sm:$0xff] %v5618
        %5683 = vst [vmem:[%s465 + $0x128] sm:$0xff] %v5619
        %5684 = vst [vmem:[%s465 + $0x130] sm:$0xff] %v5620
        %5685 = vst [vmem:[%s465 + $0x138] sm:$0xff] %v5621
        %5686 = vst [vmem:[%s465 + $0x140] sm:$0xff] %v5622
        %5687 = vst [vmem:[%s465 + $0x148] sm:$0xff] %v5623
        %5688 = vst [vmem:[%s465 + $0x150] sm:$0xff] %v5624
        %5689 = vst [vmem:[%s465 + $0x158] sm:$0xff] %v5625
        %5690 = vst [vmem:[%s465 + $0x160] sm:$0xff] %v5626
        %5691 = vst [vmem:[%s465 + $0x168] sm:$0xff] %v5627
        %5692 = vst [vmem:[%s465 + $0x170] sm:$0xff] %v5628
        %5693 = vst [vmem:[%s465 + $0x178] sm:$0xff] %v5629
        %5694 = vst [vmem:[%s465 + $0x180] sm:$0xff] %v5630
        %5695 = vst [vmem:[%s465 + $0x188] sm:$0xff] %v5631
        %5696 = vst [vmem:[%s465 + $0x190] sm:$0xff] %v5632
        %5697 = vst [vmem:[%s465 + $0x198] sm:$0xff] %v5633
        %5698 = vst [vmem:[%s465 + $0x1a0] sm:$0xff] %v5634
        %5699 = vst [vmem:[%s465 + $0x1a8] sm:$0xff] %v5635
        %5700 = vst [vmem:[%s465 + $0x1b0] sm:$0xff] %v5636
        %5701 = vst [vmem:[%s465 + $0x1b8] sm:$0xff] %v5637
        %5702 = vst [vmem:[%s465 + $0x1c0] sm:$0xff] %v5638
        %5703 = vst [vmem:[%s465 + $0x1c8] sm:$0xff] %v5639
        %5704 = vst [vmem:[%s465 + $0x1d0] sm:$0xff] %v5640
        %5705 = vst [vmem:[%s465 + $0x1d8] sm:$0xff] %v5641
        %5706 = vst [vmem:[%s465 + $0x1e0] sm:$0xff] %v5642
        %5707 = vst [vmem:[%s465 + $0x1e8] sm:$0xff] %v5643
        %5708 = vst [vmem:[%s465 + $0x1f0] sm:$0xff] %v5644
        %5709 = vst [vmem:[%s465 + $0x1f8] sm:$0xff] %v5645
        %5711 = vset.pattern.permute.xlu0 0
        %5712 = vperm.xlu0 %5711, %v962
        %v5713 = vpop.permute.xlu0 %5712
        %5716 = vset.pattern.permute.xlu0 0
        %5717 = vperm.xlu0 %5716, %v963
        %v5718 = vpop.permute.xlu0 %5717
        %5721 = vset.pattern.permute.xlu0 0
        %5722 = vperm.xlu0 %5721, %v964
        %v5723 = vpop.permute.xlu0 %5722
        %5726 = vset.pattern.permute.xlu0 0
        %5727 = vperm.xlu0 %5726, %v965
        %v5728 = vpop.permute.xlu0 %5727
        %v5730 = vmul.f32 %v5713, %v5582
        %v5731 = vmul.f32 %v5713, %v5583
        %v5732 = vmul.f32 %v5713, %v5584
        %v5733 = vmul.f32 %v5713, %v5585
        %v5734 = vmul.f32 %v5713, %v5586
        %v5735 = vmul.f32 %v5713, %v5587
        %v5736 = vmul.f32 %v5713, %v5588
        %v5737 = vmul.f32 %v5713, %v5589
        %v5738 = vmul.f32 %v5713, %v5590
        %v5739 = vmul.f32 %v5713, %v5591
        %v5740 = vmul.f32 %v5713, %v5592
        %v5741 = vmul.f32 %v5713, %v5593
        %v5742 = vmul.f32 %v5713, %v5594
        %v5743 = vmul.f32 %v5713, %v5595
        %v5744 = vmul.f32 %v5713, %v5596
        %v5745 = vmul.f32 %v5713, %v5597
        %v5746 = vmul.f32 %v5718, %v5598
        %v5747 = vmul.f32 %v5718, %v5599
        %v5748 = vmul.f32 %v5718, %v5600
        %v5749 = vmul.f32 %v5718, %v5601
        %v5750 = vmul.f32 %v5718, %v5602
        %v5751 = vmul.f32 %v5718, %v5603
        %v5752 = vmul.f32 %v5718, %v5604
        %v5753 = vmul.f32 %v5718, %v5605
        %v5754 = vmul.f32 %v5718, %v5606
        %v5755 = vmul.f32 %v5718, %v5607
        %v5756 = vmul.f32 %v5718, %v5608
        %v5757 = vmul.f32 %v5718, %v5609
        %v5758 = vmul.f32 %v5718, %v5610
        %v5759 = vmul.f32 %v5718, %v5611
        %v5760 = vmul.f32 %v5718, %v5612
        %v5761 = vmul.f32 %v5718, %v5613
        %v5762 = vmul.f32 %v5723, %v5614
        %v5763 = vmul.f32 %v5723, %v5615
        %v5764 = vmul.f32 %v5723, %v5616
        %v5765 = vmul.f32 %v5723, %v5617
        %v5766 = vmul.f32 %v5723, %v5618
        %v5767 = vmul.f32 %v5723, %v5619
        %v5768 = vmul.f32 %v5723, %v5620
        %v5769 = vmul.f32 %v5723, %v5621
        %v5770 = vmul.f32 %v5723, %v5622
        %v5771 = vmul.f32 %v5723, %v5623
        %v5772 = vmul.f32 %v5723, %v5624
        %v5773 = vmul.f32 %v5723, %v5625
        %v5774 = vmul.f32 %v5723, %v5626
        %v5775 = vmul.f32 %v5723, %v5627
        %v5776 = vmul.f32 %v5723, %v5628
        %v5777 = vmul.f32 %v5723, %v5629
        %v5778 = vmul.f32 %v5728, %v5630
        %v5779 = vmul.f32 %v5728, %v5631
        %v5780 = vmul.f32 %v5728, %v5632
        %v5781 = vmul.f32 %v5728, %v5633
        %v5782 = vmul.f32 %v5728, %v5634
        %v5783 = vmul.f32 %v5728, %v5635
        %v5784 = vmul.f32 %v5728, %v5636
        %v5785 = vmul.f32 %v5728, %v5637
        %v5786 = vmul.f32 %v5728, %v5638
        %v5787 = vmul.f32 %v5728, %v5639
        %v5788 = vmul.f32 %v5728, %v5640
        %v5789 = vmul.f32 %v5728, %v5641
        %v5790 = vmul.f32 %v5728, %v5642
        %v5791 = vmul.f32 %v5728, %v5643
        %v5792 = vmul.f32 %v5728, %v5644
        %v5793 = vmul.f32 %v5728, %v5645
        %v5794 = vadd.f32 %v5730, %v5746
        %v5795 = vadd.f32 %v5794, %v5762
        %v5796 = vadd.f32 %v5795, %v5778
        %v5797 = vrot.slane %v5796, 4
        %v5798 = vadd.f32 %v5796, %v5797
        %v5799 = vrot.slane %v5798, 2
        %v5800 = vadd.f32 %v5798, %v5799
        %v5801 = vrot.slane %v5800, 1
        %v5802 = vadd.f32 %v5800, %v5801
        %v5803 = vadd.f32 %v5731, %v5747
        %v5804 = vadd.f32 %v5803, %v5763
        %v5805 = vadd.f32 %v5804, %v5779
        %v5806 = vrot.slane %v5805, 4
        %v5807 = vadd.f32 %v5805, %v5806
        %v5808 = vrot.slane %v5807, 2
        %v5809 = vadd.f32 %v5807, %v5808
        %v5810 = vrot.slane %v5809, 1
        %v5811 = vadd.f32 %v5809, %v5810
        %v5812 = vadd.f32 %v5732, %v5748
        %v5813 = vadd.f32 %v5812, %v5764
        %v5814 = vadd.f32 %v5813, %v5780
        %v5815 = vrot.slane %v5814, 4
        %v5816 = vadd.f32 %v5814, %v5815
        %v5817 = vrot.slane %v5816, 2
        %v5818 = vadd.f32 %v5816, %v5817
        %v5819 = vrot.slane %v5818, 1
        %v5820 = vadd.f32 %v5818, %v5819
        %v5821 = vadd.f32 %v5733, %v5749
        %v5822 = vadd.f32 %v5821, %v5765
        %v5823 = vadd.f32 %v5822, %v5781
        %v5824 = vrot.slane %v5823, 4
        %v5825 = vadd.f32 %v5823, %v5824
        %v5826 = vrot.slane %v5825, 2
        %v5827 = vadd.f32 %v5825, %v5826
        %v5828 = vrot.slane %v5827, 1
        %v5829 = vadd.f32 %v5827, %v5828
        %v5830 = vadd.f32 %v5734, %v5750
        %v5831 = vadd.f32 %v5830, %v5766
        %v5832 = vadd.f32 %v5831, %v5782
        %v5833 = vrot.slane %v5832, 4
        %v5834 = vadd.f32 %v5832, %v5833
        %v5835 = vrot.slane %v5834, 2
        %v5836 = vadd.f32 %v5834, %v5835
        %v5837 = vrot.slane %v5836, 1
        %v5838 = vadd.f32 %v5836, %v5837
        %v5839 = vadd.f32 %v5735, %v5751
        %v5840 = vadd.f32 %v5839, %v5767
        %v5841 = vadd.f32 %v5840, %v5783
        %v5842 = vrot.slane %v5841, 4
        %v5843 = vadd.f32 %v5841, %v5842
        %v5844 = vrot.slane %v5843, 2
        %v5845 = vadd.f32 %v5843, %v5844
        %v5846 = vrot.slane %v5845, 1
        %v5847 = vadd.f32 %v5845, %v5846
        %v5848 = vadd.f32 %v5736, %v5752
        %v5849 = vadd.f32 %v5848, %v5768
        %v5850 = vadd.f32 %v5849, %v5784
        %v5851 = vrot.slane %v5850, 4
        %v5852 = vadd.f32 %v5850, %v5851
        %v5853 = vrot.slane %v5852, 2
        %v5854 = vadd.f32 %v5852, %v5853
        %v5855 = vrot.slane %v5854, 1
        %v5856 = vadd.f32 %v5854, %v5855
        %v5857 = vadd.f32 %v5737, %v5753
        %v5858 = vadd.f32 %v5857, %v5769
        %v5859 = vadd.f32 %v5858, %v5785
        %v5860 = vrot.slane %v5859, 4
        %v5861 = vadd.f32 %v5859, %v5860
        %v5862 = vrot.slane %v5861, 2
        %v5863 = vadd.f32 %v5861, %v5862
        %v5864 = vrot.slane %v5863, 1
        %v5865 = vadd.f32 %v5863, %v5864
        %v5866 = vadd.f32 %v5738, %v5754
        %v5867 = vadd.f32 %v5866, %v5770
        %v5868 = vadd.f32 %v5867, %v5786
        %v5869 = vrot.slane %v5868, 4
        %v5870 = vadd.f32 %v5868, %v5869
        %v5871 = vrot.slane %v5870, 2
        %v5872 = vadd.f32 %v5870, %v5871
        %v5873 = vrot.slane %v5872, 1
        %v5874 = vadd.f32 %v5872, %v5873
        %v5875 = vadd.f32 %v5739, %v5755
        %v5876 = vadd.f32 %v5875, %v5771
        %v5877 = vadd.f32 %v5876, %v5787
        %v5878 = vrot.slane %v5877, 4
        %v5879 = vadd.f32 %v5877, %v5878
        %v5880 = vrot.slane %v5879, 2
        %v5881 = vadd.f32 %v5879, %v5880
        %v5882 = vrot.slane %v5881, 1
        %v5883 = vadd.f32 %v5881, %v5882
        %v5884 = vadd.f32 %v5740, %v5756
        %v5885 = vadd.f32 %v5884, %v5772
        %v5886 = vadd.f32 %v5885, %v5788
        %v5887 = vrot.slane %v5886, 4
        %v5888 = vadd.f32 %v5886, %v5887
        %v5889 = vrot.slane %v5888, 2
        %v5890 = vadd.f32 %v5888, %v5889
        %v5891 = vrot.slane %v5890, 1
        %v5892 = vadd.f32 %v5890, %v5891
        %v5893 = vadd.f32 %v5741, %v5757
        %v5894 = vadd.f32 %v5893, %v5773
        %v5895 = vadd.f32 %v5894, %v5789
        %v5896 = vrot.slane %v5895, 4
        %v5897 = vadd.f32 %v5895, %v5896
        %v5898 = vrot.slane %v5897, 2
        %v5899 = vadd.f32 %v5897, %v5898
        %v5900 = vrot.slane %v5899, 1
        %v5901 = vadd.f32 %v5899, %v5900
        %v5902 = vadd.f32 %v5742, %v5758
        %v5903 = vadd.f32 %v5902, %v5774
        %v5904 = vadd.f32 %v5903, %v5790
        %v5905 = vrot.slane %v5904, 4
        %v5906 = vadd.f32 %v5904, %v5905
        %v5907 = vrot.slane %v5906, 2
        %v5908 = vadd.f32 %v5906, %v5907
        %v5909 = vrot.slane %v5908, 1
        %v5910 = vadd.f32 %v5908, %v5909
        %v5911 = vadd.f32 %v5743, %v5759
        %v5912 = vadd.f32 %v5911, %v5775
        %v5913 = vadd.f32 %v5912, %v5791
        %v5914 = vrot.slane %v5913, 4
        %v5915 = vadd.f32 %v5913, %v5914
        %v5916 = vrot.slane %v5915, 2
        %v5917 = vadd.f32 %v5915, %v5916
        %v5918 = vrot.slane %v5917, 1
        %v5919 = vadd.f32 %v5917, %v5918
        %v5920 = vadd.f32 %v5744, %v5760
        %v5921 = vadd.f32 %v5920, %v5776
        %v5922 = vadd.f32 %v5921, %v5792
        %v5923 = vrot.slane %v5922, 4
        %v5924 = vadd.f32 %v5922, %v5923
        %v5925 = vrot.slane %v5924, 2
        %v5926 = vadd.f32 %v5924, %v5925
        %v5927 = vrot.slane %v5926, 1
        %v5928 = vadd.f32 %v5926, %v5927
        %v5929 = vadd.f32 %v5745, %v5761
        %v5930 = vadd.f32 %v5929, %v5777
        %v5931 = vadd.f32 %v5930, %v5793
        %v5932 = vrot.slane %v5931, 4
        %v5933 = vadd.f32 %v5931, %v5932
        %v5934 = vrot.slane %v5933, 2
        %v5935 = vadd.f32 %v5933, %v5934
        %v5936 = vrot.slane %v5935, 1
        %v5937 = vadd.f32 %v5935, %v5936
        %5939 = vset.pattern.permute.xlu0 0
        %5940 = vperm.xlu0 %5939, %v966
        %v5941 = vpop.permute.xlu0 %5940
        %v5943 = vlaneseq
        %v5944 = vshrl.u32 %v5943, 7
        %v5945 = vsub.s32 0, %v5944
        %v5946 = vrot.slane %v5941, %v5945
        %v5947 = vadd.f32 %v5802, %v5946
        %v5948 = vadd.f32 %v5811, %v5946
        %v5949 = vadd.f32 %v5820, %v5946
        %v5950 = vadd.f32 %v5829, %v5946
        %v5951 = vadd.f32 %v5838, %v5946
        %v5952 = vadd.f32 %v5847, %v5946
        %v5953 = vadd.f32 %v5856, %v5946
        %v5954 = vadd.f32 %v5865, %v5946
        %v5955 = vadd.f32 %v5874, %v5946
        %v5956 = vadd.f32 %v5883, %v5946
        %v5957 = vadd.f32 %v5892, %v5946
        %v5958 = vadd.f32 %v5901, %v5946
        %v5959 = vadd.f32 %v5910, %v5946
        %v5960 = vadd.f32 %v5919, %v5946
        %v5961 = vadd.f32 %v5928, %v5946
        %v5962 = vadd.f32 %v5937, %v5946
        %v5979 = vcombine.low %v5947, %v5948
        %v5980 = vcombine.low %v5949, %v5950
        %v5981 = vcombine.low %v5951, %v5952
        %v5982 = vcombine.low %v5953, %v5954
        %v5984 = vunpack.c.l.s4 1966171168
        %v5985 = vunpack.c.0.s8 %v5984
        %v5986 = vlaneseq
        %v5987 = vshrl.u32 %v5986, 7
        %v5988 = vsub.s32 %v5985, %v5987
        %v5989 = vrot.slane %v5979, %v5988
        %v5991 = vunpack.c.l.s4 1966171168
        %v5992 = vunpack.c.0.s8 %v5991
        %v5993 = vlaneseq
        %v5994 = vshrl.u32 %v5993, 7
        %v5995 = vsub.s32 %v5992, %v5994
        %v5996 = vrot.slane %v5980, %v5995
        %v5998 = vunpack.c.l.s4 1966171168
        %v5999 = vunpack.c.0.s8 %v5998
        %v6000 = vlaneseq
        %v6001 = vshrl.u32 %v6000, 7
        %v6002 = vsub.s32 %v5999, %v6001
        %v6003 = vrot.slane %v5981, %v6002
        %v6005 = vunpack.c.l.s4 1966171168
        %v6006 = vunpack.c.0.s8 %v6005
        %v6007 = vlaneseq
        %v6008 = vshrl.u32 %v6007, 7
        %v6009 = vsub.s32 %v6006, %v6008
        %v6010 = vrot.slane %v5982, %v6009
        %v6011 = vcombine.low %v5989, %v5996
        %v6012 = vcombine.low %v6003, %v6010
        %v6014 = vunpack.c.l.s4 1966171168
        %v6015 = vunpack.c.0.s8 %v6014
        %v6016 = vlaneseq
        %v6017 = vshrl.u32 %v6016, 7
        %v6018 = vsub.s32 %v6015, %v6017
        %v6019 = vrot.slane %v6011, %v6018
        %v6021 = vunpack.c.l.s4 1966171168
        %v6022 = vunpack.c.0.s8 %v6021
        %v6023 = vlaneseq
        %v6024 = vshrl.u32 %v6023, 7
        %v6025 = vsub.s32 %v6022, %v6024
        %v6026 = vrot.slane %v6012, %v6025
        %v6027 = vcombine.low %v6019, %v6026
        %v6028 = vcombine.low %v5955, %v5956
        %v6029 = vcombine.low %v5957, %v5958
        %v6030 = vcombine.low %v5959, %v5960
        %v6031 = vcombine.low %v5961, %v5962
        %v6033 = vunpack.c.l.s4 1966171168
        %v6034 = vunpack.c.0.s8 %v6033
        %v6035 = vlaneseq
        %v6036 = vshrl.u32 %v6035, 7
        %v6037 = vsub.s32 %v6034, %v6036
        %v6038 = vrot.slane %v6028, %v6037
        %v6040 = vunpack.c.l.s4 1966171168
        %v6041 = vunpack.c.0.s8 %v6040
        %v6042 = vlaneseq
        %v6043 = vshrl.u32 %v6042, 7
        %v6044 = vsub.s32 %v6041, %v6043
        %v6045 = vrot.slane %v6029, %v6044
        %v6047 = vunpack.c.l.s4 1966171168
        %v6048 = vunpack.c.0.s8 %v6047
        %v6049 = vlaneseq
        %v6050 = vshrl.u32 %v6049, 7
        %v6051 = vsub.s32 %v6048, %v6050
        %v6052 = vrot.slane %v6030, %v6051
        %v6054 = vunpack.c.l.s4 1966171168
        %v6055 = vunpack.c.0.s8 %v6054
        %v6056 = vlaneseq
        %v6057 = vshrl.u32 %v6056, 7
        %v6058 = vsub.s32 %v6055, %v6057
        %v6059 = vrot.slane %v6031, %v6058
        %v6060 = vcombine.low %v6038, %v6045
        %v6061 = vcombine.low %v6052, %v6059
        %v6063 = vunpack.c.l.s4 1966171168
        %v6064 = vunpack.c.0.s8 %v6063
        %v6065 = vlaneseq
        %v6066 = vshrl.u32 %v6065, 7
        %v6067 = vsub.s32 %v6064, %v6066
        %v6068 = vrot.slane %v6060, %v6067
        %v6070 = vunpack.c.l.s4 1966171168
        %v6071 = vunpack.c.0.s8 %v6070
        %v6072 = vlaneseq
        %v6073 = vshrl.u32 %v6072, 7
        %v6074 = vsub.s32 %v6071, %v6073
        %v6075 = vrot.slane %v6061, %v6074
        %v6076 = vcombine.low %v6068, %v6075
        %6079 = vst [vmem:[%s499] sm:$0xff] %v6027
        %6080 = vst [vmem:[%s499 + $0x8] sm:$0xff] %v6076
        %s6081 = scalar_lea.vmem %s478, 200
        %v6082 = vld [vmem:[%s6081] sm:$0xff]
        %v6083 = vld [vmem:[%s6081 + $0x8] sm:$0xff]
        %v6084 = vld [vmem:[%s6081 + $0x10] sm:$0xff]
        %v6085 = vld [vmem:[%s6081 + $0x18] sm:$0xff]
        %v6086 = vld [vmem:[%s6081 + $0x20] sm:$0xff]
        %v6087 = vld [vmem:[%s6081 + $0x28] sm:$0xff]
        %v6088 = vld [vmem:[%s6081 + $0x30] sm:$0xff]
        %v6089 = vld [vmem:[%s6081 + $0x38] sm:$0xff]
        %v6090 = vld [vmem:[%s6081 + $0x40] sm:$0xff]
        %v6091 = vld [vmem:[%s6081 + $0x48] sm:$0xff]
        %v6092 = vld [vmem:[%s6081 + $0x50] sm:$0xff]
        %v6093 = vld [vmem:[%s6081 + $0x58] sm:$0xff]
        %v6094 = vld [vmem:[%s6081 + $0x60] sm:$0xff]
        %v6095 = vld [vmem:[%s6081 + $0x68] sm:$0xff]
        %v6096 = vld [vmem:[%s6081 + $0x70] sm:$0xff]
        %v6097 = vld [vmem:[%s6081 + $0x78] sm:$0xff]
        %v6098 = vld [vmem:[%s6081 + $0x80] sm:$0xff]
        %v6099 = vld [vmem:[%s6081 + $0x88] sm:$0xff]
        %v6100 = vld [vmem:[%s6081 + $0x90] sm:$0xff]
        %v6101 = vld [vmem:[%s6081 + $0x98] sm:$0xff]
        %v6102 = vld [vmem:[%s6081 + $0xa0] sm:$0xff]
        %v6103 = vld [vmem:[%s6081 + $0xa8] sm:$0xff]
        %v6104 = vld [vmem:[%s6081 + $0xb0] sm:$0xff]
        %v6105 = vld [vmem:[%s6081 + $0xb8] sm:$0xff]
        %v6106 = vld [vmem:[%s6081 + $0xc0] sm:$0x33]
        %s6107 = scalar_lea.vmem %s485, 84
        %v6108 = vld [vmem:[%s6107] sm:$0xff]
        %v6109 = vld [vmem:[%s6107 + $0x8] sm:$0xf]
        %v6110 = vld [vmem:[%s6107 + $0xc] sm:$0xff]
        %v6111 = vld [vmem:[%s6107 + $0x14] sm:$0xf]
        %v6112 = vld [vmem:[%s6107 + $0x18] sm:$0xff]
        %v6113 = vld [vmem:[%s6107 + $0x20] sm:$0xf]
        %v6114 = vld [vmem:[%s6107 + $0x24] sm:$0xff]
        %v6115 = vld [vmem:[%s6107 + $0x2c] sm:$0xf]
        %v6116 = vld [vmem:[%s6107 + $0x30] sm:$0xff]
        %v6117 = vld [vmem:[%s6107 + $0x38] sm:$0xf]
        %v6118 = vld [vmem:[%s6107 + $0x3c] sm:$0xff]
        %v6119 = vld [vmem:[%s6107 + $0x44] sm:$0xf]
        %v6120 = vld [vmem:[%s6107 + $0x48] sm:$0x11]
        %v6121 = vld [vmem:[%s6107 + $0x50] sm:$0x1]
        %v6147 = vunpack.c.l.b16 %v6082
        %v6148 = vunpack.c.h.b16 %v6082
        %v6149 = vunpack.c.l.b16 %v6083
        %v6150 = vunpack.c.h.b16 %v6083
        %v6151 = vunpack.c.l.b16 %v6084
        %v6152 = vunpack.c.h.b16 %v6084
        %v6153 = vunpack.c.l.b16 %v6085
        %v6154 = vunpack.c.h.b16 %v6085
        %v6155 = vunpack.c.l.b16 %v6086
        %v6156 = vunpack.c.h.b16 %v6086
        %v6157 = vunpack.c.l.b16 %v6087
        %v6158 = vunpack.c.h.b16 %v6087
        %v6159 = vunpack.c.l.b16 %v6088
        %v6160 = vunpack.c.h.b16 %v6088
        %v6161 = vunpack.c.l.b16 %v6089
        %v6162 = vunpack.c.h.b16 %v6089
        %v6163 = vunpack.c.l.b16 %v6090
        %v6164 = vunpack.c.h.b16 %v6090
        %v6165 = vunpack.c.l.b16 %v6091
        %v6166 = vunpack.c.h.b16 %v6091
        %v6167 = vunpack.c.l.b16 %v6092
        %v6168 = vunpack.c.h.b16 %v6092
        %v6169 = vunpack.c.l.b16 %v6093
        %v6170 = vunpack.c.h.b16 %v6093
        %v6171 = vunpack.c.l.b16 %v6094
        %v6172 = vunpack.c.h.b16 %v6094
        %v6173 = vunpack.c.l.b16 %v6095
        %v6174 = vunpack.c.h.b16 %v6095
        %v6175 = vunpack.c.l.b16 %v6096
        %v6176 = vunpack.c.h.b16 %v6096
        %v6177 = vunpack.c.l.b16 %v6097
        %v6178 = vunpack.c.h.b16 %v6097
        %v6179 = vunpack.c.l.b16 %v6098
        %v6180 = vunpack.c.h.b16 %v6098
        %v6181 = vunpack.c.l.b16 %v6099
        %v6182 = vunpack.c.h.b16 %v6099
        %v6183 = vunpack.c.l.b16 %v6100
        %v6184 = vunpack.c.h.b16 %v6100
        %v6185 = vunpack.c.l.b16 %v6101
        %v6186 = vunpack.c.h.b16 %v6101
        %v6187 = vunpack.c.l.b16 %v6102
        %v6188 = vunpack.c.h.b16 %v6102
        %v6189 = vunpack.c.l.b16 %v6103
        %v6190 = vunpack.c.h.b16 %v6103
        %v6191 = vunpack.c.l.b16 %v6104
        %v6192 = vunpack.c.h.b16 %v6104
        %v6193 = vunpack.c.l.b16 %v6105
        %v6194 = vunpack.c.h.b16 %v6105
        %v6195 = vunpack.c.l.b16 %v6106
        %v6196 = vunpack.c.h.b16 %v6106
        %v6197 = vpack.c.b16 %v6149, %v6147
        %v6198 = vpack.c.b16 %v6150, %v6148
        %v6199 = vpack.c.b16 %v6153, %v6151
        %v6200 = vpack.c.b16 %v6154, %v6152
        %v6201 = vpack.c.b16 %v6157, %v6155
        %v6202 = vpack.c.b16 %v6158, %v6156
        %v6203 = vpack.c.b16 %v6161, %v6159
        %v6204 = vpack.c.b16 %v6162, %v6160
        %v6205 = vpack.c.b16 %v6165, %v6163
        %v6206 = vpack.c.b16 %v6166, %v6164
        %v6207 = vpack.c.b16 %v6169, %v6167
        %v6208 = vpack.c.b16 %v6170, %v6168
        %v6209 = vpack.c.b16 %v6173, %v6171
        %v6210 = vpack.c.b16 %v6174, %v6172
        %v6211 = vpack.c.b16 %v6177, %v6175
        %v6212 = vpack.c.b16 %v6178, %v6176
        %v6213 = vpack.c.b16 %v6181, %v6179
        %v6214 = vpack.c.b16 %v6182, %v6180
        %v6215 = vpack.c.b16 %v6185, %v6183
        %v6216 = vpack.c.b16 %v6186, %v6184
        %v6217 = vpack.c.b16 %v6189, %v6187
        %v6218 = vpack.c.b16 %v6190, %v6188
        %v6219 = vpack.c.b16 %v6193, %v6191
        %v6220 = vpack.c.b16 %v6194, %v6192
        %v6221 = vpack.c.b16 %v6195, %v6195
        %v6222 = vpack.c.b16 %v6196, %v6196
        %v6237 = vsel %vm1177, %v6198, 0
        %v6240 = vsel %vm1177, %v6200, 0
        %v6243 = vsel %vm1177, %v6202, 0
        %v6246 = vsel %vm1177, %v6204, 0
        %v6249 = vsel %vm1177, %v6206, 0
        %v6252 = vsel %vm1177, %v6208, 0
        %v6255 = vsel %vm1177, %v6210, 0
        %v6258 = vsel %vm1177, %v6212, 0
        %v6261 = vsel %vm1177, %v6214, 0
        %v6264 = vsel %vm1177, %v6216, 0
        %v6267 = vsel %vm1177, %v6218, 0
        %v6270 = vsel %vm1177, %v6220, 0
        %v6273 = vsel %vm1177, %v6222, 0
        %6275 = vmatprep.subr.bf16.mxu0 0
        %6276 = vmatpush1.bf16.msra.mxu0 %v1160
        %6277 = vmatprep.subr.bf16.mxu0 0
        %6278 = vmatpush1.bf16.msra.mxu0 %v1161
        %6279 = vmatprep.subr.bf16.mxu0 0
        %6280 = vmatpush1.bf16.msra.mxu0 %v1162
        %6281 = vmatprep.subr.bf16.mxu0 0
        %6282 = vmatpush1.bf16.msra.mxu0 %v1163
        %6283 = vmatprep.subr.bf16.mxu0 0
        %6284 = vmatpush1.bf16.msra.mxu0 %v1164
        %6285 = vmatprep.subr.bf16.mxu0 0
        %6286 = vmatpush1.bf16.msra.mxu0 %v1165
        %6287 = vmatprep.subr.bf16.mxu0 0
        %6288 = vmatpush1.bf16.msra.mxu0 %v1166
        %6289 = vmatprep.subr.bf16.mxu0 0
        %6290 = vmatpush1.bf16.msra.mxu0 %v1167
        %6291 = vmatprep.subr.bf16.mxu0 0
        %6292 = vmatpush1.bf16.msra.mxu0 %v1219
        %6293 = vmatprep.subr.bf16.mxu0 0
        %6294 = vmatpush1.bf16.msra.mxu0 0
        %6295 = vmatprep.subr.bf16.mxu0 0
        %6296 = vmatpush1.bf16.msra.mxu0 0
        %6297 = vmatprep.subr.bf16.mxu0 0
        %6298 = vmatpush1.bf16.msra.mxu0 0
        %6299 = vmatprep.subr.bf16.mxu0 0
        %6300 = vmatpush1.bf16.msra.mxu0 0
        %6301 = vmatprep.subr.bf16.mxu0 0
        %6302 = vmatpush1.bf16.msra.mxu0 0
        %6303 = vmatprep.subr.bf16.mxu0 0
        %6304 = vmatpush1.bf16.msra.mxu0 0
        %6305 = vmatprep.subr.bf16.mxu0 0
        %6306 = vmatpush1.bf16.msra.mxu0 0
        %6307 = vmatprep.mubr.bf16.mxu0 %v6237
        %6308 = vmatmul.mubr.bf16.gmra.mrb[0].mxu0 %v6197
        %v6309 = vpop.f32.mrb[0].mxu0
        %v6310 = vadd.f32 %v1010, %v6309
        %v6311 = vpop.f32.mrb[0].mxu0
        %v6312 = vpop.f32.mrb[0].mxu0
        %v6313 = vadd.f32 %v1010, %v6312
        %v6314 = vpop.f32.mrb[0].mxu0
        %6315 = vmatprep.mubr.bf16.mxu0 %v6240
        %6316 = vmatmul.mubr.bf16.gmra.mrb[0].mxu0 %v6199
        %v6317 = vpop.f32.mrb[0].mxu0
        %v6318 = vadd.f32 %v1010, %v6317
        %v6319 = vpop.f32.mrb[0].mxu0
        %v6320 = vpop.f32.mrb[0].mxu0
        %v6321 = vadd.f32 %v1010, %v6320
        %v6322 = vpop.f32.mrb[0].mxu0
        %6323 = vmatprep.mubr.bf16.mxu0 %v6243
        %6324 = vmatmul.mubr.bf16.gmra.mrb[0].mxu0 %v6201
        %v6325 = vpop.f32.mrb[0].mxu0
        %v6326 = vadd.f32 %v1010, %v6325
        %v6327 = vpop.f32.mrb[0].mxu0
        %v6328 = vpop.f32.mrb[0].mxu0
        %v6329 = vadd.f32 %v1010, %v6328
        %v6330 = vpop.f32.mrb[0].mxu0
        %6331 = vmatprep.mubr.bf16.mxu0 %v6246
        %6332 = vmatmul.mubr.bf16.gmra.mrb[0].mxu0 %v6203
        %v6333 = vpop.f32.mrb[0].mxu0
        %v6334 = vadd.f32 %v1010, %v6333
        %v6335 = vpop.f32.mrb[0].mxu0
        %v6336 = vpop.f32.mrb[0].mxu0
        %v6337 = vadd.f32 %v1010, %v6336
        %v6338 = vpop.f32.mrb[0].mxu0
        %6339 = vmatprep.mubr.bf16.mxu0 %v6249
        %6340 = vmatmul.mubr.bf16.gmra.mrb[0].mxu0 %v6205
        %v6341 = vpop.f32.mrb[0].mxu0
        %v6342 = vadd.f32 %v1010, %v6341
        %v6343 = vpop.f32.mrb[0].mxu0
        %v6344 = vpop.f32.mrb[0].mxu0
        %v6345 = vadd.f32 %v1010, %v6344
        %v6346 = vpop.f32.mrb[0].mxu0
        %6347 = vmatprep.mubr.bf16.mxu0 %v6252
        %6348 = vmatmul.mubr.bf16.gmra.mrb[0].mxu0 %v6207
        %v6349 = vpop.f32.mrb[0].mxu0
        %v6350 = vadd.f32 %v1010, %v6349
        %v6351 = vpop.f32.mrb[0].mxu0
        %v6352 = vpop.f32.mrb[0].mxu0
        %v6353 = vadd.f32 %v1010, %v6352
        %v6354 = vpop.f32.mrb[0].mxu0
        %6355 = vmatprep.mubr.bf16.mxu0 %v6255
        %6356 = vmatmul.mubr.bf16.gmra.mrb[0].mxu0 %v6209
        %v6357 = vpop.f32.mrb[0].mxu0
        %v6358 = vadd.f32 %v1010, %v6357
        %v6359 = vpop.f32.mrb[0].mxu0
        %v6360 = vpop.f32.mrb[0].mxu0
        %v6361 = vadd.f32 %v1010, %v6360
        %v6362 = vpop.f32.mrb[0].mxu0
        %6363 = vmatprep.mubr.bf16.mxu0 %v6258
        %6364 = vmatmul.mubr.bf16.gmra.mrb[0].mxu0 %v6211
        %v6365 = vpop.f32.mrb[0].mxu0
        %v6366 = vadd.f32 %v1010, %v6365
        %v6367 = vpop.f32.mrb[0].mxu0
        %v6368 = vpop.f32.mrb[0].mxu0
        %v6369 = vadd.f32 %v1010, %v6368
        %v6370 = vpop.f32.mrb[0].mxu0
        %6371 = vmatprep.mubr.bf16.mxu0 %v6261
        %6372 = vmatmul.mubr.bf16.gmra.mrb[0].mxu0 %v6213
        %v6373 = vpop.f32.mrb[0].mxu0
        %v6374 = vadd.f32 %v1010, %v6373
        %v6375 = vpop.f32.mrb[0].mxu0
        %v6376 = vpop.f32.mrb[0].mxu0
        %v6377 = vadd.f32 %v1010, %v6376
        %v6378 = vpop.f32.mrb[0].mxu0
        %6379 = vmatprep.mubr.bf16.mxu0 %v6264
        %6380 = vmatmul.mubr.bf16.gmra.mrb[0].mxu0 %v6215
        %v6381 = vpop.f32.mrb[0].mxu0
        %v6382 = vadd.f32 %v1010, %v6381
        %v6383 = vpop.f32.mrb[0].mxu0
        %v6384 = vpop.f32.mrb[0].mxu0
        %v6385 = vadd.f32 %v1010, %v6384
        %v6386 = vpop.f32.mrb[0].mxu0
        %6387 = vmatprep.mubr.bf16.mxu0 %v6267
        %6388 = vmatmul.mubr.bf16.gmra.mrb[0].mxu0 %v6217
        %v6389 = vpop.f32.mrb[0].mxu0
        %v6390 = vadd.f32 %v1010, %v6389
        %v6391 = vpop.f32.mrb[0].mxu0
        %v6392 = vpop.f32.mrb[0].mxu0
        %v6393 = vadd.f32 %v1010, %v6392
        %v6394 = vpop.f32.mrb[0].mxu0
        %6395 = vmatprep.mubr.bf16.mxu0 %v6270
        %6396 = vmatmul.mubr.bf16.gmra.mrb[0].mxu0 %v6219
        %v6397 = vpop.f32.mrb[0].mxu0
        %v6398 = vadd.f32 %v1010, %v6397
        %v6399 = vpop.f32.mrb[0].mxu0
        %v6400 = vpop.f32.mrb[0].mxu0
        %v6401 = vadd.f32 %v1010, %v6400
        %v6402 = vpop.f32.mrb[0].mxu0
        %6403 = vmatprep.mubr.bf16.mxu0 %v6273
        %6404 = vmatmul.mubr.bf16.gmra.mrb[0].mxu0 %v6221
        %v6405 = vpop.f32.mrb[0].mxu0
        %v6406 = vadd.f32 %v1010, %v6405
        %v6407 = vpop.f32.mrb[0].mxu0
        %v6408 = vpop.f32.mrb[0].mxu0
        %v6409 = vpop.f32.mrb[0].mxu0
        %6410 = vdwg.mxu0
        %v6411 = vmax.f32 %v6310, 0.0
        %v6412 = vmax.f32 %v6313, 0.0
        %v6413 = vmax.f32 %v6318, 0.0
        %v6414 = vmax.f32 %v6321, 0.0
        %v6415 = vmax.f32 %v6326, 0.0
        %v6416 = vmax.f32 %v6329, 0.0
        %v6417 = vmax.f32 %v6334, 0.0
        %v6418 = vmax.f32 %v6337, 0.0
        %v6419 = vmax.f32 %v6342, 0.0
        %v6420 = vmax.f32 %v6345, 0.0
        %v6421 = vmax.f32 %v6350, 0.0
        %v6422 = vmax.f32 %v6353, 0.0
        %v6423 = vmax.f32 %v6358, 0.0
        %v6424 = vmax.f32 %v6361, 0.0
        %v6425 = vmax.f32 %v6366, 0.0
        %v6426 = vmax.f32 %v6369, 0.0
        %v6427 = vmax.f32 %v6374, 0.0
        %v6428 = vmax.f32 %v6377, 0.0
        %v6429 = vmax.f32 %v6382, 0.0
        %v6430 = vmax.f32 %v6385, 0.0
        %v6431 = vmax.f32 %v6390, 0.0
        %v6432 = vmax.f32 %v6393, 0.0
        %v6433 = vmax.f32 %v6398, 0.0
        %v6434 = vmax.f32 %v6401, 0.0
        %v6435 = vmax.f32 %v6406, 0.0
        %v6436 = vpack.c.bf16 %v6412, %v6411
        %v6437 = vpack.c.bf16 %v6414, %v6413
        %v6438 = vpack.c.bf16 %v6416, %v6415
        %v6439 = vpack.c.bf16 %v6418, %v6417
        %v6440 = vpack.c.bf16 %v6420, %v6419
        %v6441 = vpack.c.bf16 %v6422, %v6421
        %v6442 = vpack.c.bf16 %v6424, %v6423
        %v6443 = vpack.c.bf16 %v6426, %v6425
        %v6444 = vpack.c.bf16 %v6428, %v6427
        %v6445 = vpack.c.bf16 %v6430, %v6429
        %v6446 = vpack.c.bf16 %v6432, %v6431
        %v6447 = vpack.c.bf16 %v6434, %v6433
        %v6448 = vpack.c.bf16 %v6435, %v6435
        %v6450 = vsel %vm1441, %v6448, 0
        %6452 = vmatprep.subr.bf16.mxu0 0
        %6453 = vmatpush1.bf16.msra.mxu0 %v6436
        %6454 = vmatprep.subr.bf16.mxu0 0
        %6455 = vmatpush1.bf16.msra.mxu0 %v6437
        %6456 = vmatprep.subr.bf16.mxu0 0
        %6457 = vmatpush1.bf16.msra.mxu0 %v6438
        %6458 = vmatprep.subr.bf16.mxu0 0
        %6459 = vmatpush1.bf16.msra.mxu0 %v6439
        %6460 = vmatprep.subr.bf16.mxu0 0
        %6461 = vmatpush1.bf16.msra.mxu0 %v6440
        %6462 = vmatprep.subr.bf16.mxu0 0
        %6463 = vmatpush1.bf16.msra.mxu0 %v6441
        %6464 = vmatprep.subr.bf16.mxu0 0
        %6465 = vmatpush1.bf16.msra.mxu0 %v6442
        %6466 = vmatprep.subr.bf16.mxu0 0
        %6467 = vmatpush1.bf16.msra.mxu0 %v6443
        %6468 = vmatprep.subr.bf16.mxu0 0
        %6469 = vmatpush1.bf16.msra.mxu0 %v6444
        %6470 = vmatprep.subr.bf16.mxu0 0
        %6471 = vmatpush1.bf16.msra.mxu0 %v6445
        %6472 = vmatprep.subr.bf16.mxu0 0
        %6473 = vmatpush1.bf16.msra.mxu0 %v6446
        %6474 = vmatprep.subr.bf16.mxu0 0
        %6475 = vmatpush1.bf16.msra.mxu0 %v6447
        %6476 = vmatprep.subr.bf16.mxu0 0
        %6477 = vmatpush1.bf16.msra.mxu0 %v6450
        %6478 = vmatprep.subr.bf16.mxu0 0
        %6479 = vmatpush1.bf16.msra.mxu0 0
        %6480 = vmatprep.subr.bf16.mxu0 0
        %6481 = vmatpush1.bf16.msra.mxu0 0
        %6482 = vmatprep.subr.bf16.mxu0 0
        %6483 = vmatpush1.bf16.msra.mxu0 0
        %6484 = vmatprep.mubr.bf16.mxu0 %v1430
        %6485 = vmatmul.mubr.bf16.gmra.mrb[0].mxu0 %v1416
        %v6486 = vpop.f32.mrb[0].mxu0
        %v6487 = vadd.f32 0.0, %v6486
        %v6488 = vpop.f32.mrb[0].mxu0
        %v6489 = vpop.f32.mrb[0].mxu0
        %v6490 = vadd.f32 0.0, %v6489
        %v6491 = vpop.f32.mrb[0].mxu0
        %6492 = vmatprep.mubr.bf16.mxu0 %v1433
        %6493 = vmatmul.mubr.bf16.gmra.mrb[0].mxu0 %v1418
        %v6494 = vpop.f32.mrb[0].mxu0
        %v6495 = vadd.f32 0.0, %v6494
        %v6496 = vpop.f32.mrb[0].mxu0
        %v6497 = vpop.f32.mrb[0].mxu0
        %v6498 = vadd.f32 0.0, %v6497
        %v6499 = vpop.f32.mrb[0].mxu0
        %6500 = vmatprep.mubr.bf16.mxu0 %v1436
        %6501 = vmatmul.mubr.bf16.gmra.mrb[0].mxu0 %v1420
        %v6502 = vpop.f32.mrb[0].mxu0
        %v6503 = vadd.f32 0.0, %v6502
        %v6504 = vpop.f32.mrb[0].mxu0
        %v6505 = vpop.f32.mrb[0].mxu0
        %v6506 = vadd.f32 0.0, %v6505
        %v6507 = vpop.f32.mrb[0].mxu0
        %6508 = vmatprep.mubr.bf16.mxu0 %v1439
        %6509 = vmatmul.mubr.bf16.gmra.mrb[0].mxu0 %v1422
        %v6510 = vpop.f32.mrb[0].mxu0
        %v6511 = vadd.f32 0.0, %v6510
        %v6512 = vpop.f32.mrb[0].mxu0
        %v6513 = vpop.f32.mrb[0].mxu0
        %v6514 = vpop.f32.mrb[0].mxu0
        %6515 = vdwg.mxu0
        %v6530 = vunpack.c.l.b16 %v6108
        %v6531 = vunpack.c.h.b16 %v6108
        %v6532 = vunpack.c.l.b16 %v6109
        %v6533 = vunpack.c.l.b16 %v6110
        %v6534 = vunpack.c.h.b16 %v6110
        %v6535 = vunpack.c.l.b16 %v6111
        %v6536 = vunpack.c.l.b16 %v6112
        %v6537 = vunpack.c.h.b16 %v6112
        %v6538 = vunpack.c.l.b16 %v6113
        %v6539 = vunpack.c.l.b16 %v6114
        %v6540 = vunpack.c.h.b16 %v6114
        %v6541 = vunpack.c.l.b16 %v6115
        %v6542 = vunpack.c.l.b16 %v6116
        %v6543 = vunpack.c.h.b16 %v6116
        %v6544 = vunpack.c.l.b16 %v6117
        %v6545 = vunpack.c.l.b16 %v6118
        %v6546 = vunpack.c.h.b16 %v6118
        %v6547 = vunpack.c.l.b16 %v6119
        %v6548 = vunpack.c.l.b16 %v6120
        %v6549 = vunpack.c.h.b16 %v6120
        %v6550 = vunpack.c.l.b16 %v6121
        %v6551 = vpack.c.b16 %v6533, %v6530
        %v6552 = vpack.c.b16 %v6534, %v6531
        %v6553 = vpack.c.b16 %v6535, %v6532
        %v6554 = vpack.c.b16 %v6539, %v6536
        %v6555 = vpack.c.b16 %v6540, %v6537
        %v6556 = vpack.c.b16 %v6541, %v6538
        %v6557 = vpack.c.b16 %v6545, %v6542
        %v6558 = vpack.c.b16 %v6546, %v6543
        %v6559 = vpack.c.b16 %v6547, %v6544
        %v6560 = vpack.c.b16 %v6548, %v6548
        %v6561 = vpack.c.b16 %v6549, %v6549
        %v6562 = vpack.c.b16 %v6550, %v6550
        %6575 = vmatprep.subr.bf16.mxu0 %v2803
        %6576 = vmatpush1.bf16.msra.mxu0 %v2802
        %6577 = vmatprep.subr.bf16.mxu0 %v2819
        %6578 = vmatpush1.bf16.msra.mxu0 %v2818
        %6579 = vmatprep.subr.bf16.mxu0 %v2835
        %6580 = vmatpush1.bf16.msra.mxu0 %v2834
        %6581 = vmatprep.subr.bf16.mxu0 %v2851
        %6582 = vmatpush1.bf16.msra.mxu0 %v2850
        %6583 = vmatprep.subr.bf16.mxu0 %v2867
        %6584 = vmatpush1.bf16.msra.mxu0 %v2866
        %6585 = vmatprep.subr.bf16.mxu0 %v2883
        %6586 = vmatpush1.bf16.msra.mxu0 %v2882
        %6587 = vmatprep.subr.bf16.mxu0 %v2899
        %6588 = vmatpush1.bf16.msra.mxu0 %v2898
        %6589 = vmatprep.subr.bf16.mxu0 %v2915
        %6590 = vmatpush1.bf16.msra.mxu0 %v2914
        %6591 = vmatprep.subr.bf16.mxu0 %v2931
        %6592 = vmatpush1.bf16.msra.mxu0 %v2930
        %6593 = vmatprep.subr.bf16.mxu0 %v2947
        %6594 = vmatpush1.bf16.msra.mxu0 %v2946
        %6595 = vmatprep.subr.bf16.mxu0 %v2963
        %6596 = vmatpush1.bf16.msra.mxu0 %v2962
        %6597 = vmatprep.subr.bf16.mxu0 %v2979
        %6598 = vmatpush1.bf16.msra.mxu0 %v2978
        %6599 = vmatprep.subr.bf16.mxu0 %v2995
        %6600 = vmatpush1.bf16.msra.mxu0 %v2994
        %6601 = vmatprep.subr.bf16.mxu0 %v3011
        %6602 = vmatpush1.bf16.msra.mxu0 %v3010
        %6603 = vmatprep.subr.bf16.mxu0 %v3027
        %6604 = vmatpush1.bf16.msra.mxu0 %v3026
        %6605 = vmatprep.subr.bf16.mxu0 %v3043
        %6606 = vmatpush1.bf16.msra.mxu0 %v3042
        %6607 = vmatprep.mubr.bf16.mxu0 %v6552
        %6608 = vmatmul.mubr.bf16.gmra.mrb[0].mxu0 %v6551
        %v6609 = vpop.f32.mrb[0].mxu0
        %v6610 = vadd.f32 %v1514, %v6609
        %v6611 = vpop.f32.mrb[0].mxu0
        %v6612 = vadd.f32 %v1518, %v6611
        %v6613 = vpop.f32.mrb[0].mxu0
        %v6614 = vadd.f32 %v1514, %v6613
        %v6615 = vpop.f32.mrb[0].mxu0
        %v6616 = vadd.f32 %v1518, %v6615
        %6617 = vmatprep.mubr.bf16.mxu0 %v6555
        %6618 = vmatmul.mubr.bf16.gmra.mrb[0].mxu0 %v6554
        %v6619 = vpop.f32.mrb[0].mxu0
        %v6620 = vadd.f32 %v1514, %v6619
        %v6621 = vpop.f32.mrb[0].mxu0
        %v6622 = vadd.f32 %v1518, %v6621
        %v6623 = vpop.f32.mrb[0].mxu0
        %v6624 = vadd.f32 %v1514, %v6623
        %v6625 = vpop.f32.mrb[0].mxu0
        %v6626 = vadd.f32 %v1518, %v6625
        %6627 = vmatprep.mubr.bf16.mxu0 %v6558
        %6628 = vmatmul.mubr.bf16.gmra.mrb[0].mxu0 %v6557
        %v6629 = vpop.f32.mrb[0].mxu0
        %v6630 = vadd.f32 %v1514, %v6629
        %v6631 = vpop.f32.mrb[0].mxu0
        %v6632 = vadd.f32 %v1518, %v6631
        %v6633 = vpop.f32.mrb[0].mxu0
        %v6634 = vadd.f32 %v1514, %v6633
        %v6635 = vpop.f32.mrb[0].mxu0
        %v6636 = vadd.f32 %v1518, %v6635
        %6637 = vmatprep.mubr.bf16.mxu0 %v6561
        %6638 = vmatmul.mubr.bf16.gmra.mrb[0].mxu0 %v6560
        %v6639 = vpop.f32.mrb[0].mxu0
        %v6640 = vadd.f32 %v1514, %v6639
        %v6641 = vpop.f32.mrb[0].mxu0
        %v6642 = vadd.f32 %v1518, %v6641
        %v6643 = vpop.f32.mrb[0].mxu0
        %v6644 = vpop.f32.mrb[0].mxu0
        %6645 = vdwg.mxu0
        %6646 = vmatprep.subr.bf16.mxu0 %v3059
        %6647 = vmatpush1.bf16.msra.mxu0 %v3058
        %6648 = vmatprep.subr.bf16.mxu0 %v3075
        %6649 = vmatpush1.bf16.msra.mxu0 %v3074
        %6650 = vmatprep.subr.bf16.mxu0 %v3091
        %6651 = vmatpush1.bf16.msra.mxu0 %v3090
        %6652 = vmatprep.subr.bf16.mxu0 %v3107
        %6653 = vmatpush1.bf16.msra.mxu0 %v3106
        %6654 = vmatprep.subr.bf16.mxu0 %v3123
        %6655 = vmatpush1.bf16.msra.mxu0 %v3122
        %6656 = vmatprep.subr.bf16.mxu0 %v3139
        %6657 = vmatpush1.bf16.msra.mxu0 %v3138
        %6658 = vmatprep.subr.bf16.mxu0 %v3155
        %6659 = vmatpush1.bf16.msra.mxu0 %v3154
        %6660 = vmatprep.subr.bf16.mxu0 %v3171
        %6661 = vmatpush1.bf16.msra.mxu0 %v3170
        %6662 = vmatprep.subr.bf16.mxu0 0
        %6663 = vmatpush1.bf16.msra.mxu0 0
        %6664 = vmatprep.subr.bf16.mxu0 0
        %6665 = vmatpush1.bf16.msra.mxu0 0
        %6666 = vmatprep.subr.bf16.mxu0 0
        %6667 = vmatpush1.bf16.msra.mxu0 0
        %6668 = vmatprep.subr.bf16.mxu0 0
        %6669 = vmatpush1.bf16.msra.mxu0 0
        %6670 = vmatprep.subr.bf16.mxu0 0
        %6671 = vmatpush1.bf16.msra.mxu0 0
        %6672 = vmatprep.subr.bf16.mxu0 0
        %6673 = vmatpush1.bf16.msra.mxu0 0
        %6674 = vmatprep.subr.bf16.mxu0 0
        %6675 = vmatpush1.bf16.msra.mxu0 0
        %6676 = vmatprep.subr.bf16.mxu0 0
        %6677 = vmatpush1.bf16.msra.mxu0 0
        %6678 = vmatprep.mubr.bf16.mxu0 0
        %6679 = vmatmul.mubr.bf16.gmra.mrb[0].mxu0 %v6553
        %v6680 = vpop.f32.mrb[0].mxu0
        %v6681 = vadd.f32 %v6610, %v6680
        %v6682 = vpop.f32.mrb[0].mxu0
        %v6683 = vadd.f32 %v6612, %v6682
        %v6684 = vpop.f32.mrb[0].mxu0
        %v6685 = vadd.f32 %v6614, %v6684
        %v6686 = vpop.f32.mrb[0].mxu0
        %v6687 = vadd.f32 %v6616, %v6686
        %6688 = vmatprep.mubr.bf16.mxu0 0
        %6689 = vmatmul.mubr.bf16.gmra.mrb[0].mxu0 %v6556
        %v6690 = vpop.f32.mrb[0].mxu0
        %v6691 = vadd.f32 %v6620, %v6690
        %v6692 = vpop.f32.mrb[0].mxu0
        %v6693 = vadd.f32 %v6622, %v6692
        %v6694 = vpop.f32.mrb[0].mxu0
        %v6695 = vadd.f32 %v6624, %v6694
        %v6696 = vpop.f32.mrb[0].mxu0
        %v6697 = vadd.f32 %v6626, %v6696
        %6698 = vmatprep.mubr.bf16.mxu0 0
        %6699 = vmatmul.mubr.bf16.gmra.mrb[0].mxu0 %v6559
        %v6700 = vpop.f32.mrb[0].mxu0
        %v6701 = vadd.f32 %v6630, %v6700
        %v6702 = vpop.f32.mrb[0].mxu0
        %v6703 = vadd.f32 %v6632, %v6702
        %v6704 = vpop.f32.mrb[0].mxu0
        %v6705 = vadd.f32 %v6634, %v6704
        %v6706 = vpop.f32.mrb[0].mxu0
        %v6707 = vadd.f32 %v6636, %v6706
        %6708 = vmatprep.mubr.bf16.mxu0 0
        %6709 = vmatmul.mubr.bf16.gmra.mrb[0].mxu0 %v6562
        %v6710 = vpop.f32.mrb[0].mxu0
        %v6711 = vadd.f32 %v6640, %v6710
        %v6712 = vpop.f32.mrb[0].mxu0
        %v6713 = vadd.f32 %v6642, %v6712
        %v6714 = vpop.f32.mrb[0].mxu0
        %v6715 = vpop.f32.mrb[0].mxu0
        %6716 = vdwg.mxu0
        %6717 = vmatprep.subr.bf16.mxu0 %v2805
        %6718 = vmatpush1.bf16.msra.mxu0 %v2804
        %6719 = vmatprep.subr.bf16.mxu0 %v2821
        %6720 = vmatpush1.bf16.msra.mxu0 %v2820
        %6721 = vmatprep.subr.bf16.mxu0 %v2837
        %6722 = vmatpush1.bf16.msra.mxu0 %v2836
        %6723 = vmatprep.subr.bf16.mxu0 %v2853
        %6724 = vmatpush1.bf16.msra.mxu0 %v2852
        %6725 = vmatprep.subr.bf16.mxu0 %v2869
        %6726 = vmatpush1.bf16.msra.mxu0 %v2868
        %6727 = vmatprep.subr.bf16.mxu0 %v2885
        %6728 = vmatpush1.bf16.msra.mxu0 %v2884
        %6729 = vmatprep.subr.bf16.mxu0 %v2901
        %6730 = vmatpush1.bf16.msra.mxu0 %v2900
        %6731 = vmatprep.subr.bf16.mxu0 %v2917
        %6732 = vmatpush1.bf16.msra.mxu0 %v2916
        %6733 = vmatprep.subr.bf16.mxu0 %v2933
        %6734 = vmatpush1.bf16.msra.mxu0 %v2932
        %6735 = vmatprep.subr.bf16.mxu0 %v2949
        %6736 = vmatpush1.bf16.msra.mxu0 %v2948
        %6737 = vmatprep.subr.bf16.mxu0 %v2965
        %6738 = vmatpush1.bf16.msra.mxu0 %v2964
        %6739 = vmatprep.subr.bf16.mxu0 %v2981
        %6740 = vmatpush1.bf16.msra.mxu0 %v2980
        %6741 = vmatprep.subr.bf16.mxu0 %v2997
        %6742 = vmatpush1.bf16.msra.mxu0 %v2996
        %6743 = vmatprep.subr.bf16.mxu0 %v3013
        %6744 = vmatpush1.bf16.msra.mxu0 %v3012
        %6745 = vmatprep.subr.bf16.mxu0 %v3029
        %6746 = vmatpush1.bf16.msra.mxu0 %v3028
        %6747 = vmatprep.subr.bf16.mxu0 %v3045
        %6748 = vmatpush1.bf16.msra.mxu0 %v3044
        %6749 = vmatprep.mubr.bf16.mxu0 %v6552
        %6750 = vmatmul.mubr.bf16.gmra.mrb[0].mxu0 %v6551
        %v6751 = vpop.f32.mrb[0].mxu0
        %v6752 = vadd.f32 %v1522, %v6751
        %v6753 = vpop.f32.mrb[0].mxu0
        %v6754 = vadd.f32 %v1526, %v6753
        %v6755 = vpop.f32.mrb[0].mxu0
        %v6756 = vadd.f32 %v1522, %v6755
        %v6757 = vpop.f32.mrb[0].mxu0
        %v6758 = vadd.f32 %v1526, %v6757
        %6759 = vmatprep.mubr.bf16.mxu0 %v6555
        %6760 = vmatmul.mubr.bf16.gmra.mrb[0].mxu0 %v6554
        %v6761 = vpop.f32.mrb[0].mxu0
        %v6762 = vadd.f32 %v1522, %v6761
        %v6763 = vpop.f32.mrb[0].mxu0
        %v6764 = vadd.f32 %v1526, %v6763
        %v6765 = vpop.f32.mrb[0].mxu0
        %v6766 = vadd.f32 %v1522, %v6765
        %v6767 = vpop.f32.mrb[0].mxu0
        %v6768 = vadd.f32 %v1526, %v6767
        %6769 = vmatprep.mubr.bf16.mxu0 %v6558
        %6770 = vmatmul.mubr.bf16.gmra.mrb[0].mxu0 %v6557
        %v6771 = vpop.f32.mrb[0].mxu0
        %v6772 = vadd.f32 %v1522, %v6771
        %v6773 = vpop.f32.mrb[0].mxu0
        %v6774 = vadd.f32 %v1526, %v6773
        %v6775 = vpop.f32.mrb[0].mxu0
        %v6776 = vadd.f32 %v1522, %v6775
        %v6777 = vpop.f32.mrb[0].mxu0
        %v6778 = vadd.f32 %v1526, %v6777
        %6779 = vmatprep.mubr.bf16.mxu0 %v6561
        %6780 = vmatmul.mubr.bf16.gmra.mrb[0].mxu0 %v6560
        %v6781 = vpop.f32.mrb[0].mxu0
        %v6782 = vadd.f32 %v1522, %v6781
        %v6783 = vpop.f32.mrb[0].mxu0
        %v6784 = vadd.f32 %v1526, %v6783
        %v6785 = vpop.f32.mrb[0].mxu0
        %v6786 = vpop.f32.mrb[0].mxu0
        %6787 = vdwg.mxu0
        %6788 = vmatprep.subr.bf16.mxu0 %v3061
        %6789 = vmatpush1.bf16.msra.mxu0 %v3060
        %6790 = vmatprep.subr.bf16.mxu0 %v3077
        %6791 = vmatpush1.bf16.msra.mxu0 %v3076
        %6792 = vmatprep.subr.bf16.mxu0 %v3093
        %6793 = vmatpush1.bf16.msra.mxu0 %v3092
        %6794 = vmatprep.subr.bf16.mxu0 %v3109
        %6795 = vmatpush1.bf16.msra.mxu0 %v3108
        %6796 = vmatprep.subr.bf16.mxu0 %v3125
        %6797 = vmatpush1.bf16.msra.mxu0 %v3124
        %6798 = vmatprep.subr.bf16.mxu0 %v3141
        %6799 = vmatpush1.bf16.msra.mxu0 %v3140
        %6800 = vmatprep.subr.bf16.mxu0 %v3157
        %6801 = vmatpush1.bf16.msra.mxu0 %v3156
        %6802 = vmatprep.subr.bf16.mxu0 %v3173
        %6803 = vmatpush1.bf16.msra.mxu0 %v3172
        %6804 = vmatprep.subr.bf16.mxu0 0
        %6805 = vmatpush1.bf16.msra.mxu0 0
        %6806 = vmatprep.subr.bf16.mxu0 0
        %6807 = vmatpush1.bf16.msra.mxu0 0
        %6808 = vmatprep.subr.bf16.mxu0 0
        %6809 = vmatpush1.bf16.msra.mxu0 0
        %6810 = vmatprep.subr.bf16.mxu0 0
        %6811 = vmatpush1.bf16.msra.mxu0 0
        %6812 = vmatprep.subr.bf16.mxu0 0
        %6813 = vmatpush1.bf16.msra.mxu0 0
        %6814 = vmatprep.subr.bf16.mxu0 0
        %6815 = vmatpush1.bf16.msra.mxu0 0
        %6816 = vmatprep.subr.bf16.mxu0 0
        %6817 = vmatpush1.bf16.msra.mxu0 0
        %6818 = vmatprep.subr.bf16.mxu0 0
        %6819 = vmatpush1.bf16.msra.mxu0 0
        %6820 = vmatprep.mubr.bf16.mxu0 0
        %6821 = vmatmul.mubr.bf16.gmra.mrb[0].mxu0 %v6553
        %v6822 = vpop.f32.mrb[0].mxu0
        %v6823 = vadd.f32 %v6752, %v6822
        %v6824 = vpop.f32.mrb[0].mxu0
        %v6825 = vadd.f32 %v6754, %v6824
        %v6826 = vpop.f32.mrb[0].mxu0
        %v6827 = vadd.f32 %v6756, %v6826
        %v6828 = vpop.f32.mrb[0].mxu0
        %v6829 = vadd.f32 %v6758, %v6828
        %6830 = vmatprep.mubr.bf16.mxu0 0
        %6831 = vmatmul.mubr.bf16.gmra.mrb[0].mxu0 %v6556
        %v6832 = vpop.f32.mrb[0].mxu0
        %v6833 = vadd.f32 %v6762, %v6832
        %v6834 = vpop.f32.mrb[0].mxu0
        %v6835 = vadd.f32 %v6764, %v6834
        %v6836 = vpop.f32.mrb[0].mxu0
        %v6837 = vadd.f32 %v6766, %v6836
        %v6838 = vpop.f32.mrb[0].mxu0
        %v6839 = vadd.f32 %v6768, %v6838
        %6840 = vmatprep.mubr.bf16.mxu0 0
        %6841 = vmatmul.mubr.bf16.gmra.mrb[0].mxu0 %v6559
        %v6842 = vpop.f32.mrb[0].mxu0
        %v6843 = vadd.f32 %v6772, %v6842
        %v6844 = vpop.f32.mrb[0].mxu0
        %v6845 = vadd.f32 %v6774, %v6844
        %v6846 = vpop.f32.mrb[0].mxu0
        %v6847 = vadd.f32 %v6776, %v6846
        %v6848 = vpop.f32.mrb[0].mxu0
        %v6849 = vadd.f32 %v6778, %v6848
        %6850 = vmatprep.mubr.bf16.mxu0 0
        %6851 = vmatmul.mubr.bf16.gmra.mrb[0].mxu0 %v6562
        %v6852 = vpop.f32.mrb[0].mxu0
        %v6853 = vadd.f32 %v6782, %v6852
        %v6854 = vpop.f32.mrb[0].mxu0
        %v6855 = vadd.f32 %v6784, %v6854
        %v6856 = vpop.f32.mrb[0].mxu0
        %v6857 = vpop.f32.mrb[0].mxu0
        %6858 = vdwg.mxu0
        %6859 = vmatprep.subr.bf16.mxu0 %v2807
        %6860 = vmatpush1.bf16.msra.mxu0 %v2806
        %6861 = vmatprep.subr.bf16.mxu0 %v2823
        %6862 = vmatpush1.bf16.msra.mxu0 %v2822
        %6863 = vmatprep.subr.bf16.mxu0 %v2839
        %6864 = vmatpush1.bf16.msra.mxu0 %v2838
        %6865 = vmatprep.subr.bf16.mxu0 %v2855
        %6866 = vmatpush1.bf16.msra.mxu0 %v2854
        %6867 = vmatprep.subr.bf16.mxu0 %v2871
        %6868 = vmatpush1.bf16.msra.mxu0 %v2870
        %6869 = vmatprep.subr.bf16.mxu0 %v2887
        %6870 = vmatpush1.bf16.msra.mxu0 %v2886
        %6871 = vmatprep.subr.bf16.mxu0 %v2903
        %6872 = vmatpush1.bf16.msra.mxu0 %v2902
        %6873 = vmatprep.subr.bf16.mxu0 %v2919
        %6874 = vmatpush1.bf16.msra.mxu0 %v2918
        %6875 = vmatprep.subr.bf16.mxu0 %v2935
        %6876 = vmatpush1.bf16.msra.mxu0 %v2934
        %6877 = vmatprep.subr.bf16.mxu0 %v2951
        %6878 = vmatpush1.bf16.msra.mxu0 %v2950
        %6879 = vmatprep.subr.bf16.mxu0 %v2967
        %6880 = vmatpush1.bf16.msra.mxu0 %v2966
        %6881 = vmatprep.subr.bf16.mxu0 %v2983
        %6882 = vmatpush1.bf16.msra.mxu0 %v2982
        %6883 = vmatprep.subr.bf16.mxu0 %v2999
        %6884 = vmatpush1.bf16.msra.mxu0 %v2998
        %6885 = vmatprep.subr.bf16.mxu0 %v3015
        %6886 = vmatpush1.bf16.msra.mxu0 %v3014
        %6887 = vmatprep.subr.bf16.mxu0 %v3031
        %6888 = vmatpush1.bf16.msra.mxu0 %v3030
        %6889 = vmatprep.subr.bf16.mxu0 %v3047
        %6890 = vmatpush1.bf16.msra.mxu0 %v3046
        %6891 = vmatprep.mubr.bf16.mxu0 %v6552
        %6892 = vmatmul.mubr.bf16.gmra.mrb[0].mxu0 %v6551
        %v6893 = vpop.f32.mrb[0].mxu0
        %v6894 = vadd.f32 %v1530, %v6893
        %v6895 = vpop.f32.mrb[0].mxu0
        %v6896 = vadd.f32 %v1534, %v6895
        %v6897 = vpop.f32.mrb[0].mxu0
        %v6898 = vadd.f32 %v1530, %v6897
        %v6899 = vpop.f32.mrb[0].mxu0
        %v6900 = vadd.f32 %v1534, %v6899
        %6901 = vmatprep.mubr.bf16.mxu0 %v6555
        %6902 = vmatmul.mubr.bf16.gmra.mrb[0].mxu0 %v6554
        %v6903 = vpop.f32.mrb[0].mxu0
        %v6904 = vadd.f32 %v1530, %v6903
        %v6905 = vpop.f32.mrb[0].mxu0
        %v6906 = vadd.f32 %v1534, %v6905
        %v6907 = vpop.f32.mrb[0].mxu0
        %v6908 = vadd.f32 %v1530, %v6907
        %v6909 = vpop.f32.mrb[0].mxu0
        %v6910 = vadd.f32 %v1534, %v6909
        %6911 = vmatprep.mubr.bf16.mxu0 %v6558
        %6912 = vmatmul.mubr.bf16.gmra.mrb[0].mxu0 %v6557
        %v6913 = vpop.f32.mrb[0].mxu0
        %v6914 = vadd.f32 %v1530, %v6913
        %v6915 = vpop.f32.mrb[0].mxu0
        %v6916 = vadd.f32 %v1534, %v6915
        %v6917 = vpop.f32.mrb[0].mxu0
        %v6918 = vadd.f32 %v1530, %v6917
        %v6919 = vpop.f32.mrb[0].mxu0
        %v6920 = vadd.f32 %v1534, %v6919
        %6921 = vmatprep.mubr.bf16.mxu0 %v6561
        %6922 = vmatmul.mubr.bf16.gmra.mrb[0].mxu0 %v6560
        %v6923 = vpop.f32.mrb[0].mxu0
        %v6924 = vadd.f32 %v1530, %v6923
        %v6925 = vpop.f32.mrb[0].mxu0
        %v6926 = vadd.f32 %v1534, %v6925
        %v6927 = vpop.f32.mrb[0].mxu0
        %v6928 = vpop.f32.mrb[0].mxu0
        %6929 = vdwg.mxu0
        %6930 = vmatprep.subr.bf16.mxu0 %v3063
        %6931 = vmatpush1.bf16.msra.mxu0 %v3062
        %6932 = vmatprep.subr.bf16.mxu0 %v3079
        %6933 = vmatpush1.bf16.msra.mxu0 %v3078
        %6934 = vmatprep.subr.bf16.mxu0 %v3095
        %6935 = vmatpush1.bf16.msra.mxu0 %v3094
        %6936 = vmatprep.subr.bf16.mxu0 %v3111
        %6937 = vmatpush1.bf16.msra.mxu0 %v3110
        %6938 = vmatprep.subr.bf16.mxu0 %v3127
        %6939 = vmatpush1.bf16.msra.mxu0 %v3126
        %6940 = vmatprep.subr.bf16.mxu0 %v3143
        %6941 = vmatpush1.bf16.msra.mxu0 %v3142
        %6942 = vmatprep.subr.bf16.mxu0 %v3159
        %6943 = vmatpush1.bf16.msra.mxu0 %v3158
        %6944 = vmatprep.subr.bf16.mxu0 %v3175
        %6945 = vmatpush1.bf16.msra.mxu0 %v3174
        %6946 = vmatprep.subr.bf16.mxu0 0
        %6947 = vmatpush1.bf16.msra.mxu0 0
        %6948 = vmatprep.subr.bf16.mxu0 0
        %6949 = vmatpush1.bf16.msra.mxu0 0
        %6950 = vmatprep.subr.bf16.mxu0 0
        %6951 = vmatpush1.bf16.msra.mxu0 0
        %6952 = vmatprep.subr.bf16.mxu0 0
        %6953 = vmatpush1.bf16.msra.mxu0 0
        %6954 = vmatprep.subr.bf16.mxu0 0
        %6955 = vmatpush1.bf16.msra.mxu0 0
        %6956 = vmatprep.subr.bf16.mxu0 0
        %6957 = vmatpush1.bf16.msra.mxu0 0
        %6958 = vmatprep.subr.bf16.mxu0 0
        %6959 = vmatpush1.bf16.msra.mxu0 0
        %6960 = vmatprep.subr.bf16.mxu0 0
        %6961 = vmatpush1.bf16.msra.mxu0 0
        %6962 = vmatprep.mubr.bf16.mxu0 0
        %6963 = vmatmul.mubr.bf16.gmra.mrb[0].mxu0 %v6553
        %v6964 = vpop.f32.mrb[0].mxu0
        %v6965 = vadd.f32 %v6894, %v6964
        %v6966 = vpop.f32.mrb[0].mxu0
        %v6967 = vadd.f32 %v6896, %v6966
        %v6968 = vpop.f32.mrb[0].mxu0
        %v6969 = vadd.f32 %v6898, %v6968
        %v6970 = vpop.f32.mrb[0].mxu0
        %v6971 = vadd.f32 %v6900, %v6970
        %6972 = vmatprep.mubr.bf16.mxu0 0
        %6973 = vmatmul.mubr.bf16.gmra.mrb[0].mxu0 %v6556
        %v6974 = vpop.f32.mrb[0].mxu0
        %v6975 = vadd.f32 %v6904, %v6974
        %v6976 = vpop.f32.mrb[0].mxu0
        %v6977 = vadd.f32 %v6906, %v6976
        %v6978 = vpop.f32.mrb[0].mxu0
        %v6979 = vadd.f32 %v6908, %v6978
        %v6980 = vpop.f32.mrb[0].mxu0
        %v6981 = vadd.f32 %v6910, %v6980
        %6982 = vmatprep.mubr.bf16.mxu0 0
        %6983 = vmatmul.mubr.bf16.gmra.mrb[0].mxu0 %v6559
        %v6984 = vpop.f32.mrb[0].mxu0
        %v6985 = vadd.f32 %v6914, %v6984
        %v6986 = vpop.f32.mrb[0].mxu0
        %v6987 = vadd.f32 %v6916, %v6986
        %v6988 = vpop.f32.mrb[0].mxu0
        %v6989 = vadd.f32 %v6918, %v6988
        %v6990 = vpop.f32.mrb[0].mxu0
        %v6991 = vadd.f32 %v6920, %v6990
        %6992 = vmatprep.mubr.bf16.mxu0 0
        %6993 = vmatmul.mubr.bf16.gmra.mrb[0].mxu0 %v6562
        %v6994 = vpop.f32.mrb[0].mxu0
        %v6995 = vadd.f32 %v6924, %v6994
        %v6996 = vpop.f32.mrb[0].mxu0
        %v6997 = vadd.f32 %v6926, %v6996
        %v6998 = vpop.f32.mrb[0].mxu0
        %v6999 = vpop.f32.mrb[0].mxu0
        %7000 = vdwg.mxu0
        %7001 = vmatprep.subr.bf16.mxu0 %v2809
        %7002 = vmatpush1.bf16.msra.mxu0 %v2808
        %7003 = vmatprep.subr.bf16.mxu0 %v2825
        %7004 = vmatpush1.bf16.msra.mxu0 %v2824
        %7005 = vmatprep.subr.bf16.mxu0 %v2841
        %7006 = vmatpush1.bf16.msra.mxu0 %v2840
        %7007 = vmatprep.subr.bf16.mxu0 %v2857
        %7008 = vmatpush1.bf16.msra.mxu0 %v2856
        %7009 = vmatprep.subr.bf16.mxu0 %v2873
        %7010 = vmatpush1.bf16.msra.mxu0 %v2872
        %7011 = vmatprep.subr.bf16.mxu0 %v2889
        %7012 = vmatpush1.bf16.msra.mxu0 %v2888
        %7013 = vmatprep.subr.bf16.mxu0 %v2905
        %7014 = vmatpush1.bf16.msra.mxu0 %v2904
        %7015 = vmatprep.subr.bf16.mxu0 %v2921
        %7016 = vmatpush1.bf16.msra.mxu0 %v2920
        %7017 = vmatprep.subr.bf16.mxu0 %v2937
        %7018 = vmatpush1.bf16.msra.mxu0 %v2936
        %7019 = vmatprep.subr.bf16.mxu0 %v2953
        %7020 = vmatpush1.bf16.msra.mxu0 %v2952
        %7021 = vmatprep.subr.bf16.mxu0 %v2969
        %7022 = vmatpush1.bf16.msra.mxu0 %v2968
        %7023 = vmatprep.subr.bf16.mxu0 %v2985
        %7024 = vmatpush1.bf16.msra.mxu0 %v2984
        %7025 = vmatprep.subr.bf16.mxu0 %v3001
        %7026 = vmatpush1.bf16.msra.mxu0 %v3000
        %7027 = vmatprep.subr.bf16.mxu0 %v3017
        %7028 = vmatpush1.bf16.msra.mxu0 %v3016
        %7029 = vmatprep.subr.bf16.mxu0 %v3033
        %7030 = vmatpush1.bf16.msra.mxu0 %v3032
        %7031 = vmatprep.subr.bf16.mxu0 %v3049
        %7032 = vmatpush1.bf16.msra.mxu0 %v3048
        %7033 = vmatprep.mubr.bf16.mxu0 %v6552
        %7034 = vmatmul.mubr.bf16.gmra.mrb[0].mxu0 %v6551
        %v7035 = vpop.f32.mrb[0].mxu0
        %v7036 = vadd.f32 %v1538, %v7035
        %v7037 = vpop.f32.mrb[0].mxu0
        %v7038 = vadd.f32 %v1542, %v7037
        %v7039 = vpop.f32.mrb[0].mxu0
        %v7040 = vadd.f32 %v1538, %v7039
        %v7041 = vpop.f32.mrb[0].mxu0
        %v7042 = vadd.f32 %v1542, %v7041
        %7043 = vmatprep.mubr.bf16.mxu0 %v6555
        %7044 = vmatmul.mubr.bf16.gmra.mrb[0].mxu0 %v6554
        %v7045 = vpop.f32.mrb[0].mxu0
        %v7046 = vadd.f32 %v1538, %v7045
        %v7047 = vpop.f32.mrb[0].mxu0
        %v7048 = vadd.f32 %v1542, %v7047
        %v7049 = vpop.f32.mrb[0].mxu0
        %v7050 = vadd.f32 %v1538, %v7049
        %v7051 = vpop.f32.mrb[0].mxu0
        %v7052 = vadd.f32 %v1542, %v7051
        %7053 = vmatprep.mubr.bf16.mxu0 %v6558
        %7054 = vmatmul.mubr.bf16.gmra.mrb[0].mxu0 %v6557
        %v7055 = vpop.f32.mrb[0].mxu0
        %v7056 = vadd.f32 %v1538, %v7055
        %v7057 = vpop.f32.mrb[0].mxu0
        %v7058 = vadd.f32 %v1542, %v7057
        %v7059 = vpop.f32.mrb[0].mxu0
        %v7060 = vadd.f32 %v1538, %v7059
        %v7061 = vpop.f32.mrb[0].mxu0
        %v7062 = vadd.f32 %v1542, %v7061
        %7063 = vmatprep.mubr.bf16.mxu0 %v6561
        %7064 = vmatmul.mubr.bf16.gmra.mrb[0].mxu0 %v6560
        %v7065 = vpop.f32.mrb[0].mxu0
        %v7066 = vadd.f32 %v1538, %v7065
        %v7067 = vpop.f32.mrb[0].mxu0
        %v7068 = vadd.f32 %v1542, %v7067
        %v7069 = vpop.f32.mrb[0].mxu0
        %v7070 = vpop.f32.mrb[0].mxu0
        %7071 = vdwg.mxu0
        %7072 = vmatprep.subr.bf16.mxu0 %v3065
        %7073 = vmatpush1.bf16.msra.mxu0 %v3064
        %7074 = vmatprep.subr.bf16.mxu0 %v3081
        %7075 = vmatpush1.bf16.msra.mxu0 %v3080
        %7076 = vmatprep.subr.bf16.mxu0 %v3097
        %7077 = vmatpush1.bf16.msra.mxu0 %v3096
        %7078 = vmatprep.subr.bf16.mxu0 %v3113
        %7079 = vmatpush1.bf16.msra.mxu0 %v3112
        %7080 = vmatprep.subr.bf16.mxu0 %v3129
        %7081 = vmatpush1.bf16.msra.mxu0 %v3128
        %7082 = vmatprep.subr.bf16.mxu0 %v3145
        %7083 = vmatpush1.bf16.msra.mxu0 %v3144
        %7084 = vmatprep.subr.bf16.mxu0 %v3161
        %7085 = vmatpush1.bf16.msra.mxu0 %v3160
        %7086 = vmatprep.subr.bf16.mxu0 %v3177
        %7087 = vmatpush1.bf16.msra.mxu0 %v3176
        %7088 = vmatprep.subr.bf16.mxu0 0
        %7089 = vmatpush1.bf16.msra.mxu0 0
        %7090 = vmatprep.subr.bf16.mxu0 0
        %7091 = vmatpush1.bf16.msra.mxu0 0
        %7092 = vmatprep.subr.bf16.mxu0 0
        %7093 = vmatpush1.bf16.msra.mxu0 0
        %7094 = vmatprep.subr.bf16.mxu0 0
        %7095 = vmatpush1.bf16.msra.mxu0 0
        %7096 = vmatprep.subr.bf16.mxu0 0
        %7097 = vmatpush1.bf16.msra.mxu0 0
        %7098 = vmatprep.subr.bf16.mxu0 0
        %7099 = vmatpush1.bf16.msra.mxu0 0
        %7100 = vmatprep.subr.bf16.mxu0 0
        %7101 = vmatpush1.bf16.msra.mxu0 0
        %7102 = vmatprep.subr.bf16.mxu0 0
        %7103 = vmatpush1.bf16.msra.mxu0 0
        %7104 = vmatprep.mubr.bf16.mxu0 0
        %7105 = vmatmul.mubr.bf16.gmra.mrb[0].mxu0 %v6553
        %v7106 = vpop.f32.mrb[0].mxu0
        %v7107 = vadd.f32 %v7036, %v7106
        %v7108 = vpop.f32.mrb[0].mxu0
        %v7109 = vadd.f32 %v7038, %v7108
        %v7110 = vpop.f32.mrb[0].mxu0
        %v7111 = vadd.f32 %v7040, %v7110
        %v7112 = vpop.f32.mrb[0].mxu0
        %v7113 = vadd.f32 %v7042, %v7112
        %7114 = vmatprep.mubr.bf16.mxu0 0
        %7115 = vmatmul.mubr.bf16.gmra.mrb[0].mxu0 %v6556
        %v7116 = vpop.f32.mrb[0].mxu0
        %v7117 = vadd.f32 %v7046, %v7116
        %v7118 = vpop.f32.mrb[0].mxu0
        %v7119 = vadd.f32 %v7048, %v7118
        %v7120 = vpop.f32.mrb[0].mxu0
        %v7121 = vadd.f32 %v7050, %v7120
        %v7122 = vpop.f32.mrb[0].mxu0
        %v7123 = vadd.f32 %v7052, %v7122
        %7124 = vmatprep.mubr.bf16.mxu0 0
        %7125 = vmatmul.mubr.bf16.gmra.mrb[0].mxu0 %v6559
        %v7126 = vpop.f32.mrb[0].mxu0
        %v7127 = vadd.f32 %v7056, %v7126
        %v7128 = vpop.f32.mrb[0].mxu0
        %v7129 = vadd.f32 %v7058, %v7128
        %v7130 = vpop.f32.mrb[0].mxu0
        %v7131 = vadd.f32 %v7060, %v7130
        %v7132 = vpop.f32.mrb[0].mxu0
        %v7133 = vadd.f32 %v7062, %v7132
        %7134 = vmatprep.mubr.bf16.mxu0 0
        %7135 = vmatmul.mubr.bf16.gmra.mrb[0].mxu0 %v6562
        %v7136 = vpop.f32.mrb[0].mxu0
        %v7137 = vadd.f32 %v7066, %v7136
        %v7138 = vpop.f32.mrb[0].mxu0
        %v7139 = vadd.f32 %v7068, %v7138
        %v7140 = vpop.f32.mrb[0].mxu0
        %v7141 = vpop.f32.mrb[0].mxu0
        %7142 = vdwg.mxu0
        %7143 = vmatprep.subr.bf16.mxu0 %v2811
        %7144 = vmatpush1.bf16.msra.mxu0 %v2810
        %7145 = vmatprep.subr.bf16.mxu0 %v2827
        %7146 = vmatpush1.bf16.msra.mxu0 %v2826
        %7147 = vmatprep.subr.bf16.mxu0 %v2843
        %7148 = vmatpush1.bf16.msra.mxu0 %v2842
        %7149 = vmatprep.subr.bf16.mxu0 %v2859
        %7150 = vmatpush1.bf16.msra.mxu0 %v2858
        %7151 = vmatprep.subr.bf16.mxu0 %v2875
        %7152 = vmatpush1.bf16.msra.mxu0 %v2874
        %7153 = vmatprep.subr.bf16.mxu0 %v2891
        %7154 = vmatpush1.bf16.msra.mxu0 %v2890
        %7155 = vmatprep.subr.bf16.mxu0 %v2907
        %7156 = vmatpush1.bf16.msra.mxu0 %v2906
        %7157 = vmatprep.subr.bf16.mxu0 %v2923
        %7158 = vmatpush1.bf16.msra.mxu0 %v2922
        %7159 = vmatprep.subr.bf16.mxu0 %v2939
        %7160 = vmatpush1.bf16.msra.mxu0 %v2938
        %7161 = vmatprep.subr.bf16.mxu0 %v2955
        %7162 = vmatpush1.bf16.msra.mxu0 %v2954
        %7163 = vmatprep.subr.bf16.mxu0 %v2971
        %7164 = vmatpush1.bf16.msra.mxu0 %v2970
        %7165 = vmatprep.subr.bf16.mxu0 %v2987
        %7166 = vmatpush1.bf16.msra.mxu0 %v2986
        %7167 = vmatprep.subr.bf16.mxu0 %v3003
        %7168 = vmatpush1.bf16.msra.mxu0 %v3002
        %7169 = vmatprep.subr.bf16.mxu0 %v3019
        %7170 = vmatpush1.bf16.msra.mxu0 %v3018
        %7171 = vmatprep.subr.bf16.mxu0 %v3035
        %7172 = vmatpush1.bf16.msra.mxu0 %v3034
        %7173 = vmatprep.subr.bf16.mxu0 %v3051
        %7174 = vmatpush1.bf16.msra.mxu0 %v3050
        %7175 = vmatprep.mubr.bf16.mxu0 %v6552
        %7176 = vmatmul.mubr.bf16.gmra.mrb[0].mxu0 %v6551
        %v7177 = vpop.f32.mrb[0].mxu0
        %v7178 = vadd.f32 %v1546, %v7177
        %v7179 = vpop.f32.mrb[0].mxu0
        %v7180 = vadd.f32 %v1550, %v7179
        %v7181 = vpop.f32.mrb[0].mxu0
        %v7182 = vadd.f32 %v1546, %v7181
        %v7183 = vpop.f32.mrb[0].mxu0
        %v7184 = vadd.f32 %v1550, %v7183
        %7185 = vmatprep.mubr.bf16.mxu0 %v6555
        %7186 = vmatmul.mubr.bf16.gmra.mrb[0].mxu0 %v6554
        %v7187 = vpop.f32.mrb[0].mxu0
        %v7188 = vadd.f32 %v1546, %v7187
        %v7189 = vpop.f32.mrb[0].mxu0
        %v7190 = vadd.f32 %v1550, %v7189
        %v7191 = vpop.f32.mrb[0].mxu0
        %v7192 = vadd.f32 %v1546, %v7191
        %v7193 = vpop.f32.mrb[0].mxu0
        %v7194 = vadd.f32 %v1550, %v7193
        %7195 = vmatprep.mubr.bf16.mxu0 %v6558
        %7196 = vmatmul.mubr.bf16.gmra.mrb[0].mxu0 %v6557
        %v7197 = vpop.f32.mrb[0].mxu0
        %v7198 = vadd.f32 %v1546, %v7197
        %v7199 = vpop.f32.mrb[0].mxu0
        %v7200 = vadd.f32 %v1550, %v7199
        %v7201 = vpop.f32.mrb[0].mxu0
        %v7202 = vadd.f32 %v1546, %v7201
        %v7203 = vpop.f32.mrb[0].mxu0
        %v7204 = vadd.f32 %v1550, %v7203
        %7205 = vmatprep.mubr.bf16.mxu0 %v6561
        %7206 = vmatmul.mubr.bf16.gmra.mrb[0].mxu0 %v6560
        %v7207 = vpop.f32.mrb[0].mxu0
        %v7208 = vadd.f32 %v1546, %v7207
        %v7209 = vpop.f32.mrb[0].mxu0
        %v7210 = vadd.f32 %v1550, %v7209
        %v7211 = vpop.f32.mrb[0].mxu0
        %v7212 = vpop.f32.mrb[0].mxu0
        %7213 = vdwg.mxu0
        %7214 = vmatprep.subr.bf16.mxu0 %v3067
        %7215 = vmatpush1.bf16.msra.mxu0 %v3066
        %7216 = vmatprep.subr.bf16.mxu0 %v3083
        %7217 = vmatpush1.bf16.msra.mxu0 %v3082
        %7218 = vmatprep.subr.bf16.mxu0 %v3099
        %7219 = vmatpush1.bf16.msra.mxu0 %v3098
        %7220 = vmatprep.subr.bf16.mxu0 %v3115
        %7221 = vmatpush1.bf16.msra.mxu0 %v3114
        %7222 = vmatprep.subr.bf16.mxu0 %v3131
        %7223 = vmatpush1.bf16.msra.mxu0 %v3130
        %7224 = vmatprep.subr.bf16.mxu0 %v3147
        %7225 = vmatpush1.bf16.msra.mxu0 %v3146
        %7226 = vmatprep.subr.bf16.mxu0 %v3163
        %7227 = vmatpush1.bf16.msra.mxu0 %v3162
        %7228 = vmatprep.subr.bf16.mxu0 %v3179
        %7229 = vmatpush1.bf16.msra.mxu0 %v3178
        %7230 = vmatprep.subr.bf16.mxu0 0
        %7231 = vmatpush1.bf16.msra.mxu0 0
        %7232 = vmatprep.subr.bf16.mxu0 0
        %7233 = vmatpush1.bf16.msra.mxu0 0
        %7234 = vmatprep.subr.bf16.mxu0 0
        %7235 = vmatpush1.bf16.msra.mxu0 0
        %7236 = vmatprep.subr.bf16.mxu0 0
        %7237 = vmatpush1.bf16.msra.mxu0 0
        %7238 = vmatprep.subr.bf16.mxu0 0
        %7239 = vmatpush1.bf16.msra.mxu0 0
        %7240 = vmatprep.subr.bf16.mxu0 0
        %7241 = vmatpush1.bf16.msra.mxu0 0
        %7242 = vmatprep.subr.bf16.mxu0 0
        %7243 = vmatpush1.bf16.msra.mxu0 0
        %7244 = vmatprep.subr.bf16.mxu0 0
        %7245 = vmatpush1.bf16.msra.mxu0 0
        %7246 = vmatprep.mubr.bf16.mxu0 0
        %7247 = vmatmul.mubr.bf16.gmra.mrb[0].mxu0 %v6553
        %v7248 = vpop.f32.mrb[0].mxu0
        %v7249 = vadd.f32 %v7178, %v7248
        %v7250 = vpop.f32.mrb[0].mxu0
        %v7251 = vadd.f32 %v7180, %v7250
        %v7252 = vpop.f32.mrb[0].mxu0
        %v7253 = vadd.f32 %v7182, %v7252
        %v7254 = vpop.f32.mrb[0].mxu0
        %v7255 = vadd.f32 %v7184, %v7254
        %7256 = vmatprep.mubr.bf16.mxu0 0
        %7257 = vmatmul.mubr.bf16.gmra.mrb[0].mxu0 %v6556
        %v7258 = vpop.f32.mrb[0].mxu0
        %v7259 = vadd.f32 %v7188, %v7258
        %v7260 = vpop.f32.mrb[0].mxu0
        %v7261 = vadd.f32 %v7190, %v7260
        %v7262 = vpop.f32.mrb[0].mxu0
        %v7263 = vadd.f32 %v7192, %v7262
        %v7264 = vpop.f32.mrb[0].mxu0
        %v7265 = vadd.f32 %v7194, %v7264
        %7266 = vmatprep.mubr.bf16.mxu0 0
        %7267 = vmatmul.mubr.bf16.gmra.mrb[0].mxu0 %v6559
        %v7268 = vpop.f32.mrb[0].mxu0
        %v7269 = vadd.f32 %v7198, %v7268
        %v7270 = vpop.f32.mrb[0].mxu0
        %v7271 = vadd.f32 %v7200, %v7270
        %v7272 = vpop.f32.mrb[0].mxu0
        %v7273 = vadd.f32 %v7202, %v7272
        %v7274 = vpop.f32.mrb[0].mxu0
        %v7275 = vadd.f32 %v7204, %v7274
        %7276 = vmatprep.mubr.bf16.mxu0 0
        %7277 = vmatmul.mubr.bf16.gmra.mrb[0].mxu0 %v6562
        %v7278 = vpop.f32.mrb[0].mxu0
        %v7279 = vadd.f32 %v7208, %v7278
        %v7280 = vpop.f32.mrb[0].mxu0
        %v7281 = vadd.f32 %v7210, %v7280
        %v7282 = vpop.f32.mrb[0].mxu0
        %v7283 = vpop.f32.mrb[0].mxu0
        %7284 = vdwg.mxu0
        %7285 = vmatprep.subr.bf16.mxu0 %v2813
        %7286 = vmatpush1.bf16.msra.mxu0 %v2812
        %7287 = vmatprep.subr.bf16.mxu0 %v2829
        %7288 = vmatpush1.bf16.msra.mxu0 %v2828
        %7289 = vmatprep.subr.bf16.mxu0 %v2845
        %7290 = vmatpush1.bf16.msra.mxu0 %v2844
        %7291 = vmatprep.subr.bf16.mxu0 %v2861
        %7292 = vmatpush1.bf16.msra.mxu0 %v2860
        %7293 = vmatprep.subr.bf16.mxu0 %v2877
        %7294 = vmatpush1.bf16.msra.mxu0 %v2876
        %7295 = vmatprep.subr.bf16.mxu0 %v2893
        %7296 = vmatpush1.bf16.msra.mxu0 %v2892
        %7297 = vmatprep.subr.bf16.mxu0 %v2909
        %7298 = vmatpush1.bf16.msra.mxu0 %v2908
        %7299 = vmatprep.subr.bf16.mxu0 %v2925
        %7300 = vmatpush1.bf16.msra.mxu0 %v2924
        %7301 = vmatprep.subr.bf16.mxu0 %v2941
        %7302 = vmatpush1.bf16.msra.mxu0 %v2940
        %7303 = vmatprep.subr.bf16.mxu0 %v2957
        %7304 = vmatpush1.bf16.msra.mxu0 %v2956
        %7305 = vmatprep.subr.bf16.mxu0 %v2973
        %7306 = vmatpush1.bf16.msra.mxu0 %v2972
        %7307 = vmatprep.subr.bf16.mxu0 %v2989
        %7308 = vmatpush1.bf16.msra.mxu0 %v2988
        %7309 = vmatprep.subr.bf16.mxu0 %v3005
        %7310 = vmatpush1.bf16.msra.mxu0 %v3004
        %7311 = vmatprep.subr.bf16.mxu0 %v3021
        %7312 = vmatpush1.bf16.msra.mxu0 %v3020
        %7313 = vmatprep.subr.bf16.mxu0 %v3037
        %7314 = vmatpush1.bf16.msra.mxu0 %v3036
        %7315 = vmatprep.subr.bf16.mxu0 %v3053
        %7316 = vmatpush1.bf16.msra.mxu0 %v3052
        %7317 = vmatprep.mubr.bf16.mxu0 %v6552
        %7318 = vmatmul.mubr.bf16.gmra.mrb[0].mxu0 %v6551
        %v7319 = vpop.f32.mrb[0].mxu0
        %v7320 = vadd.f32 %v1554, %v7319
        %v7321 = vpop.f32.mrb[0].mxu0
        %v7322 = vadd.f32 %v1558, %v7321
        %v7323 = vpop.f32.mrb[0].mxu0
        %v7324 = vadd.f32 %v1554, %v7323
        %v7325 = vpop.f32.mrb[0].mxu0
        %v7326 = vadd.f32 %v1558, %v7325
        %7327 = vmatprep.mubr.bf16.mxu0 %v6555
        %7328 = vmatmul.mubr.bf16.gmra.mrb[0].mxu0 %v6554
        %v7329 = vpop.f32.mrb[0].mxu0
        %v7330 = vadd.f32 %v1554, %v7329
        %v7331 = vpop.f32.mrb[0].mxu0
        %v7332 = vadd.f32 %v1558, %v7331
        %v7333 = vpop.f32.mrb[0].mxu0
        %v7334 = vadd.f32 %v1554, %v7333
        %v7335 = vpop.f32.mrb[0].mxu0
        %v7336 = vadd.f32 %v1558, %v7335
        %7337 = vmatprep.mubr.bf16.mxu0 %v6558
        %7338 = vmatmul.mubr.bf16.gmra.mrb[0].mxu0 %v6557
        %v7339 = vpop.f32.mrb[0].mxu0
        %v7340 = vadd.f32 %v1554, %v7339
        %v7341 = vpop.f32.mrb[0].mxu0
        %v7342 = vadd.f32 %v1558, %v7341
        %v7343 = vpop.f32.mrb[0].mxu0
        %v7344 = vadd.f32 %v1554, %v7343
        %v7345 = vpop.f32.mrb[0].mxu0
        %v7346 = vadd.f32 %v1558, %v7345
        %7347 = vmatprep.mubr.bf16.mxu0 %v6561
        %7348 = vmatmul.mubr.bf16.gmra.mrb[0].mxu0 %v6560
        %v7349 = vpop.f32.mrb[0].mxu0
        %v7350 = vadd.f32 %v1554, %v7349
        %v7351 = vpop.f32.mrb[0].mxu0
        %v7352 = vadd.f32 %v1558, %v7351
        %v7353 = vpop.f32.mrb[0].mxu0
        %v7354 = vpop.f32.mrb[0].mxu0
        %7355 = vdwg.mxu0
        %7356 = vmatprep.subr.bf16.mxu0 %v3069
        %7357 = vmatpush1.bf16.msra.mxu0 %v3068
        %7358 = vmatprep.subr.bf16.mxu0 %v3085
        %7359 = vmatpush1.bf16.msra.mxu0 %v3084
        %7360 = vmatprep.subr.bf16.mxu0 %v3101
        %7361 = vmatpush1.bf16.msra.mxu0 %v3100
        %7362 = vmatprep.subr.bf16.mxu0 %v3117
        %7363 = vmatpush1.bf16.msra.mxu0 %v3116
        %7364 = vmatprep.subr.bf16.mxu0 %v3133
        %7365 = vmatpush1.bf16.msra.mxu0 %v3132
        %7366 = vmatprep.subr.bf16.mxu0 %v3149
        %7367 = vmatpush1.bf16.msra.mxu0 %v3148
        %7368 = vmatprep.subr.bf16.mxu0 %v3165
        %7369 = vmatpush1.bf16.msra.mxu0 %v3164
        %7370 = vmatprep.subr.bf16.mxu0 %v3181
        %7371 = vmatpush1.bf16.msra.mxu0 %v3180
        %7372 = vmatprep.subr.bf16.mxu0 0
        %7373 = vmatpush1.bf16.msra.mxu0 0
        %7374 = vmatprep.subr.bf16.mxu0 0
        %7375 = vmatpush1.bf16.msra.mxu0 0
        %7376 = vmatprep.subr.bf16.mxu0 0
        %7377 = vmatpush1.bf16.msra.mxu0 0
        %7378 = vmatprep.subr.bf16.mxu0 0
        %7379 = vmatpush1.bf16.msra.mxu0 0
        %7380 = vmatprep.subr.bf16.mxu0 0
        %7381 = vmatpush1.bf16.msra.mxu0 0
        %7382 = vmatprep.subr.bf16.mxu0 0
        %7383 = vmatpush1.bf16.msra.mxu0 0
        %7384 = vmatprep.subr.bf16.mxu0 0
        %7385 = vmatpush1.bf16.msra.mxu0 0
        %7386 = vmatprep.subr.bf16.mxu0 0
        %7387 = vmatpush1.bf16.msra.mxu0 0
        %7388 = vmatprep.mubr.bf16.mxu0 0
        %7389 = vmatmul.mubr.bf16.gmra.mrb[0].mxu0 %v6553
        %v7390 = vpop.f32.mrb[0].mxu0
        %v7391 = vadd.f32 %v7320, %v7390
        %v7392 = vpop.f32.mrb[0].mxu0
        %v7393 = vadd.f32 %v7322, %v7392
        %v7394 = vpop.f32.mrb[0].mxu0
        %v7395 = vadd.f32 %v7324, %v7394
        %v7396 = vpop.f32.mrb[0].mxu0
        %v7397 = vadd.f32 %v7326, %v7396
        %7398 = vmatprep.mubr.bf16.mxu0 0
        %7399 = vmatmul.mubr.bf16.gmra.mrb[0].mxu0 %v6556
        %v7400 = vpop.f32.mrb[0].mxu0
        %v7401 = vadd.f32 %v7330, %v7400
        %v7402 = vpop.f32.mrb[0].mxu0
        %v7403 = vadd.f32 %v7332, %v7402
        %v7404 = vpop.f32.mrb[0].mxu0
        %v7405 = vadd.f32 %v7334, %v7404
        %v7406 = vpop.f32.mrb[0].mxu0
        %v7407 = vadd.f32 %v7336, %v7406
        %7408 = vmatprep.mubr.bf16.mxu0 0
        %7409 = vmatmul.mubr.bf16.gmra.mrb[0].mxu0 %v6559
        %v7410 = vpop.f32.mrb[0].mxu0
        %v7411 = vadd.f32 %v7340, %v7410
        %v7412 = vpop.f32.mrb[0].mxu0
        %v7413 = vadd.f32 %v7342, %v7412
        %v7414 = vpop.f32.mrb[0].mxu0
        %v7415 = vadd.f32 %v7344, %v7414
        %v7416 = vpop.f32.mrb[0].mxu0
        %v7417 = vadd.f32 %v7346, %v7416
        %7418 = vmatprep.mubr.bf16.mxu0 0
        %7419 = vmatmul.mubr.bf16.gmra.mrb[0].mxu0 %v6562
        %v7420 = vpop.f32.mrb[0].mxu0
        %v7421 = vadd.f32 %v7350, %v7420
        %v7422 = vpop.f32.mrb[0].mxu0
        %v7423 = vadd.f32 %v7352, %v7422
        %v7424 = vpop.f32.mrb[0].mxu0
        %v7425 = vpop.f32.mrb[0].mxu0
        %7426 = vdwg.mxu0
        %7427 = vmatprep.subr.bf16.mxu0 %v2815
        %7428 = vmatpush1.bf16.msra.mxu0 %v2814
        %7429 = vmatprep.subr.bf16.mxu0 %v2831
        %7430 = vmatpush1.bf16.msra.mxu0 %v2830
        %7431 = vmatprep.subr.bf16.mxu0 %v2847
        %7432 = vmatpush1.bf16.msra.mxu0 %v2846
        %7433 = vmatprep.subr.bf16.mxu0 %v2863
        %7434 = vmatpush1.bf16.msra.mxu0 %v2862
        %7435 = vmatprep.subr.bf16.mxu0 %v2879
        %7436 = vmatpush1.bf16.msra.mxu0 %v2878
        %7437 = vmatprep.subr.bf16.mxu0 %v2895
        %7438 = vmatpush1.bf16.msra.mxu0 %v2894
        %7439 = vmatprep.subr.bf16.mxu0 %v2911
        %7440 = vmatpush1.bf16.msra.mxu0 %v2910
        %7441 = vmatprep.subr.bf16.mxu0 %v2927
        %7442 = vmatpush1.bf16.msra.mxu0 %v2926
        %7443 = vmatprep.subr.bf16.mxu0 %v2943
        %7444 = vmatpush1.bf16.msra.mxu0 %v2942
        %7445 = vmatprep.subr.bf16.mxu0 %v2959
        %7446 = vmatpush1.bf16.msra.mxu0 %v2958
        %7447 = vmatprep.subr.bf16.mxu0 %v2975
        %7448 = vmatpush1.bf16.msra.mxu0 %v2974
        %7449 = vmatprep.subr.bf16.mxu0 %v2991
        %7450 = vmatpush1.bf16.msra.mxu0 %v2990
        %7451 = vmatprep.subr.bf16.mxu0 %v3007
        %7452 = vmatpush1.bf16.msra.mxu0 %v3006
        %7453 = vmatprep.subr.bf16.mxu0 %v3023
        %7454 = vmatpush1.bf16.msra.mxu0 %v3022
        %7455 = vmatprep.subr.bf16.mxu0 %v3039
        %7456 = vmatpush1.bf16.msra.mxu0 %v3038
        %7457 = vmatprep.subr.bf16.mxu0 %v3055
        %7458 = vmatpush1.bf16.msra.mxu0 %v3054
        %7459 = vmatprep.mubr.bf16.mxu0 %v6552
        %7460 = vmatmul.mubr.bf16.gmra.mrb[0].mxu0 %v6551
        %v7461 = vpop.f32.mrb[0].mxu0
        %v7462 = vadd.f32 %v1562, %v7461
        %v7463 = vpop.f32.mrb[0].mxu0
        %v7464 = vadd.f32 %v1566, %v7463
        %v7465 = vpop.f32.mrb[0].mxu0
        %v7466 = vadd.f32 %v1562, %v7465
        %v7467 = vpop.f32.mrb[0].mxu0
        %v7468 = vadd.f32 %v1566, %v7467
        %7469 = vmatprep.mubr.bf16.mxu0 %v6555
        %7470 = vmatmul.mubr.bf16.gmra.mrb[0].mxu0 %v6554
        %v7471 = vpop.f32.mrb[0].mxu0
        %v7472 = vadd.f32 %v1562, %v7471
        %v7473 = vpop.f32.mrb[0].mxu0
        %v7474 = vadd.f32 %v1566, %v7473
        %v7475 = vpop.f32.mrb[0].mxu0
        %v7476 = vadd.f32 %v1562, %v7475
        %v7477 = vpop.f32.mrb[0].mxu0
        %v7478 = vadd.f32 %v1566, %v7477
        %7479 = vmatprep.mubr.bf16.mxu0 %v6558
        %7480 = vmatmul.mubr.bf16.gmra.mrb[0].mxu0 %v6557
        %v7481 = vpop.f32.mrb[0].mxu0
        %v7482 = vadd.f32 %v1562, %v7481
        %v7483 = vpop.f32.mrb[0].mxu0
        %v7484 = vadd.f32 %v1566, %v7483
        %v7485 = vpop.f32.mrb[0].mxu0
        %v7486 = vadd.f32 %v1562, %v7485
        %v7487 = vpop.f32.mrb[0].mxu0
        %v7488 = vadd.f32 %v1566, %v7487
        %7489 = vmatprep.mubr.bf16.mxu0 %v6561
        %7490 = vmatmul.mubr.bf16.gmra.mrb[0].mxu0 %v6560
        %v7491 = vpop.f32.mrb[0].mxu0
        %v7492 = vadd.f32 %v1562, %v7491
        %v7493 = vpop.f32.mrb[0].mxu0
        %v7494 = vadd.f32 %v1566, %v7493
        %v7495 = vpop.f32.mrb[0].mxu0
        %v7496 = vpop.f32.mrb[0].mxu0
        %7497 = vdwg.mxu0
        %7498 = vmatprep.subr.bf16.mxu0 %v3071
        %7499 = vmatpush1.bf16.msra.mxu0 %v3070
        %7500 = vmatprep.subr.bf16.mxu0 %v3087
        %7501 = vmatpush1.bf16.msra.mxu0 %v3086
        %7502 = vmatprep.subr.bf16.mxu0 %v3103
        %7503 = vmatpush1.bf16.msra.mxu0 %v3102
        %7504 = vmatprep.subr.bf16.mxu0 %v3119
        %7505 = vmatpush1.bf16.msra.mxu0 %v3118
        %7506 = vmatprep.subr.bf16.mxu0 %v3135
        %7507 = vmatpush1.bf16.msra.mxu0 %v3134
        %7508 = vmatprep.subr.bf16.mxu0 %v3151
        %7509 = vmatpush1.bf16.msra.mxu0 %v3150
        %7510 = vmatprep.subr.bf16.mxu0 %v3167
        %7511 = vmatpush1.bf16.msra.mxu0 %v3166
        %7512 = vmatprep.subr.bf16.mxu0 %v3183
        %7513 = vmatpush1.bf16.msra.mxu0 %v3182
        %7514 = vmatprep.subr.bf16.mxu0 0
        %7515 = vmatpush1.bf16.msra.mxu0 0
        %7516 = vmatprep.subr.bf16.mxu0 0
        %7517 = vmatpush1.bf16.msra.mxu0 0
        %7518 = vmatprep.subr.bf16.mxu0 0
        %7519 = vmatpush1.bf16.msra.mxu0 0
        %7520 = vmatprep.subr.bf16.mxu0 0
        %7521 = vmatpush1.bf16.msra.mxu0 0
        %7522 = vmatprep.subr.bf16.mxu0 0
        %7523 = vmatpush1.bf16.msra.mxu0 0
        %7524 = vmatprep.subr.bf16.mxu0 0
        %7525 = vmatpush1.bf16.msra.mxu0 0
        %7526 = vmatprep.subr.bf16.mxu0 0
        %7527 = vmatpush1.bf16.msra.mxu0 0
        %7528 = vmatprep.subr.bf16.mxu0 0
        %7529 = vmatpush1.bf16.msra.mxu0 0
        %7530 = vmatprep.mubr.bf16.mxu0 0
        %7531 = vmatmul.mubr.bf16.gmra.mrb[0].mxu0 %v6553
        %v7532 = vpop.f32.mrb[0].mxu0
        %v7533 = vadd.f32 %v7462, %v7532
        %v7534 = vpop.f32.mrb[0].mxu0
        %v7535 = vadd.f32 %v7464, %v7534
        %v7536 = vpop.f32.mrb[0].mxu0
        %v7537 = vadd.f32 %v7466, %v7536
        %v7538 = vpop.f32.mrb[0].mxu0
        %v7539 = vadd.f32 %v7468, %v7538
        %7540 = vmatprep.mubr.bf16.mxu0 0
        %7541 = vmatmul.mubr.bf16.gmra.mrb[0].mxu0 %v6556
        %v7542 = vpop.f32.mrb[0].mxu0
        %v7543 = vadd.f32 %v7472, %v7542
        %v7544 = vpop.f32.mrb[0].mxu0
        %v7545 = vadd.f32 %v7474, %v7544
        %v7546 = vpop.f32.mrb[0].mxu0
        %v7547 = vadd.f32 %v7476, %v7546
        %v7548 = vpop.f32.mrb[0].mxu0
        %v7549 = vadd.f32 %v7478, %v7548
        %7550 = vmatprep.mubr.bf16.mxu0 0
        %7551 = vmatmul.mubr.bf16.gmra.mrb[0].mxu0 %v6559
        %v7552 = vpop.f32.mrb[0].mxu0
        %v7553 = vadd.f32 %v7482, %v7552
        %v7554 = vpop.f32.mrb[0].mxu0
        %v7555 = vadd.f32 %v7484, %v7554
        %v7556 = vpop.f32.mrb[0].mxu0
        %v7557 = vadd.f32 %v7486, %v7556
        %v7558 = vpop.f32.mrb[0].mxu0
        %v7559 = vadd.f32 %v7488, %v7558
        %7560 = vmatprep.mubr.bf16.mxu0 0
        %7561 = vmatmul.mubr.bf16.gmra.mrb[0].mxu0 %v6562
        %v7562 = vpop.f32.mrb[0].mxu0
        %v7563 = vadd.f32 %v7492, %v7562
        %v7564 = vpop.f32.mrb[0].mxu0
        %v7565 = vadd.f32 %v7494, %v7564
        %v7566 = vpop.f32.mrb[0].mxu0
        %v7567 = vpop.f32.mrb[0].mxu0
        %7568 = vdwg.mxu0
        %7569 = vmatprep.subr.bf16.mxu0 %v2817
        %7570 = vmatpush1.bf16.msra.mxu0 %v2816
        %7571 = vmatprep.subr.bf16.mxu0 %v2833
        %7572 = vmatpush1.bf16.msra.mxu0 %v2832
        %7573 = vmatprep.subr.bf16.mxu0 %v2849
        %7574 = vmatpush1.bf16.msra.mxu0 %v2848
        %7575 = vmatprep.subr.bf16.mxu0 %v2865
        %7576 = vmatpush1.bf16.msra.mxu0 %v2864
        %7577 = vmatprep.subr.bf16.mxu0 %v2881
        %7578 = vmatpush1.bf16.msra.mxu0 %v2880
        %7579 = vmatprep.subr.bf16.mxu0 %v2897
        %7580 = vmatpush1.bf16.msra.mxu0 %v2896
        %7581 = vmatprep.subr.bf16.mxu0 %v2913
        %7582 = vmatpush1.bf16.msra.mxu0 %v2912
        %7583 = vmatprep.subr.bf16.mxu0 %v2929
        %7584 = vmatpush1.bf16.msra.mxu0 %v2928
        %7585 = vmatprep.subr.bf16.mxu0 %v2945
        %7586 = vmatpush1.bf16.msra.mxu0 %v2944
        %7587 = vmatprep.subr.bf16.mxu0 %v2961
        %7588 = vmatpush1.bf16.msra.mxu0 %v2960
        %7589 = vmatprep.subr.bf16.mxu0 %v2977
        %7590 = vmatpush1.bf16.msra.mxu0 %v2976
        %7591 = vmatprep.subr.bf16.mxu0 %v2993
        %7592 = vmatpush1.bf16.msra.mxu0 %v2992
        %7593 = vmatprep.subr.bf16.mxu0 %v3009
        %7594 = vmatpush1.bf16.msra.mxu0 %v3008
        %7595 = vmatprep.subr.bf16.mxu0 %v3025
        %7596 = vmatpush1.bf16.msra.mxu0 %v3024
        %7597 = vmatprep.subr.bf16.mxu0 %v3041
        %7598 = vmatpush1.bf16.msra.mxu0 %v3040
        %7599 = vmatprep.subr.bf16.mxu0 %v3057
        %7600 = vmatpush1.bf16.msra.mxu0 %v3056
        %7601 = vmatprep.mubr.bf16.mxu0 %v6552
        %7602 = vmatmul.mubr.bf16.gmra.mrb[0].mxu0 %v6551
        %v7603 = vpop.f32.mrb[0].mxu0
        %v7604 = vadd.f32 %v1570, %v7603
        %v7605 = vpop.f32.mrb[0].mxu0
        %v7606 = vadd.f32 %v1574, %v7605
        %v7607 = vpop.f32.mrb[0].mxu0
        %v7608 = vadd.f32 %v1570, %v7607
        %v7609 = vpop.f32.mrb[0].mxu0
        %v7610 = vadd.f32 %v1574, %v7609
        %7611 = vmatprep.mubr.bf16.mxu0 %v6555
        %7612 = vmatmul.mubr.bf16.gmra.mrb[0].mxu0 %v6554
        %v7613 = vpop.f32.mrb[0].mxu0
        %v7614 = vadd.f32 %v1570, %v7613
        %v7615 = vpop.f32.mrb[0].mxu0
        %v7616 = vadd.f32 %v1574, %v7615
        %v7617 = vpop.f32.mrb[0].mxu0
        %v7618 = vadd.f32 %v1570, %v7617
        %v7619 = vpop.f32.mrb[0].mxu0
        %v7620 = vadd.f32 %v1574, %v7619
        %7621 = vmatprep.mubr.bf16.mxu0 %v6558
        %7622 = vmatmul.mubr.bf16.gmra.mrb[0].mxu0 %v6557
        %v7623 = vpop.f32.mrb[0].mxu0
        %v7624 = vadd.f32 %v1570, %v7623
        %v7625 = vpop.f32.mrb[0].mxu0
        %v7626 = vadd.f32 %v1574, %v7625
        %v7627 = vpop.f32.mrb[0].mxu0
        %v7628 = vadd.f32 %v1570, %v7627
        %v7629 = vpop.f32.mrb[0].mxu0
        %v7630 = vadd.f32 %v1574, %v7629
        %7631 = vmatprep.mubr.bf16.mxu0 %v6561
        %7632 = vmatmul.mubr.bf16.gmra.mrb[0].mxu0 %v6560
        %v7633 = vpop.f32.mrb[0].mxu0
        %v7634 = vadd.f32 %v1570, %v7633
        %v7635 = vpop.f32.mrb[0].mxu0
        %v7636 = vadd.f32 %v1574, %v7635
        %v7637 = vpop.f32.mrb[0].mxu0
        %v7638 = vpop.f32.mrb[0].mxu0
        %7639 = vdwg.mxu0
        %7640 = vmatprep.subr.bf16.mxu0 %v3073
        %7641 = vmatpush1.bf16.msra.mxu0 %v3072
        %7642 = vmatprep.subr.bf16.mxu0 %v3089
        %7643 = vmatpush1.bf16.msra.mxu0 %v3088
        %7644 = vmatprep.subr.bf16.mxu0 %v3105
        %7645 = vmatpush1.bf16.msra.mxu0 %v3104
        %7646 = vmatprep.subr.bf16.mxu0 %v3121
        %7647 = vmatpush1.bf16.msra.mxu0 %v3120
        %7648 = vmatprep.subr.bf16.mxu0 %v3137
        %7649 = vmatpush1.bf16.msra.mxu0 %v3136
        %7650 = vmatprep.subr.bf16.mxu0 %v3153
        %7651 = vmatpush1.bf16.msra.mxu0 %v3152
        %7652 = vmatprep.subr.bf16.mxu0 %v3169
        %7653 = vmatpush1.bf16.msra.mxu0 %v3168
        %7654 = vmatprep.subr.bf16.mxu0 %v3185
        %7655 = vmatpush1.bf16.msra.mxu0 %v3184
        %7656 = vmatprep.subr.bf16.mxu0 0
        %7657 = vmatpush1.bf16.msra.mxu0 0
        %7658 = vmatprep.subr.bf16.mxu0 0
        %7659 = vmatpush1.bf16.msra.mxu0 0
        %7660 = vmatprep.subr.bf16.mxu0 0
        %7661 = vmatpush1.bf16.msra.mxu0 0
        %7662 = vmatprep.subr.bf16.mxu0 0
        %7663 = vmatpush1.bf16.msra.mxu0 0
        %7664 = vmatprep.subr.bf16.mxu0 0
        %7665 = vmatpush1.bf16.msra.mxu0 0
        %7666 = vmatprep.subr.bf16.mxu0 0
        %7667 = vmatpush1.bf16.msra.mxu0 0
        %7668 = vmatprep.subr.bf16.mxu0 0
        %7669 = vmatpush1.bf16.msra.mxu0 0
        %7670 = vmatprep.subr.bf16.mxu0 0
        %7671 = vmatpush1.bf16.msra.mxu0 0
        %7672 = vmatprep.mubr.bf16.mxu0 0
        %7673 = vmatmul.mubr.bf16.gmra.mrb[0].mxu0 %v6553
        %v7674 = vpop.f32.mrb[0].mxu0
        %v7675 = vadd.f32 %v7604, %v7674
        %v7676 = vpop.f32.mrb[0].mxu0
        %v7677 = vadd.f32 %v7606, %v7676
        %v7678 = vpop.f32.mrb[0].mxu0
        %v7679 = vadd.f32 %v7608, %v7678
        %v7680 = vpop.f32.mrb[0].mxu0
        %v7681 = vadd.f32 %v7610, %v7680
        %7682 = vmatprep.mubr.bf16.mxu0 0
        %7683 = vmatmul.mubr.bf16.gmra.mrb[0].mxu0 %v6556
        %v7684 = vpop.f32.mrb[0].mxu0
        %v7685 = vadd.f32 %v7614, %v7684
        %v7686 = vpop.f32.mrb[0].mxu0
        %v7687 = vadd.f32 %v7616, %v7686
        %v7688 = vpop.f32.mrb[0].mxu0
        %v7689 = vadd.f32 %v7618, %v7688
        %v7690 = vpop.f32.mrb[0].mxu0
        %v7691 = vadd.f32 %v7620, %v7690
        %7692 = vmatprep.mubr.bf16.mxu0 0
        %7693 = vmatmul.mubr.bf16.gmra.mrb[0].mxu0 %v6559
        %v7694 = vpop.f32.mrb[0].mxu0
        %v7695 = vadd.f32 %v7624, %v7694
        %v7696 = vpop.f32.mrb[0].mxu0
        %v7697 = vadd.f32 %v7626, %v7696
        %v7698 = vpop.f32.mrb[0].mxu0
        %v7699 = vadd.f32 %v7628, %v7698
        %v7700 = vpop.f32.mrb[0].mxu0
        %v7701 = vadd.f32 %v7630, %v7700
        %7702 = vmatprep.mubr.bf16.mxu0 0
        %7703 = vmatmul.mubr.bf16.gmra.mrb[0].mxu0 %v6562
        %v7704 = vpop.f32.mrb[0].mxu0
        %v7705 = vadd.f32 %v7634, %v7704
        %v7706 = vpop.f32.mrb[0].mxu0
        %v7707 = vadd.f32 %v7636, %v7706
        %v7708 = vpop.f32.mrb[0].mxu0
        %v7709 = vpop.f32.mrb[0].mxu0
        %7710 = vdwg.mxu0
        %7711 = vmatprep.subr.bf16.mxu0 0
        %7712 = vmatpush1.bf16.msra.mxu0 %v4808
        %7713 = vmatprep.subr.bf16.mxu0 0
        %7714 = vmatpush1.bf16.msra.mxu0 %v4809
        %7715 = vmatprep.subr.bf16.mxu0 0
        %7716 = vmatpush1.bf16.msra.mxu0 %v4810
        %7717 = vmatprep.subr.bf16.mxu0 0
        %7718 = vmatpush1.bf16.msra.mxu0 %v4811
        %7719 = vmatprep.subr.bf16.mxu0 0
        %7720 = vmatpush1.bf16.msra.mxu0 %v4812
        %7721 = vmatprep.subr.bf16.mxu0 0
        %7722 = vmatpush1.bf16.msra.mxu0 %v4813
        %7723 = vmatprep.subr.bf16.mxu0 0
        %7724 = vmatpush1.bf16.msra.mxu0 %v4814
        %7725 = vmatprep.subr.bf16.mxu0 0
        %7726 = vmatpush1.bf16.msra.mxu0 %v4815
        %7727 = vmatprep.subr.bf16.mxu0 0
        %7728 = vmatpush1.bf16.msra.mxu0 %v4816
        %7729 = vmatprep.subr.bf16.mxu0 0
        %7730 = vmatpush1.bf16.msra.mxu0 %v4817
        %7731 = vmatprep.subr.bf16.mxu0 0
        %7732 = vmatpush1.bf16.msra.mxu0 %v4818
        %7733 = vmatprep.subr.bf16.mxu0 0
        %7734 = vmatpush1.bf16.msra.mxu0 %v4819
        %7735 = vmatprep.subr.bf16.mxu0 0
        %7736 = vmatpush1.bf16.msra.mxu0 %v4820
        %7737 = vmatprep.subr.bf16.mxu0 0
        %7738 = vmatpush1.bf16.msra.mxu0 %v4821
        %7739 = vmatprep.subr.bf16.mxu0 0
        %7740 = vmatpush1.bf16.msra.mxu0 %v4822
        %7741 = vmatprep.subr.bf16.mxu0 0
        %7742 = vmatpush1.bf16.msra.mxu0 %v4823
        %7743 = vmatprep.mubr.bf16.mxu0 %v6552
        %7744 = vmatmul.mubr.bf16.gmra.mrb[0].mxu0 %v6551
        %v7745 = vpop.f32.mrb[0].mxu0
        %v7746 = vadd.f32 %v4710, %v7745
        %v7747 = vpop.f32.mrb[0].mxu0
        %v7748 = vpop.f32.mrb[0].mxu0
        %v7749 = vadd.f32 %v4710, %v7748
        %v7750 = vpop.f32.mrb[0].mxu0
        %7751 = vmatprep.mubr.bf16.mxu0 %v6555
        %7752 = vmatmul.mubr.bf16.gmra.mrb[0].mxu0 %v6554
        %v7753 = vpop.f32.mrb[0].mxu0
        %v7754 = vadd.f32 %v4710, %v7753
        %v7755 = vpop.f32.mrb[0].mxu0
        %v7756 = vpop.f32.mrb[0].mxu0
        %v7757 = vadd.f32 %v4710, %v7756
        %v7758 = vpop.f32.mrb[0].mxu0
        %7759 = vmatprep.mubr.bf16.mxu0 %v6558
        %7760 = vmatmul.mubr.bf16.gmra.mrb[0].mxu0 %v6557
        %v7761 = vpop.f32.mrb[0].mxu0
        %v7762 = vadd.f32 %v4710, %v7761
        %v7763 = vpop.f32.mrb[0].mxu0
        %v7764 = vpop.f32.mrb[0].mxu0
        %v7765 = vadd.f32 %v4710, %v7764
        %v7766 = vpop.f32.mrb[0].mxu0
        %7767 = vmatprep.mubr.bf16.mxu0 %v6561
        %7768 = vmatmul.mubr.bf16.gmra.mrb[0].mxu0 %v6560
        %v7769 = vpop.f32.mrb[0].mxu0
        %v7770 = vadd.f32 %v4710, %v7769
        %v7771 = vpop.f32.mrb[0].mxu0
        %v7772 = vpop.f32.mrb[0].mxu0
        %v7773 = vpop.f32.mrb[0].mxu0
        %7774 = vdwg.mxu0
        %7775 = vmatprep.subr.bf16.mxu0 0
        %7776 = vmatpush1.bf16.msra.mxu0 %v4824
        %7777 = vmatprep.subr.bf16.mxu0 0
        %7778 = vmatpush1.bf16.msra.mxu0 %v4825
        %7779 = vmatprep.subr.bf16.mxu0 0
        %7780 = vmatpush1.bf16.msra.mxu0 %v4826
        %7781 = vmatprep.subr.bf16.mxu0 0
        %7782 = vmatpush1.bf16.msra.mxu0 %v4827
        %7783 = vmatprep.subr.bf16.mxu0 0
        %7784 = vmatpush1.bf16.msra.mxu0 %v4828
        %7785 = vmatprep.subr.bf16.mxu0 0
        %7786 = vmatpush1.bf16.msra.mxu0 %v4829
        %7787 = vmatprep.subr.bf16.mxu0 0
        %7788 = vmatpush1.bf16.msra.mxu0 %v4830
        %7789 = vmatprep.subr.bf16.mxu0 0
        %7790 = vmatpush1.bf16.msra.mxu0 %v4831
        %7791 = vmatprep.subr.bf16.mxu0 0
        %7792 = vmatpush1.bf16.msra.mxu0 0
        %7793 = vmatprep.subr.bf16.mxu0 0
        %7794 = vmatpush1.bf16.msra.mxu0 0
        %7795 = vmatprep.subr.bf16.mxu0 0
        %7796 = vmatpush1.bf16.msra.mxu0 0
        %7797 = vmatprep.subr.bf16.mxu0 0
        %7798 = vmatpush1.bf16.msra.mxu0 0
        %7799 = vmatprep.subr.bf16.mxu0 0
        %7800 = vmatpush1.bf16.msra.mxu0 0
        %7801 = vmatprep.subr.bf16.mxu0 0
        %7802 = vmatpush1.bf16.msra.mxu0 0
        %7803 = vmatprep.subr.bf16.mxu0 0
        %7804 = vmatpush1.bf16.msra.mxu0 0
        %7805 = vmatprep.subr.bf16.mxu0 0
        %7806 = vmatpush1.bf16.msra.mxu0 0
        %7807 = vmatprep.mubr.bf16.mxu0 0
        %7808 = vmatmul.mubr.bf16.gmra.mrb[0].mxu0 %v6553
        %v7809 = vpop.f32.mrb[0].mxu0
        %v7810 = vadd.f32 %v7746, %v7809
        %v7811 = vpop.f32.mrb[0].mxu0
        %v7812 = vpop.f32.mrb[0].mxu0
        %v7813 = vadd.f32 %v7749, %v7812
        %v7814 = vpop.f32.mrb[0].mxu0
        %7815 = vmatprep.mubr.bf16.mxu0 0
        %7816 = vmatmul.mubr.bf16.gmra.mrb[0].mxu0 %v6556
        %v7817 = vpop.f32.mrb[0].mxu0
        %v7818 = vadd.f32 %v7754, %v7817
        %v7819 = vpop.f32.mrb[0].mxu0
        %v7820 = vpop.f32.mrb[0].mxu0
        %v7821 = vadd.f32 %v7757, %v7820
        %v7822 = vpop.f32.mrb[0].mxu0
        %7823 = vmatprep.mubr.bf16.mxu0 0
        %7824 = vmatmul.mubr.bf16.gmra.mrb[0].mxu0 %v6559
        %v7825 = vpop.f32.mrb[0].mxu0
        %v7826 = vadd.f32 %v7762, %v7825
        %v7827 = vpop.f32.mrb[0].mxu0
        %v7828 = vpop.f32.mrb[0].mxu0
        %v7829 = vadd.f32 %v7765, %v7828
        %v7830 = vpop.f32.mrb[0].mxu0
        %7831 = vmatprep.mubr.bf16.mxu0 0
        %7832 = vmatmul.mubr.bf16.gmra.mrb[0].mxu0 %v6562
        %v7833 = vpop.f32.mrb[0].mxu0
        %v7834 = vadd.f32 %v7770, %v7833
        %v7835 = vpop.f32.mrb[0].mxu0
        %v7836 = vpop.f32.mrb[0].mxu0
        %v7837 = vpop.f32.mrb[0].mxu0
        %7838 = vdwg.mxu0
        %v7839 = vmax.f32 %v7810, 0.0
        %v7840 = vmax.f32 %v7813, 0.0
        %v7841 = vmax.f32 %v7818, 0.0
        %v7842 = vmax.f32 %v7821, 0.0
        %v7843 = vmax.f32 %v7826, 0.0
        %v7844 = vmax.f32 %v7829, 0.0
        %v7845 = vmax.f32 %v7834, 0.0
        %v7846 = vadd.f32 %v7839, %v6487
        %v7847 = vadd.f32 %v7840, %v6490
        %v7848 = vadd.f32 %v7841, %v6495
        %v7849 = vadd.f32 %v7842, %v6498
        %v7850 = vadd.f32 %v7843, %v6503
        %v7851 = vadd.f32 %v7844, %v6506
        %v7852 = vadd.f32 %v7845, %v6511
        %7853 = vxpose.xlu0.b32.start [1/16] %v7846, 128
        %7854 = vxpose.xlu0.b32.cont [2/16] %v7847, 128
        %7855 = vxpose.xlu0.b32.cont [3/16] %v7848, 128
        %7856 = vxpose.xlu0.b32.cont [4/16] %v7849, 128
        %7857 = vxpose.xlu0.b32.cont [5/16] %v7850, 128
        %7858 = vxpose.xlu0.b32.cont [6/16] %v7851, 128
        %7859 = vxpose.xlu0.b32.cont [7/16] %v7852, 128
        %7860 = vxpose.xlu0.b32.cont [8/16] 0.0, 128
        %7861 = vxpose.xlu0.b32.cont [9/16] 0.0, 128
        %7862 = vxpose.xlu0.b32.cont [10/16] 0.0, 128
        %7863 = vxpose.xlu0.b32.cont [11/16] 0.0, 128
        %7864 = vxpose.xlu0.b32.cont [12/16] 0.0, 128
        %7865 = vxpose.xlu0.b32.cont [13/16] 0.0, 128
        %7866 = vxpose.xlu0.b32.cont [14/16] 0.0, 128
        %7867 = vxpose.xlu0.b32.cont [15/16] 0.0, 128
        %7868 = vxpose.xlu0.b32.end [16/16] 0.0, 128
        %v7869 = vpop.trf.xlu0
        %v7870 = vpop.trf.xlu0
        %v7871 = vpop.trf.xlu0
        %v7872 = vpop.trf.xlu0
        %v7873 = vpop.trf.xlu0
        %v7874 = vpop.trf.xlu0
        %v7875 = vpop.trf.xlu0
        %v7876 = vpop.trf.xlu0
        %v7877 = vpop.trf.xlu0
        %v7878 = vpop.trf.xlu0
        %v7879 = vpop.trf.xlu0
        %v7880 = vpop.trf.xlu0
        %v7881 = vpop.trf.xlu0
        %v7882 = vpop.trf.xlu0
        %v7883 = vpop.trf.xlu0
        %v7884 = vpop.trf.xlu0
        %s7885 = scalar_lea.vmem %s492, 32
        %7886 = vst.msk [vmem:[%s7885] sm:$0xff] %vm5030, %v7869
        %7887 = vst.msk [vmem:[%s7885 + $0x8] sm:$0xff] %vm5030, %v7870
        %7888 = vst.msk [vmem:[%s7885 + $0x10] sm:$0xff] %vm5030, %v7871
        %7889 = vst.msk [vmem:[%s7885 + $0x18] sm:$0xff] %vm5030, %v7872
        %v7890 = vpack.c.bf16 %v7870, %v7869
        %v7891 = vpack.c.bf16 %v7872, %v7871
        %v7892 = vpack.c.bf16 %v6685, %v6681
        %v7893 = vpack.c.bf16 %v6687, %v6683
        %v7894 = vpack.c.bf16 %v6827, %v6823
        %v7895 = vpack.c.bf16 %v6829, %v6825
        %v7896 = vpack.c.bf16 %v6969, %v6965
        %v7897 = vpack.c.bf16 %v6971, %v6967
        %v7898 = vpack.c.bf16 %v7111, %v7107
        %v7899 = vpack.c.bf16 %v7113, %v7109
        %v7900 = vpack.c.bf16 %v7253, %v7249
        %v7901 = vpack.c.bf16 %v7255, %v7251
        %v7902 = vpack.c.bf16 %v7395, %v7391
        %v7903 = vpack.c.bf16 %v7397, %v7393
        %v7904 = vpack.c.bf16 %v7537, %v7533
        %v7905 = vpack.c.bf16 %v7539, %v7535
        %v7906 = vpack.c.bf16 %v7679, %v7675
        %v7907 = vpack.c.bf16 %v7681, %v7677
        %v7908 = vpack.c.bf16 %v6695, %v6691
        %v7909 = vpack.c.bf16 %v6697, %v6693
        %v7910 = vpack.c.bf16 %v6837, %v6833
        %v7911 = vpack.c.bf16 %v6839, %v6835
        %v7912 = vpack.c.bf16 %v6979, %v6975
        %v7913 = vpack.c.bf16 %v6981, %v6977
        %v7914 = vpack.c.bf16 %v7121, %v7117
        %v7915 = vpack.c.bf16 %v7123, %v7119
        %v7916 = vpack.c.bf16 %v7263, %v7259
        %v7917 = vpack.c.bf16 %v7265, %v7261
        %v7918 = vpack.c.bf16 %v7405, %v7401
        %v7919 = vpack.c.bf16 %v7407, %v7403
        %v7920 = vpack.c.bf16 %v7547, %v7543
        %v7921 = vpack.c.bf16 %v7549, %v7545
        %v7922 = vpack.c.bf16 %v7689, %v7685
        %v7923 = vpack.c.bf16 %v7691, %v7687
        %v7924 = vpack.c.bf16 %v6705, %v6701
        %v7925 = vpack.c.bf16 %v6707, %v6703
        %v7926 = vpack.c.bf16 %v6847, %v6843
        %v7927 = vpack.c.bf16 %v6849, %v6845
        %v7928 = vpack.c.bf16 %v6989, %v6985
        %v7929 = vpack.c.bf16 %v6991, %v6987
        %v7930 = vpack.c.bf16 %v7131, %v7127
        %v7931 = vpack.c.bf16 %v7133, %v7129
        %v7932 = vpack.c.bf16 %v7273, %v7269
        %v7933 = vpack.c.bf16 %v7275, %v7271
        %v7934 = vpack.c.bf16 %v7415, %v7411
        %v7935 = vpack.c.bf16 %v7417, %v7413
        %v7936 = vpack.c.bf16 %v7557, %v7553
        %v7937 = vpack.c.bf16 %v7559, %v7555
        %v7938 = vpack.c.bf16 %v7699, %v7695
        %v7939 = vpack.c.bf16 %v7701, %v7697
        %v7940 = vpack.c.bf16 %v6711, %v6711
        %v7941 = vpack.c.bf16 %v6713, %v6713
        %v7942 = vpack.c.bf16 %v6853, %v6853
        %v7943 = vpack.c.bf16 %v6855, %v6855
        %v7944 = vpack.c.bf16 %v6995, %v6995
        %v7945 = vpack.c.bf16 %v6997, %v6997
        %v7946 = vpack.c.bf16 %v7137, %v7137
        %v7947 = vpack.c.bf16 %v7139, %v7139
        %v7948 = vpack.c.bf16 %v7279, %v7279
        %v7949 = vpack.c.bf16 %v7281, %v7281
        %v7950 = vpack.c.bf16 %v7421, %v7421
        %v7951 = vpack.c.bf16 %v7423, %v7423
        %v7952 = vpack.c.bf16 %v7563, %v7563
        %v7953 = vpack.c.bf16 %v7565, %v7565
        %v7954 = vpack.c.bf16 %v7705, %v7705
        %v7955 = vpack.c.bf16 %v7707, %v7707
        %v7957 = vsel %vm5030, %v7890, 0
        %v7960 = vsel %vm5030, %v7891, 0
        %v7963 = vand.u32 %v7940, %v5109
        %v7966 = vand.u32 %v7941, %v5109
        %v7969 = vand.u32 %v7942, %v5109
        %v7972 = vand.u32 %v7943, %v5109
        %v7975 = vand.u32 %v7944, %v5109
        %v7978 = vand.u32 %v7945, %v5109
        %v7981 = vand.u32 %v7946, %v5109
        %v7984 = vand.u32 %v7947, %v5109
        %v7987 = vand.u32 %v7948, %v5109
        %v7990 = vand.u32 %v7949, %v5109
        %v7993 = vand.u32 %v7950, %v5109
        %v7996 = vand.u32 %v7951, %v5109
        %v7999 = vand.u32 %v7952, %v5109
        %v8002 = vand.u32 %v7953, %v5109
        %v8005 = vand.u32 %v7954, %v5109
        %v8008 = vand.u32 %v7955, %v5109
        %8010 = vmatprep.subr.bf16.mxu0 %v7893
        %8011 = vmatpush1.bf16.msra.mxu0 %v7892
        %8012 = vmatprep.subr.bf16.mxu0 %v7909
        %8013 = vmatpush1.bf16.msra.mxu0 %v7908
        %8014 = vmatprep.subr.bf16.mxu0 %v7925
        %8015 = vmatpush1.bf16.msra.mxu0 %v7924
        %8016 = vmatprep.subr.bf16.mxu0 %v7966
        %8017 = vmatpush1.bf16.msra.mxu0 %v7963
        %8018 = vmatprep.subr.bf16.mxu0 0
        %8019 = vmatpush1.bf16.msra.mxu0 0
        %8020 = vmatprep.subr.bf16.mxu0 0
        %8021 = vmatpush1.bf16.msra.mxu0 0
        %8022 = vmatprep.subr.bf16.mxu0 0
        %8023 = vmatpush1.bf16.msra.mxu0 0
        %8024 = vmatprep.subr.bf16.mxu0 0
        %8025 = vmatpush1.bf16.msra.mxu0 0
        %8026 = vmatprep.subr.bf16.mxu0 0
        %8027 = vmatpush1.bf16.msra.mxu0 0
        %8028 = vmatprep.subr.bf16.mxu0 0
        %8029 = vmatpush1.bf16.msra.mxu0 0
        %8030 = vmatprep.subr.bf16.mxu0 0
        %8031 = vmatpush1.bf16.msra.mxu0 0
        %8032 = vmatprep.subr.bf16.mxu0 0
        %8033 = vmatpush1.bf16.msra.mxu0 0
        %8034 = vmatprep.subr.bf16.mxu0 0
        %8035 = vmatpush1.bf16.msra.mxu0 0
        %8036 = vmatprep.subr.bf16.mxu0 0
        %8037 = vmatpush1.bf16.msra.mxu0 0
        %8038 = vmatprep.subr.bf16.mxu0 0
        %8039 = vmatpush1.bf16.msra.mxu0 0
        %8040 = vmatprep.subr.bf16.mxu0 0
        %8041 = vmatpush1.bf16.msra.mxu0 0
        %8042 = vmatprep.mubr.bf16.mxu0 0
        %8043 = vmatmul.mubr.bf16.gmra.mrb[0].mxu0 %v7957
        %v8044 = vpop.f32.mrb[0].mxu0
        %v8045 = vadd.f32 0.0, %v8044
        %v8046 = vpop.f32.mrb[0].mxu0
        %v8047 = vadd.f32 0.0, %v8046
        %v8048 = vpop.f32.mrb[0].mxu0
        %v8049 = vadd.f32 0.0, %v8048
        %v8050 = vpop.f32.mrb[0].mxu0
        %v8051 = vadd.f32 0.0, %v8050
        %8052 = vmatprep.mubr.bf16.mxu0 0
        %8053 = vmatmul.mubr.bf16.gmra.mrb[0].mxu0 %v7960
        %v8054 = vpop.f32.mrb[0].mxu0
        %v8055 = vadd.f32 0.0, %v8054
        %v8056 = vpop.f32.mrb[0].mxu0
        %v8057 = vadd.f32 0.0, %v8056
        %v8058 = vpop.f32.mrb[0].mxu0
        %v8059 = vadd.f32 0.0, %v8058
        %v8060 = vpop.f32.mrb[0].mxu0
        %v8061 = vadd.f32 0.0, %v8060
        %8062 = vdwg.mxu0
        %8063 = vmatprep.subr.bf16.mxu0 %v7895
        %8064 = vmatpush1.bf16.msra.mxu0 %v7894
        %8065 = vmatprep.subr.bf16.mxu0 %v7911
        %8066 = vmatpush1.bf16.msra.mxu0 %v7910
        %8067 = vmatprep.subr.bf16.mxu0 %v7927
        %8068 = vmatpush1.bf16.msra.mxu0 %v7926
        %8069 = vmatprep.subr.bf16.mxu0 %v7972
        %8070 = vmatpush1.bf16.msra.mxu0 %v7969
        %8071 = vmatprep.subr.bf16.mxu0 0
        %8072 = vmatpush1.bf16.msra.mxu0 0
        %8073 = vmatprep.subr.bf16.mxu0 0
        %8074 = vmatpush1.bf16.msra.mxu0 0
        %8075 = vmatprep.subr.bf16.mxu0 0
        %8076 = vmatpush1.bf16.msra.mxu0 0
        %8077 = vmatprep.subr.bf16.mxu0 0
        %8078 = vmatpush1.bf16.msra.mxu0 0
        %8079 = vmatprep.subr.bf16.mxu0 0
        %8080 = vmatpush1.bf16.msra.mxu0 0
        %8081 = vmatprep.subr.bf16.mxu0 0
        %8082 = vmatpush1.bf16.msra.mxu0 0
        %8083 = vmatprep.subr.bf16.mxu0 0
        %8084 = vmatpush1.bf16.msra.mxu0 0
        %8085 = vmatprep.subr.bf16.mxu0 0
        %8086 = vmatpush1.bf16.msra.mxu0 0
        %8087 = vmatprep.subr.bf16.mxu0 0
        %8088 = vmatpush1.bf16.msra.mxu0 0
        %8089 = vmatprep.subr.bf16.mxu0 0
        %8090 = vmatpush1.bf16.msra.mxu0 0
        %8091 = vmatprep.subr.bf16.mxu0 0
        %8092 = vmatpush1.bf16.msra.mxu0 0
        %8093 = vmatprep.subr.bf16.mxu0 0
        %8094 = vmatpush1.bf16.msra.mxu0 0
        %8095 = vmatprep.mubr.bf16.mxu0 0
        %8096 = vmatmul.mubr.bf16.gmra.mrb[0].mxu0 %v7957
        %v8097 = vpop.f32.mrb[0].mxu0
        %v8098 = vadd.f32 0.0, %v8097
        %v8099 = vpop.f32.mrb[0].mxu0
        %v8100 = vadd.f32 0.0, %v8099
        %v8101 = vpop.f32.mrb[0].mxu0
        %v8102 = vadd.f32 0.0, %v8101
        %v8103 = vpop.f32.mrb[0].mxu0
        %v8104 = vadd.f32 0.0, %v8103
        %8105 = vmatprep.mubr.bf16.mxu0 0
        %8106 = vmatmul.mubr.bf16.gmra.mrb[0].mxu0 %v7960
        %v8107 = vpop.f32.mrb[0].mxu0
        %v8108 = vadd.f32 0.0, %v8107
        %v8109 = vpop.f32.mrb[0].mxu0
        %v8110 = vadd.f32 0.0, %v8109
        %v8111 = vpop.f32.mrb[0].mxu0
        %v8112 = vadd.f32 0.0, %v8111
        %v8113 = vpop.f32.mrb[0].mxu0
        %v8114 = vadd.f32 0.0, %v8113
        %8115 = vdwg.mxu0
        %8116 = vmatprep.subr.bf16.mxu0 %v7897
        %8117 = vmatpush1.bf16.msra.mxu0 %v7896
        %8118 = vmatprep.subr.bf16.mxu0 %v7913
        %8119 = vmatpush1.bf16.msra.mxu0 %v7912
        %8120 = vmatprep.subr.bf16.mxu0 %v7929
        %8121 = vmatpush1.bf16.msra.mxu0 %v7928
        %8122 = vmatprep.subr.bf16.mxu0 %v7978
        %8123 = vmatpush1.bf16.msra.mxu0 %v7975
        %8124 = vmatprep.subr.bf16.mxu0 0
        %8125 = vmatpush1.bf16.msra.mxu0 0
        %8126 = vmatprep.subr.bf16.mxu0 0
        %8127 = vmatpush1.bf16.msra.mxu0 0
        %8128 = vmatprep.subr.bf16.mxu0 0
        %8129 = vmatpush1.bf16.msra.mxu0 0
        %8130 = vmatprep.subr.bf16.mxu0 0
        %8131 = vmatpush1.bf16.msra.mxu0 0
        %8132 = vmatprep.subr.bf16.mxu0 0
        %8133 = vmatpush1.bf16.msra.mxu0 0
        %8134 = vmatprep.subr.bf16.mxu0 0
        %8135 = vmatpush1.bf16.msra.mxu0 0
        %8136 = vmatprep.subr.bf16.mxu0 0
        %8137 = vmatpush1.bf16.msra.mxu0 0
        %8138 = vmatprep.subr.bf16.mxu0 0
        %8139 = vmatpush1.bf16.msra.mxu0 0
        %8140 = vmatprep.subr.bf16.mxu0 0
        %8141 = vmatpush1.bf16.msra.mxu0 0
        %8142 = vmatprep.subr.bf16.mxu0 0
        %8143 = vmatpush1.bf16.msra.mxu0 0
        %8144 = vmatprep.subr.bf16.mxu0 0
        %8145 = vmatpush1.bf16.msra.mxu0 0
        %8146 = vmatprep.subr.bf16.mxu0 0
        %8147 = vmatpush1.bf16.msra.mxu0 0
        %8148 = vmatprep.mubr.bf16.mxu0 0
        %8149 = vmatmul.mubr.bf16.gmra.mrb[0].mxu0 %v7957
        %v8150 = vpop.f32.mrb[0].mxu0
        %v8151 = vadd.f32 0.0, %v8150
        %v8152 = vpop.f32.mrb[0].mxu0
        %v8153 = vadd.f32 0.0, %v8152
        %v8154 = vpop.f32.mrb[0].mxu0
        %v8155 = vadd.f32 0.0, %v8154
        %v8156 = vpop.f32.mrb[0].mxu0
        %v8157 = vadd.f32 0.0, %v8156
        %8158 = vmatprep.mubr.bf16.mxu0 0
        %8159 = vmatmul.mubr.bf16.gmra.mrb[0].mxu0 %v7960
        %v8160 = vpop.f32.mrb[0].mxu0
        %v8161 = vadd.f32 0.0, %v8160
        %v8162 = vpop.f32.mrb[0].mxu0
        %v8163 = vadd.f32 0.0, %v8162
        %v8164 = vpop.f32.mrb[0].mxu0
        %v8165 = vadd.f32 0.0, %v8164
        %v8166 = vpop.f32.mrb[0].mxu0
        %v8167 = vadd.f32 0.0, %v8166
        %8168 = vdwg.mxu0
        %8169 = vmatprep.subr.bf16.mxu0 %v7899
        %8170 = vmatpush1.bf16.msra.mxu0 %v7898
        %8171 = vmatprep.subr.bf16.mxu0 %v7915
        %8172 = vmatpush1.bf16.msra.mxu0 %v7914
        %8173 = vmatprep.subr.bf16.mxu0 %v7931
        %8174 = vmatpush1.bf16.msra.mxu0 %v7930
        %8175 = vmatprep.subr.bf16.mxu0 %v7984
        %8176 = vmatpush1.bf16.msra.mxu0 %v7981
        %8177 = vmatprep.subr.bf16.mxu0 0
        %8178 = vmatpush1.bf16.msra.mxu0 0
        %8179 = vmatprep.subr.bf16.mxu0 0
        %8180 = vmatpush1.bf16.msra.mxu0 0
        %8181 = vmatprep.subr.bf16.mxu0 0
        %8182 = vmatpush1.bf16.msra.mxu0 0
        %8183 = vmatprep.subr.bf16.mxu0 0
        %8184 = vmatpush1.bf16.msra.mxu0 0
        %8185 = vmatprep.subr.bf16.mxu0 0
        %8186 = vmatpush1.bf16.msra.mxu0 0
        %8187 = vmatprep.subr.bf16.mxu0 0
        %8188 = vmatpush1.bf16.msra.mxu0 0
        %8189 = vmatprep.subr.bf16.mxu0 0
        %8190 = vmatpush1.bf16.msra.mxu0 0
        %8191 = vmatprep.subr.bf16.mxu0 0
        %8192 = vmatpush1.bf16.msra.mxu0 0
        %8193 = vmatprep.subr.bf16.mxu0 0
        %8194 = vmatpush1.bf16.msra.mxu0 0
        %8195 = vmatprep.subr.bf16.mxu0 0
        %8196 = vmatpush1.bf16.msra.mxu0 0
        %8197 = vmatprep.subr.bf16.mxu0 0
        %8198 = vmatpush1.bf16.msra.mxu0 0
        %8199 = vmatprep.subr.bf16.mxu0 0
        %8200 = vmatpush1.bf16.msra.mxu0 0
        %8201 = vmatprep.mubr.bf16.mxu0 0
        %8202 = vmatmul.mubr.bf16.gmra.mrb[0].mxu0 %v7957
        %v8203 = vpop.f32.mrb[0].mxu0
        %v8204 = vadd.f32 0.0, %v8203
        %v8205 = vpop.f32.mrb[0].mxu0
        %v8206 = vadd.f32 0.0, %v8205
        %v8207 = vpop.f32.mrb[0].mxu0
        %v8208 = vadd.f32 0.0, %v8207
        %v8209 = vpop.f32.mrb[0].mxu0
        %v8210 = vadd.f32 0.0, %v8209
        %8211 = vmatprep.mubr.bf16.mxu0 0
        %8212 = vmatmul.mubr.bf16.gmra.mrb[0].mxu0 %v7960
        %v8213 = vpop.f32.mrb[0].mxu0
        %v8214 = vadd.f32 0.0, %v8213
        %v8215 = vpop.f32.mrb[0].mxu0
        %v8216 = vadd.f32 0.0, %v8215
        %v8217 = vpop.f32.mrb[0].mxu0
        %v8218 = vadd.f32 0.0, %v8217
        %v8219 = vpop.f32.mrb[0].mxu0
        %v8220 = vadd.f32 0.0, %v8219
        %8221 = vdwg.mxu0
        %8222 = vmatprep.subr.bf16.mxu0 %v7901
        %8223 = vmatpush1.bf16.msra.mxu0 %v7900
        %8224 = vmatprep.subr.bf16.mxu0 %v7917
        %8225 = vmatpush1.bf16.msra.mxu0 %v7916
        %8226 = vmatprep.subr.bf16.mxu0 %v7933
        %8227 = vmatpush1.bf16.msra.mxu0 %v7932
        %8228 = vmatprep.subr.bf16.mxu0 %v7990
        %8229 = vmatpush1.bf16.msra.mxu0 %v7987
        %8230 = vmatprep.subr.bf16.mxu0 0
        %8231 = vmatpush1.bf16.msra.mxu0 0
        %8232 = vmatprep.subr.bf16.mxu0 0
        %8233 = vmatpush1.bf16.msra.mxu0 0
        %8234 = vmatprep.subr.bf16.mxu0 0
        %8235 = vmatpush1.bf16.msra.mxu0 0
        %8236 = vmatprep.subr.bf16.mxu0 0
        %8237 = vmatpush1.bf16.msra.mxu0 0
        %8238 = vmatprep.subr.bf16.mxu0 0
        %8239 = vmatpush1.bf16.msra.mxu0 0
        %8240 = vmatprep.subr.bf16.mxu0 0
        %8241 = vmatpush1.bf16.msra.mxu0 0
        %8242 = vmatprep.subr.bf16.mxu0 0
        %8243 = vmatpush1.bf16.msra.mxu0 0
        %8244 = vmatprep.subr.bf16.mxu0 0
        %8245 = vmatpush1.bf16.msra.mxu0 0
        %8246 = vmatprep.subr.bf16.mxu0 0
        %8247 = vmatpush1.bf16.msra.mxu0 0
        %8248 = vmatprep.subr.bf16.mxu0 0
        %8249 = vmatpush1.bf16.msra.mxu0 0
        %8250 = vmatprep.subr.bf16.mxu0 0
        %8251 = vmatpush1.bf16.msra.mxu0 0
        %8252 = vmatprep.subr.bf16.mxu0 0
        %8253 = vmatpush1.bf16.msra.mxu0 0
        %8254 = vmatprep.mubr.bf16.mxu0 0
        %8255 = vmatmul.mubr.bf16.gmra.mrb[0].mxu0 %v7957
        %v8256 = vpop.f32.mrb[0].mxu0
        %v8257 = vadd.f32 0.0, %v8256
        %v8258 = vpop.f32.mrb[0].mxu0
        %v8259 = vadd.f32 0.0, %v8258
        %v8260 = vpop.f32.mrb[0].mxu0
        %v8261 = vadd.f32 0.0, %v8260
        %v8262 = vpop.f32.mrb[0].mxu0
        %v8263 = vadd.f32 0.0, %v8262
        %8264 = vmatprep.mubr.bf16.mxu0 0
        %8265 = vmatmul.mubr.bf16.gmra.mrb[0].mxu0 %v7960
        %v8266 = vpop.f32.mrb[0].mxu0
        %v8267 = vadd.f32 0.0, %v8266
        %v8268 = vpop.f32.mrb[0].mxu0
        %v8269 = vadd.f32 0.0, %v8268
        %v8270 = vpop.f32.mrb[0].mxu0
        %v8271 = vadd.f32 0.0, %v8270
        %v8272 = vpop.f32.mrb[0].mxu0
        %v8273 = vadd.f32 0.0, %v8272
        %8274 = vdwg.mxu0
        %8275 = vmatprep.subr.bf16.mxu0 %v7903
        %8276 = vmatpush1.bf16.msra.mxu0 %v7902
        %8277 = vmatprep.subr.bf16.mxu0 %v7919
        %8278 = vmatpush1.bf16.msra.mxu0 %v7918
        %8279 = vmatprep.subr.bf16.mxu0 %v7935
        %8280 = vmatpush1.bf16.msra.mxu0 %v7934
        %8281 = vmatprep.subr.bf16.mxu0 %v7996
        %8282 = vmatpush1.bf16.msra.mxu0 %v7993
        %8283 = vmatprep.subr.bf16.mxu0 0
        %8284 = vmatpush1.bf16.msra.mxu0 0
        %8285 = vmatprep.subr.bf16.mxu0 0
        %8286 = vmatpush1.bf16.msra.mxu0 0
        %8287 = vmatprep.subr.bf16.mxu0 0
        %8288 = vmatpush1.bf16.msra.mxu0 0
        %8289 = vmatprep.subr.bf16.mxu0 0
        %8290 = vmatpush1.bf16.msra.mxu0 0
        %8291 = vmatprep.subr.bf16.mxu0 0
        %8292 = vmatpush1.bf16.msra.mxu0 0
        %8293 = vmatprep.subr.bf16.mxu0 0
        %8294 = vmatpush1.bf16.msra.mxu0 0
        %8295 = vmatprep.subr.bf16.mxu0 0
        %8296 = vmatpush1.bf16.msra.mxu0 0
        %8297 = vmatprep.subr.bf16.mxu0 0
        %8298 = vmatpush1.bf16.msra.mxu0 0
        %8299 = vmatprep.subr.bf16.mxu0 0
        %8300 = vmatpush1.bf16.msra.mxu0 0
        %8301 = vmatprep.subr.bf16.mxu0 0
        %8302 = vmatpush1.bf16.msra.mxu0 0
        %8303 = vmatprep.subr.bf16.mxu0 0
        %8304 = vmatpush1.bf16.msra.mxu0 0
        %8305 = vmatprep.subr.bf16.mxu0 0
        %8306 = vmatpush1.bf16.msra.mxu0 0
        %8307 = vmatprep.mubr.bf16.mxu0 0
        %8308 = vmatmul.mubr.bf16.gmra.mrb[0].mxu0 %v7957
        %v8309 = vpop.f32.mrb[0].mxu0
        %v8310 = vadd.f32 0.0, %v8309
        %v8311 = vpop.f32.mrb[0].mxu0
        %v8312 = vadd.f32 0.0, %v8311
        %v8313 = vpop.f32.mrb[0].mxu0
        %v8314 = vadd.f32 0.0, %v8313
        %v8315 = vpop.f32.mrb[0].mxu0
        %v8316 = vadd.f32 0.0, %v8315
        %8317 = vmatprep.mubr.bf16.mxu0 0
        %8318 = vmatmul.mubr.bf16.gmra.mrb[0].mxu0 %v7960
        %v8319 = vpop.f32.mrb[0].mxu0
        %v8320 = vadd.f32 0.0, %v8319
        %v8321 = vpop.f32.mrb[0].mxu0
        %v8322 = vadd.f32 0.0, %v8321
        %v8323 = vpop.f32.mrb[0].mxu0
        %v8324 = vadd.f32 0.0, %v8323
        %v8325 = vpop.f32.mrb[0].mxu0
        %v8326 = vadd.f32 0.0, %v8325
        %8327 = vdwg.mxu0
        %8328 = vmatprep.subr.bf16.mxu0 %v7905
        %8329 = vmatpush1.bf16.msra.mxu0 %v7904
        %8330 = vmatprep.subr.bf16.mxu0 %v7921
        %8331 = vmatpush1.bf16.msra.mxu0 %v7920
        %8332 = vmatprep.subr.bf16.mxu0 %v7937
        %8333 = vmatpush1.bf16.msra.mxu0 %v7936
        %8334 = vmatprep.subr.bf16.mxu0 %v8002
        %8335 = vmatpush1.bf16.msra.mxu0 %v7999
        %8336 = vmatprep.subr.bf16.mxu0 0
        %8337 = vmatpush1.bf16.msra.mxu0 0
        %8338 = vmatprep.subr.bf16.mxu0 0
        %8339 = vmatpush1.bf16.msra.mxu0 0
        %8340 = vmatprep.subr.bf16.mxu0 0
        %8341 = vmatpush1.bf16.msra.mxu0 0
        %8342 = vmatprep.subr.bf16.mxu0 0
        %8343 = vmatpush1.bf16.msra.mxu0 0
        %8344 = vmatprep.subr.bf16.mxu0 0
        %8345 = vmatpush1.bf16.msra.mxu0 0
        %8346 = vmatprep.subr.bf16.mxu0 0
        %8347 = vmatpush1.bf16.msra.mxu0 0
        %8348 = vmatprep.subr.bf16.mxu0 0
        %8349 = vmatpush1.bf16.msra.mxu0 0
        %8350 = vmatprep.subr.bf16.mxu0 0
        %8351 = vmatpush1.bf16.msra.mxu0 0
        %8352 = vmatprep.subr.bf16.mxu0 0
        %8353 = vmatpush1.bf16.msra.mxu0 0
        %8354 = vmatprep.subr.bf16.mxu0 0
        %8355 = vmatpush1.bf16.msra.mxu0 0
        %8356 = vmatprep.subr.bf16.mxu0 0
        %8357 = vmatpush1.bf16.msra.mxu0 0
        %8358 = vmatprep.subr.bf16.mxu0 0
        %8359 = vmatpush1.bf16.msra.mxu0 0
        %8360 = vmatprep.mubr.bf16.mxu0 0
        %8361 = vmatmul.mubr.bf16.gmra.mrb[0].mxu0 %v7957
        %v8362 = vpop.f32.mrb[0].mxu0
        %v8363 = vadd.f32 0.0, %v8362
        %v8364 = vpop.f32.mrb[0].mxu0
        %v8365 = vadd.f32 0.0, %v8364
        %v8366 = vpop.f32.mrb[0].mxu0
        %v8367 = vadd.f32 0.0, %v8366
        %v8368 = vpop.f32.mrb[0].mxu0
        %v8369 = vadd.f32 0.0, %v8368
        %8370 = vmatprep.mubr.bf16.mxu0 0
        %8371 = vmatmul.mubr.bf16.gmra.mrb[0].mxu0 %v7960
        %v8372 = vpop.f32.mrb[0].mxu0
        %v8373 = vadd.f32 0.0, %v8372
        %v8374 = vpop.f32.mrb[0].mxu0
        %v8375 = vadd.f32 0.0, %v8374
        %v8376 = vpop.f32.mrb[0].mxu0
        %v8377 = vadd.f32 0.0, %v8376
        %v8378 = vpop.f32.mrb[0].mxu0
        %v8379 = vadd.f32 0.0, %v8378
        %8380 = vdwg.mxu0
        %8381 = vmatprep.subr.bf16.mxu0 %v7907
        %8382 = vmatpush1.bf16.msra.mxu0 %v7906
        %8383 = vmatprep.subr.bf16.mxu0 %v7923
        %8384 = vmatpush1.bf16.msra.mxu0 %v7922
        %8385 = vmatprep.subr.bf16.mxu0 %v7939
        %8386 = vmatpush1.bf16.msra.mxu0 %v7938
        %8387 = vmatprep.subr.bf16.mxu0 %v8008
        %8388 = vmatpush1.bf16.msra.mxu0 %v8005
        %8389 = vmatprep.subr.bf16.mxu0 0
        %8390 = vmatpush1.bf16.msra.mxu0 0
        %8391 = vmatprep.subr.bf16.mxu0 0
        %8392 = vmatpush1.bf16.msra.mxu0 0
        %8393 = vmatprep.subr.bf16.mxu0 0
        %8394 = vmatpush1.bf16.msra.mxu0 0
        %8395 = vmatprep.subr.bf16.mxu0 0
        %8396 = vmatpush1.bf16.msra.mxu0 0
        %8397 = vmatprep.subr.bf16.mxu0 0
        %8398 = vmatpush1.bf16.msra.mxu0 0
        %8399 = vmatprep.subr.bf16.mxu0 0
        %8400 = vmatpush1.bf16.msra.mxu0 0
        %8401 = vmatprep.subr.bf16.mxu0 0
        %8402 = vmatpush1.bf16.msra.mxu0 0
        %8403 = vmatprep.subr.bf16.mxu0 0
        %8404 = vmatpush1.bf16.msra.mxu0 0
        %8405 = vmatprep.subr.bf16.mxu0 0
        %8406 = vmatpush1.bf16.msra.mxu0 0
        %8407 = vmatprep.subr.bf16.mxu0 0
        %8408 = vmatpush1.bf16.msra.mxu0 0
        %8409 = vmatprep.subr.bf16.mxu0 0
        %8410 = vmatpush1.bf16.msra.mxu0 0
        %8411 = vmatprep.subr.bf16.mxu0 0
        %8412 = vmatpush1.bf16.msra.mxu0 0
        %8413 = vmatprep.mubr.bf16.mxu0 0
        %8414 = vmatmul.mubr.bf16.gmra.mrb[0].mxu0 %v7957
        %v8415 = vpop.f32.mrb[0].mxu0
        %v8416 = vadd.f32 0.0, %v8415
        %v8417 = vpop.f32.mrb[0].mxu0
        %v8418 = vadd.f32 0.0, %v8417
        %v8419 = vpop.f32.mrb[0].mxu0
        %v8420 = vadd.f32 0.0, %v8419
        %v8421 = vpop.f32.mrb[0].mxu0
        %v8422 = vadd.f32 0.0, %v8421
        %8423 = vmatprep.mubr.bf16.mxu0 0
        %8424 = vmatmul.mubr.bf16.gmra.mrb[0].mxu0 %v7960
        %v8425 = vpop.f32.mrb[0].mxu0
        %v8426 = vadd.f32 0.0, %v8425
        %v8427 = vpop.f32.mrb[0].mxu0
        %v8428 = vadd.f32 0.0, %v8427
        %v8429 = vpop.f32.mrb[0].mxu0
        %v8430 = vadd.f32 0.0, %v8429
        %v8431 = vpop.f32.mrb[0].mxu0
        %v8432 = vadd.f32 0.0, %v8431
        %8433 = vdwg.mxu0
        %v8434 = vmul.f32 %v8045, 0.020408163
        %v8435 = vmul.f32 %v8047, 0.020408163
        %v8436 = vmul.f32 %v8098, 0.020408163
        %v8437 = vmul.f32 %v8100, 0.020408163
        %v8438 = vmul.f32 %v8151, 0.020408163
        %v8439 = vmul.f32 %v8153, 0.020408163
        %v8440 = vmul.f32 %v8204, 0.020408163
        %v8441 = vmul.f32 %v8206, 0.020408163
        %v8442 = vmul.f32 %v8257, 0.020408163
        %v8443 = vmul.f32 %v8259, 0.020408163
        %v8444 = vmul.f32 %v8310, 0.020408163
        %v8445 = vmul.f32 %v8312, 0.020408163
        %v8446 = vmul.f32 %v8363, 0.020408163
        %v8447 = vmul.f32 %v8365, 0.020408163
        %v8448 = vmul.f32 %v8416, 0.020408163
        %v8449 = vmul.f32 %v8418, 0.020408163
        %v8450 = vmul.f32 %v8049, 0.020408163
        %v8451 = vmul.f32 %v8051, 0.020408163
        %v8452 = vmul.f32 %v8102, 0.020408163
        %v8453 = vmul.f32 %v8104, 0.020408163
        %v8454 = vmul.f32 %v8155, 0.020408163
        %v8455 = vmul.f32 %v8157, 0.020408163
        %v8456 = vmul.f32 %v8208, 0.020408163
        %v8457 = vmul.f32 %v8210, 0.020408163
        %v8458 = vmul.f32 %v8261, 0.020408163
        %v8459 = vmul.f32 %v8263, 0.020408163
        %v8460 = vmul.f32 %v8314, 0.020408163
        %v8461 = vmul.f32 %v8316, 0.020408163
        %v8462 = vmul.f32 %v8367, 0.020408163
        %v8463 = vmul.f32 %v8369, 0.020408163
        %v8464 = vmul.f32 %v8420, 0.020408163
        %v8465 = vmul.f32 %v8422, 0.020408163
        %v8466 = vmul.f32 %v8055, 0.020408163
        %v8467 = vmul.f32 %v8057, 0.020408163
        %v8468 = vmul.f32 %v8108, 0.020408163
        %v8469 = vmul.f32 %v8110, 0.020408163
        %v8470 = vmul.f32 %v8161, 0.020408163
        %v8471 = vmul.f32 %v8163, 0.020408163
        %v8472 = vmul.f32 %v8214, 0.020408163
        %v8473 = vmul.f32 %v8216, 0.020408163
        %v8474 = vmul.f32 %v8267, 0.020408163
        %v8475 = vmul.f32 %v8269, 0.020408163
        %v8476 = vmul.f32 %v8320, 0.020408163
        %v8477 = vmul.f32 %v8322, 0.020408163
        %v8478 = vmul.f32 %v8373, 0.020408163
        %v8479 = vmul.f32 %v8375, 0.020408163
        %v8480 = vmul.f32 %v8426, 0.020408163
        %v8481 = vmul.f32 %v8428, 0.020408163
        %v8482 = vmul.f32 %v8059, 0.020408163
        %v8483 = vmul.f32 %v8061, 0.020408163
        %v8484 = vmul.f32 %v8112, 0.020408163
        %v8485 = vmul.f32 %v8114, 0.020408163
        %v8486 = vmul.f32 %v8165, 0.020408163
        %v8487 = vmul.f32 %v8167, 0.020408163
        %v8488 = vmul.f32 %v8218, 0.020408163
        %v8489 = vmul.f32 %v8220, 0.020408163
        %v8490 = vmul.f32 %v8271, 0.020408163
        %v8491 = vmul.f32 %v8273, 0.020408163
        %v8492 = vmul.f32 %v8324, 0.020408163
        %v8493 = vmul.f32 %v8326, 0.020408163
        %v8494 = vmul.f32 %v8377, 0.020408163
        %v8495 = vmul.f32 %v8379, 0.020408163
        %v8496 = vmul.f32 %v8430, 0.020408163
        %v8497 = vmul.f32 %v8432, 0.020408163
        %s8498 = scalar_lea.vmem %s465, 512 [#allocation3]
        %8499 = vst [vmem:[%s8498] sm:$0xff] %v8434
        %8500 = vst [vmem:[%s8498 + $0x8] sm:$0xff] %v8435
        %8501 = vst [vmem:[%s8498 + $0x10] sm:$0xff] %v8436
        %8502 = vst [vmem:[%s8498 + $0x18] sm:$0xff] %v8437
        %8503 = vst [vmem:[%s8498 + $0x20] sm:$0xff] %v8438
        %8504 = vst [vmem:[%s8498 + $0x28] sm:$0xff] %v8439
        %8505 = vst [vmem:[%s8498 + $0x30] sm:$0xff] %v8440
        %8506 = vst [vmem:[%s8498 + $0x38] sm:$0xff] %v8441
        %8507 = vst [vmem:[%s8498 + $0x40] sm:$0xff] %v8442
        %8508 = vst [vmem:[%s8498 + $0x48] sm:$0xff] %v8443
        %8509 = vst [vmem:[%s8498 + $0x50] sm:$0xff] %v8444
        %8510 = vst [vmem:[%s8498 + $0x58] sm:$0xff] %v8445
        %8511 = vst [vmem:[%s8498 + $0x60] sm:$0xff] %v8446
        %8512 = vst [vmem:[%s8498 + $0x68] sm:$0xff] %v8447
        %8513 = vst [vmem:[%s8498 + $0x70] sm:$0xff] %v8448
        %8514 = vst [vmem:[%s8498 + $0x78] sm:$0xff] %v8449
        %8515 = vst [vmem:[%s8498 + $0x80] sm:$0xff] %v8450
        %8516 = vst [vmem:[%s8498 + $0x88] sm:$0xff] %v8451
        %8517 = vst [vmem:[%s8498 + $0x90] sm:$0xff] %v8452
        %8518 = vst [vmem:[%s8498 + $0x98] sm:$0xff] %v8453
        %8519 = vst [vmem:[%s8498 + $0xa0] sm:$0xff] %v8454
        %8520 = vst [vmem:[%s8498 + $0xa8] sm:$0xff] %v8455
        %8521 = vst [vmem:[%s8498 + $0xb0] sm:$0xff] %v8456
        %8522 = vst [vmem:[%s8498 + $0xb8] sm:$0xff] %v8457
        %8523 = vst [vmem:[%s8498 + $0xc0] sm:$0xff] %v8458
        %8524 = vst [vmem:[%s8498 + $0xc8] sm:$0xff] %v8459
        %8525 = vst [vmem:[%s8498 + $0xd0] sm:$0xff] %v8460
        %8526 = vst [vmem:[%s8498 + $0xd8] sm:$0xff] %v8461
        %8527 = vst [vmem:[%s8498 + $0xe0] sm:$0xff] %v8462
        %8528 = vst [vmem:[%s8498 + $0xe8] sm:$0xff] %v8463
        %8529 = vst [vmem:[%s8498 + $0xf0] sm:$0xff] %v8464
        %8530 = vst [vmem:[%s8498 + $0xf8] sm:$0xff] %v8465
        %8531 = vst [vmem:[%s8498 + $0x100] sm:$0xff] %v8466
        %8532 = vst [vmem:[%s8498 + $0x108] sm:$0xff] %v8467
        %8533 = vst [vmem:[%s8498 + $0x110] sm:$0xff] %v8468
        %8534 = vst [vmem:[%s8498 + $0x118] sm:$0xff] %v8469
        %8535 = vst [vmem:[%s8498 + $0x120] sm:$0xff] %v8470
        %8536 = vst [vmem:[%s8498 + $0x128] sm:$0xff] %v8471
        %8537 = vst [vmem:[%s8498 + $0x130] sm:$0xff] %v8472
        %8538 = vst [vmem:[%s8498 + $0x138] sm:$0xff] %v8473
        %8539 = vst [vmem:[%s8498 + $0x140] sm:$0xff] %v8474
        %8540 = vst [vmem:[%s8498 + $0x148] sm:$0xff] %v8475
        %8541 = vst [vmem:[%s8498 + $0x150] sm:$0xff] %v8476
        %8542 = vst [vmem:[%s8498 + $0x158] sm:$0xff] %v8477
        %8543 = vst [vmem:[%s8498 + $0x160] sm:$0xff] %v8478
        %8544 = vst [vmem:[%s8498 + $0x168] sm:$0xff] %v8479
        %8545 = vst [vmem:[%s8498 + $0x170] sm:$0xff] %v8480
        %8546 = vst [vmem:[%s8498 + $0x178] sm:$0xff] %v8481
        %8547 = vst [vmem:[%s8498 + $0x180] sm:$0xff] %v8482
        %8548 = vst [vmem:[%s8498 + $0x188] sm:$0xff] %v8483
        %8549 = vst [vmem:[%s8498 + $0x190] sm:$0xff] %v8484
        %8550 = vst [vmem:[%s8498 + $0x198] sm:$0xff] %v8485
        %8551 = vst [vmem:[%s8498 + $0x1a0] sm:$0xff] %v8486
        %8552 = vst [vmem:[%s8498 + $0x1a8] sm:$0xff] %v8487
        %8553 = vst [vmem:[%s8498 + $0x1b0] sm:$0xff] %v8488
        %8554 = vst [vmem:[%s8498 + $0x1b8] sm:$0xff] %v8489
        %8555 = vst [vmem:[%s8498 + $0x1c0] sm:$0xff] %v8490
        %8556 = vst [vmem:[%s8498 + $0x1c8] sm:$0xff] %v8491
        %8557 = vst [vmem:[%s8498 + $0x1d0] sm:$0xff] %v8492
        %8558 = vst [vmem:[%s8498 + $0x1d8] sm:$0xff] %v8493
        %8559 = vst [vmem:[%s8498 + $0x1e0] sm:$0xff] %v8494
        %8560 = vst [vmem:[%s8498 + $0x1e8] sm:$0xff] %v8495
        %8561 = vst [vmem:[%s8498 + $0x1f0] sm:$0xff] %v8496
        %8562 = vst [vmem:[%s8498 + $0x1f8] sm:$0xff] %v8497
        %v8563 = vmul.f32 %v5713, %v8434
        %v8564 = vmul.f32 %v5713, %v8435
        %v8565 = vmul.f32 %v5713, %v8436
        %v8566 = vmul.f32 %v5713, %v8437
        %v8567 = vmul.f32 %v5713, %v8438
        %v8568 = vmul.f32 %v5713, %v8439
        %v8569 = vmul.f32 %v5713, %v8440
        %v8570 = vmul.f32 %v5713, %v8441
        %v8571 = vmul.f32 %v5713, %v8442
        %v8572 = vmul.f32 %v5713, %v8443
        %v8573 = vmul.f32 %v5713, %v8444
        %v8574 = vmul.f32 %v5713, %v8445
        %v8575 = vmul.f32 %v5713, %v8446
        %v8576 = vmul.f32 %v5713, %v8447
        %v8577 = vmul.f32 %v5713, %v8448
        %v8578 = vmul.f32 %v5713, %v8449
        %v8579 = vmul.f32 %v5718, %v8450
        %v8580 = vmul.f32 %v5718, %v8451
        %v8581 = vmul.f32 %v5718, %v8452
        %v8582 = vmul.f32 %v5718, %v8453
        %v8583 = vmul.f32 %v5718, %v8454
        %v8584 = vmul.f32 %v5718, %v8455
        %v8585 = vmul.f32 %v5718, %v8456
        %v8586 = vmul.f32 %v5718, %v8457
        %v8587 = vmul.f32 %v5718, %v8458
        %v8588 = vmul.f32 %v5718, %v8459
        %v8589 = vmul.f32 %v5718, %v8460
        %v8590 = vmul.f32 %v5718, %v8461
        %v8591 = vmul.f32 %v5718, %v8462
        %v8592 = vmul.f32 %v5718, %v8463
        %v8593 = vmul.f32 %v5718, %v8464
        %v8594 = vmul.f32 %v5718, %v8465
        %v8595 = vmul.f32 %v5723, %v8466
        %v8596 = vmul.f32 %v5723, %v8467
        %v8597 = vmul.f32 %v5723, %v8468
        %v8598 = vmul.f32 %v5723, %v8469
        %v8599 = vmul.f32 %v5723, %v8470
        %v8600 = vmul.f32 %v5723, %v8471
        %v8601 = vmul.f32 %v5723, %v8472
        %v8602 = vmul.f32 %v5723, %v8473
        %v8603 = vmul.f32 %v5723, %v8474
        %v8604 = vmul.f32 %v5723, %v8475
        %v8605 = vmul.f32 %v5723, %v8476
        %v8606 = vmul.f32 %v5723, %v8477
        %v8607 = vmul.f32 %v5723, %v8478
        %v8608 = vmul.f32 %v5723, %v8479
        %v8609 = vmul.f32 %v5723, %v8480
        %v8610 = vmul.f32 %v5723, %v8481
        %v8611 = vmul.f32 %v5728, %v8482
        %v8612 = vmul.f32 %v5728, %v8483
        %v8613 = vmul.f32 %v5728, %v8484
        %v8614 = vmul.f32 %v5728, %v8485
        %v8615 = vmul.f32 %v5728, %v8486
        %v8616 = vmul.f32 %v5728, %v8487
        %v8617 = vmul.f32 %v5728, %v8488
        %v8618 = vmul.f32 %v5728, %v8489
        %v8619 = vmul.f32 %v5728, %v8490
        %v8620 = vmul.f32 %v5728, %v8491
        %v8621 = vmul.f32 %v5728, %v8492
        %v8622 = vmul.f32 %v5728, %v8493
        %v8623 = vmul.f32 %v5728, %v8494
        %v8624 = vmul.f32 %v5728, %v8495
        %v8625 = vmul.f32 %v5728, %v8496
        %v8626 = vmul.f32 %v5728, %v8497
        %v8627 = vadd.f32 %v8563, %v8579
        %v8628 = vadd.f32 %v8627, %v8595
        %v8629 = vadd.f32 %v8628, %v8611
        %v8630 = vrot.slane %v8629, 4
        %v8631 = vadd.f32 %v8629, %v8630
        %v8632 = vrot.slane %v8631, 2
        %v8633 = vadd.f32 %v8631, %v8632
        %v8634 = vrot.slane %v8633, 1
        %v8635 = vadd.f32 %v8633, %v8634
        %v8636 = vadd.f32 %v8564, %v8580
        %v8637 = vadd.f32 %v8636, %v8596
        %v8638 = vadd.f32 %v8637, %v8612
        %v8639 = vrot.slane %v8638, 4
        %v8640 = vadd.f32 %v8638, %v8639
        %v8641 = vrot.slane %v8640, 2
        %v8642 = vadd.f32 %v8640, %v8641
        %v8643 = vrot.slane %v8642, 1
        %v8644 = vadd.f32 %v8642, %v8643
        %v8645 = vadd.f32 %v8565, %v8581
        %v8646 = vadd.f32 %v8645, %v8597
        %v8647 = vadd.f32 %v8646, %v8613
        %v8648 = vrot.slane %v8647, 4
        %v8649 = vadd.f32 %v8647, %v8648
        %v8650 = vrot.slane %v8649, 2
        %v8651 = vadd.f32 %v8649, %v8650
        %v8652 = vrot.slane %v8651, 1
        %v8653 = vadd.f32 %v8651, %v8652
        %v8654 = vadd.f32 %v8566, %v8582
        %v8655 = vadd.f32 %v8654, %v8598
        %v8656 = vadd.f32 %v8655, %v8614
        %v8657 = vrot.slane %v8656, 4
        %v8658 = vadd.f32 %v8656, %v8657
        %v8659 = vrot.slane %v8658, 2
        %v8660 = vadd.f32 %v8658, %v8659
        %v8661 = vrot.slane %v8660, 1
        %v8662 = vadd.f32 %v8660, %v8661
        %v8663 = vadd.f32 %v8567, %v8583
        %v8664 = vadd.f32 %v8663, %v8599
        %v8665 = vadd.f32 %v8664, %v8615
        %v8666 = vrot.slane %v8665, 4
        %v8667 = vadd.f32 %v8665, %v8666
        %v8668 = vrot.slane %v8667, 2
        %v8669 = vadd.f32 %v8667, %v8668
        %v8670 = vrot.slane %v8669, 1
        %v8671 = vadd.f32 %v8669, %v8670
        %v8672 = vadd.f32 %v8568, %v8584
        %v8673 = vadd.f32 %v8672, %v8600
        %v8674 = vadd.f32 %v8673, %v8616
        %v8675 = vrot.slane %v8674, 4
        %v8676 = vadd.f32 %v8674, %v8675
        %v8677 = vrot.slane %v8676, 2
        %v8678 = vadd.f32 %v8676, %v8677
        %v8679 = vrot.slane %v8678, 1
        %v8680 = vadd.f32 %v8678, %v8679
        %v8681 = vadd.f32 %v8569, %v8585
        %v8682 = vadd.f32 %v8681, %v8601
        %v8683 = vadd.f32 %v8682, %v8617
        %v8684 = vrot.slane %v8683, 4
        %v8685 = vadd.f32 %v8683, %v8684
        %v8686 = vrot.slane %v8685, 2
        %v8687 = vadd.f32 %v8685, %v8686
        %v8688 = vrot.slane %v8687, 1
        %v8689 = vadd.f32 %v8687, %v8688
        %v8690 = vadd.f32 %v8570, %v8586
        %v8691 = vadd.f32 %v8690, %v8602
        %v8692 = vadd.f32 %v8691, %v8618
        %v8693 = vrot.slane %v8692, 4
        %v8694 = vadd.f32 %v8692, %v8693
        %v8695 = vrot.slane %v8694, 2
        %v8696 = vadd.f32 %v8694, %v8695
        %v8697 = vrot.slane %v8696, 1
        %v8698 = vadd.f32 %v8696, %v8697
        %v8699 = vadd.f32 %v8571, %v8587
        %v8700 = vadd.f32 %v8699, %v8603
        %v8701 = vadd.f32 %v8700, %v8619
        %v8702 = vrot.slane %v8701, 4
        %v8703 = vadd.f32 %v8701, %v8702
        %v8704 = vrot.slane %v8703, 2
        %v8705 = vadd.f32 %v8703, %v8704
        %v8706 = vrot.slane %v8705, 1
        %v8707 = vadd.f32 %v8705, %v8706
        %v8708 = vadd.f32 %v8572, %v8588
        %v8709 = vadd.f32 %v8708, %v8604
        %v8710 = vadd.f32 %v8709, %v8620
        %v8711 = vrot.slane %v8710, 4
        %v8712 = vadd.f32 %v8710, %v8711
        %v8713 = vrot.slane %v8712, 2
        %v8714 = vadd.f32 %v8712, %v8713
        %v8715 = vrot.slane %v8714, 1
        %v8716 = vadd.f32 %v8714, %v8715
        %v8717 = vadd.f32 %v8573, %v8589
        %v8718 = vadd.f32 %v8717, %v8605
        %v8719 = vadd.f32 %v8718, %v8621
        %v8720 = vrot.slane %v8719, 4
        %v8721 = vadd.f32 %v8719, %v8720
        %v8722 = vrot.slane %v8721, 2
        %v8723 = vadd.f32 %v8721, %v8722
        %v8724 = vrot.slane %v8723, 1
        %v8725 = vadd.f32 %v8723, %v8724
        %v8726 = vadd.f32 %v8574, %v8590
        %v8727 = vadd.f32 %v8726, %v8606
        %v8728 = vadd.f32 %v8727, %v8622
        %v8729 = vrot.slane %v8728, 4
        %v8730 = vadd.f32 %v8728, %v8729
        %v8731 = vrot.slane %v8730, 2
        %v8732 = vadd.f32 %v8730, %v8731
        %v8733 = vrot.slane %v8732, 1
        %v8734 = vadd.f32 %v8732, %v8733
        %v8735 = vadd.f32 %v8575, %v8591
        %v8736 = vadd.f32 %v8735, %v8607
        %v8737 = vadd.f32 %v8736, %v8623
        %v8738 = vrot.slane %v8737, 4
        %v8739 = vadd.f32 %v8737, %v8738
        %v8740 = vrot.slane %v8739, 2
        %v8741 = vadd.f32 %v8739, %v8740
        %v8742 = vrot.slane %v8741, 1
        %v8743 = vadd.f32 %v8741, %v8742
        %v8744 = vadd.f32 %v8576, %v8592
        %v8745 = vadd.f32 %v8744, %v8608
        %v8746 = vadd.f32 %v8745, %v8624
        %v8747 = vrot.slane %v8746, 4
        %v8748 = vadd.f32 %v8746, %v8747
        %v8749 = vrot.slane %v8748, 2
        %v8750 = vadd.f32 %v8748, %v8749
        %v8751 = vrot.slane %v8750, 1
        %v8752 = vadd.f32 %v8750, %v8751
        %v8753 = vadd.f32 %v8577, %v8593
        %v8754 = vadd.f32 %v8753, %v8609
        %v8755 = vadd.f32 %v8754, %v8625
        %v8756 = vrot.slane %v8755, 4
        %v8757 = vadd.f32 %v8755, %v8756
        %v8758 = vrot.slane %v8757, 2
        %v8759 = vadd.f32 %v8757, %v8758
        %v8760 = vrot.slane %v8759, 1
        %v8761 = vadd.f32 %v8759, %v8760
        %v8762 = vadd.f32 %v8578, %v8594
        %v8763 = vadd.f32 %v8762, %v8610
        %v8764 = vadd.f32 %v8763, %v8626
        %v8765 = vrot.slane %v8764, 4
        %v8766 = vadd.f32 %v8764, %v8765
        %v8767 = vrot.slane %v8766, 2
        %v8768 = vadd.f32 %v8766, %v8767
        %v8769 = vrot.slane %v8768, 1
        %v8770 = vadd.f32 %v8768, %v8769
        %v8771 = vadd.f32 %v8635, %v5946
        %v8772 = vadd.f32 %v8644, %v5946
        %v8773 = vadd.f32 %v8653, %v5946
        %v8774 = vadd.f32 %v8662, %v5946
        %v8775 = vadd.f32 %v8671, %v5946
        %v8776 = vadd.f32 %v8680, %v5946
        %v8777 = vadd.f32 %v8689, %v5946
        %v8778 = vadd.f32 %v8698, %v5946
        %v8779 = vadd.f32 %v8707, %v5946
        %v8780 = vadd.f32 %v8716, %v5946
        %v8781 = vadd.f32 %v8725, %v5946
        %v8782 = vadd.f32 %v8734, %v5946
        %v8783 = vadd.f32 %v8743, %v5946
        %v8784 = vadd.f32 %v8752, %v5946
        %v8785 = vadd.f32 %v8761, %v5946
        %v8786 = vadd.f32 %v8770, %v5946
        %v8803 = vcombine.low %v8771, %v8772
        %v8804 = vcombine.low %v8773, %v8774
        %v8805 = vcombine.low %v8775, %v8776
        %v8806 = vcombine.low %v8777, %v8778
        %v8808 = vunpack.c.l.s4 1966171168
        %v8809 = vunpack.c.0.s8 %v8808
        %v8810 = vlaneseq
        %v8811 = vshrl.u32 %v8810, 7
        %v8812 = vsub.s32 %v8809, %v8811
        %v8813 = vrot.slane %v8803, %v8812
        %v8815 = vunpack.c.l.s4 1966171168
        %v8816 = vunpack.c.0.s8 %v8815
        %v8817 = vlaneseq
        %v8818 = vshrl.u32 %v8817, 7
        %v8819 = vsub.s32 %v8816, %v8818
        %v8820 = vrot.slane %v8804, %v8819
        %v8822 = vunpack.c.l.s4 1966171168
        %v8823 = vunpack.c.0.s8 %v8822
        %v8824 = vlaneseq
        %v8825 = vshrl.u32 %v8824, 7
        %v8826 = vsub.s32 %v8823, %v8825
        %v8827 = vrot.slane %v8805, %v8826
        %v8829 = vunpack.c.l.s4 1966171168
        %v8830 = vunpack.c.0.s8 %v8829
        %v8831 = vlaneseq
        %v8832 = vshrl.u32 %v8831, 7
        %v8833 = vsub.s32 %v8830, %v8832
        %v8834 = vrot.slane %v8806, %v8833
        %v8835 = vcombine.low %v8813, %v8820
        %v8836 = vcombine.low %v8827, %v8834
        %v8838 = vunpack.c.l.s4 1966171168
        %v8839 = vunpack.c.0.s8 %v8838
        %v8840 = vlaneseq
        %v8841 = vshrl.u32 %v8840, 7
        %v8842 = vsub.s32 %v8839, %v8841
        %v8843 = vrot.slane %v8835, %v8842
        %v8845 = vunpack.c.l.s4 1966171168
        %v8846 = vunpack.c.0.s8 %v8845
        %v8847 = vlaneseq
        %v8848 = vshrl.u32 %v8847, 7
        %v8849 = vsub.s32 %v8846, %v8848
        %v8850 = vrot.slane %v8836, %v8849
        %v8851 = vcombine.low %v8843, %v8850
        %v8852 = vcombine.low %v8779, %v8780
        %v8853 = vcombine.low %v8781, %v8782
        %v8854 = vcombine.low %v8783, %v8784
        %v8855 = vcombine.low %v8785, %v8786
        %v8857 = vunpack.c.l.s4 1966171168
        %v8858 = vunpack.c.0.s8 %v8857
        %v8859 = vlaneseq
        %v8860 = vshrl.u32 %v8859, 7
        %v8861 = vsub.s32 %v8858, %v8860
        %v8862 = vrot.slane %v8852, %v8861
        %v8864 = vunpack.c.l.s4 1966171168
        %v8865 = vunpack.c.0.s8 %v8864
        %v8866 = vlaneseq
        %v8867 = vshrl.u32 %v8866, 7
        %v8868 = vsub.s32 %v8865, %v8867
        %v8869 = vrot.slane %v8853, %v8868
        %v8871 = vunpack.c.l.s4 1966171168
        %v8872 = vunpack.c.0.s8 %v8871
        %v8873 = vlaneseq
        %v8874 = vshrl.u32 %v8873, 7
        %v8875 = vsub.s32 %v8872, %v8874
        %v8876 = vrot.slane %v8854, %v8875
        %v8878 = vunpack.c.l.s4 1966171168
        %v8879 = vunpack.c.0.s8 %v8878
        %v8880 = vlaneseq
        %v8881 = vshrl.u32 %v8880, 7
        %v8882 = vsub.s32 %v8879, %v8881
        %v8883 = vrot.slane %v8855, %v8882
        %v8884 = vcombine.low %v8862, %v8869
        %v8885 = vcombine.low %v8876, %v8883
        %v8887 = vunpack.c.l.s4 1966171168
        %v8888 = vunpack.c.0.s8 %v8887
        %v8889 = vlaneseq
        %v8890 = vshrl.u32 %v8889, 7
        %v8891 = vsub.s32 %v8888, %v8890
        %v8892 = vrot.slane %v8884, %v8891
        %v8894 = vunpack.c.l.s4 1966171168
        %v8895 = vunpack.c.0.s8 %v8894
        %v8896 = vlaneseq
        %v8897 = vshrl.u32 %v8896, 7
        %v8898 = vsub.s32 %v8895, %v8897
        %v8899 = vrot.slane %v8885, %v8898
        %v8900 = vcombine.low %v8892, %v8899
        %s8903 = scalar_lea.vmem %s499, 16
        %8904 = vst [vmem:[%s8903] sm:$0xff] %v8851
        %8905 = vst [vmem:[%s8903 + $0x8] sm:$0xff] %v8900
        %s8906 = smul.u32 2, %s30
        %p8907 = scmp.lt.s32.totalorder %s8906, 3
        %s8908 = scalar_select %p8907, %s8906, 3
        %s8909 = smul.addr %s8908, 4
        %s8910 = smul.addr %s8909, 8
        %s8911 = scalar_lea.vmem %s11, %s8910
        %s8912 = sand.u32 %s305, 1
        %s8913 = scalar_lea.sflag [#allocation4], %s8912
        %s8914 = sand.u32 %s305, 1
        %s8915 = smul.addr %s8914, 1024
        %s8916 = scalar_lea.vmem [#allocation3], %s8915
        %s8917 = smul.u32 2, %s30
        %p8918 = scmp.lt.s32.totalorder %s8917, 3
        %s8919 = scalar_select %p8918, %s8917, 3
        %s8920 = smul.addr %s8919, 16
        %s8921 = scalar_lea.vmem %s13, %s8920
        // Predicated region
        $region65: #{effi_encoder_msfe_forward.1} parent=63 // pred_check
          %p8922 = pneg %p289
        $region66: #{effi_encoder_msfe_forward.1} parent=63 // pred_check_branch
          %8924 = sbr.rel (%p8922) target = $region68
        $region67: #{effi_encoder_msfe_forward.1} parent=63 // pred_region
          %s8925 = smul.u32 2, %s30
        $region68: #{effi_encoder_msfe_forward.1} parent=63 // pred_fallthru
          _
        // Predicated region
        $region69: #{effi_encoder_msfe_forward.1} parent=63 // pred_check
          %p8926 = pneg %p315
        $region70: #{effi_encoder_msfe_forward.1} parent=63 // pred_check_branch
          %8928 = sbr.rel (%p8926) target = $region72
        $region71: #{effi_encoder_msfe_forward.1} parent=63 // pred_region
          %s8929 = smul.u32 2, %s30
          %s8931 = ssub.s32 16384, 16384
          %8932 = vsyncadd %s8913, %s8931
          %s8933 = smul.addr %s8929, 64
          %s8934 = smul.addr %s8933, 128
          %s8935 = scalar_lea.hbm %s12, %s8934
          %s8936 = sshll.u32 %s8916, 4
          %s8937 = int_to_ptr.vmem [resolvable:$true] %s8936
          %8942 = dma.vmem_to_hbm [thread:$0]  %s8937, 16384, %s8935, %s8913, 2048, 2048, 128
        $region72: #{effi_encoder_msfe_forward.1} parent=63 // pred_fallthru
          _
        // Predicated region
        $region73: #{effi_encoder_msfe_forward.1} parent=63 // pred_check
          %p8943 = pneg %p341
        $region74: #{effi_encoder_msfe_forward.1} parent=63 // pred_check_branch
          %8945 = sbr.rel (%p8943) target = $region76
        $region75: #{effi_encoder_msfe_forward.1} parent=63 // pred_region
          %s8946 = smul.u32 2, %s30
        $region76: #{effi_encoder_msfe_forward.1} parent=63 // pred_fallthru
          _
      $region64: #{effi_encoder_msfe_forward.1} parent=5 // pred_fallthru
        _
      %p8947 = scmp.le.s32.totalorder 2, %s25
      // Predicated region
      $region77: #{effi_encoder_msfe_forward.1} parent=5 // pred_check
        %p8948 = pneg %p8947
      $region78: #{effi_encoder_msfe_forward.1} parent=5 // pred_check_branch
        %8950 = sbr.rel (%p8948) target = $region80
      $region79: #{effi_encoder_msfe_forward.1} parent=5 // pred_region
        %s8951 = ssub.s32 %s25, 2
        // Predicated region
        $region81: #{effi_encoder_msfe_forward.1} parent=79 // pred_check
          %p8952 = pneg %p295
        $region82: #{effi_encoder_msfe_forward.1} parent=79 // pred_check_branch
          %8954 = sbr.rel (%p8952) target = $region84
        $region83: #{effi_encoder_msfe_forward.1} parent=79 // pred_region
          %s8955 = smul.u32 2, %s31
          %p8956 = scmp.lt.s32.totalorder %s8955, 3
          %s8957 = scalar_select %p8956, %s8955, 3
          %s8958 = smul.addr %s8957, 4
          %s8959 = smul.addr %s8958, 8
          %s8960 = scalar_lea.vmem %s11, %s8959
        $region84: #{effi_encoder_msfe_forward.1} parent=79 // pred_fallthru
          _
        // Predicated region
        $region85: #{effi_encoder_msfe_forward.1} parent=79 // pred_check
          %p8961 = pneg %p321
        $region86: #{effi_encoder_msfe_forward.1} parent=79 // pred_check_branch
          %8963 = sbr.rel (%p8961) target = $region88
        $region87: #{effi_encoder_msfe_forward.1} parent=79 // pred_region
          %s8964 = sand.u32 %s306, 1
          %s8965 = scalar_lea.sflag [#allocation4], %s8964
          %s8966 = sand.u32 %s306, 1
          %s8967 = smul.addr %s8966, 1024
          %s8968 = scalar_lea.vmem [#allocation3], %s8967
          %8969 = dma.done %s8965, 16384
        $region88: #{effi_encoder_msfe_forward.1} parent=79 // pred_fallthru
          _
        // Predicated region
        $region89: #{effi_encoder_msfe_forward.1} parent=79 // pred_check
          %p8970 = pneg %p347
        $region90: #{effi_encoder_msfe_forward.1} parent=79 // pred_check_branch
          %8972 = sbr.rel (%p8970) target = $region92
        $region91: #{effi_encoder_msfe_forward.1} parent=79 // pred_region
          %s8973 = smul.u32 2, %s31
          %p8974 = scmp.lt.s32.totalorder %s8973, 3
          %s8975 = scalar_select %p8974, %s8973, 3
          %s8976 = smul.addr %s8975, 16
          %s8977 = scalar_lea.vmem %s13, %s8976
        $region92: #{effi_encoder_msfe_forward.1} parent=79 // pred_fallthru
          _
      $region80: #{effi_encoder_msfe_forward.1} parent=5 // pred_fallthru
        _
    $region6: #{effi_encoder_msfe_forward.1} parent=1 // loop_footer
      %s29 = sadd.s32 1, %s25
    $region7: #{effi_encoder_msfe_forward.1} parent=1 // loop_footer_branch
      %24 = sbr.rel target = $region3
    $region8: #{effi_encoder_msfe_forward.1} parent=1 // loop_exit
      _
    %8978 = vsyncpa [#allocation4], 1
    %s8979 = scalar_lea.sflag [#allocation4], 1
    %8980 = vsyncpa %s8979, 1

</llo_original>
